<compile_context>
chip_gen: v5e
topology: v5e:2x2
jax: 0.10.0
libtpu: 0.0.40
codegen_flags: <defaults>
</compile_context>

<pallas_src>
import jax
import jax.numpy as jnp
from jax.experimental import pallas as pl
from jax.experimental.pallas import tpu as pltpu

C1, C2 = 32, 64          # conv channel counts
K1 = 9                   # conv1 taps (Cin=1, 3x3)
PPAD1 = 768              # 26*26 = 676 conv1 pooled pixels, padded to lane multiple
P2_LEN = 156             # conv2 pooled block per channel: 12 rows * 13-lane stride
FC1_IN = C2 * P2_LEN     # 9984 remapped fc1 input features (9216 real + holes)
HID, OUT = 128, 10


# --------------------------------------------------------------------------- #
# Fused conv1 + relu + pool + conv2 + relu + pool (one batch element / step)
# --------------------------------------------------------------------------- #
def fused_conv_kernel(p1_ref, w1_ref, b1_ref, w2_ref, b2_ref, o_ref):
    """p1_ref: (1, 4, 9, 768) bf16  conv1 patches; axis1 = conv1 pool group
                                    (pH1*2+pW1); lane = parity-plane order of the
                                    26x26 pooled grid.
       w1_ref: (32, 9)   bf16       conv1 weights, col = dy*3+dx
       b1_ref: (32, 1)   f32
       w2_ref: (9, 64, 32) bf16     conv2 weights per tap t=dy*3+dx: (Cout, Cin)
       b2_ref: (64, 1)   f32
       o_ref : (1, 64, 156) bf16    pooled conv2 output; lane = i*13 + j, j<12
                                    valid (j==12 lanes map to zero fc1 rows)."""
    w1 = w1_ref[...]

    # conv1 (+bias+relu) fused with 2x2 max-pool: running max over the 4 pool
    # groups keeps the f32 working set at one (32, 768) tile.
    m1 = None
    for q1 in range(4):
        z = jnp.dot(w1, p1_ref[0, q1], preferred_element_type=jnp.float32)
        m1 = z if m1 is None else jnp.maximum(m1, z)
    y1 = jnp.maximum(m1 + b1_ref[...], 0.0)          # (32, 768) f32
    y1 = y1.astype(jnp.bfloat16)                     # MXU operand for conv2

    # conv2 (+bias+relu+pool), entirely from the in-VMEM y1 value.
    # For pool group (pH,pW) and tap (dy,dx), y1[:, 2i+pH+dy, 2j+pW+dx] is a
    # contiguous lane slice of the parity-plane layout starting at `off`; the
    # output column index is i*13 + j (j == 12 columns are garbage).
    m2 = None
    for q in range(4):
        pH, pW = q // 2, q % 2
        acc = None
        for dy in range(3):
            for dx in range(3):
                k, l = pH + dy, pW + dx
                off = (k % 2) * 338 + (l % 2) * 169 + (k // 2) * 13 + (l // 2)
                rhs = y1[:, off:off + P2_LEN]                      # (32, 156)
                z = jnp.dot(w2_ref[dy * 3 + dx], rhs,
                            preferred_element_type=jnp.float32)    # (64, 156)
                acc = z if acc is None else acc + z
        m2 = acc if m2 is None else jnp.maximum(m2, acc)
    y2 = jnp.maximum(m2 + b2_ref[...], 0.0)          # (64, 156) f32
    o_ref[0] = y2.astype(o_ref.dtype)


def _conv_stage(p1, w1k, b1k, w2k, b2k):
    n = p1.shape[0]
    return pl.pallas_call(
        fused_conv_kernel,
        out_shape=jax.ShapeDtypeStruct((n, C2, P2_LEN), jnp.bfloat16),
        grid=(n,),
        in_specs=[
            pl.BlockSpec((1, 4, K1, PPAD1), lambda i: (i, 0, 0, 0)),
            pl.BlockSpec((C1, K1), lambda i: (0, 0)),
            pl.BlockSpec((C1, 1), lambda i: (0, 0)),
            pl.BlockSpec((K1, C2, C1), lambda i: (0, 0, 0)),
            pl.BlockSpec((C2, 1), lambda i: (0, 0)),
        ],
        out_specs=pl.BlockSpec((1, C2, P2_LEN), lambda i: (i, 0, 0)),
        compiler_params=pltpu.CompilerParams(
            dimension_semantics=("parallel",),
            vmem_limit_bytes=32 * 1024 * 1024),
    )(p1, w1k, b1k, w2k, b2k)


def _conv1_patches(x_nchw):
    """(N,1,54,54) -> (N, 4, 9, 768) bf16 conv1 patches: pool-grouped + parity-plane
    lane order (all glue done in bf16; value = x[2r+pH1+dy, 2s+pW1+dx])."""
    n = x_nchw.shape[0]
    x = x_nchw[:, 0].astype(jnp.bfloat16)                      # (N, 54, 54)
    cols = [x[:, dy:dy + 52, dx:dx + 52] for dy in range(3) for dx in range(3)]
    p = jnp.stack(cols, axis=1)                                # (N, 9, 52, 52)
    # window row index = 4u + 2a + pH1 ; window col index = 4v + 2b + pW1
    p = p.reshape(n, 9, 13, 2, 2, 13, 2, 2)                    # (n,tap,u,a,pH1,v,b,pW1)
    p = p.transpose(0, 4, 7, 1, 3, 6, 2, 5)                    # (n,pH1,pW1,tap,a,b,u,v)
    p = p.reshape(n, 4, K1, 676)
    return jnp.pad(p, ((0, 0), (0, 0), (0, 0), (0, PPAD1 - 676)))


# --------------------------------------------------------------------------- #
# fc1 (+relu) + fc2, K-tiled with fused finalize
# --------------------------------------------------------------------------- #
def mlp_kernel(x_ref, w1_ref, b1_ref, w2_ref, b2_ref, o_ref, acc_ref):
    k = pl.program_id(1)

    @pl.when(k == 0)
    def _():
        acc_ref[...] = jnp.zeros_like(acc_ref)

    acc_ref[...] += jnp.dot(x_ref[...], w1_ref[...],
                            preferred_element_type=jnp.float32)

    @pl.when(k == pl.num_programs(1) - 1)
    def _():
        h = jnp.maximum(acc_ref[...] + b1_ref[...], 0.0)        # (bm, 128) f32
        o_ref[...] = jnp.dot(h, w2_ref[...],
                             preferred_element_type=jnp.float32) + b2_ref[...]


def _mlp(feats, wf1k, bf1k, wf2k, bf2k, *, tk=4992):
    n, d = feats.shape
    assert d % tk == 0
    bm = min(n, 256)                      # row tile: leading "parallel" batch axis
    grid = (pl.cdiv(n, bm), d // tk)
    return pl.pallas_call(
        mlp_kernel,
        out_shape=jax.ShapeDtypeStruct((n, OUT), jnp.float32),
        grid=grid,
        in_specs=[
            pl.BlockSpec((bm, tk), lambda m, k: (m, k)),
            pl.BlockSpec((tk, HID), lambda m, k: (k, 0)),
            pl.BlockSpec((1, HID), lambda m, k: (0, 0)),
            pl.BlockSpec((HID, OUT), lambda m, k: (0, 0)),
            pl.BlockSpec((1, OUT), lambda m, k: (0, 0)),
        ],
        out_specs=pl.BlockSpec((bm, OUT), lambda m, k: (m, 0)),
        scratch_shapes=[pltpu.VMEM((bm, HID), jnp.float32)],
        compiler_params=pltpu.CompilerParams(
            dimension_semantics=("parallel", "arbitrary"),
            vmem_limit_bytes=32 * 1024 * 1024),
    )(feats, wf1k, bf1k, wf2k, bf2k)


# --------------------------------------------------------------------------- #
# Forward, params
# --------------------------------------------------------------------------- #
def digit_encoder_forward(x_nchw, kparams):
    (w1k, b1k, w2k, b2k, wf1k, bf1k, wf2k, bf2k) = kparams
    n = x_nchw.shape[0]
    p1 = _conv1_patches(x_nchw)                       # (N, 4, 9, 768) bf16
    y2 = _conv_stage(p1, w1k, b1k, w2k, b2k)          # (N, 64, 156) bf16
    feats = y2.reshape(n, FC1_IN)                     # feature g = c*156 + i*13 + j
    return _mlp(feats, wf1k, bf1k, wf2k, bf2k)


def init_params(key):
    """Parameters in the original PyTorch layouts."""
    ks = jax.random.split(key, 8)

    def p(k, shape, fan_in):
        return jax.random.normal(k, shape, jnp.float32) / jnp.sqrt(float(fan_in))

    return (
        p(ks[0], (32, 1, 3, 3), 9), p(ks[1], (32,), 9),        # conv1
        p(ks[2], (64, 32, 3, 3), 288), p(ks[3], (64,), 288),   # conv2
        p(ks[4], (128, 9216), 9216), p(ks[5], (128,), 9216),   # fc1
        p(ks[6], (10, 128), 128), p(ks[7], (10,), 128),        # fc2
    )


def prepare_params(params):
    """One-time (outside jit) layout remaps + bf16 casts of the MXU operands."""
    (cw1, cb1, cw2, cb2, fw1, fb1, fw2, fb2) = params
    w1k = cw1.reshape(C1, K1).astype(jnp.bfloat16)                   # col = dy*3+dx
    b1k = cb1.reshape(C1, 1).astype(jnp.float32)
    w2k = cw2.transpose(2, 3, 0, 1).reshape(K1, C2, C1).astype(jnp.bfloat16)
    b2k = cb2.reshape(C2, 1).astype(jnp.float32)
    # fc1: torch flatten index f = c*144 + i*12 + j  ->  kernel feature index
    # g = c*156 + i*13 + j.  The j == 12 hole rows stay zero so the conv kernel's
    # garbage lanes never contribute.
    co = jnp.arange(C2)[:, None, None]
    ii = jnp.arange(12)[None, :, None]
    jj = jnp.arange(12)[None, None, :]
    g = (co * P2_LEN + ii * 13 + jj).reshape(-1)
    wf1k = jnp.zeros((FC1_IN, HID), jnp.float32).at[g].set(fw1.T)
    wf1k = wf1k.astype(jnp.bfloat16)
    bf1k = fb1.reshape(1, HID).astype(jnp.float32)
    wf2k = fw2.T.astype(jnp.float32)
    bf2k = fb2.reshape(1, OUT).astype(jnp.float32)
    return (w1k, b1k, w2k, b2k, wf1k, bf1k, wf2k, bf2k)


# --------------------------------------------------------------------------- #
# Pure-JAX f32 reference (PyTorch semantics) for a sanity check
# --------------------------------------------------------------------------- #
def _pool2(y):
    n, c, h, w = y.shape
    return y.reshape(n, c, h // 2, 2, w // 2, 2).max(axis=(3, 5))


def reference_forward(x, params):
    (cw1, cb1, cw2, cb2, fw1, fb1, fw2, fb2) = params
    dn = ("NCHW", "OIHW", "NCHW")
    y = jax.lax.conv_general_dilated(x, cw1, (1, 1), "VALID", dimension_numbers=dn)
    y = _pool2(jnp.maximum(y + cb1.reshape(1, -1, 1, 1), 0.0))
    y = jax.lax.conv_general_dilated(y, cw2, (1, 1), "VALID", dimension_numbers=dn)
    y = _pool2(jnp.maximum(y + cb2.reshape(1, -1, 1, 1), 0.0))
    f = y.reshape(y.shape[0], -1)
    h = jnp.maximum(f @ fw1.T + fb1, 0.0)
    return h @ fw2.T + fb2


if __name__ == "__main__":
    key = jax.random.PRNGKey(0)
    kx, kp = jax.random.split(key)
    # 54x54 single-channel input: the only spatial size consistent with fc1's
    # 9216 input features given this forward (54 -> 52 -> 26 -> 24 -> 12).
    x = jax.random.normal(kx, (2, 1, 54, 54), jnp.float32)
    params = init_params(kp)
    kparams = prepare_params(params)      # bf16 cast / remap once, outside jit

    fwd = jax.jit(digit_encoder_forward)
    out = jax.block_until_ready(fwd(x, kparams))
    assert out.shape == (2, 10) and out.dtype == jnp.float32

    ref = reference_forward(x, params)    # f32 reference vs bf16-operand kernels
    max_diff = float(jnp.max(jnp.abs(out - ref)))
    assert max_diff < 2e-1, max_diff
    print("KERNEL_OK")
</pallas_src>

<mosaic_0001>
module attributes {stable_mosaic.version = 11 : i64} {
  func.func @fused_conv_kernel(%arg0: i32, %arg1: memref<1x4x9x768xbf16, #tpu.memory_space<vmem>>, %arg2: memref<32x9xbf16, #tpu.memory_space<vmem>>, %arg3: memref<32x1xf32, #tpu.memory_space<vmem>>, %arg4: memref<9x64x32xbf16, #tpu.memory_space<vmem>>, %arg5: memref<64x1xf32, #tpu.memory_space<vmem>>, %arg6: memref<1x64x156xbf16, #tpu.memory_space<vmem>>) attributes {dimension_semantics = [#tpu.dimension_semantics<parallel>], iteration_bounds = array<i64: 2>, scalar_prefetch = 0 : i64, scratch_operands = 0 : i64, tpu.core_type = #tpu.core_type<tc>, window_params = [{transform_indices = @transform_0, window_bounds = array<i64: 1, 4, 9, 768>}, {pipeline_mode = #tpu.pipeline_mode<synchronous>, transform_indices = @transform_1, window_bounds = array<i64: 32, 9>}, {pipeline_mode = #tpu.pipeline_mode<synchronous>, transform_indices = @transform_2, window_bounds = array<i64: 32, 1>}, {pipeline_mode = #tpu.pipeline_mode<synchronous>, transform_indices = @transform_3, window_bounds = array<i64: 9, 64, 32>}, {pipeline_mode = #tpu.pipeline_mode<synchronous>, transform_indices = @transform_4, window_bounds = array<i64: 64, 1>}, {transform_indices = @transform_5, window_bounds = array<i64: 1, 64, 156>}]} {
    %c0 = arith.constant 0 : index
    %c0_0 = arith.constant 0 : index
    %0 = vector.load %arg2[%c0, %c0_0] : memref<32x9xbf16, #tpu.memory_space<vmem>>, vector<32x9xbf16>
    %c0_1 = arith.constant 0 : index
    %c0_2 = arith.constant 0 : index
    %c0_3 = arith.constant 0 : index
    %c0_4 = arith.constant 0 : index
    %1 = vector.load %arg1[%c0_1, %c0_2, %c0_3, %c0_4] : memref<1x4x9x768xbf16, #tpu.memory_space<vmem>>, vector<1x1x9x768xbf16>
    %2 = vector.shape_cast %1 : vector<1x1x9x768xbf16> to vector<9x768xbf16>
    %cst = arith.constant dense<0.000000e+00> : vector<32x768xf32>
    %3 = tpu.matmul %0, %2, %cst {dimension_numbers = #tpu.dot_dimension_numbers<[1], [0], [0], [1], [0, 0, 1, 1], [], []>} : vector<32x9xbf16>, vector<9x768xbf16>, vector<32x768xf32> -> vector<32x768xf32>
    %c0_5 = arith.constant 0 : index
    %c1 = arith.constant 1 : index
    %c0_6 = arith.constant 0 : index
    %c0_7 = arith.constant 0 : index
    %4 = vector.load %arg1[%c0_5, %c1, %c0_6, %c0_7] : memref<1x4x9x768xbf16, #tpu.memory_space<vmem>>, vector<1x1x9x768xbf16>
    %5 = vector.shape_cast %4 : vector<1x1x9x768xbf16> to vector<9x768xbf16>
    %cst_8 = arith.constant dense<0.000000e+00> : vector<32x768xf32>
    %6 = tpu.matmul %0, %5, %cst_8 {dimension_numbers = #tpu.dot_dimension_numbers<[1], [0], [0], [1], [0, 0, 1, 1], [], []>} : vector<32x9xbf16>, vector<9x768xbf16>, vector<32x768xf32> -> vector<32x768xf32>
    %7 = arith.maximumf %3, %6 : vector<32x768xf32>
    %c0_9 = arith.constant 0 : index
    %c2 = arith.constant 2 : index
    %c0_10 = arith.constant 0 : index
    %c0_11 = arith.constant 0 : index
    %8 = vector.load %arg1[%c0_9, %c2, %c0_10, %c0_11] : memref<1x4x9x768xbf16, #tpu.memory_space<vmem>>, vector<1x1x9x768xbf16>
    %9 = vector.shape_cast %8 : vector<1x1x9x768xbf16> to vector<9x768xbf16>
    %cst_12 = arith.constant dense<0.000000e+00> : vector<32x768xf32>
    %10 = tpu.matmul %0, %9, %cst_12 {dimension_numbers = #tpu.dot_dimension_numbers<[1], [0], [0], [1], [0, 0, 1, 1], [], []>} : vector<32x9xbf16>, vector<9x768xbf16>, vector<32x768xf32> -> vector<32x768xf32>
    %11 = arith.maximumf %7, %10 : vector<32x768xf32>
    %c0_13 = arith.constant 0 : index
    %c3 = arith.constant 3 : index
    %c0_14 = arith.constant 0 : index
    %c0_15 = arith.constant 0 : index
    %12 = vector.load %arg1[%c0_13, %c3, %c0_14, %c0_15] : memref<1x4x9x768xbf16, #tpu.memory_space<vmem>>, vector<1x1x9x768xbf16>
    %13 = vector.shape_cast %12 : vector<1x1x9x768xbf16> to vector<9x768xbf16>
    %cst_16 = arith.constant dense<0.000000e+00> : vector<32x768xf32>
    %14 = tpu.matmul %0, %13, %cst_16 {dimension_numbers = #tpu.dot_dimension_numbers<[1], [0], [0], [1], [0, 0, 1, 1], [], []>} : vector<32x9xbf16>, vector<9x768xbf16>, vector<32x768xf32> -> vector<32x768xf32>
    %15 = arith.maximumf %11, %14 : vector<32x768xf32>
    %c0_17 = arith.constant 0 : index
    %c0_18 = arith.constant 0 : index
    %16 = vector.load %arg3[%c0_17, %c0_18] : memref<32x1xf32, #tpu.memory_space<vmem>>, vector<32x1xf32>
    %17 = vector.broadcast %16 : vector<32x1xf32> to vector<32x768xf32>
    %18 = arith.addf %15, %17 : vector<32x768xf32>
    %cst_19 = arith.constant 0.000000e+00 : f32
    %19 = vector.broadcast %cst_19 : f32 to vector<32x768xf32>
    %20 = arith.maximumf %18, %19 : vector<32x768xf32>
    %21 = arith.truncf %20 : vector<32x768xf32> to vector<32x768xbf16>
    %22 = vector.extract_strided_slice %21 {offsets = [0, 0], sizes = [32, 156], strides = [1, 1]} : vector<32x768xbf16> to vector<32x156xbf16>
    %c0_20 = arith.constant 0 : index
    %c0_21 = arith.constant 0 : index
    %c0_22 = arith.constant 0 : index
    %23 = vector.load %arg4[%c0_20, %c0_21, %c0_22] : memref<9x64x32xbf16, #tpu.memory_space<vmem>>, vector<1x64x32xbf16>
    %24 = vector.shape_cast %23 : vector<1x64x32xbf16> to vector<64x32xbf16>
    %cst_23 = arith.constant dense<0.000000e+00> : vector<64x156xf32>
    %25 = tpu.matmul %24, %22, %cst_23 {dimension_numbers = #tpu.dot_dimension_numbers<[1], [0], [0], [1], [0, 0, 1, 1], [], []>} : vector<64x32xbf16>, vector<32x156xbf16>, vector<64x156xf32> -> vector<64x156xf32>
    %26 = vector.extract_strided_slice %21 {offsets = [0, 169], sizes = [32, 156], strides = [1, 1]} : vector<32x768xbf16> to vector<32x156xbf16>
    %c1_24 = arith.constant 1 : index
    %c0_25 = arith.constant 0 : index
    %c0_26 = arith.constant 0 : index
    %27 = vector.load %arg4[%c1_24, %c0_25, %c0_26] : memref<9x64x32xbf16, #tpu.memory_space<vmem>>, vector<1x64x32xbf16>
    %28 = vector.shape_cast %27 : vector<1x64x32xbf16> to vector<64x32xbf16>
    %cst_27 = arith.constant dense<0.000000e+00> : vector<64x156xf32>
    %29 = tpu.matmul %28, %26, %cst_27 {dimension_numbers = #tpu.dot_dimension_numbers<[1], [0], [0], [1], [0, 0, 1, 1], [], []>} : vector<64x32xbf16>, vector<32x156xbf16>, vector<64x156xf32> -> vector<64x156xf32>
    %30 = arith.addf %25, %29 : vector<64x156xf32>
    %31 = vector.extract_strided_slice %21 {offsets = [0, 1], sizes = [32, 156], strides = [1, 1]} : vector<32x768xbf16> to vector<32x156xbf16>
    %c2_28 = arith.constant 2 : index
    %c0_29 = arith.constant 0 : index
    %c0_30 = arith.constant 0 : index
    %32 = vector.load %arg4[%c2_28, %c0_29, %c0_30] : memref<9x64x32xbf16, #tpu.memory_space<vmem>>, vector<1x64x32xbf16>
    %33 = vector.shape_cast %32 : vector<1x64x32xbf16> to vector<64x32xbf16>
    %cst_31 = arith.constant dense<0.000000e+00> : vector<64x156xf32>
    %34 = tpu.matmul %33, %31, %cst_31 {dimension_numbers = #tpu.dot_dimension_numbers<[1], [0], [0], [1], [0, 0, 1, 1], [], []>} : vector<64x32xbf16>, vector<32x156xbf16>, vector<64x156xf32> -> vector<64x156xf32>
    %35 = arith.addf %30, %34 : vector<64x156xf32>
    %36 = vector.extract_strided_slice %21 {offsets = [0, 338], sizes = [32, 156], strides = [1, 1]} : vector<32x768xbf16> to vector<32x156xbf16>
    %c3_32 = arith.constant 3 : index
    %c0_33 = arith.constant 0 : index
    %c0_34 = arith.constant 0 : index
    %37 = vector.load %arg4[%c3_32, %c0_33, %c0_34] : memref<9x64x32xbf16, #tpu.memory_space<vmem>>, vector<1x64x32xbf16>
    %38 = vector.shape_cast %37 : vector<1x64x32xbf16> to vector<64x32xbf16>
    %cst_35 = arith.constant dense<0.000000e+00> : vector<64x156xf32>
    %39 = tpu.matmul %38, %36, %cst_35 {dimension_numbers = #tpu.dot_dimension_numbers<[1], [0], [0], [1], [0, 0, 1, 1], [], []>} : vector<64x32xbf16>, vector<32x156xbf16>, vector<64x156xf32> -> vector<64x156xf32>
    %40 = arith.addf %35, %39 : vector<64x156xf32>
    %41 = vector.extract_strided_slice %21 {offsets = [0, 507], sizes = [32, 156], strides = [1, 1]} : vector<32x768xbf16> to vector<32x156xbf16>
    %c4 = arith.constant 4 : index
    %c0_36 = arith.constant 0 : index
    %c0_37 = arith.constant 0 : index
    %42 = vector.load %arg4[%c4, %c0_36, %c0_37] : memref<9x64x32xbf16, #tpu.memory_space<vmem>>, vector<1x64x32xbf16>
    %43 = vector.shape_cast %42 : vector<1x64x32xbf16> to vector<64x32xbf16>
    %cst_38 = arith.constant dense<0.000000e+00> : vector<64x156xf32>
    %44 = tpu.matmul %43, %41, %cst_38 {dimension_numbers = #tpu.dot_dimension_numbers<[1], [0], [0], [1], [0, 0, 1, 1], [], []>} : vector<64x32xbf16>, vector<32x156xbf16>, vector<64x156xf32> -> vector<64x156xf32>
    %45 = arith.addf %40, %44 : vector<64x156xf32>
    %46 = vector.extract_strided_slice %21 {offsets = [0, 339], sizes = [32, 156], strides = [1, 1]} : vector<32x768xbf16> to vector<32x156xbf16>
    %c5 = arith.constant 5 : index
    %c0_39 = arith.constant 0 : index
    %c0_40 = arith.constant 0 : index
    %47 = vector.load %arg4[%c5, %c0_39, %c0_40] : memref<9x64x32xbf16, #tpu.memory_space<vmem>>, vector<1x64x32xbf16>
    %48 = vector.shape_cast %47 : vector<1x64x32xbf16> to vector<64x32xbf16>
    %cst_41 = arith.constant dense<0.000000e+00> : vector<64x156xf32>
    %49 = tpu.matmul %48, %46, %cst_41 {dimension_numbers = #tpu.dot_dimension_numbers<[1], [0], [0], [1], [0, 0, 1, 1], [], []>} : vector<64x32xbf16>, vector<32x156xbf16>, vector<64x156xf32> -> vector<64x156xf32>
    %50 = arith.addf %45, %49 : vector<64x156xf32>
    %51 = vector.extract_strided_slice %21 {offsets = [0, 13], sizes = [32, 156], strides = [1, 1]} : vector<32x768xbf16> to vector<32x156xbf16>
    %c6 = arith.constant 6 : index
    %c0_42 = arith.constant 0 : index
    %c0_43 = arith.constant 0 : index
    %52 = vector.load %arg4[%c6, %c0_42, %c0_43] : memref<9x64x32xbf16, #tpu.memory_space<vmem>>, vector<1x64x32xbf16>
    %53 = vector.shape_cast %52 : vector<1x64x32xbf16> to vector<64x32xbf16>
    %cst_44 = arith.constant dense<0.000000e+00> : vector<64x156xf32>
    %54 = tpu.matmul %53, %51, %cst_44 {dimension_numbers = #tpu.dot_dimension_numbers<[1], [0], [0], [1], [0, 0, 1, 1], [], []>} : vector<64x32xbf16>, vector<32x156xbf16>, vector<64x156xf32> -> vector<64x156xf32>
    %55 = arith.addf %50, %54 : vector<64x156xf32>
    %56 = vector.extract_strided_slice %21 {offsets = [0, 182], sizes = [32, 156], strides = [1, 1]} : vector<32x768xbf16> to vector<32x156xbf16>
    %c7 = arith.constant 7 : index
    %c0_45 = arith.constant 0 : index
    %c0_46 = arith.constant 0 : index
    %57 = vector.load %arg4[%c7, %c0_45, %c0_46] : memref<9x64x32xbf16, #tpu.memory_space<vmem>>, vector<1x64x32xbf16>
    %58 = vector.shape_cast %57 : vector<1x64x32xbf16> to vector<64x32xbf16>
    %cst_47 = arith.constant dense<0.000000e+00> : vector<64x156xf32>
    %59 = tpu.matmul %58, %56, %cst_47 {dimension_numbers = #tpu.dot_dimension_numbers<[1], [0], [0], [1], [0, 0, 1, 1], [], []>} : vector<64x32xbf16>, vector<32x156xbf16>, vector<64x156xf32> -> vector<64x156xf32>
    %60 = arith.addf %55, %59 : vector<64x156xf32>
    %61 = vector.extract_strided_slice %21 {offsets = [0, 14], sizes = [32, 156], strides = [1, 1]} : vector<32x768xbf16> to vector<32x156xbf16>
    %c8 = arith.constant 8 : index
    %c0_48 = arith.constant 0 : index
    %c0_49 = arith.constant 0 : index
    %62 = vector.load %arg4[%c8, %c0_48, %c0_49] : memref<9x64x32xbf16, #tpu.memory_space<vmem>>, vector<1x64x32xbf16>
    %63 = vector.shape_cast %62 : vector<1x64x32xbf16> to vector<64x32xbf16>
    %cst_50 = arith.constant dense<0.000000e+00> : vector<64x156xf32>
    %64 = tpu.matmul %63, %61, %cst_50 {dimension_numbers = #tpu.dot_dimension_numbers<[1], [0], [0], [1], [0, 0, 1, 1], [], []>} : vector<64x32xbf16>, vector<32x156xbf16>, vector<64x156xf32> -> vector<64x156xf32>
    %65 = arith.addf %60, %64 : vector<64x156xf32>
    %66 = vector.extract_strided_slice %21 {offsets = [0, 169], sizes = [32, 156], strides = [1, 1]} : vector<32x768xbf16> to vector<32x156xbf16>
    %c0_51 = arith.constant 0 : index
    %c0_52 = arith.constant 0 : index
    %c0_53 = arith.constant 0 : index
    %67 = vector.load %arg4[%c0_51, %c0_52, %c0_53] : memref<9x64x32xbf16, #tpu.memory_space<vmem>>, vector<1x64x32xbf16>
    %68 = vector.shape_cast %67 : vector<1x64x32xbf16> to vector<64x32xbf16>
    %cst_54 = arith.constant dense<0.000000e+00> : vector<64x156xf32>
    %69 = tpu.matmul %68, %66, %cst_54 {dimension_numbers = #tpu.dot_dimension_numbers<[1], [0], [0], [1], [0, 0, 1, 1], [], []>} : vector<64x32xbf16>, vector<32x156xbf16>, vector<64x156xf32> -> vector<64x156xf32>
    %70 = vector.extract_strided_slice %21 {offsets = [0, 1], sizes = [32, 156], strides = [1, 1]} : vector<32x768xbf16> to vector<32x156xbf16>
    %c1_55 = arith.constant 1 : index
    %c0_56 = arith.constant 0 : index
    %c0_57 = arith.constant 0 : index
    %71 = vector.load %arg4[%c1_55, %c0_56, %c0_57] : memref<9x64x32xbf16, #tpu.memory_space<vmem>>, vector<1x64x32xbf16>
    %72 = vector.shape_cast %71 : vector<1x64x32xbf16> to vector<64x32xbf16>
    %cst_58 = arith.constant dense<0.000000e+00> : vector<64x156xf32>
    %73 = tpu.matmul %72, %70, %cst_58 {dimension_numbers = #tpu.dot_dimension_numbers<[1], [0], [0], [1], [0, 0, 1, 1], [], []>} : vector<64x32xbf16>, vector<32x156xbf16>, vector<64x156xf32> -> vector<64x156xf32>
    %74 = arith.addf %69, %73 : vector<64x156xf32>
    %75 = vector.extract_strided_slice %21 {offsets = [0, 170], sizes = [32, 156], strides = [1, 1]} : vector<32x768xbf16> to vector<32x156xbf16>
    %c2_59 = arith.constant 2 : index
    %c0_60 = arith.constant 0 : index
    %c0_61 = arith.constant 0 : index
    %76 = vector.load %arg4[%c2_59, %c0_60, %c0_61] : memref<9x64x32xbf16, #tpu.memory_space<vmem>>, vector<1x64x32xbf16>
    %77 = vector.shape_cast %76 : vector<1x64x32xbf16> to vector<64x32xbf16>
    %cst_62 = arith.constant dense<0.000000e+00> : vector<64x156xf32>
    %78 = tpu.matmul %77, %75, %cst_62 {dimension_numbers = #tpu.dot_dimension_numbers<[1], [0], [0], [1], [0, 0, 1, 1], [], []>} : vector<64x32xbf16>, vector<32x156xbf16>, vector<64x156xf32> -> vector<64x156xf32>
    %79 = arith.addf %74, %78 : vector<64x156xf32>
    %80 = vector.extract_strided_slice %21 {offsets = [0, 507], sizes = [32, 156], strides = [1, 1]} : vector<32x768xbf16> to vector<32x156xbf16>
    %c3_63 = arith.constant 3 : index
    %c0_64 = arith.constant 0 : index
    %c0_65 = arith.constant 0 : index
    %81 = vector.load %arg4[%c3_63, %c0_64, %c0_65] : memref<9x64x32xbf16, #tpu.memory_space<vmem>>, vector<1x64x32xbf16>
    %82 = vector.shape_cast %81 : vector<1x64x32xbf16> to vector<64x32xbf16>
    %cst_66 = arith.constant dense<0.000000e+00> : vector<64x156xf32>
    %83 = tpu.matmul %82, %80, %cst_66 {dimension_numbers = #tpu.dot_dimension_numbers<[1], [0], [0], [1], [0, 0, 1, 1], [], []>} : vector<64x32xbf16>, vector<32x156xbf16>, vector<64x156xf32> -> vector<64x156xf32>
    %84 = arith.addf %79, %83 : vector<64x156xf32>
    %85 = vector.extract_strided_slice %21 {offsets = [0, 339], sizes = [32, 156], strides = [1, 1]} : vector<32x768xbf16> to vector<32x156xbf16>
    %c4_67 = arith.constant 4 : index
    %c0_68 = arith.constant 0 : index
    %c0_69 = arith.constant 0 : index
    %86 = vector.load %arg4[%c4_67, %c0_68, %c0_69] : memref<9x64x32xbf16, #tpu.memory_space<vmem>>, vector<1x64x32xbf16>
    %87 = vector.shape_cast %86 : vector<1x64x32xbf16> to vector<64x32xbf16>
    %cst_70 = arith.constant dense<0.000000e+00> : vector<64x156xf32>
    %88 = tpu.matmul %87, %85, %cst_70 {dimension_numbers = #tpu.dot_dimension_numbers<[1], [0], [0], [1], [0, 0, 1, 1], [], []>} : vector<64x32xbf16>, vector<32x156xbf16>, vector<64x156xf32> -> vector<64x156xf32>
    %89 = arith.addf %84, %88 : vector<64x156xf32>
    %90 = vector.extract_strided_slice %21 {offsets = [0, 508], sizes = [32, 156], strides = [1, 1]} : vector<32x768xbf16> to vector<32x156xbf16>
    %c5_71 = arith.constant 5 : index
    %c0_72 = arith.constant 0 : index
    %c0_73 = arith.constant 0 : index
    %91 = vector.load %arg4[%c5_71, %c0_72, %c0_73] : memref<9x64x32xbf16, #tpu.memory_space<vmem>>, vector<1x64x32xbf16>
    %92 = vector.shape_cast %91 : vector<1x64x32xbf16> to vector<64x32xbf16>
    %cst_74 = arith.constant dense<0.000000e+00> : vector<64x156xf32>
    %93 = tpu.matmul %92, %90, %cst_74 {dimension_numbers = #tpu.dot_dimension_numbers<[1], [0], [0], [1], [0, 0, 1, 1], [], []>} : vector<64x32xbf16>, vector<32x156xbf16>, vector<64x156xf32> -> vector<64x156xf32>
    %94 = arith.addf %89, %93 : vector<64x156xf32>
    %95 = vector.extract_strided_slice %21 {offsets = [0, 182], sizes = [32, 156], strides = [1, 1]} : vector<32x768xbf16> to vector<32x156xbf16>
    %c6_75 = arith.constant 6 : index
    %c0_76 = arith.constant 0 : index
    %c0_77 = arith.constant 0 : index
    %96 = vector.load %arg4[%c6_75, %c0_76, %c0_77] : memref<9x64x32xbf16, #tpu.memory_space<vmem>>, vector<1x64x32xbf16>
    %97 = vector.shape_cast %96 : vector<1x64x32xbf16> to vector<64x32xbf16>
    %cst_78 = arith.constant dense<0.000000e+00> : vector<64x156xf32>
    %98 = tpu.matmul %97, %95, %cst_78 {dimension_numbers = #tpu.dot_dimension_numbers<[1], [0], [0], [1], [0, 0, 1, 1], [], []>} : vector<64x32xbf16>, vector<32x156xbf16>, vector<64x156xf32> -> vector<64x156xf32>
    %99 = arith.addf %94, %98 : vector<64x156xf32>
    %100 = vector.extract_strided_slice %21 {offsets = [0, 14], sizes = [32, 156], strides = [1, 1]} : vector<32x768xbf16> to vector<32x156xbf16>
    %c7_79 = arith.constant 7 : index
    %c0_80 = arith.constant 0 : index
    %c0_81 = arith.constant 0 : index
    %101 = vector.load %arg4[%c7_79, %c0_80, %c0_81] : memref<9x64x32xbf16, #tpu.memory_space<vmem>>, vector<1x64x32xbf16>
    %102 = vector.shape_cast %101 : vector<1x64x32xbf16> to vector<64x32xbf16>
    %cst_82 = arith.constant dense<0.000000e+00> : vector<64x156xf32>
    %103 = tpu.matmul %102, %100, %cst_82 {dimension_numbers = #tpu.dot_dimension_numbers<[1], [0], [0], [1], [0, 0, 1, 1], [], []>} : vector<64x32xbf16>, vector<32x156xbf16>, vector<64x156xf32> -> vector<64x156xf32>
    %104 = arith.addf %99, %103 : vector<64x156xf32>
    %105 = vector.extract_strided_slice %21 {offsets = [0, 183], sizes = [32, 156], strides = [1, 1]} : vector<32x768xbf16> to vector<32x156xbf16>
    %c8_83 = arith.constant 8 : index
    %c0_84 = arith.constant 0 : index
    %c0_85 = arith.constant 0 : index
    %106 = vector.load %arg4[%c8_83, %c0_84, %c0_85] : memref<9x64x32xbf16, #tpu.memory_space<vmem>>, vector<1x64x32xbf16>
    %107 = vector.shape_cast %106 : vector<1x64x32xbf16> to vector<64x32xbf16>
    %cst_86 = arith.constant dense<0.000000e+00> : vector<64x156xf32>
    %108 = tpu.matmul %107, %105, %cst_86 {dimension_numbers = #tpu.dot_dimension_numbers<[1], [0], [0], [1], [0, 0, 1, 1], [], []>} : vector<64x32xbf16>, vector<32x156xbf16>, vector<64x156xf32> -> vector<64x156xf32>
    %109 = arith.addf %104, %108 : vector<64x156xf32>
    %110 = arith.maximumf %65, %109 : vector<64x156xf32>
    %111 = vector.extract_strided_slice %21 {offsets = [0, 338], sizes = [32, 156], strides = [1, 1]} : vector<32x768xbf16> to vector<32x156xbf16>
    %c0_87 = arith.constant 0 : index
    %c0_88 = arith.constant 0 : index
    %c0_89 = arith.constant 0 : index
    %112 = vector.load %arg4[%c0_87, %c0_88, %c0_89] : memref<9x64x32xbf16, #tpu.memory_space<vmem>>, vector<1x64x32xbf16>
    %113 = vector.shape_cast %112 : vector<1x64x32xbf16> to vector<64x32xbf16>
    %cst_90 = arith.constant dense<0.000000e+00> : vector<64x156xf32>
    %114 = tpu.matmul %113, %111, %cst_90 {dimension_numbers = #tpu.dot_dimension_numbers<[1], [0], [0], [1], [0, 0, 1, 1], [], []>} : vector<64x32xbf16>, vector<32x156xbf16>, vector<64x156xf32> -> vector<64x156xf32>
    %115 = vector.extract_strided_slice %21 {offsets = [0, 507], sizes = [32, 156], strides = [1, 1]} : vector<32x768xbf16> to vector<32x156xbf16>
    %c1_91 = arith.constant 1 : index
    %c0_92 = arith.constant 0 : index
    %c0_93 = arith.constant 0 : index
    %116 = vector.load %arg4[%c1_91, %c0_92, %c0_93] : memref<9x64x32xbf16, #tpu.memory_space<vmem>>, vector<1x64x32xbf16>
    %117 = vector.shape_cast %116 : vector<1x64x32xbf16> to vector<64x32xbf16>
    %cst_94 = arith.constant dense<0.000000e+00> : vector<64x156xf32>
    %118 = tpu.matmul %117, %115, %cst_94 {dimension_numbers = #tpu.dot_dimension_numbers<[1], [0], [0], [1], [0, 0, 1, 1], [], []>} : vector<64x32xbf16>, vector<32x156xbf16>, vector<64x156xf32> -> vector<64x156xf32>
    %119 = arith.addf %114, %118 : vector<64x156xf32>
    %120 = vector.extract_strided_slice %21 {offsets = [0, 339], sizes = [32, 156], strides = [1, 1]} : vector<32x768xbf16> to vector<32x156xbf16>
    %c2_95 = arith.constant 2 : index
    %c0_96 = arith.constant 0 : index
    %c0_97 = arith.constant 0 : index
    %121 = vector.load %arg4[%c2_95, %c0_96, %c0_97] : memref<9x64x32xbf16, #tpu.memory_space<vmem>>, vector<1x64x32xbf16>
    %122 = vector.shape_cast %121 : vector<1x64x32xbf16> to vector<64x32xbf16>
    %cst_98 = arith.constant dense<0.000000e+00> : vector<64x156xf32>
    %123 = tpu.matmul %122, %120, %cst_98 {dimension_numbers = #tpu.dot_dimension_numbers<[1], [0], [0], [1], [0, 0, 1, 1], [], []>} : vector<64x32xbf16>, vector<32x156xbf16>, vector<64x156xf32> -> vector<64x156xf32>
    %124 = arith.addf %119, %123 : vector<64x156xf32>
    %125 = vector.extract_strided_slice %21 {offsets = [0, 13], sizes = [32, 156], strides = [1, 1]} : vector<32x768xbf16> to vector<32x156xbf16>
    %c3_99 = arith.constant 3 : index
    %c0_100 = arith.constant 0 : index
    %c0_101 = arith.constant 0 : index
    %126 = vector.load %arg4[%c3_99, %c0_100, %c0_101] : memref<9x64x32xbf16, #tpu.memory_space<vmem>>, vector<1x64x32xbf16>
    %127 = vector.shape_cast %126 : vector<1x64x32xbf16> to vector<64x32xbf16>
    %cst_102 = arith.constant dense<0.000000e+00> : vector<64x156xf32>
    %128 = tpu.matmul %127, %125, %cst_102 {dimension_numbers = #tpu.dot_dimension_numbers<[1], [0], [0], [1], [0, 0, 1, 1], [], []>} : vector<64x32xbf16>, vector<32x156xbf16>, vector<64x156xf32> -> vector<64x156xf32>
    %129 = arith.addf %124, %128 : vector<64x156xf32>
    %130 = vector.extract_strided_slice %21 {offsets = [0, 182], sizes = [32, 156], strides = [1, 1]} : vector<32x768xbf16> to vector<32x156xbf16>
    %c4_103 = arith.constant 4 : index
    %c0_104 = arith.constant 0 : index
    %c0_105 = arith.constant 0 : index
    %131 = vector.load %arg4[%c4_103, %c0_104, %c0_105] : memref<9x64x32xbf16, #tpu.memory_space<vmem>>, vector<1x64x32xbf16>
    %132 = vector.shape_cast %131 : vector<1x64x32xbf16> to vector<64x32xbf16>
    %cst_106 = arith.constant dense<0.000000e+00> : vector<64x156xf32>
    %133 = tpu.matmul %132, %130, %cst_106 {dimension_numbers = #tpu.dot_dimension_numbers<[1], [0], [0], [1], [0, 0, 1, 1], [], []>} : vector<64x32xbf16>, vector<32x156xbf16>, vector<64x156xf32> -> vector<64x156xf32>
    %134 = arith.addf %129, %133 : vector<64x156xf32>
    %135 = vector.extract_strided_slice %21 {offsets = [0, 14], sizes = [32, 156], strides = [1, 1]} : vector<32x768xbf16> to vector<32x156xbf16>
    %c5_107 = arith.constant 5 : index
    %c0_108 = arith.constant 0 : index
    %c0_109 = arith.constant 0 : index
    %136 = vector.load %arg4[%c5_107, %c0_108, %c0_109] : memref<9x64x32xbf16, #tpu.memory_space<vmem>>, vector<1x64x32xbf16>
    %137 = vector.shape_cast %136 : vector<1x64x32xbf16> to vector<64x32xbf16>
    %cst_110 = arith.constant dense<0.000000e+00> : vector<64x156xf32>
    %138 = tpu.matmul %137, %135, %cst_110 {dimension_numbers = #tpu.dot_dimension_numbers<[1], [0], [0], [1], [0, 0, 1, 1], [], []>} : vector<64x32xbf16>, vector<32x156xbf16>, vector<64x156xf32> -> vector<64x156xf32>
    %139 = arith.addf %134, %138 : vector<64x156xf32>
    %140 = vector.extract_strided_slice %21 {offsets = [0, 351], sizes = [32, 156], strides = [1, 1]} : vector<32x768xbf16> to vector<32x156xbf16>
    %c6_111 = arith.constant 6 : index
    %c0_112 = arith.constant 0 : index
    %c0_113 = arith.constant 0 : index
    %141 = vector.load %arg4[%c6_111, %c0_112, %c0_113] : memref<9x64x32xbf16, #tpu.memory_space<vmem>>, vector<1x64x32xbf16>
    %142 = vector.shape_cast %141 : vector<1x64x32xbf16> to vector<64x32xbf16>
    %cst_114 = arith.constant dense<0.000000e+00> : vector<64x156xf32>
    %143 = tpu.matmul %142, %140, %cst_114 {dimension_numbers = #tpu.dot_dimension_numbers<[1], [0], [0], [1], [0, 0, 1, 1], [], []>} : vector<64x32xbf16>, vector<32x156xbf16>, vector<64x156xf32> -> vector<64x156xf32>
    %144 = arith.addf %139, %143 : vector<64x156xf32>
    %145 = vector.extract_strided_slice %21 {offsets = [0, 520], sizes = [32, 156], strides = [1, 1]} : vector<32x768xbf16> to vector<32x156xbf16>
    %c7_115 = arith.constant 7 : index
    %c0_116 = arith.constant 0 : index
    %c0_117 = arith.constant 0 : index
    %146 = vector.load %arg4[%c7_115, %c0_116, %c0_117] : memref<9x64x32xbf16, #tpu.memory_space<vmem>>, vector<1x64x32xbf16>
    %147 = vector.shape_cast %146 : vector<1x64x32xbf16> to vector<64x32xbf16>
    %cst_118 = arith.constant dense<0.000000e+00> : vector<64x156xf32>
    %148 = tpu.matmul %147, %145, %cst_118 {dimension_numbers = #tpu.dot_dimension_numbers<[1], [0], [0], [1], [0, 0, 1, 1], [], []>} : vector<64x32xbf16>, vector<32x156xbf16>, vector<64x156xf32> -> vector<64x156xf32>
    %149 = arith.addf %144, %148 : vector<64x156xf32>
    %150 = vector.extract_strided_slice %21 {offsets = [0, 352], sizes = [32, 156], strides = [1, 1]} : vector<32x768xbf16> to vector<32x156xbf16>
    %c8_119 = arith.constant 8 : index
    %c0_120 = arith.constant 0 : index
    %c0_121 = arith.constant 0 : index
    %151 = vector.load %arg4[%c8_119, %c0_120, %c0_121] : memref<9x64x32xbf16, #tpu.memory_space<vmem>>, vector<1x64x32xbf16>
    %152 = vector.shape_cast %151 : vector<1x64x32xbf16> to vector<64x32xbf16>
    %cst_122 = arith.constant dense<0.000000e+00> : vector<64x156xf32>
    %153 = tpu.matmul %152, %150, %cst_122 {dimension_numbers = #tpu.dot_dimension_numbers<[1], [0], [0], [1], [0, 0, 1, 1], [], []>} : vector<64x32xbf16>, vector<32x156xbf16>, vector<64x156xf32> -> vector<64x156xf32>
    %154 = arith.addf %149, %153 : vector<64x156xf32>
    %155 = arith.maximumf %110, %154 : vector<64x156xf32>
    %156 = vector.extract_strided_slice %21 {offsets = [0, 507], sizes = [32, 156], strides = [1, 1]} : vector<32x768xbf16> to vector<32x156xbf16>
    %c0_123 = arith.constant 0 : index
    %c0_124 = arith.constant 0 : index
    %c0_125 = arith.constant 0 : index
    %157 = vector.load %arg4[%c0_123, %c0_124, %c0_125] : memref<9x64x32xbf16, #tpu.memory_space<vmem>>, vector<1x64x32xbf16>
    %158 = vector.shape_cast %157 : vector<1x64x32xbf16> to vector<64x32xbf16>
    %cst_126 = arith.constant dense<0.000000e+00> : vector<64x156xf32>
    %159 = tpu.matmul %158, %156, %cst_126 {dimension_numbers = #tpu.dot_dimension_numbers<[1], [0], [0], [1], [0, 0, 1, 1], [], []>} : vector<64x32xbf16>, vector<32x156xbf16>, vector<64x156xf32> -> vector<64x156xf32>
    %160 = vector.extract_strided_slice %21 {offsets = [0, 339], sizes = [32, 156], strides = [1, 1]} : vector<32x768xbf16> to vector<32x156xbf16>
    %c1_127 = arith.constant 1 : index
    %c0_128 = arith.constant 0 : index
    %c0_129 = arith.constant 0 : index
    %161 = vector.load %arg4[%c1_127, %c0_128, %c0_129] : memref<9x64x32xbf16, #tpu.memory_space<vmem>>, vector<1x64x32xbf16>
    %162 = vector.shape_cast %161 : vector<1x64x32xbf16> to vector<64x32xbf16>
    %cst_130 = arith.constant dense<0.000000e+00> : vector<64x156xf32>
    %163 = tpu.matmul %162, %160, %cst_130 {dimension_numbers = #tpu.dot_dimension_numbers<[1], [0], [0], [1], [0, 0, 1, 1], [], []>} : vector<64x32xbf16>, vector<32x156xbf16>, vector<64x156xf32> -> vector<64x156xf32>
    %164 = arith.addf %159, %163 : vector<64x156xf32>
    %165 = vector.extract_strided_slice %21 {offsets = [0, 508], sizes = [32, 156], strides = [1, 1]} : vector<32x768xbf16> to vector<32x156xbf16>
    %c2_131 = arith.constant 2 : index
    %c0_132 = arith.constant 0 : index
    %c0_133 = arith.constant 0 : index
    %166 = vector.load %arg4[%c2_131, %c0_132, %c0_133] : memref<9x64x32xbf16, #tpu.memory_space<vmem>>, vector<1x64x32xbf16>
    %167 = vector.shape_cast %166 : vector<1x64x32xbf16> to vector<64x32xbf16>
    %cst_134 = arith.constant dense<0.000000e+00> : vector<64x156xf32>
    %168 = tpu.matmul %167, %165, %cst_134 {dimension_numbers = #tpu.dot_dimension_numbers<[1], [0], [0], [1], [0, 0, 1, 1], [], []>} : vector<64x32xbf16>, vector<32x156xbf16>, vector<64x156xf32> -> vector<64x156xf32>
    %169 = arith.addf %164, %168 : vector<64x156xf32>
    %170 = vector.extract_strided_slice %21 {offsets = [0, 182], sizes = [32, 156], strides = [1, 1]} : vector<32x768xbf16> to vector<32x156xbf16>
    %c3_135 = arith.constant 3 : index
    %c0_136 = arith.constant 0 : index
    %c0_137 = arith.constant 0 : index
    %171 = vector.load %arg4[%c3_135, %c0_136, %c0_137] : memref<9x64x32xbf16, #tpu.memory_space<vmem>>, vector<1x64x32xbf16>
    %172 = vector.shape_cast %171 : vector<1x64x32xbf16> to vector<64x32xbf16>
    %cst_138 = arith.constant dense<0.000000e+00> : vector<64x156xf32>
    %173 = tpu.matmul %172, %170, %cst_138 {dimension_numbers = #tpu.dot_dimension_numbers<[1], [0], [0], [1], [0, 0, 1, 1], [], []>} : vector<64x32xbf16>, vector<32x156xbf16>, vector<64x156xf32> -> vector<64x156xf32>
    %174 = arith.addf %169, %173 : vector<64x156xf32>
    %175 = vector.extract_strided_slice %21 {offsets = [0, 14], sizes = [32, 156], strides = [1, 1]} : vector<32x768xbf16> to vector<32x156xbf16>
    %c4_139 = arith.constant 4 : index
    %c0_140 = arith.constant 0 : index
    %c0_141 = arith.constant 0 : index
    %176 = vector.load %arg4[%c4_139, %c0_140, %c0_141] : memref<9x64x32xbf16, #tpu.memory_space<vmem>>, vector<1x64x32xbf16>
    %177 = vector.shape_cast %176 : vector<1x64x32xbf16> to vector<64x32xbf16>
    %cst_142 = arith.constant dense<0.000000e+00> : vector<64x156xf32>
    %178 = tpu.matmul %177, %175, %cst_142 {dimension_numbers = #tpu.dot_dimension_numbers<[1], [0], [0], [1], [0, 0, 1, 1], [], []>} : vector<64x32xbf16>, vector<32x156xbf16>, vector<64x156xf32> -> vector<64x156xf32>
    %179 = arith.addf %174, %178 : vector<64x156xf32>
    %180 = vector.extract_strided_slice %21 {offsets = [0, 183], sizes = [32, 156], strides = [1, 1]} : vector<32x768xbf16> to vector<32x156xbf16>
    %c5_143 = arith.constant 5 : index
    %c0_144 = arith.constant 0 : index
    %c0_145 = arith.constant 0 : index
    %181 = vector.load %arg4[%c5_143, %c0_144, %c0_145] : memref<9x64x32xbf16, #tpu.memory_space<vmem>>, vector<1x64x32xbf16>
    %182 = vector.shape_cast %181 : vector<1x64x32xbf16> to vector<64x32xbf16>
    %cst_146 = arith.constant dense<0.000000e+00> : vector<64x156xf32>
    %183 = tpu.matmul %182, %180, %cst_146 {dimension_numbers = #tpu.dot_dimension_numbers<[1], [0], [0], [1], [0, 0, 1, 1], [], []>} : vector<64x32xbf16>, vector<32x156xbf16>, vector<64x156xf32> -> vector<64x156xf32>
    %184 = arith.addf %179, %183 : vector<64x156xf32>
    %185 = vector.extract_strided_slice %21 {offsets = [0, 520], sizes = [32, 156], strides = [1, 1]} : vector<32x768xbf16> to vector<32x156xbf16>
    %c6_147 = arith.constant 6 : index
    %c0_148 = arith.constant 0 : index
    %c0_149 = arith.constant 0 : index
    %186 = vector.load %arg4[%c6_147, %c0_148, %c0_149] : memref<9x64x32xbf16, #tpu.memory_space<vmem>>, vector<1x64x32xbf16>
    %187 = vector.shape_cast %186 : vector<1x64x32xbf16> to vector<64x32xbf16>
    %cst_150 = arith.constant dense<0.000000e+00> : vector<64x156xf32>
    %188 = tpu.matmul %187, %185, %cst_150 {dimension_numbers = #tpu.dot_dimension_numbers<[1], [0], [0], [1], [0, 0, 1, 1], [], []>} : vector<64x32xbf16>, vector<32x156xbf16>, vector<64x156xf32> -> vector<64x156xf32>
    %189 = arith.addf %184, %188 : vector<64x156xf32>
    %190 = vector.extract_strided_slice %21 {offsets = [0, 352], sizes = [32, 156], strides = [1, 1]} : vector<32x768xbf16> to vector<32x156xbf16>
    %c7_151 = arith.constant 7 : index
    %c0_152 = arith.constant 0 : index
    %c0_153 = arith.constant 0 : index
    %191 = vector.load %arg4[%c7_151, %c0_152, %c0_153] : memref<9x64x32xbf16, #tpu.memory_space<vmem>>, vector<1x64x32xbf16>
    %192 = vector.shape_cast %191 : vector<1x64x32xbf16> to vector<64x32xbf16>
    %cst_154 = arith.constant dense<0.000000e+00> : vector<64x156xf32>
    %193 = tpu.matmul %192, %190, %cst_154 {dimension_numbers = #tpu.dot_dimension_numbers<[1], [0], [0], [1], [0, 0, 1, 1], [], []>} : vector<64x32xbf16>, vector<32x156xbf16>, vector<64x156xf32> -> vector<64x156xf32>
    %194 = arith.addf %189, %193 : vector<64x156xf32>
    %195 = vector.extract_strided_slice %21 {offsets = [0, 521], sizes = [32, 156], strides = [1, 1]} : vector<32x768xbf16> to vector<32x156xbf16>
    %c8_155 = arith.constant 8 : index
    %c0_156 = arith.constant 0 : index
    %c0_157 = arith.constant 0 : index
    %196 = vector.load %arg4[%c8_155, %c0_156, %c0_157] : memref<9x64x32xbf16, #tpu.memory_space<vmem>>, vector<1x64x32xbf16>
    %197 = vector.shape_cast %196 : vector<1x64x32xbf16> to vector<64x32xbf16>
    %cst_158 = arith.constant dense<0.000000e+00> : vector<64x156xf32>
    %198 = tpu.matmul %197, %195, %cst_158 {dimension_numbers = #tpu.dot_dimension_numbers<[1], [0], [0], [1], [0, 0, 1, 1], [], []>} : vector<64x32xbf16>, vector<32x156xbf16>, vector<64x156xf32> -> vector<64x156xf32>
    %199 = arith.addf %194, %198 : vector<64x156xf32>
    %200 = arith.maximumf %155, %199 : vector<64x156xf32>
    %c0_159 = arith.constant 0 : index
    %c0_160 = arith.constant 0 : index
    %201 = vector.load %arg5[%c0_159, %c0_160] : memref<64x1xf32, #tpu.memory_space<vmem>>, vector<64x1xf32>
    %202 = vector.broadcast %201 : vector<64x1xf32> to vector<64x156xf32>
    %203 = arith.addf %200, %202 : vector<64x156xf32>
    %cst_161 = arith.constant 0.000000e+00 : f32
    %204 = vector.broadcast %cst_161 : f32 to vector<64x156xf32>
    %205 = arith.maximumf %203, %204 : vector<64x156xf32>
    %206 = arith.truncf %205 : vector<64x156xf32> to vector<64x156xbf16>
    %c0_162 = arith.constant 0 : index
    %c0_163 = arith.constant 0 : index
    %c0_164 = arith.constant 0 : index
    %207 = vector.load %arg6[%c0_162, %c0_163, %c0_164] : memref<1x64x156xbf16, #tpu.memory_space<vmem>>, vector<1x64x156xbf16>
    %208 = vector.shape_cast %207 : vector<1x64x156xbf16> to vector<64x156xbf16>
    %209 = vector.shape_cast %206 : vector<64x156xbf16> to vector<1x64x156xbf16>
    tpu.vector_store %arg6[%c0_162, %c0_163, %c0_164], %209 {strides = array<i32>} : memref<1x64x156xbf16, #tpu.memory_space<vmem>>, vector<1x64x156xbf16>,
    return
  }
  func.func @transform_0(%arg0: i32) -> (i32, i32, i32, i32) {
    %c0_i32 = arith.constant 0 : i32
    %c0_i32_0 = arith.constant 0 : i32
    %c0_i32_1 = arith.constant 0 : i32
    %c0_i32_2 = arith.constant 0 : i32
    return %arg0, %c0_i32, %c0_i32_0, %c0_i32_1 : i32, i32, i32, i32
  }
  func.func @transform_1(%arg0: i32) -> (i32, i32) {
    %c0_i32 = arith.constant 0 : i32
    %c0_i32_0 = arith.constant 0 : i32
    %c0_i32_1 = arith.constant 0 : i32
    return %c0_i32, %c0_i32_0 : i32, i32
  }
  func.func @transform_2(%arg0: i32) -> (i32, i32) {
    %c0_i32 = arith.constant 0 : i32
    %c0_i32_0 = arith.constant 0 : i32
    %c0_i32_1 = arith.constant 0 : i32
    return %c0_i32, %c0_i32_0 : i32, i32
  }
  func.func @transform_3(%arg0: i32) -> (i32, i32, i32) {
    %c0_i32 = arith.constant 0 : i32
    %c0_i32_0 = arith.constant 0 : i32
    %c0_i32_1 = arith.constant 0 : i32
    %c0_i32_2 = arith.constant 0 : i32
    return %c0_i32, %c0_i32_0, %c0_i32_1 : i32, i32, i32
  }
  func.func @transform_4(%arg0: i32) -> (i32, i32) {
    %c0_i32 = arith.constant 0 : i32
    %c0_i32_0 = arith.constant 0 : i32
    %c0_i32_1 = arith.constant 0 : i32
    return %c0_i32, %c0_i32_0 : i32, i32
  }
  func.func @transform_5(%arg0: i32) -> (i32, i32, i32) {
    %c0_i32 = arith.constant 0 : i32
    %c0_i32_0 = arith.constant 0 : i32
    %c0_i32_1 = arith.constant 0 : i32
    return %arg0, %c0_i32, %c0_i32_0 : i32, i32, i32
  }
}

module attributes {stable_mosaic.version = 11 : i64} {
  func.func @mlp_kernel(%arg0: i32, %arg1: i32, %arg2: memref<2x4992xbf16, #tpu.memory_space<vmem>>, %arg3: memref<4992x128xbf16, #tpu.memory_space<vmem>>, %arg4: memref<1x128xf32, #tpu.memory_space<vmem>>, %arg5: memref<128x10xf32, #tpu.memory_space<vmem>>, %arg6: memref<1x10xf32, #tpu.memory_space<vmem>>, %arg7: memref<2x10xf32, #tpu.memory_space<vmem>>, %arg8: memref<2x128xf32, #tpu.memory_space<vmem>>) attributes {dimension_semantics = [#tpu.dimension_semantics<parallel>, #tpu.dimension_semantics<arbitrary>], iteration_bounds = array<i64: 1, 2>, scalar_prefetch = 0 : i64, scratch_operands = 1 : i64, tpu.core_type = #tpu.core_type<tc>, window_params = [{transform_indices = @transform_0, window_bounds = array<i64: 2, 4992>}, {transform_indices = @transform_1, window_bounds = array<i64: 4992, 128>}, {pipeline_mode = #tpu.pipeline_mode<synchronous>, transform_indices = @transform_2, window_bounds = array<i64: 1, 128>}, {pipeline_mode = #tpu.pipeline_mode<synchronous>, transform_indices = @transform_3, window_bounds = array<i64: 128, 10>}, {pipeline_mode = #tpu.pipeline_mode<synchronous>, transform_indices = @transform_4, window_bounds = array<i64: 1, 10>}, {transform_indices = @transform_5, window_bounds = array<i64: 2, 10>}]} {
    %c0_i32 = arith.constant 0 : i32
    %0 = arith.cmpi eq, %arg1, %c0_i32 : i32
    %1 = arith.extui %0 : i1 to i32
    %c0_i32_0 = arith.constant 0 : i32
    %2 = arith.cmpi ne, %1, %c0_i32_0 : i32
    scf.if %2 {
      %cst_9 = arith.constant 0.000000e+00 : f32
      %12 = vector.broadcast %cst_9 : f32 to vector<2x128xf32>
      %c0_10 = arith.constant 0 : index
      %c0_11 = arith.constant 0 : index
      %13 = vector.load %arg8[%c0_10, %c0_11] : memref<2x128xf32, #tpu.memory_space<vmem>>, vector<2x128xf32>
      tpu.vector_store %arg8[%c0_10, %c0_11], %12 {strides = array<i32>} : memref<2x128xf32, #tpu.memory_space<vmem>>, vector<2x128xf32>,
    } else {
    }
    %c0 = arith.constant 0 : index
    %c0_1 = arith.constant 0 : index
    %3 = vector.load %arg8[%c0, %c0_1] : memref<2x128xf32, #tpu.memory_space<vmem>>, vector<2x128xf32>
    %c0_2 = arith.constant 0 : index
    %c0_3 = arith.constant 0 : index
    %4 = vector.load %arg2[%c0_2, %c0_3] : memref<2x4992xbf16, #tpu.memory_space<vmem>>, vector<2x4992xbf16>
    %c0_4 = arith.constant 0 : index
    %c0_5 = arith.constant 0 : index
    %5 = vector.load %arg3[%c0_4, %c0_5] : memref<4992x128xbf16, #tpu.memory_space<vmem>>, vector<4992x128xbf16>
    %cst = arith.constant dense<0.000000e+00> : vector<2x128xf32>
    %6 = tpu.matmul %4, %5, %cst {dimension_numbers = #tpu.dot_dimension_numbers<[1], [0], [0], [1], [0, 0, 1, 1], [], []>} : vector<2x4992xbf16>, vector<4992x128xbf16>, vector<2x128xf32> -> vector<2x128xf32>
    %7 = arith.addf %3, %6 : vector<2x128xf32>
    %c0_6 = arith.constant 0 : index
    %c0_7 = arith.constant 0 : index
    %8 = vector.load %arg8[%c0_6, %c0_7] : memref<2x128xf32, #tpu.memory_space<vmem>>, vector<2x128xf32>
    tpu.vector_store %arg8[%c0_6, %c0_7], %7 {strides = array<i32>} : memref<2x128xf32, #tpu.memory_space<vmem>>, vector<2x128xf32>,
    %c1_i32 = arith.constant 1 : i32
    %9 = arith.cmpi eq, %arg1, %c1_i32 : i32
    %10 = arith.extui %9 : i1 to i32
    %c0_i32_8 = arith.constant 0 : i32
    %11 = arith.cmpi ne, %10, %c0_i32_8 : i32
    scf.if %11 {
      %c0_9 = arith.constant 0 : index
      %c0_10 = arith.constant 0 : index
      %12 = vector.load %arg8[%c0_9, %c0_10] : memref<2x128xf32, #tpu.memory_space<vmem>>, vector<2x128xf32>
      %c0_11 = arith.constant 0 : index
      %c0_12 = arith.constant 0 : index
      %13 = vector.load %arg4[%c0_11, %c0_12] : memref<1x128xf32, #tpu.memory_space<vmem>>, vector<1x128xf32>
      %14 = vector.broadcast %13 : vector<1x128xf32> to vector<2x128xf32>
      %15 = arith.addf %12, %14 : vector<2x128xf32>
      %cst_13 = arith.constant 0.000000e+00 : f32
      %16 = vector.broadcast %cst_13 : f32 to vector<2x128xf32>
      %17 = arith.maximumf %15, %16 : vector<2x128xf32>
      %c0_14 = arith.constant 0 : index
      %c0_15 = arith.constant 0 : index
      %18 = vector.load %arg5[%c0_14, %c0_15] : memref<128x10xf32, #tpu.memory_space<vmem>>, vector<128x10xf32>
      %cst_16 = arith.constant dense<0.000000e+00> : vector<2x10xf32>
      %19 = tpu.matmul %17, %18, %cst_16 {dimension_numbers = #tpu.dot_dimension_numbers<[1], [0], [0], [1], [0, 0, 1, 1], [], []>} : vector<2x128xf32>, vector<128x10xf32>, vector<2x10xf32> -> vector<2x10xf32>
      %c0_17 = arith.constant 0 : index
      %c0_18 = arith.constant 0 : index
      %20 = vector.load %arg6[%c0_17, %c0_18] : memref<1x10xf32, #tpu.memory_space<vmem>>, vector<1x10xf32>
      %21 = vector.broadcast %20 : vector<1x10xf32> to vector<2x10xf32>
      %22 = arith.addf %19, %21 : vector<2x10xf32>
      %c0_19 = arith.constant 0 : index
      %c0_20 = arith.constant 0 : index
      %23 = vector.load %arg7[%c0_19, %c0_20] : memref<2x10xf32, #tpu.memory_space<vmem>>, vector<2x10xf32>
      tpu.vector_store %arg7[%c0_19, %c0_20], %22 {strides = array<i32>} : memref<2x10xf32, #tpu.memory_space<vmem>>, vector<2x10xf32>,
    } else {
    }
    return
  }
  func.func @transform_0(%arg0: i32, %arg1: i32) -> (i32, i32) {
    %c0_i32 = arith.constant 0 : i32
    return %arg0, %arg1 : i32, i32
  }
  func.func @transform_1(%arg0: i32, %arg1: i32) -> (i32, i32) {
    %c0_i32 = arith.constant 0 : i32
    %c0_i32_0 = arith.constant 0 : i32
    return %arg1, %c0_i32 : i32, i32
  }
  func.func @transform_2(%arg0: i32, %arg1: i32) -> (i32, i32) {
    %c0_i32 = arith.constant 0 : i32
    %c0_i32_0 = arith.constant 0 : i32
    %c0_i32_1 = arith.constant 0 : i32
    return %c0_i32, %c0_i32_0 : i32, i32
  }
  func.func @transform_3(%arg0: i32, %arg1: i32) -> (i32, i32) {
    %c0_i32 = arith.constant 0 : i32
    %c0_i32_0 = arith.constant 0 : i32
    %c0_i32_1 = arith.constant 0 : i32
    return %c0_i32, %c0_i32_0 : i32, i32
  }
  func.func @transform_4(%arg0: i32, %arg1: i32) -> (i32, i32) {
    %c0_i32 = arith.constant 0 : i32
    %c0_i32_0 = arith.constant 0 : i32
    %c0_i32_1 = arith.constant 0 : i32
    return %c0_i32, %c0_i32_0 : i32, i32
  }
  func.func @transform_5(%arg0: i32, %arg1: i32) -> (i32, i32) {
    %c0_i32 = arith.constant 0 : i32
    %c0_i32_0 = arith.constant 0 : i32
    return %arg0, %c0_i32 : i32, i32
  }
}

</mosaic_0001>

<llo_original>
// kernel: digit_encoder_forward.2
$region0: #{digit_encoder_forward.2}
  #allocation0 [shape = 'u32[]', space=smem, size = 0x4, offset = 0x4, fixed_abs, tag = 'smem constant byte address 0x4 - core index']
  #allocation1 [shape = 'u32[72,128]{1,0:T(1,128)}', space=vmem, size = 0x9000, scoped, tag = 'internal scratch']
  %s0 = inlined_call_operand.vmem [shape: bf16[2,4,9,768], index: 0, kind: input, shape index: {}]
  %s1 = inlined_call_operand.vmem [shape: bf16[32,9], index: 1, kind: input, shape index: {}]
  %s2 = inlined_call_operand.vmem [shape: f32[32,1], index: 2, kind: input, shape index: {}]
  %s3 = inlined_call_operand.vmem [shape: bf16[9,64,32], index: 3, kind: input, shape index: {}]
  %s4 = inlined_call_operand.vmem [shape: f32[64,1], index: 4, kind: input, shape index: {}]
  %s5 = inlined_call_operand.vmem [shape: bf16[2,64,156], index: 5, kind: output, shape index: {}]
  %s6 = sld [smem:[#allocation0]]
  $region53: #{digit_encoder_forward.2} parent=0
    _
  %s8 = ssub.s32 1, %s6
  %s9 = scalar_select 0, %s8, %s6
  loop: start=0, step=1, limit=4
  $region2: #{digit_encoder_forward.2} parent=0 // loop_pre_header
    _
  $region3: #{digit_encoder_forward.2} parent=0 // loop_header
    %s11 = sphi 0, %s15
    %p12 = scmp.ge.s32.totalorder %s11, 4
    %s21 = sphi 0, %s23
    %s24 = sphi 0, %s21
    %s25 = sphi 0, %s24
    %s41 = sphi 0, %s25
    %s45 = sphi 0, %s45
    %s47 = sphi 0, %s45
    %s48 = sphi 0, %s47
    %s62 = sphi 0, %s48
    %s66 = sphi 0, %s66
    %s68 = sphi 0, %s66
    %s69 = sphi 0, %s68
    %s83 = sphi 0, %s69
    %s87 = sphi 0, %s87
    %s89 = sphi 0, %s87
    %s90 = sphi 0, %s89
    %s104 = sphi 0, %s90
    %s108 = sphi 0, %s108
    %s110 = sphi 0, %s108
    %s111 = sphi 0, %s110
    %s125 = sphi 0, %s111
    %s131 = sphi 0, %s133
    %s134 = sphi 0, %s131
    %s135 = sphi 0, %s134
    %s151 = sphi 0, %s135
  $region4: #{digit_encoder_forward.2} parent=0 // loop_header_branch
    %14 = sbr.rel (%p12) target = $region8
  $region5: #{digit_encoder_forward.2} parent=0 // loop_body
    %s16 = ssub.s32 %s11, 1
    %s17 = ssub.s32 %s11, 2
    %s18 = sadd.s32 %s11, 1
    %s19 = ssub.s32 %s11, %s18
    %p20 = scmp.eq.s32.totalorder %s19, 0
    %s22 = sadd.s32 %s21, 1
    %s23 = scalar_select %p20, %s21, %s22
    %p26 = pneg %p20
    %p27 = scmp.eq.s32.totalorder %s11, 1
    %p28 = por %p26, %p27
    %p29 = scmp.ne.s32.totalorder %s21, %s24
    %p30 = scmp.eq.s32.totalorder %s11, 0
    %p31 = por %p29, %p30
    %p32 = scmp.ne.s32.totalorder %s21, %s24
    %p33 = scmp.eq.s32.totalorder %s16, 1
    %p34 = por %p32, %p33
    %p35 = scmp.ne.s32.totalorder %s24, %s25
    %p36 = scmp.eq.s32.totalorder %s16, 0
    %p37 = por %p35, %p36
    %p38 = scmp.ne.s32.totalorder %s24, %s25
    %p39 = scmp.eq.s32.totalorder %s17, 1
    %p40 = por %p38, %p39
    %p42 = scmp.ne.s32.totalorder %s25, %s41
    %p43 = scmp.eq.s32.totalorder %s17, 0
    %p44 = por %p42, %p43
    %s46 = sadd.s32 %s45, 1
    %p49 = scmp.eq.s32.totalorder %s11, 1
    %p50 = scmp.ne.s32.totalorder %s45, %s47
    %p51 = scmp.eq.s32.totalorder %s11, 0
    %p52 = por %p50, %p51
    %p53 = scmp.ne.s32.totalorder %s45, %s47
    %p54 = scmp.eq.s32.totalorder %s16, 1
    %p55 = por %p53, %p54
    %p56 = scmp.ne.s32.totalorder %s47, %s48
    %p57 = scmp.eq.s32.totalorder %s16, 0
    %p58 = por %p56, %p57
    %p59 = scmp.ne.s32.totalorder %s47, %s48
    %p60 = scmp.eq.s32.totalorder %s17, 1
    %p61 = por %p59, %p60
    %p63 = scmp.ne.s32.totalorder %s48, %s62
    %p64 = scmp.eq.s32.totalorder %s17, 0
    %p65 = por %p63, %p64
    %s67 = sadd.s32 %s66, 1
    %p70 = scmp.eq.s32.totalorder %s11, 1
    %p71 = scmp.ne.s32.totalorder %s66, %s68
    %p72 = scmp.eq.s32.totalorder %s11, 0
    %p73 = por %p71, %p72
    %p74 = scmp.ne.s32.totalorder %s66, %s68
    %p75 = scmp.eq.s32.totalorder %s16, 1
    %p76 = por %p74, %p75
    %p77 = scmp.ne.s32.totalorder %s68, %s69
    %p78 = scmp.eq.s32.totalorder %s16, 0
    %p79 = por %p77, %p78
    %p80 = scmp.ne.s32.totalorder %s68, %s69
    %p81 = scmp.eq.s32.totalorder %s17, 1
    %p82 = por %p80, %p81
    %p84 = scmp.ne.s32.totalorder %s69, %s83
    %p85 = scmp.eq.s32.totalorder %s17, 0
    %p86 = por %p84, %p85
    %s88 = sadd.s32 %s87, 1
    %p91 = scmp.eq.s32.totalorder %s11, 1
    %p92 = scmp.ne.s32.totalorder %s87, %s89
    %p93 = scmp.eq.s32.totalorder %s11, 0
    %p94 = por %p92, %p93
    %p95 = scmp.ne.s32.totalorder %s87, %s89
    %p96 = scmp.eq.s32.totalorder %s16, 1
    %p97 = por %p95, %p96
    %p98 = scmp.ne.s32.totalorder %s89, %s90
    %p99 = scmp.eq.s32.totalorder %s16, 0
    %p100 = por %p98, %p99
    %p101 = scmp.ne.s32.totalorder %s89, %s90
    %p102 = scmp.eq.s32.totalorder %s17, 1
    %p103 = por %p101, %p102
    %p105 = scmp.ne.s32.totalorder %s90, %s104
    %p106 = scmp.eq.s32.totalorder %s17, 0
    %p107 = por %p105, %p106
    %s109 = sadd.s32 %s108, 1
    %p112 = scmp.eq.s32.totalorder %s11, 1
    %p113 = scmp.ne.s32.totalorder %s108, %s110
    %p114 = scmp.eq.s32.totalorder %s11, 0
    %p115 = por %p113, %p114
    %p116 = scmp.ne.s32.totalorder %s108, %s110
    %p117 = scmp.eq.s32.totalorder %s16, 1
    %p118 = por %p116, %p117
    %p119 = scmp.ne.s32.totalorder %s110, %s111
    %p120 = scmp.eq.s32.totalorder %s16, 0
    %p121 = por %p119, %p120
    %p122 = scmp.ne.s32.totalorder %s110, %s111
    %p123 = scmp.eq.s32.totalorder %s17, 1
    %p124 = por %p122, %p123
    %p126 = scmp.ne.s32.totalorder %s111, %s125
    %p127 = scmp.eq.s32.totalorder %s17, 0
    %p128 = por %p126, %p127
    %s129 = ssub.s32 %s11, %s18
    %p130 = scmp.eq.s32.totalorder %s129, 0
    %s132 = sadd.s32 %s131, 1
    %s133 = scalar_select %p130, %s131, %s132
    %p136 = pneg %p130
    %p137 = scmp.eq.s32.totalorder %s11, 1
    %p138 = por %p136, %p137
    %p139 = scmp.ne.s32.totalorder %s131, %s134
    %p140 = scmp.eq.s32.totalorder %s11, 0
    %p141 = por %p139, %p140
    %p142 = scmp.ne.s32.totalorder %s131, %s134
    %p143 = scmp.eq.s32.totalorder %s16, 1
    %p144 = por %p142, %p143
    %p145 = scmp.ne.s32.totalorder %s134, %s135
    %p146 = scmp.eq.s32.totalorder %s16, 0
    %p147 = por %p145, %p146
    %p148 = scmp.ne.s32.totalorder %s134, %s135
    %p149 = scmp.eq.s32.totalorder %s17, 1
    %p150 = por %p148, %p149
    %p152 = scmp.ne.s32.totalorder %s135, %s151
    %p153 = scmp.eq.s32.totalorder %s17, 0
    %p154 = por %p152, %p153
    %p155 = scmp.le.s32.totalorder 1, %s11
    %p156 = scmp.lt.s32.totalorder %s11, 3
    %p157 = pnand %p155, %p156
    %p158 = pneg %p157
    // Predicated region
    $region9: #{digit_encoder_forward.2} parent=5 // pred_check
      _
    $region10: #{digit_encoder_forward.2} parent=5 // pred_check_branch
      %160 = sbr.rel (%p157) target = $region12
    $region11: #{digit_encoder_forward.2} parent=5 // pred_region
      %s161 = ssub.s32 %s11, 1
      // Predicated region
      $region13: #{digit_encoder_forward.2} parent=11 // pred_check
        %p162 = pneg %p58
      $region14: #{digit_encoder_forward.2} parent=11 // pred_check_branch
        %164 = sbr.rel (%p162) target = $region16
      $region15: #{digit_encoder_forward.2} parent=11 // pred_region
        _
      $region16: #{digit_encoder_forward.2} parent=11 // pred_fallthru
        _
      // Predicated region
      $region17: #{digit_encoder_forward.2} parent=11 // pred_check
        %p165 = pneg %p79
      $region18: #{digit_encoder_forward.2} parent=11 // pred_check_branch
        %167 = sbr.rel (%p165) target = $region20
      $region19: #{digit_encoder_forward.2} parent=11 // pred_region
        _
      $region20: #{digit_encoder_forward.2} parent=11 // pred_fallthru
        _
      // Predicated region
      $region21: #{digit_encoder_forward.2} parent=11 // pred_check
        %p168 = pneg %p100
      $region22: #{digit_encoder_forward.2} parent=11 // pred_check_branch
        %170 = sbr.rel (%p168) target = $region24
      $region23: #{digit_encoder_forward.2} parent=11 // pred_region
        _
      $region24: #{digit_encoder_forward.2} parent=11 // pred_fallthru
        _
      // Predicated region
      $region25: #{digit_encoder_forward.2} parent=11 // pred_check
        %p171 = pneg %p121
      $region26: #{digit_encoder_forward.2} parent=11 // pred_check_branch
        %173 = sbr.rel (%p171) target = $region28
      $region27: #{digit_encoder_forward.2} parent=11 // pred_region
        _
      $region28: #{digit_encoder_forward.2} parent=11 // pred_fallthru
        _
    $region12: #{digit_encoder_forward.2} parent=5 // pred_fallthru
      _
    %p174 = scmp.lt.s32.totalorder %s11, 2
    // Predicated region
    $region29: #{digit_encoder_forward.2} parent=5 // pred_check
      %p175 = pneg %p174
    $region30: #{digit_encoder_forward.2} parent=5 // pred_check_branch
      %177 = sbr.rel (%p175) target = $region32
    $region31: #{digit_encoder_forward.2} parent=5 // pred_region
      // Predicated region
      $region33: #{digit_encoder_forward.2} parent=31 // pred_check
        %p178 = pneg %p31
      $region34: #{digit_encoder_forward.2} parent=31 // pred_check_branch
        %180 = sbr.rel (%p178) target = $region36
      $region35: #{digit_encoder_forward.2} parent=31 // pred_region
        %p181 = scmp.lt.s32.totalorder %s11, 1
        %s182 = scalar_select %p181, %s11, 1
        %s183 = smul.addr %s182, 48
        %s184 = smul.addr %s183, 4
        %s185 = scalar_lea.vmem %s0, %s184
      $region36: #{digit_encoder_forward.2} parent=31 // pred_fallthru
        _
    $region32: #{digit_encoder_forward.2} parent=5 // pred_fallthru
      _
    %p186 = scmp.le.s32.totalorder 1, %s11
    %p187 = scmp.lt.s32.totalorder %s11, 3
    %p188 = pnand %p186, %p187
    %p189 = pneg %p188
    // Predicated region
    $region37: #{digit_encoder_forward.2} parent=5 // pred_check
      _
    $region38: #{digit_encoder_forward.2} parent=5 // pred_check_branch
      %191 = sbr.rel (%p188) target = $region40
    $region39: #{digit_encoder_forward.2} parent=5 // pred_region
      %s192 = ssub.s32 %s11, 1
      %p193 = scmp.lt.s32.totalorder %s16, 1
      %s194 = scalar_select %p193, %s16, 1
      %s195 = smul.addr %s194, 48
      %s196 = smul.addr %s195, 4
      %s197 = scalar_lea.vmem %s0, %s196
      %p198 = pneg %p37
      %p199 = pneg %p34
      %p200 = pneg %p58
      %p201 = pneg %p55
      %p202 = pneg %p79
      %p203 = pneg %p76
      %p204 = pneg %p100
      %p205 = pneg %p97
      %p206 = pneg %p121
      %p207 = pneg %p118
      %p208 = pneg %p147
      %p209 = pneg %p144
      %p210 = scmp.lt.s32.totalorder %s16, 1
      %s211 = scalar_select %p210, %s16, 1
      %s212 = smul.addr %s211, 16
      %s213 = smul.addr %s212, 4
      %s214 = scalar_lea.vmem %s5, %s213
      %p215 = scmp.lt.s32.totalorder %s16, 1
      %s216 = scalar_select %p215, %s16, 1
      %s217 = smul.addr %s216, 48
      %s218 = smul.addr %s217, 4
      %s219 = scalar_lea.vmem %s0, %s218
      %p220 = scmp.lt.s32.totalorder %s16, 1
      %s221 = scalar_select %p220, %s16, 1
      %s222 = smul.addr %s221, 16
      %s223 = smul.addr %s222, 4
      %s224 = scalar_lea.vmem %s5, %s223
      %v226 = vld [vmem:[%s1] sm:$0xf]
      %v227 = vld [vmem:[%s1 + $0x4] sm:$0xf]
      %v228 = vld [vmem:[%s1 + $0x8] sm:$0xf]
      %v229 = vld [vmem:[%s1 + $0xc] sm:$0xf]
      %v230 = vld [vmem:[%s219] sm:$0xff]
      %v231 = vld [vmem:[%s219 + $0x8] sm:$0xff]
      %v232 = vld [vmem:[%s219 + $0x10] sm:$0xff]
      %v233 = vld [vmem:[%s219 + $0x18] sm:$0x11]
      %v234 = vld [vmem:[%s219 + $0x20] sm:$0x11]
      %v235 = vld [vmem:[%s219 + $0x28] sm:$0x11]
      %v240 = vunpack.c.l.b16 %v226
      %v241 = vunpack.c.l.b16 %v227
      %v242 = vunpack.c.l.b16 %v228
      %v243 = vunpack.c.l.b16 %v229
      %v244 = vpack.c.b16 %v241, %v240
      %v245 = vpack.c.b16 %v243, %v242
      %v252 = vunpack.c.l.b16 %v230
      %v253 = vunpack.c.h.b16 %v230
      %v254 = vunpack.c.l.b16 %v231
      %v255 = vunpack.c.h.b16 %v231
      %v256 = vunpack.c.l.b16 %v232
      %v257 = vunpack.c.h.b16 %v232
      %v258 = vunpack.c.l.b16 %v233
      %v259 = vunpack.c.h.b16 %v233
      %v260 = vunpack.c.l.b16 %v234
      %v261 = vunpack.c.h.b16 %v234
      %v262 = vunpack.c.l.b16 %v235
      %v263 = vunpack.c.h.b16 %v235
      %v264 = vpack.c.b16 %v258, %v252
      %v265 = vpack.c.b16 %v259, %v253
      %v266 = vpack.c.b16 %v260, %v254
      %v267 = vpack.c.b16 %v261, %v255
      %v268 = vpack.c.b16 %v262, %v256
      %v269 = vpack.c.b16 %v263, %v257
      %vm270 = vcmask 72704
      %v272 = vsel %vm270, %v244, 0
      %v275 = vsel %vm270, %v245, 0
      %vm277 = vcmask 1043456
      %vm278 = vcmask 1044480
      %v279 = vsel %vm277, 4294967295, 65535
      %v280 = vsel %vm278, %v279, 0
      %v282 = vand.u32 %v264, %v280
      %v285 = vand.u32 %v265, %v280
      %v288 = vand.u32 %v266, %v280
      %v291 = vand.u32 %v267, %v280
      %v294 = vand.u32 %v268, %v280
      %v297 = vand.u32 %v269, %v280
      %299 = vmatpush.bf16.msra.mxu0 0
      %300 = vmatpush.bf16.msra.mxu0 0
      %301 = vmatpush.bf16.msra.mxu0 0
      %302 = vmatpush.bf16.msra.mxu0 0
      %303 = vmatpush.bf16.msra.mxu0 0
      %304 = vmatpush.bf16.msra.mxu0 0
      %305 = vmatpush.bf16.msra.mxu0 0
      %306 = vmatpush.bf16.msra.mxu0 %v282
      %307 = vmatmul.bf16.gmra.mxu0 %v272
      %v308 = vpop.f32.mrf.mxu0
      %v309 = vadd.f32 0.0, %v308
      %v310 = vpop.f32.mrf.mxu0
      %v311 = vadd.f32 0.0, %v310
      %312 = vmatmul.bf16.gmra.mxu0 %v275
      %v313 = vpop.f32.mrf.mxu0
      %v314 = vadd.f32 0.0, %v313
      %v315 = vpop.f32.mrf.mxu0
      %v316 = vadd.f32 0.0, %v315
      %317 = vdwg.mxu0
      %318 = vmatpush.bf16.msra.mxu0 0
      %319 = vmatpush.bf16.msra.mxu0 0
      %320 = vmatpush.bf16.msra.mxu0 0
      %321 = vmatpush.bf16.msra.mxu0 0
      %322 = vmatpush.bf16.msra.mxu0 0
      %323 = vmatpush.bf16.msra.mxu0 0
      %324 = vmatpush.bf16.msra.mxu0 0
      %325 = vmatpush.bf16.msra.mxu0 %v285
      %326 = vmatmul.bf16.gmra.mxu0 %v272
      %v327 = vpop.f32.mrf.mxu0
      %v328 = vadd.f32 0.0, %v327
      %v329 = vpop.f32.mrf.mxu0
      %v330 = vadd.f32 0.0, %v329
      %331 = vmatmul.bf16.gmra.mxu0 %v275
      %v332 = vpop.f32.mrf.mxu0
      %v333 = vadd.f32 0.0, %v332
      %v334 = vpop.f32.mrf.mxu0
      %v335 = vadd.f32 0.0, %v334
      %336 = vdwg.mxu0
      %337 = vmatpush.bf16.msra.mxu0 0
      %338 = vmatpush.bf16.msra.mxu0 0
      %339 = vmatpush.bf16.msra.mxu0 0
      %340 = vmatpush.bf16.msra.mxu0 0
      %341 = vmatpush.bf16.msra.mxu0 0
      %342 = vmatpush.bf16.msra.mxu0 0
      %343 = vmatpush.bf16.msra.mxu0 0
      %344 = vmatpush.bf16.msra.mxu0 %v288
      %345 = vmatmul.bf16.gmra.mxu0 %v272
      %v346 = vpop.f32.mrf.mxu0
      %v347 = vadd.f32 0.0, %v346
      %v348 = vpop.f32.mrf.mxu0
      %v349 = vadd.f32 0.0, %v348
      %350 = vmatmul.bf16.gmra.mxu0 %v275
      %v351 = vpop.f32.mrf.mxu0
      %v352 = vadd.f32 0.0, %v351
      %v353 = vpop.f32.mrf.mxu0
      %v354 = vadd.f32 0.0, %v353
      %355 = vdwg.mxu0
      %356 = vmatpush.bf16.msra.mxu0 0
      %357 = vmatpush.bf16.msra.mxu0 0
      %358 = vmatpush.bf16.msra.mxu0 0
      %359 = vmatpush.bf16.msra.mxu0 0
      %360 = vmatpush.bf16.msra.mxu0 0
      %361 = vmatpush.bf16.msra.mxu0 0
      %362 = vmatpush.bf16.msra.mxu0 0
      %363 = vmatpush.bf16.msra.mxu0 %v291
      %364 = vmatmul.bf16.gmra.mxu0 %v272
      %v365 = vpop.f32.mrf.mxu0
      %v366 = vadd.f32 0.0, %v365
      %v367 = vpop.f32.mrf.mxu0
      %v368 = vadd.f32 0.0, %v367
      %369 = vmatmul.bf16.gmra.mxu0 %v275
      %v370 = vpop.f32.mrf.mxu0
      %v371 = vadd.f32 0.0, %v370
      %v372 = vpop.f32.mrf.mxu0
      %v373 = vadd.f32 0.0, %v372
      %374 = vdwg.mxu0
      %375 = vmatpush.bf16.msra.mxu0 0
      %376 = vmatpush.bf16.msra.mxu0 0
      %377 = vmatpush.bf16.msra.mxu0 0
      %378 = vmatpush.bf16.msra.mxu0 0
      %379 = vmatpush.bf16.msra.mxu0 0
      %380 = vmatpush.bf16.msra.mxu0 0
      %381 = vmatpush.bf16.msra.mxu0 0
      %382 = vmatpush.bf16.msra.mxu0 %v294
      %383 = vmatmul.bf16.gmra.mxu0 %v272
      %v384 = vpop.f32.mrf.mxu0
      %v385 = vadd.f32 0.0, %v384
      %v386 = vpop.f32.mrf.mxu0
      %v387 = vadd.f32 0.0, %v386
      %388 = vmatmul.bf16.gmra.mxu0 %v275
      %v389 = vpop.f32.mrf.mxu0
      %v390 = vadd.f32 0.0, %v389
      %v391 = vpop.f32.mrf.mxu0
      %v392 = vadd.f32 0.0, %v391
      %393 = vdwg.mxu0
      %394 = vmatpush.bf16.msra.mxu0 0
      %395 = vmatpush.bf16.msra.mxu0 0
      %396 = vmatpush.bf16.msra.mxu0 0
      %397 = vmatpush.bf16.msra.mxu0 0
      %398 = vmatpush.bf16.msra.mxu0 0
      %399 = vmatpush.bf16.msra.mxu0 0
      %400 = vmatpush.bf16.msra.mxu0 0
      %401 = vmatpush.bf16.msra.mxu0 %v297
      %402 = vmatmul.bf16.gmra.mxu0 %v272
      %v403 = vpop.f32.mrf.mxu0
      %v404 = vadd.f32 0.0, %v403
      %v405 = vpop.f32.mrf.mxu0
      %v406 = vadd.f32 0.0, %v405
      %407 = vmatmul.bf16.gmra.mxu0 %v275
      %v408 = vpop.f32.mrf.mxu0
      %v409 = vadd.f32 0.0, %v408
      %v410 = vpop.f32.mrf.mxu0
      %v411 = vadd.f32 0.0, %v410
      %412 = vdwg.mxu0
      %s413 = scalar_lea.vmem %s219, 48
      %v414 = vld [vmem:[%s413] sm:$0xff]
      %v415 = vld [vmem:[%s413 + $0x8] sm:$0xff]
      %v416 = vld [vmem:[%s413 + $0x10] sm:$0xff]
      %v417 = vld [vmem:[%s413 + $0x18] sm:$0x11]
      %v418 = vld [vmem:[%s413 + $0x20] sm:$0x11]
      %v419 = vld [vmem:[%s413 + $0x28] sm:$0x11]
      %v426 = vunpack.c.l.b16 %v414
      %v427 = vunpack.c.h.b16 %v414
      %v428 = vunpack.c.l.b16 %v415
      %v429 = vunpack.c.h.b16 %v415
      %v430 = vunpack.c.l.b16 %v416
      %v431 = vunpack.c.h.b16 %v416
      %v432 = vunpack.c.l.b16 %v417
      %v433 = vunpack.c.h.b16 %v417
      %v434 = vunpack.c.l.b16 %v418
      %v435 = vunpack.c.h.b16 %v418
      %v436 = vunpack.c.l.b16 %v419
      %v437 = vunpack.c.h.b16 %v419
      %v438 = vpack.c.b16 %v432, %v426
      %v439 = vpack.c.b16 %v433, %v427
      %v440 = vpack.c.b16 %v434, %v428
      %v441 = vpack.c.b16 %v435, %v429
      %v442 = vpack.c.b16 %v436, %v430
      %v443 = vpack.c.b16 %v437, %v431
      %v445 = vand.u32 %v438, %v280
      %v448 = vand.u32 %v439, %v280
      %v451 = vand.u32 %v440, %v280
      %v454 = vand.u32 %v441, %v280
      %v457 = vand.u32 %v442, %v280
      %v460 = vand.u32 %v443, %v280
      %462 = vmatpush.bf16.msra.mxu0 0
      %463 = vmatpush.bf16.msra.mxu0 0
      %464 = vmatpush.bf16.msra.mxu0 0
      %465 = vmatpush.bf16.msra.mxu0 0
      %466 = vmatpush.bf16.msra.mxu0 0
      %467 = vmatpush.bf16.msra.mxu0 0
      %468 = vmatpush.bf16.msra.mxu0 0
      %469 = vmatpush.bf16.msra.mxu0 %v445
      %470 = vmatmul.bf16.gmra.mxu0 %v272
      %v471 = vpop.f32.mrf.mxu0
      %v472 = vadd.f32 0.0, %v471
      %v473 = vpop.f32.mrf.mxu0
      %v474 = vadd.f32 0.0, %v473
      %475 = vmatmul.bf16.gmra.mxu0 %v275
      %v476 = vpop.f32.mrf.mxu0
      %v477 = vadd.f32 0.0, %v476
      %v478 = vpop.f32.mrf.mxu0
      %v479 = vadd.f32 0.0, %v478
      %480 = vdwg.mxu0
      %481 = vmatpush.bf16.msra.mxu0 0
      %482 = vmatpush.bf16.msra.mxu0 0
      %483 = vmatpush.bf16.msra.mxu0 0
      %484 = vmatpush.bf16.msra.mxu0 0
      %485 = vmatpush.bf16.msra.mxu0 0
      %486 = vmatpush.bf16.msra.mxu0 0
      %487 = vmatpush.bf16.msra.mxu0 0
      %488 = vmatpush.bf16.msra.mxu0 %v448
      %489 = vmatmul.bf16.gmra.mxu0 %v272
      %v490 = vpop.f32.mrf.mxu0
      %v491 = vadd.f32 0.0, %v490
      %v492 = vpop.f32.mrf.mxu0
      %v493 = vadd.f32 0.0, %v492
      %494 = vmatmul.bf16.gmra.mxu0 %v275
      %v495 = vpop.f32.mrf.mxu0
      %v496 = vadd.f32 0.0, %v495
      %v497 = vpop.f32.mrf.mxu0
      %v498 = vadd.f32 0.0, %v497
      %499 = vdwg.mxu0
      %500 = vmatpush.bf16.msra.mxu0 0
      %501 = vmatpush.bf16.msra.mxu0 0
      %502 = vmatpush.bf16.msra.mxu0 0
      %503 = vmatpush.bf16.msra.mxu0 0
      %504 = vmatpush.bf16.msra.mxu0 0
      %505 = vmatpush.bf16.msra.mxu0 0
      %506 = vmatpush.bf16.msra.mxu0 0
      %507 = vmatpush.bf16.msra.mxu0 %v451
      %508 = vmatmul.bf16.gmra.mxu0 %v272
      %v509 = vpop.f32.mrf.mxu0
      %v510 = vadd.f32 0.0, %v509
      %v511 = vpop.f32.mrf.mxu0
      %v512 = vadd.f32 0.0, %v511
      %513 = vmatmul.bf16.gmra.mxu0 %v275
      %v514 = vpop.f32.mrf.mxu0
      %v515 = vadd.f32 0.0, %v514
      %v516 = vpop.f32.mrf.mxu0
      %v517 = vadd.f32 0.0, %v516
      %518 = vdwg.mxu0
      %519 = vmatpush.bf16.msra.mxu0 0
      %520 = vmatpush.bf16.msra.mxu0 0
      %521 = vmatpush.bf16.msra.mxu0 0
      %522 = vmatpush.bf16.msra.mxu0 0
      %523 = vmatpush.bf16.msra.mxu0 0
      %524 = vmatpush.bf16.msra.mxu0 0
      %525 = vmatpush.bf16.msra.mxu0 0
      %526 = vmatpush.bf16.msra.mxu0 %v454
      %527 = vmatmul.bf16.gmra.mxu0 %v272
      %v528 = vpop.f32.mrf.mxu0
      %v529 = vadd.f32 0.0, %v528
      %v530 = vpop.f32.mrf.mxu0
      %v531 = vadd.f32 0.0, %v530
      %532 = vmatmul.bf16.gmra.mxu0 %v275
      %v533 = vpop.f32.mrf.mxu0
      %v534 = vadd.f32 0.0, %v533
      %v535 = vpop.f32.mrf.mxu0
      %v536 = vadd.f32 0.0, %v535
      %537 = vdwg.mxu0
      %538 = vmatpush.bf16.msra.mxu0 0
      %539 = vmatpush.bf16.msra.mxu0 0
      %540 = vmatpush.bf16.msra.mxu0 0
      %541 = vmatpush.bf16.msra.mxu0 0
      %542 = vmatpush.bf16.msra.mxu0 0
      %543 = vmatpush.bf16.msra.mxu0 0
      %544 = vmatpush.bf16.msra.mxu0 0
      %545 = vmatpush.bf16.msra.mxu0 %v457
      %546 = vmatmul.bf16.gmra.mxu0 %v272
      %v547 = vpop.f32.mrf.mxu0
      %v548 = vadd.f32 0.0, %v547
      %v549 = vpop.f32.mrf.mxu0
      %v550 = vadd.f32 0.0, %v549
      %551 = vmatmul.bf16.gmra.mxu0 %v275
      %v552 = vpop.f32.mrf.mxu0
      %v553 = vadd.f32 0.0, %v552
      %v554 = vpop.f32.mrf.mxu0
      %v555 = vadd.f32 0.0, %v554
      %556 = vdwg.mxu0
      %557 = vmatpush.bf16.msra.mxu0 0
      %558 = vmatpush.bf16.msra.mxu0 0
      %559 = vmatpush.bf16.msra.mxu0 0
      %560 = vmatpush.bf16.msra.mxu0 0
      %561 = vmatpush.bf16.msra.mxu0 0
      %562 = vmatpush.bf16.msra.mxu0 0
      %563 = vmatpush.bf16.msra.mxu0 0
      %564 = vmatpush.bf16.msra.mxu0 %v460
      %565 = vmatmul.bf16.gmra.mxu0 %v272
      %v566 = vpop.f32.mrf.mxu0
      %v567 = vadd.f32 0.0, %v566
      %v568 = vpop.f32.mrf.mxu0
      %v569 = vadd.f32 0.0, %v568
      %570 = vmatmul.bf16.gmra.mxu0 %v275
      %v571 = vpop.f32.mrf.mxu0
      %v572 = vadd.f32 0.0, %v571
      %v573 = vpop.f32.mrf.mxu0
      %v574 = vadd.f32 0.0, %v573
      %575 = vdwg.mxu0
      %v576 = vmax.f32 %v309, %v472
      %v577 = vmax.f32 %v328, %v491
      %v578 = vmax.f32 %v347, %v510
      %v579 = vmax.f32 %v366, %v529
      %v580 = vmax.f32 %v385, %v548
      %v581 = vmax.f32 %v404, %v567
      %v582 = vmax.f32 %v311, %v474
      %v583 = vmax.f32 %v330, %v493
      %v584 = vmax.f32 %v349, %v512
      %v585 = vmax.f32 %v368, %v531
      %v586 = vmax.f32 %v387, %v550
      %v587 = vmax.f32 %v406, %v569
      %v588 = vmax.f32 %v314, %v477
      %v589 = vmax.f32 %v333, %v496
      %v590 = vmax.f32 %v352, %v515
      %v591 = vmax.f32 %v371, %v534
      %v592 = vmax.f32 %v390, %v553
      %v593 = vmax.f32 %v409, %v572
      %v594 = vmax.f32 %v316, %v479
      %v595 = vmax.f32 %v335, %v498
      %v596 = vmax.f32 %v354, %v517
      %v597 = vmax.f32 %v373, %v536
      %v598 = vmax.f32 %v392, %v555
      %v599 = vmax.f32 %v411, %v574
      %s600 = scalar_lea.vmem %s219, 96
      %v601 = vld [vmem:[%s600] sm:$0xff]
      %v602 = vld [vmem:[%s600 + $0x8] sm:$0xff]
      %v603 = vld [vmem:[%s600 + $0x10] sm:$0xff]
      %v604 = vld [vmem:[%s600 + $0x18] sm:$0x11]
      %v605 = vld [vmem:[%s600 + $0x20] sm:$0x11]
      %v606 = vld [vmem:[%s600 + $0x28] sm:$0x11]
      %v613 = vunpack.c.l.b16 %v601
      %v614 = vunpack.c.h.b16 %v601
      %v615 = vunpack.c.l.b16 %v602
      %v616 = vunpack.c.h.b16 %v602
      %v617 = vunpack.c.l.b16 %v603
      %v618 = vunpack.c.h.b16 %v603
      %v619 = vunpack.c.l.b16 %v604
      %v620 = vunpack.c.h.b16 %v604
      %v621 = vunpack.c.l.b16 %v605
      %v622 = vunpack.c.h.b16 %v605
      %v623 = vunpack.c.l.b16 %v606
      %v624 = vunpack.c.h.b16 %v606
      %v625 = vpack.c.b16 %v619, %v613
      %v626 = vpack.c.b16 %v620, %v614
      %v627 = vpack.c.b16 %v621, %v615
      %v628 = vpack.c.b16 %v622, %v616
      %v629 = vpack.c.b16 %v623, %v617
      %v630 = vpack.c.b16 %v624, %v618
      %v632 = vand.u32 %v625, %v280
      %v635 = vand.u32 %v626, %v280
      %v638 = vand.u32 %v627, %v280
      %v641 = vand.u32 %v628, %v280
      %v644 = vand.u32 %v629, %v280
      %v647 = vand.u32 %v630, %v280
      %649 = vmatpush.bf16.msra.mxu0 0
      %650 = vmatpush.bf16.msra.mxu0 0
      %651 = vmatpush.bf16.msra.mxu0 0
      %652 = vmatpush.bf16.msra.mxu0 0
      %653 = vmatpush.bf16.msra.mxu0 0
      %654 = vmatpush.bf16.msra.mxu0 0
      %655 = vmatpush.bf16.msra.mxu0 0
      %656 = vmatpush.bf16.msra.mxu0 %v632
      %657 = vmatmul.bf16.gmra.mxu0 %v272
      %v658 = vpop.f32.mrf.mxu0
      %v659 = vadd.f32 0.0, %v658
      %v660 = vpop.f32.mrf.mxu0
      %v661 = vadd.f32 0.0, %v660
      %662 = vmatmul.bf16.gmra.mxu0 %v275
      %v663 = vpop.f32.mrf.mxu0
      %v664 = vadd.f32 0.0, %v663
      %v665 = vpop.f32.mrf.mxu0
      %v666 = vadd.f32 0.0, %v665
      %667 = vdwg.mxu0
      %668 = vmatpush.bf16.msra.mxu0 0
      %669 = vmatpush.bf16.msra.mxu0 0
      %670 = vmatpush.bf16.msra.mxu0 0
      %671 = vmatpush.bf16.msra.mxu0 0
      %672 = vmatpush.bf16.msra.mxu0 0
      %673 = vmatpush.bf16.msra.mxu0 0
      %674 = vmatpush.bf16.msra.mxu0 0
      %675 = vmatpush.bf16.msra.mxu0 %v635
      %676 = vmatmul.bf16.gmra.mxu0 %v272
      %v677 = vpop.f32.mrf.mxu0
      %v678 = vadd.f32 0.0, %v677
      %v679 = vpop.f32.mrf.mxu0
      %v680 = vadd.f32 0.0, %v679
      %681 = vmatmul.bf16.gmra.mxu0 %v275
      %v682 = vpop.f32.mrf.mxu0
      %v683 = vadd.f32 0.0, %v682
      %v684 = vpop.f32.mrf.mxu0
      %v685 = vadd.f32 0.0, %v684
      %686 = vdwg.mxu0
      %687 = vmatpush.bf16.msra.mxu0 0
      %688 = vmatpush.bf16.msra.mxu0 0
      %689 = vmatpush.bf16.msra.mxu0 0
      %690 = vmatpush.bf16.msra.mxu0 0
      %691 = vmatpush.bf16.msra.mxu0 0
      %692 = vmatpush.bf16.msra.mxu0 0
      %693 = vmatpush.bf16.msra.mxu0 0
      %694 = vmatpush.bf16.msra.mxu0 %v638
      %695 = vmatmul.bf16.gmra.mxu0 %v272
      %v696 = vpop.f32.mrf.mxu0
      %v697 = vadd.f32 0.0, %v696
      %v698 = vpop.f32.mrf.mxu0
      %v699 = vadd.f32 0.0, %v698
      %700 = vmatmul.bf16.gmra.mxu0 %v275
      %v701 = vpop.f32.mrf.mxu0
      %v702 = vadd.f32 0.0, %v701
      %v703 = vpop.f32.mrf.mxu0
      %v704 = vadd.f32 0.0, %v703
      %705 = vdwg.mxu0
      %706 = vmatpush.bf16.msra.mxu0 0
      %707 = vmatpush.bf16.msra.mxu0 0
      %708 = vmatpush.bf16.msra.mxu0 0
      %709 = vmatpush.bf16.msra.mxu0 0
      %710 = vmatpush.bf16.msra.mxu0 0
      %711 = vmatpush.bf16.msra.mxu0 0
      %712 = vmatpush.bf16.msra.mxu0 0
      %713 = vmatpush.bf16.msra.mxu0 %v641
      %714 = vmatmul.bf16.gmra.mxu0 %v272
      %v715 = vpop.f32.mrf.mxu0
      %v716 = vadd.f32 0.0, %v715
      %v717 = vpop.f32.mrf.mxu0
      %v718 = vadd.f32 0.0, %v717
      %719 = vmatmul.bf16.gmra.mxu0 %v275
      %v720 = vpop.f32.mrf.mxu0
      %v721 = vadd.f32 0.0, %v720
      %v722 = vpop.f32.mrf.mxu0
      %v723 = vadd.f32 0.0, %v722
      %724 = vdwg.mxu0
      %725 = vmatpush.bf16.msra.mxu0 0
      %726 = vmatpush.bf16.msra.mxu0 0
      %727 = vmatpush.bf16.msra.mxu0 0
      %728 = vmatpush.bf16.msra.mxu0 0
      %729 = vmatpush.bf16.msra.mxu0 0
      %730 = vmatpush.bf16.msra.mxu0 0
      %731 = vmatpush.bf16.msra.mxu0 0
      %732 = vmatpush.bf16.msra.mxu0 %v644
      %733 = vmatmul.bf16.gmra.mxu0 %v272
      %v734 = vpop.f32.mrf.mxu0
      %v735 = vadd.f32 0.0, %v734
      %v736 = vpop.f32.mrf.mxu0
      %v737 = vadd.f32 0.0, %v736
      %738 = vmatmul.bf16.gmra.mxu0 %v275
      %v739 = vpop.f32.mrf.mxu0
      %v740 = vadd.f32 0.0, %v739
      %v741 = vpop.f32.mrf.mxu0
      %v742 = vadd.f32 0.0, %v741
      %743 = vdwg.mxu0
      %744 = vmatpush.bf16.msra.mxu0 0
      %745 = vmatpush.bf16.msra.mxu0 0
      %746 = vmatpush.bf16.msra.mxu0 0
      %747 = vmatpush.bf16.msra.mxu0 0
      %748 = vmatpush.bf16.msra.mxu0 0
      %749 = vmatpush.bf16.msra.mxu0 0
      %750 = vmatpush.bf16.msra.mxu0 0
      %751 = vmatpush.bf16.msra.mxu0 %v647
      %752 = vmatmul.bf16.gmra.mxu0 %v272
      %v753 = vpop.f32.mrf.mxu0
      %v754 = vadd.f32 0.0, %v753
      %v755 = vpop.f32.mrf.mxu0
      %v756 = vadd.f32 0.0, %v755
      %757 = vmatmul.bf16.gmra.mxu0 %v275
      %v758 = vpop.f32.mrf.mxu0
      %v759 = vadd.f32 0.0, %v758
      %v760 = vpop.f32.mrf.mxu0
      %v761 = vadd.f32 0.0, %v760
      %762 = vdwg.mxu0
      %v763 = vmax.f32 %v576, %v659
      %v764 = vmax.f32 %v577, %v678
      %v765 = vmax.f32 %v578, %v697
      %v766 = vmax.f32 %v579, %v716
      %v767 = vmax.f32 %v580, %v735
      %v768 = vmax.f32 %v581, %v754
      %v769 = vmax.f32 %v582, %v661
      %v770 = vmax.f32 %v583, %v680
      %v771 = vmax.f32 %v584, %v699
      %v772 = vmax.f32 %v585, %v718
      %v773 = vmax.f32 %v586, %v737
      %v774 = vmax.f32 %v587, %v756
      %v775 = vmax.f32 %v588, %v664
      %v776 = vmax.f32 %v589, %v683
      %v777 = vmax.f32 %v590, %v702
      %v778 = vmax.f32 %v591, %v721
      %v779 = vmax.f32 %v592, %v740
      %v780 = vmax.f32 %v593, %v759
      %v781 = vmax.f32 %v594, %v666
      %v782 = vmax.f32 %v595, %v685
      %v783 = vmax.f32 %v596, %v704
      %v784 = vmax.f32 %v597, %v723
      %v785 = vmax.f32 %v598, %v742
      %v786 = vmax.f32 %v599, %v761
      %s787 = scalar_lea.vmem %s219, 144
      %v788 = vld [vmem:[%s787] sm:$0xff]
      %v789 = vld [vmem:[%s787 + $0x8] sm:$0xff]
      %v790 = vld [vmem:[%s787 + $0x10] sm:$0xff]
      %v791 = vld [vmem:[%s787 + $0x18] sm:$0x11]
      %v792 = vld [vmem:[%s787 + $0x20] sm:$0x11]
      %v793 = vld [vmem:[%s787 + $0x28] sm:$0x11]
      %v800 = vunpack.c.l.b16 %v788
      %v801 = vunpack.c.h.b16 %v788
      %v802 = vunpack.c.l.b16 %v789
      %v803 = vunpack.c.h.b16 %v789
      %v804 = vunpack.c.l.b16 %v790
      %v805 = vunpack.c.h.b16 %v790
      %v806 = vunpack.c.l.b16 %v791
      %v807 = vunpack.c.h.b16 %v791
      %v808 = vunpack.c.l.b16 %v792
      %v809 = vunpack.c.h.b16 %v792
      %v810 = vunpack.c.l.b16 %v793
      %v811 = vunpack.c.h.b16 %v793
      %v812 = vpack.c.b16 %v806, %v800
      %v813 = vpack.c.b16 %v807, %v801
      %v814 = vpack.c.b16 %v808, %v802
      %v815 = vpack.c.b16 %v809, %v803
      %v816 = vpack.c.b16 %v810, %v804
      %v817 = vpack.c.b16 %v811, %v805
      %v819 = vand.u32 %v812, %v280
      %v822 = vand.u32 %v813, %v280
      %v825 = vand.u32 %v814, %v280
      %v828 = vand.u32 %v815, %v280
      %v831 = vand.u32 %v816, %v280
      %v834 = vand.u32 %v817, %v280
      %836 = vmatpush.bf16.msra.mxu0 0
      %837 = vmatpush.bf16.msra.mxu0 0
      %838 = vmatpush.bf16.msra.mxu0 0
      %839 = vmatpush.bf16.msra.mxu0 0
      %840 = vmatpush.bf16.msra.mxu0 0
      %841 = vmatpush.bf16.msra.mxu0 0
      %842 = vmatpush.bf16.msra.mxu0 0
      %843 = vmatpush.bf16.msra.mxu0 %v819
      %844 = vmatmul.bf16.gmra.mxu0 %v272
      %v845 = vpop.f32.mrf.mxu0
      %v846 = vadd.f32 0.0, %v845
      %v847 = vpop.f32.mrf.mxu0
      %v848 = vadd.f32 0.0, %v847
      %849 = vmatmul.bf16.gmra.mxu0 %v275
      %v850 = vpop.f32.mrf.mxu0
      %v851 = vadd.f32 0.0, %v850
      %v852 = vpop.f32.mrf.mxu0
      %v853 = vadd.f32 0.0, %v852
      %854 = vdwg.mxu0
      %855 = vmatpush.bf16.msra.mxu0 0
      %856 = vmatpush.bf16.msra.mxu0 0
      %857 = vmatpush.bf16.msra.mxu0 0
      %858 = vmatpush.bf16.msra.mxu0 0
      %859 = vmatpush.bf16.msra.mxu0 0
      %860 = vmatpush.bf16.msra.mxu0 0
      %861 = vmatpush.bf16.msra.mxu0 0
      %862 = vmatpush.bf16.msra.mxu0 %v822
      %863 = vmatmul.bf16.gmra.mxu0 %v272
      %v864 = vpop.f32.mrf.mxu0
      %v865 = vadd.f32 0.0, %v864
      %v866 = vpop.f32.mrf.mxu0
      %v867 = vadd.f32 0.0, %v866
      %868 = vmatmul.bf16.gmra.mxu0 %v275
      %v869 = vpop.f32.mrf.mxu0
      %v870 = vadd.f32 0.0, %v869
      %v871 = vpop.f32.mrf.mxu0
      %v872 = vadd.f32 0.0, %v871
      %873 = vdwg.mxu0
      %874 = vmatpush.bf16.msra.mxu0 0
      %875 = vmatpush.bf16.msra.mxu0 0
      %876 = vmatpush.bf16.msra.mxu0 0
      %877 = vmatpush.bf16.msra.mxu0 0
      %878 = vmatpush.bf16.msra.mxu0 0
      %879 = vmatpush.bf16.msra.mxu0 0
      %880 = vmatpush.bf16.msra.mxu0 0
      %881 = vmatpush.bf16.msra.mxu0 %v825
      %882 = vmatmul.bf16.gmra.mxu0 %v272
      %v883 = vpop.f32.mrf.mxu0
      %v884 = vadd.f32 0.0, %v883
      %v885 = vpop.f32.mrf.mxu0
      %v886 = vadd.f32 0.0, %v885
      %887 = vmatmul.bf16.gmra.mxu0 %v275
      %v888 = vpop.f32.mrf.mxu0
      %v889 = vadd.f32 0.0, %v888
      %v890 = vpop.f32.mrf.mxu0
      %v891 = vadd.f32 0.0, %v890
      %892 = vdwg.mxu0
      %893 = vmatpush.bf16.msra.mxu0 0
      %894 = vmatpush.bf16.msra.mxu0 0
      %895 = vmatpush.bf16.msra.mxu0 0
      %896 = vmatpush.bf16.msra.mxu0 0
      %897 = vmatpush.bf16.msra.mxu0 0
      %898 = vmatpush.bf16.msra.mxu0 0
      %899 = vmatpush.bf16.msra.mxu0 0
      %900 = vmatpush.bf16.msra.mxu0 %v828
      %901 = vmatmul.bf16.gmra.mxu0 %v272
      %v902 = vpop.f32.mrf.mxu0
      %v903 = vadd.f32 0.0, %v902
      %v904 = vpop.f32.mrf.mxu0
      %v905 = vadd.f32 0.0, %v904
      %906 = vmatmul.bf16.gmra.mxu0 %v275
      %v907 = vpop.f32.mrf.mxu0
      %v908 = vadd.f32 0.0, %v907
      %v909 = vpop.f32.mrf.mxu0
      %v910 = vadd.f32 0.0, %v909
      %911 = vdwg.mxu0
      %912 = vmatpush.bf16.msra.mxu0 0
      %913 = vmatpush.bf16.msra.mxu0 0
      %914 = vmatpush.bf16.msra.mxu0 0
      %915 = vmatpush.bf16.msra.mxu0 0
      %916 = vmatpush.bf16.msra.mxu0 0
      %917 = vmatpush.bf16.msra.mxu0 0
      %918 = vmatpush.bf16.msra.mxu0 0
      %919 = vmatpush.bf16.msra.mxu0 %v831
      %920 = vmatmul.bf16.gmra.mxu0 %v272
      %v921 = vpop.f32.mrf.mxu0
      %v922 = vadd.f32 0.0, %v921
      %v923 = vpop.f32.mrf.mxu0
      %v924 = vadd.f32 0.0, %v923
      %925 = vmatmul.bf16.gmra.mxu0 %v275
      %v926 = vpop.f32.mrf.mxu0
      %v927 = vadd.f32 0.0, %v926
      %v928 = vpop.f32.mrf.mxu0
      %v929 = vadd.f32 0.0, %v928
      %930 = vdwg.mxu0
      %931 = vmatpush.bf16.msra.mxu0 0
      %932 = vmatpush.bf16.msra.mxu0 0
      %933 = vmatpush.bf16.msra.mxu0 0
      %934 = vmatpush.bf16.msra.mxu0 0
      %935 = vmatpush.bf16.msra.mxu0 0
      %936 = vmatpush.bf16.msra.mxu0 0
      %937 = vmatpush.bf16.msra.mxu0 0
      %938 = vmatpush.bf16.msra.mxu0 %v834
      %939 = vmatmul.bf16.gmra.mxu0 %v272
      %v940 = vpop.f32.mrf.mxu0
      %v941 = vadd.f32 0.0, %v940
      %v942 = vpop.f32.mrf.mxu0
      %v943 = vadd.f32 0.0, %v942
      %944 = vmatmul.bf16.gmra.mxu0 %v275
      %v945 = vpop.f32.mrf.mxu0
      %v946 = vadd.f32 0.0, %v945
      %v947 = vpop.f32.mrf.mxu0
      %v948 = vadd.f32 0.0, %v947
      %949 = vdwg.mxu0
      %v950 = vmax.f32 %v763, %v846
      %v951 = vmax.f32 %v764, %v865
      %v952 = vmax.f32 %v765, %v884
      %v953 = vmax.f32 %v766, %v903
      %v954 = vmax.f32 %v767, %v922
      %v955 = vmax.f32 %v768, %v941
      %v956 = vmax.f32 %v769, %v848
      %v957 = vmax.f32 %v770, %v867
      %v958 = vmax.f32 %v771, %v886
      %v959 = vmax.f32 %v772, %v905
      %v960 = vmax.f32 %v773, %v924
      %v961 = vmax.f32 %v774, %v943
      %v962 = vmax.f32 %v775, %v851
      %v963 = vmax.f32 %v776, %v870
      %v964 = vmax.f32 %v777, %v889
      %v965 = vmax.f32 %v778, %v908
      %v966 = vmax.f32 %v779, %v927
      %v967 = vmax.f32 %v780, %v946
      %v968 = vmax.f32 %v781, %v853
      %v969 = vmax.f32 %v782, %v872
      %v970 = vmax.f32 %v783, %v891
      %v971 = vmax.f32 %v784, %v910
      %v972 = vmax.f32 %v785, %v929
      %v973 = vmax.f32 %v786, %v948
      %v974 = vld [vmem:[%s2] sm:$0xff]
      %v975 = vld [vmem:[%s2 + $0x8] sm:$0xff]
      %v976 = vld [vmem:[%s2 + $0x10] sm:$0xff]
      %v977 = vld [vmem:[%s2 + $0x18] sm:$0xff]
      %979 = vset.pattern.permute.xlu0 0
      %980 = vperm.xlu0 %979, %v974
      %v981 = vpop.permute.xlu0 %980
      %984 = vset.pattern.permute.xlu0 0
      %985 = vperm.xlu0 %984, %v975
      %v986 = vpop.permute.xlu0 %985
      %989 = vset.pattern.permute.xlu0 0
      %990 = vperm.xlu0 %989, %v976
      %v991 = vpop.permute.xlu0 %990
      %994 = vset.pattern.permute.xlu0 0
      %995 = vperm.xlu0 %994, %v977
      %v996 = vpop.permute.xlu0 %995
      %v998 = vadd.f32 %v950, %v981
      %v999 = vadd.f32 %v951, %v981
      %v1000 = vadd.f32 %v952, %v981
      %v1001 = vadd.f32 %v953, %v981
      %v1002 = vadd.f32 %v954, %v981
      %v1003 = vadd.f32 %v955, %v981
      %v1004 = vadd.f32 %v956, %v986
      %v1005 = vadd.f32 %v957, %v986
      %v1006 = vadd.f32 %v958, %v986
      %v1007 = vadd.f32 %v959, %v986
      %v1008 = vadd.f32 %v960, %v986
      %v1009 = vadd.f32 %v961, %v986
      %v1010 = vadd.f32 %v962, %v991
      %v1011 = vadd.f32 %v963, %v991
      %v1012 = vadd.f32 %v964, %v991
      %v1013 = vadd.f32 %v965, %v991
      %v1014 = vadd.f32 %v966, %v991
      %v1015 = vadd.f32 %v967, %v991
      %v1016 = vadd.f32 %v968, %v996
      %v1017 = vadd.f32 %v969, %v996
      %v1018 = vadd.f32 %v970, %v996
      %v1019 = vadd.f32 %v971, %v996
      %v1020 = vadd.f32 %v972, %v996
      %v1021 = vadd.f32 %v973, %v996
      %v1022 = vmax.f32 %v998, 0.0
      %v1023 = vmax.f32 %v999, 0.0
      %v1024 = vmax.f32 %v1000, 0.0
      %v1025 = vmax.f32 %v1001, 0.0
      %v1026 = vmax.f32 %v1002, 0.0
      %v1027 = vmax.f32 %v1003, 0.0
      %v1028 = vmax.f32 %v1004, 0.0
      %v1029 = vmax.f32 %v1005, 0.0
      %v1030 = vmax.f32 %v1006, 0.0
      %v1031 = vmax.f32 %v1007, 0.0
      %v1032 = vmax.f32 %v1008, 0.0
      %v1033 = vmax.f32 %v1009, 0.0
      %v1034 = vmax.f32 %v1010, 0.0
      %v1035 = vmax.f32 %v1011, 0.0
      %v1036 = vmax.f32 %v1012, 0.0
      %v1037 = vmax.f32 %v1013, 0.0
      %v1038 = vmax.f32 %v1014, 0.0
      %v1039 = vmax.f32 %v1015, 0.0
      %v1040 = vmax.f32 %v1016, 0.0
      %v1041 = vmax.f32 %v1017, 0.0
      %v1042 = vmax.f32 %v1018, 0.0
      %v1043 = vmax.f32 %v1019, 0.0
      %v1044 = vmax.f32 %v1020, 0.0
      %v1045 = vmax.f32 %v1021, 0.0
      %v1046 = vpack.c.bf16 %v1023, %v1022
      %v1047 = vpack.c.bf16 %v1025, %v1024
      %v1048 = vpack.c.bf16 %v1027, %v1026
      %v1049 = vpack.c.bf16 %v1029, %v1028
      %v1050 = vpack.c.bf16 %v1031, %v1030
      %v1051 = vpack.c.bf16 %v1033, %v1032
      %v1052 = vpack.c.bf16 %v1035, %v1034
      %v1053 = vpack.c.bf16 %v1037, %v1036
      %v1054 = vpack.c.bf16 %v1039, %v1038
      %v1055 = vpack.c.bf16 %v1041, %v1040
      %v1056 = vpack.c.bf16 %v1043, %v1042
      %v1057 = vpack.c.bf16 %v1045, %v1044
      %v1058 = vld [vmem:[%s3] sm:$0xf]
      %v1059 = vld [vmem:[%s3 + $0x4] sm:$0xf]
      %v1060 = vld [vmem:[%s3 + $0x8] sm:$0xf]
      %v1061 = vld [vmem:[%s3 + $0xc] sm:$0xf]
      %v1062 = vld [vmem:[%s3 + $0x10] sm:$0xf]
      %v1063 = vld [vmem:[%s3 + $0x14] sm:$0xf]
      %v1064 = vld [vmem:[%s3 + $0x18] sm:$0xf]
      %v1065 = vld [vmem:[%s3 + $0x1c] sm:$0xf]
      %s1066 = scalar_lea.vmem %s3, 32
      %v1067 = vld [vmem:[%s1066] sm:$0xf]
      %v1068 = vld [vmem:[%s1066 + $0x4] sm:$0xf]
      %v1069 = vld [vmem:[%s1066 + $0x8] sm:$0xf]
      %v1070 = vld [vmem:[%s1066 + $0xc] sm:$0xf]
      %v1071 = vld [vmem:[%s1066 + $0x10] sm:$0xf]
      %v1072 = vld [vmem:[%s1066 + $0x14] sm:$0xf]
      %v1073 = vld [vmem:[%s1066 + $0x18] sm:$0xf]
      %v1074 = vld [vmem:[%s1066 + $0x1c] sm:$0xf]
      %v1083 = vunpack.c.l.b16 %v1067
      %v1084 = vunpack.c.l.b16 %v1068
      %v1085 = vunpack.c.l.b16 %v1069
      %v1086 = vunpack.c.l.b16 %v1070
      %v1087 = vunpack.c.l.b16 %v1071
      %v1088 = vunpack.c.l.b16 %v1072
      %v1089 = vunpack.c.l.b16 %v1073
      %v1090 = vunpack.c.l.b16 %v1074
      %v1091 = vpack.c.b16 %v1084, %v1083
      %v1092 = vpack.c.b16 %v1086, %v1085
      %v1093 = vpack.c.b16 %v1088, %v1087
      %v1094 = vpack.c.b16 %v1090, %v1089
      %v1103 = vunpack.c.h.b16 %v1046
      %v1104 = vunpack.c.l.b16 %v1047
      %v1105 = vunpack.c.h.b16 %v1049
      %v1106 = vunpack.c.l.b16 %v1050
      %v1107 = vunpack.c.h.b16 %v1052
      %v1108 = vunpack.c.l.b16 %v1053
      %v1109 = vunpack.c.h.b16 %v1055
      %v1110 = vunpack.c.l.b16 %v1056
      %v1111 = vpack.c.b16 %v1105, %v1103
      %v1112 = vpack.c.b16 %v1106, %v1104
      %v1113 = vpack.c.b16 %v1109, %v1107
      %v1114 = vpack.c.b16 %v1110, %v1108
      %1115 = vrot.lane.b32.xlu0 %v1111, 87
      %v1116 = vpop.permute.xlu0 %1115
      %1117 = vrot.lane.b32.xlu0 %v1112, 87
      %v1118 = vpop.permute.xlu0 %1117
      %1119 = vrot.lane.b32.xlu0 %v1113, 87
      %v1120 = vpop.permute.xlu0 %1119
      %1121 = vrot.lane.b32.xlu0 %v1114, 87
      %v1122 = vpop.permute.xlu0 %1121
      %vm1123 = vcmask 711680
      %v1124 = vsel %vm1123, %v1116, %v1118
      %v1125 = vsel %vm1123, %v1120, %v1122
      %vm1130 = vcmask 261120
      %v1132 = vsel %vm1130, %v1091, 0
      %v1135 = vsel %vm1130, %v1092, 0
      %v1138 = vsel %vm1130, %v1093, 0
      %v1141 = vsel %vm1130, %v1094, 0
      %1143 = vmatpush.bf16.msra.mxu0 0
      %1144 = vmatpush.bf16.msra.mxu0 0
      %1145 = vmatpush.bf16.msra.mxu0 0
      %1146 = vmatpush.bf16.msra.mxu0 0
      %1147 = vmatpush.bf16.msra.mxu0 0
      %1148 = vmatpush.bf16.msra.mxu0 0
      %1149 = vmatpush.bf16.msra.mxu0 %v1125
      %1150 = vmatpush.bf16.msra.mxu0 %v1124
      %1151 = vmatmul.bf16.gmra.mxu0 %v1132
      %v1152 = vpop.f32.mrf.mxu0
      %v1153 = vadd.f32 0.0, %v1152
      %v1154 = vpop.f32.mrf.mxu0
      %v1155 = vadd.f32 0.0, %v1154
      %1156 = vmatmul.bf16.gmra.mxu0 %v1135
      %v1157 = vpop.f32.mrf.mxu0
      %v1158 = vadd.f32 0.0, %v1157
      %v1159 = vpop.f32.mrf.mxu0
      %v1160 = vadd.f32 0.0, %v1159
      %1161 = vmatmul.bf16.gmra.mxu0 %v1138
      %v1162 = vpop.f32.mrf.mxu0
      %v1163 = vadd.f32 0.0, %v1162
      %v1164 = vpop.f32.mrf.mxu0
      %v1165 = vadd.f32 0.0, %v1164
      %1166 = vmatmul.bf16.gmra.mxu0 %v1141
      %v1167 = vpop.f32.mrf.mxu0
      %v1168 = vadd.f32 0.0, %v1167
      %v1169 = vpop.f32.mrf.mxu0
      %v1170 = vadd.f32 0.0, %v1169
      %1171 = vdwg.mxu0
      %1172 = vmatpush.bf16.msra.mxu0 0
      %1173 = vmatpush.bf16.msra.mxu0 0
      %1174 = vmatpush.bf16.msra.mxu0 0
      %1175 = vmatpush.bf16.msra.mxu0 0
      %1176 = vmatpush.bf16.msra.mxu0 0
      %1177 = vmatpush.bf16.msra.mxu0 0
      %1178 = vmatpush.bf16.msra.mxu0 %v1122
      %1179 = vmatpush.bf16.msra.mxu0 %v1118
      %1180 = vmatmul.bf16.gmra.mxu0 %v1132
      %v1181 = vpop.f32.mrf.mxu0
      %v1182 = vadd.f32 0.0, %v1181
      %v1183 = vpop.f32.mrf.mxu0
      %v1184 = vadd.f32 0.0, %v1183
      %1185 = vmatmul.bf16.gmra.mxu0 %v1135
      %v1186 = vpop.f32.mrf.mxu0
      %v1187 = vadd.f32 0.0, %v1186
      %v1188 = vpop.f32.mrf.mxu0
      %v1189 = vadd.f32 0.0, %v1188
      %1190 = vmatmul.bf16.gmra.mxu0 %v1138
      %v1191 = vpop.f32.mrf.mxu0
      %v1192 = vadd.f32 0.0, %v1191
      %v1193 = vpop.f32.mrf.mxu0
      %v1194 = vadd.f32 0.0, %v1193
      %1195 = vmatmul.bf16.gmra.mxu0 %v1141
      %v1196 = vpop.f32.mrf.mxu0
      %v1197 = vadd.f32 0.0, %v1196
      %v1198 = vpop.f32.mrf.mxu0
      %v1199 = vadd.f32 0.0, %v1198
      %1200 = vdwg.mxu0
      %v1209 = vunpack.c.l.b16 %v1058
      %v1210 = vunpack.c.l.b16 %v1059
      %v1211 = vunpack.c.l.b16 %v1060
      %v1212 = vunpack.c.l.b16 %v1061
      %v1213 = vunpack.c.l.b16 %v1062
      %v1214 = vunpack.c.l.b16 %v1063
      %v1215 = vunpack.c.l.b16 %v1064
      %v1216 = vunpack.c.l.b16 %v1065
      %v1217 = vpack.c.b16 %v1210, %v1209
      %v1218 = vpack.c.b16 %v1212, %v1211
      %v1219 = vpack.c.b16 %v1214, %v1213
      %v1220 = vpack.c.b16 %v1216, %v1215
      %v1221 = vunpack.c.l.b16 %v1046
      %v1222 = vunpack.c.l.b16 %v1049
      %v1223 = vunpack.c.l.b16 %v1052
      %v1224 = vunpack.c.l.b16 %v1055
      %v1225 = vpack.c.b16 %v1222, %v1221
      %v1226 = vpack.c.b16 %v1224, %v1223
      %v1232 = vsel %vm1130, %v1217, 0
      %v1235 = vsel %vm1130, %v1218, 0
      %v1238 = vsel %vm1130, %v1219, 0
      %v1241 = vsel %vm1130, %v1220, 0
      %1243 = vmatpush.bf16.msra.mxu0 0
      %1244 = vmatpush.bf16.msra.mxu0 0
      %1245 = vmatpush.bf16.msra.mxu0 0
      %1246 = vmatpush.bf16.msra.mxu0 0
      %1247 = vmatpush.bf16.msra.mxu0 0
      %1248 = vmatpush.bf16.msra.mxu0 0
      %1249 = vmatpush.bf16.msra.mxu0 %v1226
      %1250 = vmatpush.bf16.msra.mxu0 %v1225
      %1251 = vmatmul.bf16.gmra.mxu0 %v1232
      %v1252 = vpop.f32.mrf.mxu0
      %v1253 = vadd.f32 %v1153, %v1252
      %v1254 = vpop.f32.mrf.mxu0
      %v1255 = vadd.f32 %v1155, %v1254
      %1256 = vmatmul.bf16.gmra.mxu0 %v1235
      %v1257 = vpop.f32.mrf.mxu0
      %v1258 = vadd.f32 %v1158, %v1257
      %v1259 = vpop.f32.mrf.mxu0
      %v1260 = vadd.f32 %v1160, %v1259
      %1261 = vmatmul.bf16.gmra.mxu0 %v1238
      %v1262 = vpop.f32.mrf.mxu0
      %v1263 = vadd.f32 %v1163, %v1262
      %v1264 = vpop.f32.mrf.mxu0
      %v1265 = vadd.f32 %v1165, %v1264
      %1266 = vmatmul.bf16.gmra.mxu0 %v1241
      %v1267 = vpop.f32.mrf.mxu0
      %v1268 = vadd.f32 %v1168, %v1267
      %v1269 = vpop.f32.mrf.mxu0
      %v1270 = vadd.f32 %v1170, %v1269
      %1271 = vdwg.mxu0
      %1272 = vmatpush.bf16.msra.mxu0 0
      %1273 = vmatpush.bf16.msra.mxu0 0
      %1274 = vmatpush.bf16.msra.mxu0 0
      %1275 = vmatpush.bf16.msra.mxu0 0
      %1276 = vmatpush.bf16.msra.mxu0 0
      %1277 = vmatpush.bf16.msra.mxu0 0
      %1278 = vmatpush.bf16.msra.mxu0 %v1113
      %1279 = vmatpush.bf16.msra.mxu0 %v1111
      %1280 = vmatmul.bf16.gmra.mxu0 %v1232
      %v1281 = vpop.f32.mrf.mxu0
      %v1282 = vadd.f32 %v1182, %v1281
      %v1283 = vpop.f32.mrf.mxu0
      %v1284 = vadd.f32 %v1184, %v1283
      %1285 = vmatmul.bf16.gmra.mxu0 %v1235
      %v1286 = vpop.f32.mrf.mxu0
      %v1287 = vadd.f32 %v1187, %v1286
      %v1288 = vpop.f32.mrf.mxu0
      %v1289 = vadd.f32 %v1189, %v1288
      %1290 = vmatmul.bf16.gmra.mxu0 %v1238
      %v1291 = vpop.f32.mrf.mxu0
      %v1292 = vadd.f32 %v1192, %v1291
      %v1293 = vpop.f32.mrf.mxu0
      %v1294 = vadd.f32 %v1194, %v1293
      %1295 = vmatmul.bf16.gmra.mxu0 %v1241
      %v1296 = vpop.f32.mrf.mxu0
      %v1297 = vadd.f32 %v1197, %v1296
      %v1298 = vpop.f32.mrf.mxu0
      %v1299 = vadd.f32 %v1199, %v1298
      %1300 = vdwg.mxu0
      %s1301 = scalar_lea.vmem %s3, 64
      %v1302 = vld [vmem:[%s1301] sm:$0xf]
      %v1303 = vld [vmem:[%s1301 + $0x4] sm:$0xf]
      %v1304 = vld [vmem:[%s1301 + $0x8] sm:$0xf]
      %v1305 = vld [vmem:[%s1301 + $0xc] sm:$0xf]
      %v1306 = vld [vmem:[%s1301 + $0x10] sm:$0xf]
      %v1307 = vld [vmem:[%s1301 + $0x14] sm:$0xf]
      %v1308 = vld [vmem:[%s1301 + $0x18] sm:$0xf]
      %v1309 = vld [vmem:[%s1301 + $0x1c] sm:$0xf]
      %v1318 = vunpack.c.l.b16 %v1302
      %v1319 = vunpack.c.l.b16 %v1303
      %v1320 = vunpack.c.l.b16 %v1304
      %v1321 = vunpack.c.l.b16 %v1305
      %v1322 = vunpack.c.l.b16 %v1306
      %v1323 = vunpack.c.l.b16 %v1307
      %v1324 = vunpack.c.l.b16 %v1308
      %v1325 = vunpack.c.l.b16 %v1309
      %v1326 = vpack.c.b16 %v1319, %v1318
      %v1327 = vpack.c.b16 %v1321, %v1320
      %v1328 = vpack.c.b16 %v1323, %v1322
      %v1329 = vpack.c.b16 %v1325, %v1324
      %1330 = vrot.lane.b32.xlu0 %v1225, 127
      %v1331 = vpop.permute.xlu0 %1330
      %1332 = vrot.lane.b32.xlu0 %v1111, 127
      %v1333 = vpop.permute.xlu0 %1332
      %1334 = vrot.lane.b32.xlu0 %v1226, 127
      %v1335 = vpop.permute.xlu0 %1334
      %1336 = vrot.lane.b32.xlu0 %v1113, 127
      %v1337 = vpop.permute.xlu0 %1336
      %vm1338 = vcmask 1039360
      %v1339 = vsel %vm1338, %v1331, %v1333
      %v1340 = vsel %vm1338, %v1335, %v1337
      %v1346 = vsel %vm1130, %v1326, 0
      %v1349 = vsel %vm1130, %v1327, 0
      %v1352 = vsel %vm1130, %v1328, 0
      %v1355 = vsel %vm1130, %v1329, 0
      %1357 = vmatpush.bf16.msra.mxu0 0
      %1358 = vmatpush.bf16.msra.mxu0 0
      %1359 = vmatpush.bf16.msra.mxu0 0
      %1360 = vmatpush.bf16.msra.mxu0 0
      %1361 = vmatpush.bf16.msra.mxu0 0
      %1362 = vmatpush.bf16.msra.mxu0 0
      %1363 = vmatpush.bf16.msra.mxu0 %v1340
      %1364 = vmatpush.bf16.msra.mxu0 %v1339
      %1365 = vmatmul.bf16.gmra.mxu0 %v1346
      %v1366 = vpop.f32.mrf.mxu0
      %v1367 = vadd.f32 0.0, %v1366
      %v1368 = vpop.f32.mrf.mxu0
      %v1369 = vadd.f32 0.0, %v1368
      %1370 = vmatmul.bf16.gmra.mxu0 %v1349
      %v1371 = vpop.f32.mrf.mxu0
      %v1372 = vadd.f32 0.0, %v1371
      %v1373 = vpop.f32.mrf.mxu0
      %v1374 = vadd.f32 0.0, %v1373
      %1375 = vmatmul.bf16.gmra.mxu0 %v1352
      %v1376 = vpop.f32.mrf.mxu0
      %v1377 = vadd.f32 0.0, %v1376
      %v1378 = vpop.f32.mrf.mxu0
      %v1379 = vadd.f32 0.0, %v1378
      %1380 = vmatmul.bf16.gmra.mxu0 %v1355
      %v1381 = vpop.f32.mrf.mxu0
      %v1382 = vadd.f32 0.0, %v1381
      %v1383 = vpop.f32.mrf.mxu0
      %v1384 = vadd.f32 0.0, %v1383
      %1385 = vdwg.mxu0
      %1386 = vmatpush.bf16.msra.mxu0 0
      %1387 = vmatpush.bf16.msra.mxu0 0
      %1388 = vmatpush.bf16.msra.mxu0 0
      %1389 = vmatpush.bf16.msra.mxu0 0
      %1390 = vmatpush.bf16.msra.mxu0 0
      %1391 = vmatpush.bf16.msra.mxu0 0
      %1392 = vmatpush.bf16.msra.mxu0 %v1337
      %1393 = vmatpush.bf16.msra.mxu0 %v1333
      %1394 = vmatmul.bf16.gmra.mxu0 %v1346
      %v1395 = vpop.f32.mrf.mxu0
      %v1396 = vadd.f32 0.0, %v1395
      %v1397 = vpop.f32.mrf.mxu0
      %v1398 = vadd.f32 0.0, %v1397
      %1399 = vmatmul.bf16.gmra.mxu0 %v1349
      %v1400 = vpop.f32.mrf.mxu0
      %v1401 = vadd.f32 0.0, %v1400
      %v1402 = vpop.f32.mrf.mxu0
      %v1403 = vadd.f32 0.0, %v1402
      %1404 = vmatmul.bf16.gmra.mxu0 %v1352
      %v1405 = vpop.f32.mrf.mxu0
      %v1406 = vadd.f32 0.0, %v1405
      %v1407 = vpop.f32.mrf.mxu0
      %v1408 = vadd.f32 0.0, %v1407
      %1409 = vmatmul.bf16.gmra.mxu0 %v1355
      %v1410 = vpop.f32.mrf.mxu0
      %v1411 = vadd.f32 0.0, %v1410
      %v1412 = vpop.f32.mrf.mxu0
      %v1413 = vadd.f32 0.0, %v1412
      %1414 = vdwg.mxu0
      %v1415 = vadd.f32 %v1253, %v1367
      %v1416 = vadd.f32 %v1282, %v1396
      %v1417 = vadd.f32 %v1255, %v1369
      %v1418 = vadd.f32 %v1284, %v1398
      %v1419 = vadd.f32 %v1258, %v1372
      %v1420 = vadd.f32 %v1287, %v1401
      %v1421 = vadd.f32 %v1260, %v1374
      %v1422 = vadd.f32 %v1289, %v1403
      %v1423 = vadd.f32 %v1263, %v1377
      %v1424 = vadd.f32 %v1292, %v1406
      %v1425 = vadd.f32 %v1265, %v1379
      %v1426 = vadd.f32 %v1294, %v1408
      %v1427 = vadd.f32 %v1268, %v1382
      %v1428 = vadd.f32 %v1297, %v1411
      %v1429 = vadd.f32 %v1270, %v1384
      %v1430 = vadd.f32 %v1299, %v1413
      %s1431 = scalar_lea.vmem %s3, 96
      %v1432 = vld [vmem:[%s1431] sm:$0xf]
      %v1433 = vld [vmem:[%s1431 + $0x4] sm:$0xf]
      %v1434 = vld [vmem:[%s1431 + $0x8] sm:$0xf]
      %v1435 = vld [vmem:[%s1431 + $0xc] sm:$0xf]
      %v1436 = vld [vmem:[%s1431 + $0x10] sm:$0xf]
      %v1437 = vld [vmem:[%s1431 + $0x14] sm:$0xf]
      %v1438 = vld [vmem:[%s1431 + $0x18] sm:$0xf]
      %v1439 = vld [vmem:[%s1431 + $0x1c] sm:$0xf]
      %v1448 = vunpack.c.l.b16 %v1432
      %v1449 = vunpack.c.l.b16 %v1433
      %v1450 = vunpack.c.l.b16 %v1434
      %v1451 = vunpack.c.l.b16 %v1435
      %v1452 = vunpack.c.l.b16 %v1436
      %v1453 = vunpack.c.l.b16 %v1437
      %v1454 = vunpack.c.l.b16 %v1438
      %v1455 = vunpack.c.l.b16 %v1439
      %v1456 = vpack.c.b16 %v1449, %v1448
      %v1457 = vpack.c.b16 %v1451, %v1450
      %v1458 = vpack.c.b16 %v1453, %v1452
      %v1459 = vpack.c.b16 %v1455, %v1454
      %v1460 = vunpack.c.h.b16 %v1047
      %v1461 = vunpack.c.h.b16 %v1050
      %v1462 = vunpack.c.h.b16 %v1053
      %v1463 = vunpack.c.h.b16 %v1056
      %v1464 = vpack.c.b16 %v1461, %v1460
      %v1465 = vpack.c.b16 %v1463, %v1462
      %1466 = vrot.lane.b32.xlu0 %v1112, 46
      %v1467 = vpop.permute.xlu0 %1466
      %1468 = vrot.lane.b32.xlu0 %v1464, 46
      %v1469 = vpop.permute.xlu0 %1468
      %1470 = vrot.lane.b32.xlu0 %v1114, 46
      %v1471 = vpop.permute.xlu0 %1470
      %1472 = vrot.lane.b32.xlu0 %v1465, 46
      %v1473 = vpop.permute.xlu0 %1472
      %vm1474 = vcmask 375808
      %v1475 = vsel %vm1474, %v1467, %v1469
      %v1476 = vsel %vm1474, %v1471, %v1473
      %v1482 = vsel %vm1130, %v1456, 0
      %v1485 = vsel %vm1130, %v1457, 0
      %v1488 = vsel %vm1130, %v1458, 0
      %v1491 = vsel %vm1130, %v1459, 0
      %1493 = vmatpush.bf16.msra.mxu0 0
      %1494 = vmatpush.bf16.msra.mxu0 0
      %1495 = vmatpush.bf16.msra.mxu0 0
      %1496 = vmatpush.bf16.msra.mxu0 0
      %1497 = vmatpush.bf16.msra.mxu0 0
      %1498 = vmatpush.bf16.msra.mxu0 0
      %1499 = vmatpush.bf16.msra.mxu0 %v1476
      %1500 = vmatpush.bf16.msra.mxu0 %v1475
      %1501 = vmatmul.bf16.gmra.mxu0 %v1482
      %v1502 = vpop.f32.mrf.mxu0
      %v1503 = vadd.f32 0.0, %v1502
      %v1504 = vpop.f32.mrf.mxu0
      %v1505 = vadd.f32 0.0, %v1504
      %1506 = vmatmul.bf16.gmra.mxu0 %v1485
      %v1507 = vpop.f32.mrf.mxu0
      %v1508 = vadd.f32 0.0, %v1507
      %v1509 = vpop.f32.mrf.mxu0
      %v1510 = vadd.f32 0.0, %v1509
      %1511 = vmatmul.bf16.gmra.mxu0 %v1488
      %v1512 = vpop.f32.mrf.mxu0
      %v1513 = vadd.f32 0.0, %v1512
      %v1514 = vpop.f32.mrf.mxu0
      %v1515 = vadd.f32 0.0, %v1514
      %1516 = vmatmul.bf16.gmra.mxu0 %v1491
      %v1517 = vpop.f32.mrf.mxu0
      %v1518 = vadd.f32 0.0, %v1517
      %v1519 = vpop.f32.mrf.mxu0
      %v1520 = vadd.f32 0.0, %v1519
      %1521 = vdwg.mxu0
      %1522 = vmatpush.bf16.msra.mxu0 0
      %1523 = vmatpush.bf16.msra.mxu0 0
      %1524 = vmatpush.bf16.msra.mxu0 0
      %1525 = vmatpush.bf16.msra.mxu0 0
      %1526 = vmatpush.bf16.msra.mxu0 0
      %1527 = vmatpush.bf16.msra.mxu0 0
      %1528 = vmatpush.bf16.msra.mxu0 %v1473
      %1529 = vmatpush.bf16.msra.mxu0 %v1469
      %1530 = vmatmul.bf16.gmra.mxu0 %v1482
      %v1531 = vpop.f32.mrf.mxu0
      %v1532 = vadd.f32 0.0, %v1531
      %v1533 = vpop.f32.mrf.mxu0
      %v1534 = vadd.f32 0.0, %v1533
      %1535 = vmatmul.bf16.gmra.mxu0 %v1485
      %v1536 = vpop.f32.mrf.mxu0
      %v1537 = vadd.f32 0.0, %v1536
      %v1538 = vpop.f32.mrf.mxu0
      %v1539 = vadd.f32 0.0, %v1538
      %1540 = vmatmul.bf16.gmra.mxu0 %v1488
      %v1541 = vpop.f32.mrf.mxu0
      %v1542 = vadd.f32 0.0, %v1541
      %v1543 = vpop.f32.mrf.mxu0
      %v1544 = vadd.f32 0.0, %v1543
      %1545 = vmatmul.bf16.gmra.mxu0 %v1491
      %v1546 = vpop.f32.mrf.mxu0
      %v1547 = vadd.f32 0.0, %v1546
      %v1548 = vpop.f32.mrf.mxu0
      %v1549 = vadd.f32 0.0, %v1548
      %1550 = vdwg.mxu0
      %v1551 = vadd.f32 %v1415, %v1503
      %v1552 = vadd.f32 %v1416, %v1532
      %v1553 = vadd.f32 %v1417, %v1505
      %v1554 = vadd.f32 %v1418, %v1534
      %v1555 = vadd.f32 %v1419, %v1508
      %v1556 = vadd.f32 %v1420, %v1537
      %v1557 = vadd.f32 %v1421, %v1510
      %v1558 = vadd.f32 %v1422, %v1539
      %v1559 = vadd.f32 %v1423, %v1513
      %v1560 = vadd.f32 %v1424, %v1542
      %v1561 = vadd.f32 %v1425, %v1515
      %v1562 = vadd.f32 %v1426, %v1544
      %v1563 = vadd.f32 %v1427, %v1518
      %v1564 = vadd.f32 %v1428, %v1547
      %v1565 = vadd.f32 %v1429, %v1520
      %v1566 = vadd.f32 %v1430, %v1549
      %s1567 = scalar_lea.vmem %s3, 128
      %v1568 = vld [vmem:[%s1567] sm:$0xf]
      %v1569 = vld [vmem:[%s1567 + $0x4] sm:$0xf]
      %v1570 = vld [vmem:[%s1567 + $0x8] sm:$0xf]
      %v1571 = vld [vmem:[%s1567 + $0xc] sm:$0xf]
      %v1572 = vld [vmem:[%s1567 + $0x10] sm:$0xf]
      %v1573 = vld [vmem:[%s1567 + $0x14] sm:$0xf]
      %v1574 = vld [vmem:[%s1567 + $0x18] sm:$0xf]
      %v1575 = vld [vmem:[%s1567 + $0x1c] sm:$0xf]
      %v1584 = vunpack.c.l.b16 %v1568
      %v1585 = vunpack.c.l.b16 %v1569
      %v1586 = vunpack.c.l.b16 %v1570
      %v1587 = vunpack.c.l.b16 %v1571
      %v1588 = vunpack.c.l.b16 %v1572
      %v1589 = vunpack.c.l.b16 %v1573
      %v1590 = vunpack.c.l.b16 %v1574
      %v1591 = vunpack.c.l.b16 %v1575
      %v1592 = vpack.c.b16 %v1585, %v1584
      %v1593 = vpack.c.b16 %v1587, %v1586
      %v1594 = vpack.c.b16 %v1589, %v1588
      %v1595 = vpack.c.b16 %v1591, %v1590
      %v1600 = vunpack.c.l.b16 %v1048
      %v1601 = vunpack.c.h.b16 %v1048
      %v1602 = vunpack.c.l.b16 %v1051
      %v1603 = vunpack.c.h.b16 %v1051
      %v1604 = vunpack.c.l.b16 %v1054
      %v1605 = vunpack.c.h.b16 %v1054
      %v1606 = vunpack.c.l.b16 %v1057
      %v1607 = vunpack.c.h.b16 %v1057
      %v1608 = vpack.c.b16 %v1602, %v1600
      %v1609 = vpack.c.b16 %v1603, %v1601
      %v1610 = vpack.c.b16 %v1606, %v1604
      %v1611 = vpack.c.b16 %v1607, %v1605
      %1612 = vrot.lane.b32.xlu0 %v1464, 5
      %v1613 = vpop.permute.xlu0 %1612
      %1614 = vrot.lane.b32.xlu0 %v1608, 5
      %v1615 = vpop.permute.xlu0 %1614
      %1616 = vrot.lane.b32.xlu0 %v1609, 5
      %v1617 = vpop.permute.xlu0 %1616
      %1618 = vrot.lane.b32.xlu0 %v1465, 5
      %v1619 = vpop.permute.xlu0 %1618
      %1620 = vrot.lane.b32.xlu0 %v1610, 5
      %v1621 = vpop.permute.xlu0 %1620
      %1622 = vrot.lane.b32.xlu0 %v1611, 5
      %v1623 = vpop.permute.xlu0 %1622
      %vm1624 = vcmask 39936
      %v1625 = vsel %vm1624, %v1613, %v1615
      %v1626 = vsel %vm1624, %v1615, %v1617
      %v1627 = vsel %vm1624, %v1619, %v1621
      %v1628 = vsel %vm1624, %v1621, %v1623
      %v1634 = vsel %vm1130, %v1592, 0
      %v1637 = vsel %vm1130, %v1593, 0
      %v1640 = vsel %vm1130, %v1594, 0
      %v1643 = vsel %vm1130, %v1595, 0
      %1645 = vmatpush.bf16.msra.mxu0 0
      %1646 = vmatpush.bf16.msra.mxu0 0
      %1647 = vmatpush.bf16.msra.mxu0 0
      %1648 = vmatpush.bf16.msra.mxu0 0
      %1649 = vmatpush.bf16.msra.mxu0 0
      %1650 = vmatpush.bf16.msra.mxu0 0
      %1651 = vmatpush.bf16.msra.mxu0 %v1627
      %1652 = vmatpush.bf16.msra.mxu0 %v1625
      %1653 = vmatmul.bf16.gmra.mxu0 %v1634
      %v1654 = vpop.f32.mrf.mxu0
      %v1655 = vadd.f32 0.0, %v1654
      %v1656 = vpop.f32.mrf.mxu0
      %v1657 = vadd.f32 0.0, %v1656
      %1658 = vmatmul.bf16.gmra.mxu0 %v1637
      %v1659 = vpop.f32.mrf.mxu0
      %v1660 = vadd.f32 0.0, %v1659
      %v1661 = vpop.f32.mrf.mxu0
      %v1662 = vadd.f32 0.0, %v1661
      %1663 = vmatmul.bf16.gmra.mxu0 %v1640
      %v1664 = vpop.f32.mrf.mxu0
      %v1665 = vadd.f32 0.0, %v1664
      %v1666 = vpop.f32.mrf.mxu0
      %v1667 = vadd.f32 0.0, %v1666
      %1668 = vmatmul.bf16.gmra.mxu0 %v1643
      %v1669 = vpop.f32.mrf.mxu0
      %v1670 = vadd.f32 0.0, %v1669
      %v1671 = vpop.f32.mrf.mxu0
      %v1672 = vadd.f32 0.0, %v1671
      %1673 = vdwg.mxu0
      %1674 = vmatpush.bf16.msra.mxu0 0
      %1675 = vmatpush.bf16.msra.mxu0 0
      %1676 = vmatpush.bf16.msra.mxu0 0
      %1677 = vmatpush.bf16.msra.mxu0 0
      %1678 = vmatpush.bf16.msra.mxu0 0
      %1679 = vmatpush.bf16.msra.mxu0 0
      %1680 = vmatpush.bf16.msra.mxu0 %v1628
      %1681 = vmatpush.bf16.msra.mxu0 %v1626
      %1682 = vmatmul.bf16.gmra.mxu0 %v1634
      %v1683 = vpop.f32.mrf.mxu0
      %v1684 = vadd.f32 0.0, %v1683
      %v1685 = vpop.f32.mrf.mxu0
      %v1686 = vadd.f32 0.0, %v1685
      %1687 = vmatmul.bf16.gmra.mxu0 %v1637
      %v1688 = vpop.f32.mrf.mxu0
      %v1689 = vadd.f32 0.0, %v1688
      %v1690 = vpop.f32.mrf.mxu0
      %v1691 = vadd.f32 0.0, %v1690
      %1692 = vmatmul.bf16.gmra.mxu0 %v1640
      %v1693 = vpop.f32.mrf.mxu0
      %v1694 = vadd.f32 0.0, %v1693
      %v1695 = vpop.f32.mrf.mxu0
      %v1696 = vadd.f32 0.0, %v1695
      %1697 = vmatmul.bf16.gmra.mxu0 %v1643
      %v1698 = vpop.f32.mrf.mxu0
      %v1699 = vadd.f32 0.0, %v1698
      %v1700 = vpop.f32.mrf.mxu0
      %v1701 = vadd.f32 0.0, %v1700
      %1702 = vdwg.mxu0
      %v1703 = vadd.f32 %v1551, %v1655
      %v1704 = vadd.f32 %v1552, %v1684
      %v1705 = vadd.f32 %v1553, %v1657
      %v1706 = vadd.f32 %v1554, %v1686
      %v1707 = vadd.f32 %v1555, %v1660
      %v1708 = vadd.f32 %v1556, %v1689
      %v1709 = vadd.f32 %v1557, %v1662
      %v1710 = vadd.f32 %v1558, %v1691
      %v1711 = vadd.f32 %v1559, %v1665
      %v1712 = vadd.f32 %v1560, %v1694
      %v1713 = vadd.f32 %v1561, %v1667
      %v1714 = vadd.f32 %v1562, %v1696
      %v1715 = vadd.f32 %v1563, %v1670
      %v1716 = vadd.f32 %v1564, %v1699
      %v1717 = vadd.f32 %v1565, %v1672
      %v1718 = vadd.f32 %v1566, %v1701
      %s1719 = scalar_lea.vmem %s3, 160
      %v1720 = vld [vmem:[%s1719] sm:$0xf]
      %v1721 = vld [vmem:[%s1719 + $0x4] sm:$0xf]
      %v1722 = vld [vmem:[%s1719 + $0x8] sm:$0xf]
      %v1723 = vld [vmem:[%s1719 + $0xc] sm:$0xf]
      %v1724 = vld [vmem:[%s1719 + $0x10] sm:$0xf]
      %v1725 = vld [vmem:[%s1719 + $0x14] sm:$0xf]
      %v1726 = vld [vmem:[%s1719 + $0x18] sm:$0xf]
      %v1727 = vld [vmem:[%s1719 + $0x1c] sm:$0xf]
      %v1736 = vunpack.c.l.b16 %v1720
      %v1737 = vunpack.c.l.b16 %v1721
      %v1738 = vunpack.c.l.b16 %v1722
      %v1739 = vunpack.c.l.b16 %v1723
      %v1740 = vunpack.c.l.b16 %v1724
      %v1741 = vunpack.c.l.b16 %v1725
      %v1742 = vunpack.c.l.b16 %v1726
      %v1743 = vunpack.c.l.b16 %v1727
      %v1744 = vpack.c.b16 %v1737, %v1736
      %v1745 = vpack.c.b16 %v1739, %v1738
      %v1746 = vpack.c.b16 %v1741, %v1740
      %v1747 = vpack.c.b16 %v1743, %v1742
      %1748 = vrot.lane.b32.xlu0 %v1112, 45
      %v1749 = vpop.permute.xlu0 %1748
      %1750 = vrot.lane.b32.xlu0 %v1464, 45
      %v1751 = vpop.permute.xlu0 %1750
      %1752 = vrot.lane.b32.xlu0 %v1114, 45
      %v1753 = vpop.permute.xlu0 %1752
      %1754 = vrot.lane.b32.xlu0 %v1465, 45
      %v1755 = vpop.permute.xlu0 %1754
      %vm1756 = vcmask 367616
      %v1757 = vsel %vm1756, %v1749, %v1751
      %v1758 = vsel %vm1756, %v1753, %v1755
      %v1764 = vsel %vm1130, %v1744, 0
      %v1767 = vsel %vm1130, %v1745, 0
      %v1770 = vsel %vm1130, %v1746, 0
      %v1773 = vsel %vm1130, %v1747, 0
      %1775 = vmatpush.bf16.msra.mxu0 0
      %1776 = vmatpush.bf16.msra.mxu0 0
      %1777 = vmatpush.bf16.msra.mxu0 0
      %1778 = vmatpush.bf16.msra.mxu0 0
      %1779 = vmatpush.bf16.msra.mxu0 0
      %1780 = vmatpush.bf16.msra.mxu0 0
      %1781 = vmatpush.bf16.msra.mxu0 %v1758
      %1782 = vmatpush.bf16.msra.mxu0 %v1757
      %1783 = vmatmul.bf16.gmra.mxu0 %v1764
      %v1784 = vpop.f32.mrf.mxu0
      %v1785 = vadd.f32 0.0, %v1784
      %v1786 = vpop.f32.mrf.mxu0
      %v1787 = vadd.f32 0.0, %v1786
      %1788 = vmatmul.bf16.gmra.mxu0 %v1767
      %v1789 = vpop.f32.mrf.mxu0
      %v1790 = vadd.f32 0.0, %v1789
      %v1791 = vpop.f32.mrf.mxu0
      %v1792 = vadd.f32 0.0, %v1791
      %1793 = vmatmul.bf16.gmra.mxu0 %v1770
      %v1794 = vpop.f32.mrf.mxu0
      %v1795 = vadd.f32 0.0, %v1794
      %v1796 = vpop.f32.mrf.mxu0
      %v1797 = vadd.f32 0.0, %v1796
      %1798 = vmatmul.bf16.gmra.mxu0 %v1773
      %v1799 = vpop.f32.mrf.mxu0
      %v1800 = vadd.f32 0.0, %v1799
      %v1801 = vpop.f32.mrf.mxu0
      %v1802 = vadd.f32 0.0, %v1801
      %1803 = vdwg.mxu0
      %1804 = vmatpush.bf16.msra.mxu0 0
      %1805 = vmatpush.bf16.msra.mxu0 0
      %1806 = vmatpush.bf16.msra.mxu0 0
      %1807 = vmatpush.bf16.msra.mxu0 0
      %1808 = vmatpush.bf16.msra.mxu0 0
      %1809 = vmatpush.bf16.msra.mxu0 0
      %1810 = vmatpush.bf16.msra.mxu0 %v1755
      %1811 = vmatpush.bf16.msra.mxu0 %v1751
      %1812 = vmatmul.bf16.gmra.mxu0 %v1764
      %v1813 = vpop.f32.mrf.mxu0
      %v1814 = vadd.f32 0.0, %v1813
      %v1815 = vpop.f32.mrf.mxu0
      %v1816 = vadd.f32 0.0, %v1815
      %1817 = vmatmul.bf16.gmra.mxu0 %v1767
      %v1818 = vpop.f32.mrf.mxu0
      %v1819 = vadd.f32 0.0, %v1818
      %v1820 = vpop.f32.mrf.mxu0
      %v1821 = vadd.f32 0.0, %v1820
      %1822 = vmatmul.bf16.gmra.mxu0 %v1770
      %v1823 = vpop.f32.mrf.mxu0
      %v1824 = vadd.f32 0.0, %v1823
      %v1825 = vpop.f32.mrf.mxu0
      %v1826 = vadd.f32 0.0, %v1825
      %1827 = vmatmul.bf16.gmra.mxu0 %v1773
      %v1828 = vpop.f32.mrf.mxu0
      %v1829 = vadd.f32 0.0, %v1828
      %v1830 = vpop.f32.mrf.mxu0
      %v1831 = vadd.f32 0.0, %v1830
      %1832 = vdwg.mxu0
      %v1833 = vadd.f32 %v1703, %v1785
      %v1834 = vadd.f32 %v1704, %v1814
      %v1835 = vadd.f32 %v1705, %v1787
      %v1836 = vadd.f32 %v1706, %v1816
      %v1837 = vadd.f32 %v1707, %v1790
      %v1838 = vadd.f32 %v1708, %v1819
      %v1839 = vadd.f32 %v1709, %v1792
      %v1840 = vadd.f32 %v1710, %v1821
      %v1841 = vadd.f32 %v1711, %v1795
      %v1842 = vadd.f32 %v1712, %v1824
      %v1843 = vadd.f32 %v1713, %v1797
      %v1844 = vadd.f32 %v1714, %v1826
      %v1845 = vadd.f32 %v1715, %v1800
      %v1846 = vadd.f32 %v1716, %v1829
      %v1847 = vadd.f32 %v1717, %v1802
      %v1848 = vadd.f32 %v1718, %v1831
      %s1849 = scalar_lea.vmem %s3, 192
      %v1850 = vld [vmem:[%s1849] sm:$0xf]
      %v1851 = vld [vmem:[%s1849 + $0x4] sm:$0xf]
      %v1852 = vld [vmem:[%s1849 + $0x8] sm:$0xf]
      %v1853 = vld [vmem:[%s1849 + $0xc] sm:$0xf]
      %v1854 = vld [vmem:[%s1849 + $0x10] sm:$0xf]
      %v1855 = vld [vmem:[%s1849 + $0x14] sm:$0xf]
      %v1856 = vld [vmem:[%s1849 + $0x18] sm:$0xf]
      %v1857 = vld [vmem:[%s1849 + $0x1c] sm:$0xf]
      %v1866 = vunpack.c.l.b16 %v1850
      %v1867 = vunpack.c.l.b16 %v1851
      %v1868 = vunpack.c.l.b16 %v1852
      %v1869 = vunpack.c.l.b16 %v1853
      %v1870 = vunpack.c.l.b16 %v1854
      %v1871 = vunpack.c.l.b16 %v1855
      %v1872 = vunpack.c.l.b16 %v1856
      %v1873 = vunpack.c.l.b16 %v1857
      %v1874 = vpack.c.b16 %v1867, %v1866
      %v1875 = vpack.c.b16 %v1869, %v1868
      %v1876 = vpack.c.b16 %v1871, %v1870
      %v1877 = vpack.c.b16 %v1873, %v1872
      %1878 = vrot.lane.b32.xlu0 %v1225, 115
      %v1879 = vpop.permute.xlu0 %1878
      %1880 = vrot.lane.b32.xlu0 %v1111, 115
      %v1881 = vpop.permute.xlu0 %1880
      %1882 = vrot.lane.b32.xlu0 %v1226, 115
      %v1883 = vpop.permute.xlu0 %1882
      %1884 = vrot.lane.b32.xlu0 %v1113, 115
      %v1885 = vpop.permute.xlu0 %1884
      %vm1886 = vcmask 941056
      %v1887 = vsel %vm1886, %v1879, %v1881
      %v1888 = vsel %vm1886, %v1883, %v1885
      %v1894 = vsel %vm1130, %v1874, 0
      %v1897 = vsel %vm1130, %v1875, 0
      %v1900 = vsel %vm1130, %v1876, 0
      %v1903 = vsel %vm1130, %v1877, 0
      %1905 = vmatpush.bf16.msra.mxu0 0
      %1906 = vmatpush.bf16.msra.mxu0 0
      %1907 = vmatpush.bf16.msra.mxu0 0
      %1908 = vmatpush.bf16.msra.mxu0 0
      %1909 = vmatpush.bf16.msra.mxu0 0
      %1910 = vmatpush.bf16.msra.mxu0 0
      %1911 = vmatpush.bf16.msra.mxu0 %v1888
      %1912 = vmatpush.bf16.msra.mxu0 %v1887
      %1913 = vmatmul.bf16.gmra.mxu0 %v1894
      %v1914 = vpop.f32.mrf.mxu0
      %v1915 = vadd.f32 0.0, %v1914
      %v1916 = vpop.f32.mrf.mxu0
      %v1917 = vadd.f32 0.0, %v1916
      %1918 = vmatmul.bf16.gmra.mxu0 %v1897
      %v1919 = vpop.f32.mrf.mxu0
      %v1920 = vadd.f32 0.0, %v1919
      %v1921 = vpop.f32.mrf.mxu0
      %v1922 = vadd.f32 0.0, %v1921
      %1923 = vmatmul.bf16.gmra.mxu0 %v1900
      %v1924 = vpop.f32.mrf.mxu0
      %v1925 = vadd.f32 0.0, %v1924
      %v1926 = vpop.f32.mrf.mxu0
      %v1927 = vadd.f32 0.0, %v1926
      %1928 = vmatmul.bf16.gmra.mxu0 %v1903
      %v1929 = vpop.f32.mrf.mxu0
      %v1930 = vadd.f32 0.0, %v1929
      %v1931 = vpop.f32.mrf.mxu0
      %v1932 = vadd.f32 0.0, %v1931
      %1933 = vdwg.mxu0
      %1934 = vmatpush.bf16.msra.mxu0 0
      %1935 = vmatpush.bf16.msra.mxu0 0
      %1936 = vmatpush.bf16.msra.mxu0 0
      %1937 = vmatpush.bf16.msra.mxu0 0
      %1938 = vmatpush.bf16.msra.mxu0 0
      %1939 = vmatpush.bf16.msra.mxu0 0
      %1940 = vmatpush.bf16.msra.mxu0 %v1885
      %1941 = vmatpush.bf16.msra.mxu0 %v1881
      %1942 = vmatmul.bf16.gmra.mxu0 %v1894
      %v1943 = vpop.f32.mrf.mxu0
      %v1944 = vadd.f32 0.0, %v1943
      %v1945 = vpop.f32.mrf.mxu0
      %v1946 = vadd.f32 0.0, %v1945
      %1947 = vmatmul.bf16.gmra.mxu0 %v1897
      %v1948 = vpop.f32.mrf.mxu0
      %v1949 = vadd.f32 0.0, %v1948
      %v1950 = vpop.f32.mrf.mxu0
      %v1951 = vadd.f32 0.0, %v1950
      %1952 = vmatmul.bf16.gmra.mxu0 %v1900
      %v1953 = vpop.f32.mrf.mxu0
      %v1954 = vadd.f32 0.0, %v1953
      %v1955 = vpop.f32.mrf.mxu0
      %v1956 = vadd.f32 0.0, %v1955
      %1957 = vmatmul.bf16.gmra.mxu0 %v1903
      %v1958 = vpop.f32.mrf.mxu0
      %v1959 = vadd.f32 0.0, %v1958
      %v1960 = vpop.f32.mrf.mxu0
      %v1961 = vadd.f32 0.0, %v1960
      %1962 = vdwg.mxu0
      %v1963 = vadd.f32 %v1833, %v1915
      %v1964 = vadd.f32 %v1834, %v1944
      %v1965 = vadd.f32 %v1835, %v1917
      %v1966 = vadd.f32 %v1836, %v1946
      %v1967 = vadd.f32 %v1837, %v1920
      %v1968 = vadd.f32 %v1838, %v1949
      %v1969 = vadd.f32 %v1839, %v1922
      %v1970 = vadd.f32 %v1840, %v1951
      %v1971 = vadd.f32 %v1841, %v1925
      %v1972 = vadd.f32 %v1842, %v1954
      %v1973 = vadd.f32 %v1843, %v1927
      %v1974 = vadd.f32 %v1844, %v1956
      %v1975 = vadd.f32 %v1845, %v1930
      %v1976 = vadd.f32 %v1846, %v1959
      %v1977 = vadd.f32 %v1847, %v1932
      %v1978 = vadd.f32 %v1848, %v1961
      %s1979 = scalar_lea.vmem %s3, 224
      %v1980 = vld [vmem:[%s1979] sm:$0xf]
      %v1981 = vld [vmem:[%s1979 + $0x4] sm:$0xf]
      %v1982 = vld [vmem:[%s1979 + $0x8] sm:$0xf]
      %v1983 = vld [vmem:[%s1979 + $0xc] sm:$0xf]
      %v1984 = vld [vmem:[%s1979 + $0x10] sm:$0xf]
      %v1985 = vld [vmem:[%s1979 + $0x14] sm:$0xf]
      %v1986 = vld [vmem:[%s1979 + $0x18] sm:$0xf]
      %v1987 = vld [vmem:[%s1979 + $0x1c] sm:$0xf]
      %v1996 = vunpack.c.l.b16 %v1980
      %v1997 = vunpack.c.l.b16 %v1981
      %v1998 = vunpack.c.l.b16 %v1982
      %v1999 = vunpack.c.l.b16 %v1983
      %v2000 = vunpack.c.l.b16 %v1984
      %v2001 = vunpack.c.l.b16 %v1985
      %v2002 = vunpack.c.l.b16 %v1986
      %v2003 = vunpack.c.l.b16 %v1987
      %v2004 = vpack.c.b16 %v1997, %v1996
      %v2005 = vpack.c.b16 %v1999, %v1998
      %v2006 = vpack.c.b16 %v2001, %v2000
      %v2007 = vpack.c.b16 %v2003, %v2002
      %2008 = vrot.lane.b32.xlu0 %v1111, 74
      %v2009 = vpop.permute.xlu0 %2008
      %2010 = vrot.lane.b32.xlu0 %v1112, 74
      %v2011 = vpop.permute.xlu0 %2010
      %2012 = vrot.lane.b32.xlu0 %v1113, 74
      %v2013 = vpop.permute.xlu0 %2012
      %2014 = vrot.lane.b32.xlu0 %v1114, 74
      %v2015 = vpop.permute.xlu0 %2014
      %vm2016 = vcmask 605184
      %v2017 = vsel %vm2016, %v2009, %v2011
      %v2018 = vsel %vm2016, %v2013, %v2015
      %v2024 = vsel %vm1130, %v2004, 0
      %v2027 = vsel %vm1130, %v2005, 0
      %v2030 = vsel %vm1130, %v2006, 0
      %v2033 = vsel %vm1130, %v2007, 0
      %2035 = vmatpush.bf16.msra.mxu0 0
      %2036 = vmatpush.bf16.msra.mxu0 0
      %2037 = vmatpush.bf16.msra.mxu0 0
      %2038 = vmatpush.bf16.msra.mxu0 0
      %2039 = vmatpush.bf16.msra.mxu0 0
      %2040 = vmatpush.bf16.msra.mxu0 0
      %2041 = vmatpush.bf16.msra.mxu0 %v2018
      %2042 = vmatpush.bf16.msra.mxu0 %v2017
      %2043 = vmatmul.bf16.gmra.mxu0 %v2024
      %v2044 = vpop.f32.mrf.mxu0
      %v2045 = vadd.f32 0.0, %v2044
      %v2046 = vpop.f32.mrf.mxu0
      %v2047 = vadd.f32 0.0, %v2046
      %2048 = vmatmul.bf16.gmra.mxu0 %v2027
      %v2049 = vpop.f32.mrf.mxu0
      %v2050 = vadd.f32 0.0, %v2049
      %v2051 = vpop.f32.mrf.mxu0
      %v2052 = vadd.f32 0.0, %v2051
      %2053 = vmatmul.bf16.gmra.mxu0 %v2030
      %v2054 = vpop.f32.mrf.mxu0
      %v2055 = vadd.f32 0.0, %v2054
      %v2056 = vpop.f32.mrf.mxu0
      %v2057 = vadd.f32 0.0, %v2056
      %2058 = vmatmul.bf16.gmra.mxu0 %v2033
      %v2059 = vpop.f32.mrf.mxu0
      %v2060 = vadd.f32 0.0, %v2059
      %v2061 = vpop.f32.mrf.mxu0
      %v2062 = vadd.f32 0.0, %v2061
      %2063 = vdwg.mxu0
      %2064 = vmatpush.bf16.msra.mxu0 0
      %2065 = vmatpush.bf16.msra.mxu0 0
      %2066 = vmatpush.bf16.msra.mxu0 0
      %2067 = vmatpush.bf16.msra.mxu0 0
      %2068 = vmatpush.bf16.msra.mxu0 0
      %2069 = vmatpush.bf16.msra.mxu0 0
      %2070 = vmatpush.bf16.msra.mxu0 %v2015
      %2071 = vmatpush.bf16.msra.mxu0 %v2011
      %2072 = vmatmul.bf16.gmra.mxu0 %v2024
      %v2073 = vpop.f32.mrf.mxu0
      %v2074 = vadd.f32 0.0, %v2073
      %v2075 = vpop.f32.mrf.mxu0
      %v2076 = vadd.f32 0.0, %v2075
      %2077 = vmatmul.bf16.gmra.mxu0 %v2027
      %v2078 = vpop.f32.mrf.mxu0
      %v2079 = vadd.f32 0.0, %v2078
      %v2080 = vpop.f32.mrf.mxu0
      %v2081 = vadd.f32 0.0, %v2080
      %2082 = vmatmul.bf16.gmra.mxu0 %v2030
      %v2083 = vpop.f32.mrf.mxu0
      %v2084 = vadd.f32 0.0, %v2083
      %v2085 = vpop.f32.mrf.mxu0
      %v2086 = vadd.f32 0.0, %v2085
      %2087 = vmatmul.bf16.gmra.mxu0 %v2033
      %v2088 = vpop.f32.mrf.mxu0
      %v2089 = vadd.f32 0.0, %v2088
      %v2090 = vpop.f32.mrf.mxu0
      %v2091 = vadd.f32 0.0, %v2090
      %2092 = vdwg.mxu0
      %v2093 = vadd.f32 %v1963, %v2045
      %v2094 = vadd.f32 %v1964, %v2074
      %v2095 = vadd.f32 %v1965, %v2047
      %v2096 = vadd.f32 %v1966, %v2076
      %v2097 = vadd.f32 %v1967, %v2050
      %v2098 = vadd.f32 %v1968, %v2079
      %v2099 = vadd.f32 %v1969, %v2052
      %v2100 = vadd.f32 %v1970, %v2081
      %v2101 = vadd.f32 %v1971, %v2055
      %v2102 = vadd.f32 %v1972, %v2084
      %v2103 = vadd.f32 %v1973, %v2057
      %v2104 = vadd.f32 %v1974, %v2086
      %v2105 = vadd.f32 %v1975, %v2060
      %v2106 = vadd.f32 %v1976, %v2089
      %v2107 = vadd.f32 %v1977, %v2062
      %v2108 = vadd.f32 %v1978, %v2091
      %s2109 = scalar_lea.vmem %s3, 256
      %v2110 = vld [vmem:[%s2109] sm:$0xf]
      %v2111 = vld [vmem:[%s2109 + $0x4] sm:$0xf]
      %v2112 = vld [vmem:[%s2109 + $0x8] sm:$0xf]
      %v2113 = vld [vmem:[%s2109 + $0xc] sm:$0xf]
      %v2114 = vld [vmem:[%s2109 + $0x10] sm:$0xf]
      %v2115 = vld [vmem:[%s2109 + $0x14] sm:$0xf]
      %v2116 = vld [vmem:[%s2109 + $0x18] sm:$0xf]
      %v2117 = vld [vmem:[%s2109 + $0x1c] sm:$0xf]
      %v2126 = vunpack.c.l.b16 %v2110
      %v2127 = vunpack.c.l.b16 %v2111
      %v2128 = vunpack.c.l.b16 %v2112
      %v2129 = vunpack.c.l.b16 %v2113
      %v2130 = vunpack.c.l.b16 %v2114
      %v2131 = vunpack.c.l.b16 %v2115
      %v2132 = vunpack.c.l.b16 %v2116
      %v2133 = vunpack.c.l.b16 %v2117
      %v2134 = vpack.c.b16 %v2127, %v2126
      %v2135 = vpack.c.b16 %v2129, %v2128
      %v2136 = vpack.c.b16 %v2131, %v2130
      %v2137 = vpack.c.b16 %v2133, %v2132
      %2138 = vrot.lane.b32.xlu0 %v1225, 114
      %v2139 = vpop.permute.xlu0 %2138
      %2140 = vrot.lane.b32.xlu0 %v1111, 114
      %v2141 = vpop.permute.xlu0 %2140
      %2142 = vrot.lane.b32.xlu0 %v1226, 114
      %v2143 = vpop.permute.xlu0 %2142
      %2144 = vrot.lane.b32.xlu0 %v1113, 114
      %v2145 = vpop.permute.xlu0 %2144
      %vm2146 = vcmask 932864
      %v2147 = vsel %vm2146, %v2139, %v2141
      %v2148 = vsel %vm2146, %v2143, %v2145
      %v2154 = vsel %vm1130, %v2134, 0
      %v2157 = vsel %vm1130, %v2135, 0
      %v2160 = vsel %vm1130, %v2136, 0
      %v2163 = vsel %vm1130, %v2137, 0
      %2165 = vmatpush.bf16.msra.mxu0 0
      %2166 = vmatpush.bf16.msra.mxu0 0
      %2167 = vmatpush.bf16.msra.mxu0 0
      %2168 = vmatpush.bf16.msra.mxu0 0
      %2169 = vmatpush.bf16.msra.mxu0 0
      %2170 = vmatpush.bf16.msra.mxu0 0
      %2171 = vmatpush.bf16.msra.mxu0 %v2148
      %2172 = vmatpush.bf16.msra.mxu0 %v2147
      %2173 = vmatmul.bf16.gmra.mxu0 %v2154
      %v2174 = vpop.f32.mrf.mxu0
      %v2175 = vadd.f32 0.0, %v2174
      %v2176 = vpop.f32.mrf.mxu0
      %v2177 = vadd.f32 0.0, %v2176
      %2178 = vmatmul.bf16.gmra.mxu0 %v2157
      %v2179 = vpop.f32.mrf.mxu0
      %v2180 = vadd.f32 0.0, %v2179
      %v2181 = vpop.f32.mrf.mxu0
      %v2182 = vadd.f32 0.0, %v2181
      %2183 = vmatmul.bf16.gmra.mxu0 %v2160
      %v2184 = vpop.f32.mrf.mxu0
      %v2185 = vadd.f32 0.0, %v2184
      %v2186 = vpop.f32.mrf.mxu0
      %v2187 = vadd.f32 0.0, %v2186
      %2188 = vmatmul.bf16.gmra.mxu0 %v2163
      %v2189 = vpop.f32.mrf.mxu0
      %v2190 = vadd.f32 0.0, %v2189
      %v2191 = vpop.f32.mrf.mxu0
      %v2192 = vadd.f32 0.0, %v2191
      %2193 = vdwg.mxu0
      %2194 = vmatpush.bf16.msra.mxu0 0
      %2195 = vmatpush.bf16.msra.mxu0 0
      %2196 = vmatpush.bf16.msra.mxu0 0
      %2197 = vmatpush.bf16.msra.mxu0 0
      %2198 = vmatpush.bf16.msra.mxu0 0
      %2199 = vmatpush.bf16.msra.mxu0 0
      %2200 = vmatpush.bf16.msra.mxu0 %v2145
      %2201 = vmatpush.bf16.msra.mxu0 %v2141
      %2202 = vmatmul.bf16.gmra.mxu0 %v2154
      %v2203 = vpop.f32.mrf.mxu0
      %v2204 = vadd.f32 0.0, %v2203
      %v2205 = vpop.f32.mrf.mxu0
      %v2206 = vadd.f32 0.0, %v2205
      %2207 = vmatmul.bf16.gmra.mxu0 %v2157
      %v2208 = vpop.f32.mrf.mxu0
      %v2209 = vadd.f32 0.0, %v2208
      %v2210 = vpop.f32.mrf.mxu0
      %v2211 = vadd.f32 0.0, %v2210
      %2212 = vmatmul.bf16.gmra.mxu0 %v2160
      %v2213 = vpop.f32.mrf.mxu0
      %v2214 = vadd.f32 0.0, %v2213
      %v2215 = vpop.f32.mrf.mxu0
      %v2216 = vadd.f32 0.0, %v2215
      %2217 = vmatmul.bf16.gmra.mxu0 %v2163
      %v2218 = vpop.f32.mrf.mxu0
      %v2219 = vadd.f32 0.0, %v2218
      %v2220 = vpop.f32.mrf.mxu0
      %v2221 = vadd.f32 0.0, %v2220
      %2222 = vdwg.mxu0
      %v2223 = vadd.f32 %v2093, %v2175
      %v2224 = vadd.f32 %v2094, %v2204
      %v2225 = vadd.f32 %v2095, %v2177
      %v2226 = vadd.f32 %v2096, %v2206
      %v2227 = vadd.f32 %v2097, %v2180
      %v2228 = vadd.f32 %v2098, %v2209
      %v2229 = vadd.f32 %v2099, %v2182
      %v2230 = vadd.f32 %v2100, %v2211
      %v2231 = vadd.f32 %v2101, %v2185
      %v2232 = vadd.f32 %v2102, %v2214
      %v2233 = vadd.f32 %v2103, %v2187
      %v2234 = vadd.f32 %v2104, %v2216
      %v2235 = vadd.f32 %v2105, %v2190
      %v2236 = vadd.f32 %v2106, %v2219
      %v2237 = vadd.f32 %v2107, %v2192
      %v2238 = vadd.f32 %v2108, %v2221
      %2239 = vmatpush.bf16.msra.mxu0 0
      %2240 = vmatpush.bf16.msra.mxu0 0
      %2241 = vmatpush.bf16.msra.mxu0 0
      %2242 = vmatpush.bf16.msra.mxu0 0
      %2243 = vmatpush.bf16.msra.mxu0 0
      %2244 = vmatpush.bf16.msra.mxu0 0
      %2245 = vmatpush.bf16.msra.mxu0 %v1340
      %2246 = vmatpush.bf16.msra.mxu0 %v1339
      %2247 = vmatmul.bf16.gmra.mxu0 %v1132
      %v2248 = vpop.f32.mrf.mxu0
      %v2249 = vadd.f32 0.0, %v2248
      %v2250 = vpop.f32.mrf.mxu0
      %v2251 = vadd.f32 0.0, %v2250
      %2252 = vmatmul.bf16.gmra.mxu0 %v1135
      %v2253 = vpop.f32.mrf.mxu0
      %v2254 = vadd.f32 0.0, %v2253
      %v2255 = vpop.f32.mrf.mxu0
      %v2256 = vadd.f32 0.0, %v2255
      %2257 = vmatmul.bf16.gmra.mxu0 %v1138
      %v2258 = vpop.f32.mrf.mxu0
      %v2259 = vadd.f32 0.0, %v2258
      %v2260 = vpop.f32.mrf.mxu0
      %v2261 = vadd.f32 0.0, %v2260
      %2262 = vmatmul.bf16.gmra.mxu0 %v1141
      %v2263 = vpop.f32.mrf.mxu0
      %v2264 = vadd.f32 0.0, %v2263
      %v2265 = vpop.f32.mrf.mxu0
      %v2266 = vadd.f32 0.0, %v2265
      %2267 = vdwg.mxu0
      %2268 = vmatpush.bf16.msra.mxu0 0
      %2269 = vmatpush.bf16.msra.mxu0 0
      %2270 = vmatpush.bf16.msra.mxu0 0
      %2271 = vmatpush.bf16.msra.mxu0 0
      %2272 = vmatpush.bf16.msra.mxu0 0
      %2273 = vmatpush.bf16.msra.mxu0 0
      %2274 = vmatpush.bf16.msra.mxu0 %v1337
      %2275 = vmatpush.bf16.msra.mxu0 %v1333
      %2276 = vmatmul.bf16.gmra.mxu0 %v1132
      %v2277 = vpop.f32.mrf.mxu0
      %v2278 = vadd.f32 0.0, %v2277
      %v2279 = vpop.f32.mrf.mxu0
      %v2280 = vadd.f32 0.0, %v2279
      %2281 = vmatmul.bf16.gmra.mxu0 %v1135
      %v2282 = vpop.f32.mrf.mxu0
      %v2283 = vadd.f32 0.0, %v2282
      %v2284 = vpop.f32.mrf.mxu0
      %v2285 = vadd.f32 0.0, %v2284
      %2286 = vmatmul.bf16.gmra.mxu0 %v1138
      %v2287 = vpop.f32.mrf.mxu0
      %v2288 = vadd.f32 0.0, %v2287
      %v2289 = vpop.f32.mrf.mxu0
      %v2290 = vadd.f32 0.0, %v2289
      %2291 = vmatmul.bf16.gmra.mxu0 %v1141
      %v2292 = vpop.f32.mrf.mxu0
      %v2293 = vadd.f32 0.0, %v2292
      %v2294 = vpop.f32.mrf.mxu0
      %v2295 = vadd.f32 0.0, %v2294
      %2296 = vdwg.mxu0
      %2297 = vmatpush.bf16.msra.mxu0 0
      %2298 = vmatpush.bf16.msra.mxu0 0
      %2299 = vmatpush.bf16.msra.mxu0 0
      %2300 = vmatpush.bf16.msra.mxu0 0
      %2301 = vmatpush.bf16.msra.mxu0 0
      %2302 = vmatpush.bf16.msra.mxu0 0
      %2303 = vmatpush.bf16.msra.mxu0 %v1125
      %2304 = vmatpush.bf16.msra.mxu0 %v1124
      %2305 = vmatmul.bf16.gmra.mxu0 %v1232
      %v2306 = vpop.f32.mrf.mxu0
      %v2307 = vadd.f32 %v2249, %v2306
      %v2308 = vpop.f32.mrf.mxu0
      %v2309 = vadd.f32 %v2251, %v2308
      %2310 = vmatmul.bf16.gmra.mxu0 %v1235
      %v2311 = vpop.f32.mrf.mxu0
      %v2312 = vadd.f32 %v2254, %v2311
      %v2313 = vpop.f32.mrf.mxu0
      %v2314 = vadd.f32 %v2256, %v2313
      %2315 = vmatmul.bf16.gmra.mxu0 %v1238
      %v2316 = vpop.f32.mrf.mxu0
      %v2317 = vadd.f32 %v2259, %v2316
      %v2318 = vpop.f32.mrf.mxu0
      %v2319 = vadd.f32 %v2261, %v2318
      %2320 = vmatmul.bf16.gmra.mxu0 %v1241
      %v2321 = vpop.f32.mrf.mxu0
      %v2322 = vadd.f32 %v2264, %v2321
      %v2323 = vpop.f32.mrf.mxu0
      %v2324 = vadd.f32 %v2266, %v2323
      %2325 = vdwg.mxu0
      %2326 = vmatpush.bf16.msra.mxu0 0
      %2327 = vmatpush.bf16.msra.mxu0 0
      %2328 = vmatpush.bf16.msra.mxu0 0
      %2329 = vmatpush.bf16.msra.mxu0 0
      %2330 = vmatpush.bf16.msra.mxu0 0
      %2331 = vmatpush.bf16.msra.mxu0 0
      %2332 = vmatpush.bf16.msra.mxu0 %v1122
      %2333 = vmatpush.bf16.msra.mxu0 %v1118
      %2334 = vmatmul.bf16.gmra.mxu0 %v1232
      %v2335 = vpop.f32.mrf.mxu0
      %v2336 = vadd.f32 %v2278, %v2335
      %v2337 = vpop.f32.mrf.mxu0
      %v2338 = vadd.f32 %v2280, %v2337
      %2339 = vmatmul.bf16.gmra.mxu0 %v1235
      %v2340 = vpop.f32.mrf.mxu0
      %v2341 = vadd.f32 %v2283, %v2340
      %v2342 = vpop.f32.mrf.mxu0
      %v2343 = vadd.f32 %v2285, %v2342
      %2344 = vmatmul.bf16.gmra.mxu0 %v1238
      %v2345 = vpop.f32.mrf.mxu0
      %v2346 = vadd.f32 %v2288, %v2345
      %v2347 = vpop.f32.mrf.mxu0
      %v2348 = vadd.f32 %v2290, %v2347
      %2349 = vmatmul.bf16.gmra.mxu0 %v1241
      %v2350 = vpop.f32.mrf.mxu0
      %v2351 = vadd.f32 %v2293, %v2350
      %v2352 = vpop.f32.mrf.mxu0
      %v2353 = vadd.f32 %v2295, %v2352
      %2354 = vdwg.mxu0
      %2355 = vrot.lane.b32.xlu0 %v1111, 86
      %v2356 = vpop.permute.xlu0 %2355
      %2357 = vrot.lane.b32.xlu0 %v1112, 86
      %v2358 = vpop.permute.xlu0 %2357
      %2359 = vrot.lane.b32.xlu0 %v1113, 86
      %v2360 = vpop.permute.xlu0 %2359
      %2361 = vrot.lane.b32.xlu0 %v1114, 86
      %v2362 = vpop.permute.xlu0 %2361
      %vm2363 = vcmask 703488
      %v2364 = vsel %vm2363, %v2356, %v2358
      %v2365 = vsel %vm2363, %v2360, %v2362
      %2370 = vmatpush.bf16.msra.mxu0 0
      %2371 = vmatpush.bf16.msra.mxu0 0
      %2372 = vmatpush.bf16.msra.mxu0 0
      %2373 = vmatpush.bf16.msra.mxu0 0
      %2374 = vmatpush.bf16.msra.mxu0 0
      %2375 = vmatpush.bf16.msra.mxu0 0
      %2376 = vmatpush.bf16.msra.mxu0 %v2365
      %2377 = vmatpush.bf16.msra.mxu0 %v2364
      %2378 = vmatmul.bf16.gmra.mxu0 %v1346
      %v2379 = vpop.f32.mrf.mxu0
      %v2380 = vadd.f32 0.0, %v2379
      %v2381 = vpop.f32.mrf.mxu0
      %v2382 = vadd.f32 0.0, %v2381
      %2383 = vmatmul.bf16.gmra.mxu0 %v1349
      %v2384 = vpop.f32.mrf.mxu0
      %v2385 = vadd.f32 0.0, %v2384
      %v2386 = vpop.f32.mrf.mxu0
      %v2387 = vadd.f32 0.0, %v2386
      %2388 = vmatmul.bf16.gmra.mxu0 %v1352
      %v2389 = vpop.f32.mrf.mxu0
      %v2390 = vadd.f32 0.0, %v2389
      %v2391 = vpop.f32.mrf.mxu0
      %v2392 = vadd.f32 0.0, %v2391
      %2393 = vmatmul.bf16.gmra.mxu0 %v1355
      %v2394 = vpop.f32.mrf.mxu0
      %v2395 = vadd.f32 0.0, %v2394
      %v2396 = vpop.f32.mrf.mxu0
      %v2397 = vadd.f32 0.0, %v2396
      %2398 = vdwg.mxu0
      %2399 = vmatpush.bf16.msra.mxu0 0
      %2400 = vmatpush.bf16.msra.mxu0 0
      %2401 = vmatpush.bf16.msra.mxu0 0
      %2402 = vmatpush.bf16.msra.mxu0 0
      %2403 = vmatpush.bf16.msra.mxu0 0
      %2404 = vmatpush.bf16.msra.mxu0 0
      %2405 = vmatpush.bf16.msra.mxu0 %v2362
      %2406 = vmatpush.bf16.msra.mxu0 %v2358
      %2407 = vmatmul.bf16.gmra.mxu0 %v1346
      %v2408 = vpop.f32.mrf.mxu0
      %v2409 = vadd.f32 0.0, %v2408
      %v2410 = vpop.f32.mrf.mxu0
      %v2411 = vadd.f32 0.0, %v2410
      %2412 = vmatmul.bf16.gmra.mxu0 %v1349
      %v2413 = vpop.f32.mrf.mxu0
      %v2414 = vadd.f32 0.0, %v2413
      %v2415 = vpop.f32.mrf.mxu0
      %v2416 = vadd.f32 0.0, %v2415
      %2417 = vmatmul.bf16.gmra.mxu0 %v1352
      %v2418 = vpop.f32.mrf.mxu0
      %v2419 = vadd.f32 0.0, %v2418
      %v2420 = vpop.f32.mrf.mxu0
      %v2421 = vadd.f32 0.0, %v2420
      %2422 = vmatmul.bf16.gmra.mxu0 %v1355
      %v2423 = vpop.f32.mrf.mxu0
      %v2424 = vadd.f32 0.0, %v2423
      %v2425 = vpop.f32.mrf.mxu0
      %v2426 = vadd.f32 0.0, %v2425
      %2427 = vdwg.mxu0
      %v2428 = vadd.f32 %v2307, %v2380
      %v2429 = vadd.f32 %v2336, %v2409
      %v2430 = vadd.f32 %v2309, %v2382
      %v2431 = vadd.f32 %v2338, %v2411
      %v2432 = vadd.f32 %v2312, %v2385
      %v2433 = vadd.f32 %v2341, %v2414
      %v2434 = vadd.f32 %v2314, %v2387
      %v2435 = vadd.f32 %v2343, %v2416
      %v2436 = vadd.f32 %v2317, %v2390
      %v2437 = vadd.f32 %v2346, %v2419
      %v2438 = vadd.f32 %v2319, %v2392
      %v2439 = vadd.f32 %v2348, %v2421
      %v2440 = vadd.f32 %v2322, %v2395
      %v2441 = vadd.f32 %v2351, %v2424
      %v2442 = vadd.f32 %v2324, %v2397
      %v2443 = vadd.f32 %v2353, %v2426
      %2444 = vmatpush.bf16.msra.mxu0 0
      %2445 = vmatpush.bf16.msra.mxu0 0
      %2446 = vmatpush.bf16.msra.mxu0 0
      %2447 = vmatpush.bf16.msra.mxu0 0
      %2448 = vmatpush.bf16.msra.mxu0 0
      %2449 = vmatpush.bf16.msra.mxu0 0
      %2450 = vmatpush.bf16.msra.mxu0 %v1627
      %2451 = vmatpush.bf16.msra.mxu0 %v1625
      %2452 = vmatmul.bf16.gmra.mxu0 %v1482
      %v2453 = vpop.f32.mrf.mxu0
      %v2454 = vadd.f32 0.0, %v2453
      %v2455 = vpop.f32.mrf.mxu0
      %v2456 = vadd.f32 0.0, %v2455
      %2457 = vmatmul.bf16.gmra.mxu0 %v1485
      %v2458 = vpop.f32.mrf.mxu0
      %v2459 = vadd.f32 0.0, %v2458
      %v2460 = vpop.f32.mrf.mxu0
      %v2461 = vadd.f32 0.0, %v2460
      %2462 = vmatmul.bf16.gmra.mxu0 %v1488
      %v2463 = vpop.f32.mrf.mxu0
      %v2464 = vadd.f32 0.0, %v2463
      %v2465 = vpop.f32.mrf.mxu0
      %v2466 = vadd.f32 0.0, %v2465
      %2467 = vmatmul.bf16.gmra.mxu0 %v1491
      %v2468 = vpop.f32.mrf.mxu0
      %v2469 = vadd.f32 0.0, %v2468
      %v2470 = vpop.f32.mrf.mxu0
      %v2471 = vadd.f32 0.0, %v2470
      %2472 = vdwg.mxu0
      %2473 = vmatpush.bf16.msra.mxu0 0
      %2474 = vmatpush.bf16.msra.mxu0 0
      %2475 = vmatpush.bf16.msra.mxu0 0
      %2476 = vmatpush.bf16.msra.mxu0 0
      %2477 = vmatpush.bf16.msra.mxu0 0
      %2478 = vmatpush.bf16.msra.mxu0 0
      %2479 = vmatpush.bf16.msra.mxu0 %v1628
      %2480 = vmatpush.bf16.msra.mxu0 %v1626
      %2481 = vmatmul.bf16.gmra.mxu0 %v1482
      %v2482 = vpop.f32.mrf.mxu0
      %v2483 = vadd.f32 0.0, %v2482
      %v2484 = vpop.f32.mrf.mxu0
      %v2485 = vadd.f32 0.0, %v2484
      %2486 = vmatmul.bf16.gmra.mxu0 %v1485
      %v2487 = vpop.f32.mrf.mxu0
      %v2488 = vadd.f32 0.0, %v2487
      %v2489 = vpop.f32.mrf.mxu0
      %v2490 = vadd.f32 0.0, %v2489
      %2491 = vmatmul.bf16.gmra.mxu0 %v1488
      %v2492 = vpop.f32.mrf.mxu0
      %v2493 = vadd.f32 0.0, %v2492
      %v2494 = vpop.f32.mrf.mxu0
      %v2495 = vadd.f32 0.0, %v2494
      %2496 = vmatmul.bf16.gmra.mxu0 %v1491
      %v2497 = vpop.f32.mrf.mxu0
      %v2498 = vadd.f32 0.0, %v2497
      %v2499 = vpop.f32.mrf.mxu0
      %v2500 = vadd.f32 0.0, %v2499
      %2501 = vdwg.mxu0
      %v2502 = vadd.f32 %v2428, %v2454
      %v2503 = vadd.f32 %v2429, %v2483
      %v2504 = vadd.f32 %v2430, %v2456
      %v2505 = vadd.f32 %v2431, %v2485
      %v2506 = vadd.f32 %v2432, %v2459
      %v2507 = vadd.f32 %v2433, %v2488
      %v2508 = vadd.f32 %v2434, %v2461
      %v2509 = vadd.f32 %v2435, %v2490
      %v2510 = vadd.f32 %v2436, %v2464
      %v2511 = vadd.f32 %v2437, %v2493
      %v2512 = vadd.f32 %v2438, %v2466
      %v2513 = vadd.f32 %v2439, %v2495
      %v2514 = vadd.f32 %v2440, %v2469
      %v2515 = vadd.f32 %v2441, %v2498
      %v2516 = vadd.f32 %v2442, %v2471
      %v2517 = vadd.f32 %v2443, %v2500
      %2518 = vmatpush.bf16.msra.mxu0 0
      %2519 = vmatpush.bf16.msra.mxu0 0
      %2520 = vmatpush.bf16.msra.mxu0 0
      %2521 = vmatpush.bf16.msra.mxu0 0
      %2522 = vmatpush.bf16.msra.mxu0 0
      %2523 = vmatpush.bf16.msra.mxu0 0
      %2524 = vmatpush.bf16.msra.mxu0 %v1758
      %2525 = vmatpush.bf16.msra.mxu0 %v1757
      %2526 = vmatmul.bf16.gmra.mxu0 %v1634
      %v2527 = vpop.f32.mrf.mxu0
      %v2528 = vadd.f32 0.0, %v2527
      %v2529 = vpop.f32.mrf.mxu0
      %v2530 = vadd.f32 0.0, %v2529
      %2531 = vmatmul.bf16.gmra.mxu0 %v1637
      %v2532 = vpop.f32.mrf.mxu0
      %v2533 = vadd.f32 0.0, %v2532
      %v2534 = vpop.f32.mrf.mxu0
      %v2535 = vadd.f32 0.0, %v2534
      %2536 = vmatmul.bf16.gmra.mxu0 %v1640
      %v2537 = vpop.f32.mrf.mxu0
      %v2538 = vadd.f32 0.0, %v2537
      %v2539 = vpop.f32.mrf.mxu0
      %v2540 = vadd.f32 0.0, %v2539
      %2541 = vmatmul.bf16.gmra.mxu0 %v1643
      %v2542 = vpop.f32.mrf.mxu0
      %v2543 = vadd.f32 0.0, %v2542
      %v2544 = vpop.f32.mrf.mxu0
      %v2545 = vadd.f32 0.0, %v2544
      %2546 = vdwg.mxu0
      %2547 = vmatpush.bf16.msra.mxu0 0
      %2548 = vmatpush.bf16.msra.mxu0 0
      %2549 = vmatpush.bf16.msra.mxu0 0
      %2550 = vmatpush.bf16.msra.mxu0 0
      %2551 = vmatpush.bf16.msra.mxu0 0
      %2552 = vmatpush.bf16.msra.mxu0 0
      %2553 = vmatpush.bf16.msra.mxu0 %v1755
      %2554 = vmatpush.bf16.msra.mxu0 %v1751
      %2555 = vmatmul.bf16.gmra.mxu0 %v1634
      %v2556 = vpop.f32.mrf.mxu0
      %v2557 = vadd.f32 0.0, %v2556
      %v2558 = vpop.f32.mrf.mxu0
      %v2559 = vadd.f32 0.0, %v2558
      %2560 = vmatmul.bf16.gmra.mxu0 %v1637
      %v2561 = vpop.f32.mrf.mxu0
      %v2562 = vadd.f32 0.0, %v2561
      %v2563 = vpop.f32.mrf.mxu0
      %v2564 = vadd.f32 0.0, %v2563
      %2565 = vmatmul.bf16.gmra.mxu0 %v1640
      %v2566 = vpop.f32.mrf.mxu0
      %v2567 = vadd.f32 0.0, %v2566
      %v2568 = vpop.f32.mrf.mxu0
      %v2569 = vadd.f32 0.0, %v2568
      %2570 = vmatmul.bf16.gmra.mxu0 %v1643
      %v2571 = vpop.f32.mrf.mxu0
      %v2572 = vadd.f32 0.0, %v2571
      %v2573 = vpop.f32.mrf.mxu0
      %v2574 = vadd.f32 0.0, %v2573
      %2575 = vdwg.mxu0
      %v2576 = vadd.f32 %v2502, %v2528
      %v2577 = vadd.f32 %v2503, %v2557
      %v2578 = vadd.f32 %v2504, %v2530
      %v2579 = vadd.f32 %v2505, %v2559
      %v2580 = vadd.f32 %v2506, %v2533
      %v2581 = vadd.f32 %v2507, %v2562
      %v2582 = vadd.f32 %v2508, %v2535
      %v2583 = vadd.f32 %v2509, %v2564
      %v2584 = vadd.f32 %v2510, %v2538
      %v2585 = vadd.f32 %v2511, %v2567
      %v2586 = vadd.f32 %v2512, %v2540
      %v2587 = vadd.f32 %v2513, %v2569
      %v2588 = vadd.f32 %v2514, %v2543
      %v2589 = vadd.f32 %v2515, %v2572
      %v2590 = vadd.f32 %v2516, %v2545
      %v2591 = vadd.f32 %v2517, %v2574
      %2592 = vrot.lane.b32.xlu0 %v1464, 4
      %v2593 = vpop.permute.xlu0 %2592
      %2594 = vrot.lane.b32.xlu0 %v1608, 4
      %v2595 = vpop.permute.xlu0 %2594
      %2596 = vrot.lane.b32.xlu0 %v1609, 4
      %v2597 = vpop.permute.xlu0 %2596
      %2598 = vrot.lane.b32.xlu0 %v1465, 4
      %v2599 = vpop.permute.xlu0 %2598
      %2600 = vrot.lane.b32.xlu0 %v1610, 4
      %v2601 = vpop.permute.xlu0 %2600
      %2602 = vrot.lane.b32.xlu0 %v1611, 4
      %v2603 = vpop.permute.xlu0 %2602
      %vm2604 = vcmask 31744
      %v2605 = vsel %vm2604, %v2593, %v2595
      %v2606 = vsel %vm2604, %v2595, %v2597
      %v2607 = vsel %vm2604, %v2599, %v2601
      %v2608 = vsel %vm2604, %v2601, %v2603
      %2613 = vmatpush.bf16.msra.mxu0 0
      %2614 = vmatpush.bf16.msra.mxu0 0
      %2615 = vmatpush.bf16.msra.mxu0 0
      %2616 = vmatpush.bf16.msra.mxu0 0
      %2617 = vmatpush.bf16.msra.mxu0 0
      %2618 = vmatpush.bf16.msra.mxu0 0
      %2619 = vmatpush.bf16.msra.mxu0 %v2607
      %2620 = vmatpush.bf16.msra.mxu0 %v2605
      %2621 = vmatmul.bf16.gmra.mxu0 %v1764
      %v2622 = vpop.f32.mrf.mxu0
      %v2623 = vadd.f32 0.0, %v2622
      %v2624 = vpop.f32.mrf.mxu0
      %v2625 = vadd.f32 0.0, %v2624
      %2626 = vmatmul.bf16.gmra.mxu0 %v1767
      %v2627 = vpop.f32.mrf.mxu0
      %v2628 = vadd.f32 0.0, %v2627
      %v2629 = vpop.f32.mrf.mxu0
      %v2630 = vadd.f32 0.0, %v2629
      %2631 = vmatmul.bf16.gmra.mxu0 %v1770
      %v2632 = vpop.f32.mrf.mxu0
      %v2633 = vadd.f32 0.0, %v2632
      %v2634 = vpop.f32.mrf.mxu0
      %v2635 = vadd.f32 0.0, %v2634
      %2636 = vmatmul.bf16.gmra.mxu0 %v1773
      %v2637 = vpop.f32.mrf.mxu0
      %v2638 = vadd.f32 0.0, %v2637
      %v2639 = vpop.f32.mrf.mxu0
      %v2640 = vadd.f32 0.0, %v2639
      %2641 = vdwg.mxu0
      %2642 = vmatpush.bf16.msra.mxu0 0
      %2643 = vmatpush.bf16.msra.mxu0 0
      %2644 = vmatpush.bf16.msra.mxu0 0
      %2645 = vmatpush.bf16.msra.mxu0 0
      %2646 = vmatpush.bf16.msra.mxu0 0
      %2647 = vmatpush.bf16.msra.mxu0 0
      %2648 = vmatpush.bf16.msra.mxu0 %v2608
      %2649 = vmatpush.bf16.msra.mxu0 %v2606
      %2650 = vmatmul.bf16.gmra.mxu0 %v1764
      %v2651 = vpop.f32.mrf.mxu0
      %v2652 = vadd.f32 0.0, %v2651
      %v2653 = vpop.f32.mrf.mxu0
      %v2654 = vadd.f32 0.0, %v2653
      %2655 = vmatmul.bf16.gmra.mxu0 %v1767
      %v2656 = vpop.f32.mrf.mxu0
      %v2657 = vadd.f32 0.0, %v2656
      %v2658 = vpop.f32.mrf.mxu0
      %v2659 = vadd.f32 0.0, %v2658
      %2660 = vmatmul.bf16.gmra.mxu0 %v1770
      %v2661 = vpop.f32.mrf.mxu0
      %v2662 = vadd.f32 0.0, %v2661
      %v2663 = vpop.f32.mrf.mxu0
      %v2664 = vadd.f32 0.0, %v2663
      %2665 = vmatmul.bf16.gmra.mxu0 %v1773
      %v2666 = vpop.f32.mrf.mxu0
      %v2667 = vadd.f32 0.0, %v2666
      %v2668 = vpop.f32.mrf.mxu0
      %v2669 = vadd.f32 0.0, %v2668
      %2670 = vdwg.mxu0
      %v2671 = vadd.f32 %v2576, %v2623
      %v2672 = vadd.f32 %v2577, %v2652
      %v2673 = vadd.f32 %v2578, %v2625
      %v2674 = vadd.f32 %v2579, %v2654
      %v2675 = vadd.f32 %v2580, %v2628
      %v2676 = vadd.f32 %v2581, %v2657
      %v2677 = vadd.f32 %v2582, %v2630
      %v2678 = vadd.f32 %v2583, %v2659
      %v2679 = vadd.f32 %v2584, %v2633
      %v2680 = vadd.f32 %v2585, %v2662
      %v2681 = vadd.f32 %v2586, %v2635
      %v2682 = vadd.f32 %v2587, %v2664
      %v2683 = vadd.f32 %v2588, %v2638
      %v2684 = vadd.f32 %v2589, %v2667
      %v2685 = vadd.f32 %v2590, %v2640
      %v2686 = vadd.f32 %v2591, %v2669
      %2687 = vmatpush.bf16.msra.mxu0 0
      %2688 = vmatpush.bf16.msra.mxu0 0
      %2689 = vmatpush.bf16.msra.mxu0 0
      %2690 = vmatpush.bf16.msra.mxu0 0
      %2691 = vmatpush.bf16.msra.mxu0 0
      %2692 = vmatpush.bf16.msra.mxu0 0
      %2693 = vmatpush.bf16.msra.mxu0 %v2018
      %2694 = vmatpush.bf16.msra.mxu0 %v2017
      %2695 = vmatmul.bf16.gmra.mxu0 %v1894
      %v2696 = vpop.f32.mrf.mxu0
      %v2697 = vadd.f32 0.0, %v2696
      %v2698 = vpop.f32.mrf.mxu0
      %v2699 = vadd.f32 0.0, %v2698
      %2700 = vmatmul.bf16.gmra.mxu0 %v1897
      %v2701 = vpop.f32.mrf.mxu0
      %v2702 = vadd.f32 0.0, %v2701
      %v2703 = vpop.f32.mrf.mxu0
      %v2704 = vadd.f32 0.0, %v2703
      %2705 = vmatmul.bf16.gmra.mxu0 %v1900
      %v2706 = vpop.f32.mrf.mxu0
      %v2707 = vadd.f32 0.0, %v2706
      %v2708 = vpop.f32.mrf.mxu0
      %v2709 = vadd.f32 0.0, %v2708
      %2710 = vmatmul.bf16.gmra.mxu0 %v1903
      %v2711 = vpop.f32.mrf.mxu0
      %v2712 = vadd.f32 0.0, %v2711
      %v2713 = vpop.f32.mrf.mxu0
      %v2714 = vadd.f32 0.0, %v2713
      %2715 = vdwg.mxu0
      %2716 = vmatpush.bf16.msra.mxu0 0
      %2717 = vmatpush.bf16.msra.mxu0 0
      %2718 = vmatpush.bf16.msra.mxu0 0
      %2719 = vmatpush.bf16.msra.mxu0 0
      %2720 = vmatpush.bf16.msra.mxu0 0
      %2721 = vmatpush.bf16.msra.mxu0 0
      %2722 = vmatpush.bf16.msra.mxu0 %v2015
      %2723 = vmatpush.bf16.msra.mxu0 %v2011
      %2724 = vmatmul.bf16.gmra.mxu0 %v1894
      %v2725 = vpop.f32.mrf.mxu0
      %v2726 = vadd.f32 0.0, %v2725
      %v2727 = vpop.f32.mrf.mxu0
      %v2728 = vadd.f32 0.0, %v2727
      %2729 = vmatmul.bf16.gmra.mxu0 %v1897
      %v2730 = vpop.f32.mrf.mxu0
      %v2731 = vadd.f32 0.0, %v2730
      %v2732 = vpop.f32.mrf.mxu0
      %v2733 = vadd.f32 0.0, %v2732
      %2734 = vmatmul.bf16.gmra.mxu0 %v1900
      %v2735 = vpop.f32.mrf.mxu0
      %v2736 = vadd.f32 0.0, %v2735
      %v2737 = vpop.f32.mrf.mxu0
      %v2738 = vadd.f32 0.0, %v2737
      %2739 = vmatmul.bf16.gmra.mxu0 %v1903
      %v2740 = vpop.f32.mrf.mxu0
      %v2741 = vadd.f32 0.0, %v2740
      %v2742 = vpop.f32.mrf.mxu0
      %v2743 = vadd.f32 0.0, %v2742
      %2744 = vdwg.mxu0
      %v2745 = vadd.f32 %v2671, %v2697
      %v2746 = vadd.f32 %v2672, %v2726
      %v2747 = vadd.f32 %v2673, %v2699
      %v2748 = vadd.f32 %v2674, %v2728
      %v2749 = vadd.f32 %v2675, %v2702
      %v2750 = vadd.f32 %v2676, %v2731
      %v2751 = vadd.f32 %v2677, %v2704
      %v2752 = vadd.f32 %v2678, %v2733
      %v2753 = vadd.f32 %v2679, %v2707
      %v2754 = vadd.f32 %v2680, %v2736
      %v2755 = vadd.f32 %v2681, %v2709
      %v2756 = vadd.f32 %v2682, %v2738
      %v2757 = vadd.f32 %v2683, %v2712
      %v2758 = vadd.f32 %v2684, %v2741
      %v2759 = vadd.f32 %v2685, %v2714
      %v2760 = vadd.f32 %v2686, %v2743
      %2761 = vmatpush.bf16.msra.mxu0 0
      %2762 = vmatpush.bf16.msra.mxu0 0
      %2763 = vmatpush.bf16.msra.mxu0 0
      %2764 = vmatpush.bf16.msra.mxu0 0
      %2765 = vmatpush.bf16.msra.mxu0 0
      %2766 = vmatpush.bf16.msra.mxu0 0
      %2767 = vmatpush.bf16.msra.mxu0 %v2148
      %2768 = vmatpush.bf16.msra.mxu0 %v2147
      %2769 = vmatmul.bf16.gmra.mxu0 %v2024
      %v2770 = vpop.f32.mrf.mxu0
      %v2771 = vadd.f32 0.0, %v2770
      %v2772 = vpop.f32.mrf.mxu0
      %v2773 = vadd.f32 0.0, %v2772
      %2774 = vmatmul.bf16.gmra.mxu0 %v2027
      %v2775 = vpop.f32.mrf.mxu0
      %v2776 = vadd.f32 0.0, %v2775
      %v2777 = vpop.f32.mrf.mxu0
      %v2778 = vadd.f32 0.0, %v2777
      %2779 = vmatmul.bf16.gmra.mxu0 %v2030
      %v2780 = vpop.f32.mrf.mxu0
      %v2781 = vadd.f32 0.0, %v2780
      %v2782 = vpop.f32.mrf.mxu0
      %v2783 = vadd.f32 0.0, %v2782
      %2784 = vmatmul.bf16.gmra.mxu0 %v2033
      %v2785 = vpop.f32.mrf.mxu0
      %v2786 = vadd.f32 0.0, %v2785
      %v2787 = vpop.f32.mrf.mxu0
      %v2788 = vadd.f32 0.0, %v2787
      %2789 = vdwg.mxu0
      %2790 = vmatpush.bf16.msra.mxu0 0
      %2791 = vmatpush.bf16.msra.mxu0 0
      %2792 = vmatpush.bf16.msra.mxu0 0
      %2793 = vmatpush.bf16.msra.mxu0 0
      %2794 = vmatpush.bf16.msra.mxu0 0
      %2795 = vmatpush.bf16.msra.mxu0 0
      %2796 = vmatpush.bf16.msra.mxu0 %v2145
      %2797 = vmatpush.bf16.msra.mxu0 %v2141
      %2798 = vmatmul.bf16.gmra.mxu0 %v2024
      %v2799 = vpop.f32.mrf.mxu0
      %v2800 = vadd.f32 0.0, %v2799
      %v2801 = vpop.f32.mrf.mxu0
      %v2802 = vadd.f32 0.0, %v2801
      %2803 = vmatmul.bf16.gmra.mxu0 %v2027
      %v2804 = vpop.f32.mrf.mxu0
      %v2805 = vadd.f32 0.0, %v2804
      %v2806 = vpop.f32.mrf.mxu0
      %v2807 = vadd.f32 0.0, %v2806
      %2808 = vmatmul.bf16.gmra.mxu0 %v2030
      %v2809 = vpop.f32.mrf.mxu0
      %v2810 = vadd.f32 0.0, %v2809
      %v2811 = vpop.f32.mrf.mxu0
      %v2812 = vadd.f32 0.0, %v2811
      %2813 = vmatmul.bf16.gmra.mxu0 %v2033
      %v2814 = vpop.f32.mrf.mxu0
      %v2815 = vadd.f32 0.0, %v2814
      %v2816 = vpop.f32.mrf.mxu0
      %v2817 = vadd.f32 0.0, %v2816
      %2818 = vdwg.mxu0
      %v2819 = vadd.f32 %v2745, %v2771
      %v2820 = vadd.f32 %v2746, %v2800
      %v2821 = vadd.f32 %v2747, %v2773
      %v2822 = vadd.f32 %v2748, %v2802
      %v2823 = vadd.f32 %v2749, %v2776
      %v2824 = vadd.f32 %v2750, %v2805
      %v2825 = vadd.f32 %v2751, %v2778
      %v2826 = vadd.f32 %v2752, %v2807
      %v2827 = vadd.f32 %v2753, %v2781
      %v2828 = vadd.f32 %v2754, %v2810
      %v2829 = vadd.f32 %v2755, %v2783
      %v2830 = vadd.f32 %v2756, %v2812
      %v2831 = vadd.f32 %v2757, %v2786
      %v2832 = vadd.f32 %v2758, %v2815
      %v2833 = vadd.f32 %v2759, %v2788
      %v2834 = vadd.f32 %v2760, %v2817
      %2835 = vrot.lane.b32.xlu0 %v1111, 73
      %v2836 = vpop.permute.xlu0 %2835
      %2837 = vrot.lane.b32.xlu0 %v1112, 73
      %v2838 = vpop.permute.xlu0 %2837
      %2839 = vrot.lane.b32.xlu0 %v1113, 73
      %v2840 = vpop.permute.xlu0 %2839
      %2841 = vrot.lane.b32.xlu0 %v1114, 73
      %v2842 = vpop.permute.xlu0 %2841
      %vm2843 = vcmask 596992
      %v2844 = vsel %vm2843, %v2836, %v2838
      %v2845 = vsel %vm2843, %v2840, %v2842
      %2850 = vmatpush.bf16.msra.mxu0 0
      %2851 = vmatpush.bf16.msra.mxu0 0
      %2852 = vmatpush.bf16.msra.mxu0 0
      %2853 = vmatpush.bf16.msra.mxu0 0
      %2854 = vmatpush.bf16.msra.mxu0 0
      %2855 = vmatpush.bf16.msra.mxu0 0
      %2856 = vmatpush.bf16.msra.mxu0 %v2845
      %2857 = vmatpush.bf16.msra.mxu0 %v2844
      %2858 = vmatmul.bf16.gmra.mxu0 %v2154
      %v2859 = vpop.f32.mrf.mxu0
      %v2860 = vadd.f32 0.0, %v2859
      %v2861 = vpop.f32.mrf.mxu0
      %v2862 = vadd.f32 0.0, %v2861
      %2863 = vmatmul.bf16.gmra.mxu0 %v2157
      %v2864 = vpop.f32.mrf.mxu0
      %v2865 = vadd.f32 0.0, %v2864
      %v2866 = vpop.f32.mrf.mxu0
      %v2867 = vadd.f32 0.0, %v2866
      %2868 = vmatmul.bf16.gmra.mxu0 %v2160
      %v2869 = vpop.f32.mrf.mxu0
      %v2870 = vadd.f32 0.0, %v2869
      %v2871 = vpop.f32.mrf.mxu0
      %v2872 = vadd.f32 0.0, %v2871
      %2873 = vmatmul.bf16.gmra.mxu0 %v2163
      %v2874 = vpop.f32.mrf.mxu0
      %v2875 = vadd.f32 0.0, %v2874
      %v2876 = vpop.f32.mrf.mxu0
      %v2877 = vadd.f32 0.0, %v2876
      %2878 = vdwg.mxu0
      %2879 = vmatpush.bf16.msra.mxu0 0
      %2880 = vmatpush.bf16.msra.mxu0 0
      %2881 = vmatpush.bf16.msra.mxu0 0
      %2882 = vmatpush.bf16.msra.mxu0 0
      %2883 = vmatpush.bf16.msra.mxu0 0
      %2884 = vmatpush.bf16.msra.mxu0 0
      %2885 = vmatpush.bf16.msra.mxu0 %v2842
      %2886 = vmatpush.bf16.msra.mxu0 %v2838
      %2887 = vmatmul.bf16.gmra.mxu0 %v2154
      %v2888 = vpop.f32.mrf.mxu0
      %v2889 = vadd.f32 0.0, %v2888
      %v2890 = vpop.f32.mrf.mxu0
      %v2891 = vadd.f32 0.0, %v2890
      %2892 = vmatmul.bf16.gmra.mxu0 %v2157
      %v2893 = vpop.f32.mrf.mxu0
      %v2894 = vadd.f32 0.0, %v2893
      %v2895 = vpop.f32.mrf.mxu0
      %v2896 = vadd.f32 0.0, %v2895
      %2897 = vmatmul.bf16.gmra.mxu0 %v2160
      %v2898 = vpop.f32.mrf.mxu0
      %v2899 = vadd.f32 0.0, %v2898
      %v2900 = vpop.f32.mrf.mxu0
      %v2901 = vadd.f32 0.0, %v2900
      %2902 = vmatmul.bf16.gmra.mxu0 %v2163
      %v2903 = vpop.f32.mrf.mxu0
      %v2904 = vadd.f32 0.0, %v2903
      %v2905 = vpop.f32.mrf.mxu0
      %v2906 = vadd.f32 0.0, %v2905
      %2907 = vdwg.mxu0
      %v2908 = vadd.f32 %v2819, %v2860
      %v2909 = vadd.f32 %v2820, %v2889
      %v2910 = vadd.f32 %v2821, %v2862
      %v2911 = vadd.f32 %v2822, %v2891
      %v2912 = vadd.f32 %v2823, %v2865
      %v2913 = vadd.f32 %v2824, %v2894
      %v2914 = vadd.f32 %v2825, %v2867
      %v2915 = vadd.f32 %v2826, %v2896
      %v2916 = vadd.f32 %v2827, %v2870
      %v2917 = vadd.f32 %v2828, %v2899
      %v2918 = vadd.f32 %v2829, %v2872
      %v2919 = vadd.f32 %v2830, %v2901
      %v2920 = vadd.f32 %v2831, %v2875
      %v2921 = vadd.f32 %v2832, %v2904
      %v2922 = vadd.f32 %v2833, %v2877
      %v2923 = vadd.f32 %v2834, %v2906
      %v2924 = vmax.f32 %v2223, %v2908
      %v2925 = vmax.f32 %v2224, %v2909
      %v2926 = vmax.f32 %v2225, %v2910
      %v2927 = vmax.f32 %v2226, %v2911
      %v2928 = vmax.f32 %v2227, %v2912
      %v2929 = vmax.f32 %v2228, %v2913
      %v2930 = vmax.f32 %v2229, %v2914
      %v2931 = vmax.f32 %v2230, %v2915
      %v2932 = vmax.f32 %v2231, %v2916
      %v2933 = vmax.f32 %v2232, %v2917
      %v2934 = vmax.f32 %v2233, %v2918
      %v2935 = vmax.f32 %v2234, %v2919
      %v2936 = vmax.f32 %v2235, %v2920
      %v2937 = vmax.f32 %v2236, %v2921
      %v2938 = vmax.f32 %v2237, %v2922
      %v2939 = vmax.f32 %v2238, %v2923
      %2940 = vmatpush.bf16.msra.mxu0 0
      %2941 = vmatpush.bf16.msra.mxu0 0
      %2942 = vmatpush.bf16.msra.mxu0 0
      %2943 = vmatpush.bf16.msra.mxu0 0
      %2944 = vmatpush.bf16.msra.mxu0 0
      %2945 = vmatpush.bf16.msra.mxu0 0
      %2946 = vmatpush.bf16.msra.mxu0 %v1627
      %2947 = vmatpush.bf16.msra.mxu0 %v1625
      %2948 = vmatmul.bf16.gmra.mxu0 %v1132
      %v2949 = vpop.f32.mrf.mxu0
      %v2950 = vadd.f32 0.0, %v2949
      %v2951 = vpop.f32.mrf.mxu0
      %v2952 = vadd.f32 0.0, %v2951
      %2953 = vmatmul.bf16.gmra.mxu0 %v1135
      %v2954 = vpop.f32.mrf.mxu0
      %v2955 = vadd.f32 0.0, %v2954
      %v2956 = vpop.f32.mrf.mxu0
      %v2957 = vadd.f32 0.0, %v2956
      %2958 = vmatmul.bf16.gmra.mxu0 %v1138
      %v2959 = vpop.f32.mrf.mxu0
      %v2960 = vadd.f32 0.0, %v2959
      %v2961 = vpop.f32.mrf.mxu0
      %v2962 = vadd.f32 0.0, %v2961
      %2963 = vmatmul.bf16.gmra.mxu0 %v1141
      %v2964 = vpop.f32.mrf.mxu0
      %v2965 = vadd.f32 0.0, %v2964
      %v2966 = vpop.f32.mrf.mxu0
      %v2967 = vadd.f32 0.0, %v2966
      %2968 = vdwg.mxu0
      %2969 = vmatpush.bf16.msra.mxu0 0
      %2970 = vmatpush.bf16.msra.mxu0 0
      %2971 = vmatpush.bf16.msra.mxu0 0
      %2972 = vmatpush.bf16.msra.mxu0 0
      %2973 = vmatpush.bf16.msra.mxu0 0
      %2974 = vmatpush.bf16.msra.mxu0 0
      %2975 = vmatpush.bf16.msra.mxu0 %v1628
      %2976 = vmatpush.bf16.msra.mxu0 %v1626
      %2977 = vmatmul.bf16.gmra.mxu0 %v1132
      %v2978 = vpop.f32.mrf.mxu0
      %v2979 = vadd.f32 0.0, %v2978
      %v2980 = vpop.f32.mrf.mxu0
      %v2981 = vadd.f32 0.0, %v2980
      %2982 = vmatmul.bf16.gmra.mxu0 %v1135
      %v2983 = vpop.f32.mrf.mxu0
      %v2984 = vadd.f32 0.0, %v2983
      %v2985 = vpop.f32.mrf.mxu0
      %v2986 = vadd.f32 0.0, %v2985
      %2987 = vmatmul.bf16.gmra.mxu0 %v1138
      %v2988 = vpop.f32.mrf.mxu0
      %v2989 = vadd.f32 0.0, %v2988
      %v2990 = vpop.f32.mrf.mxu0
      %v2991 = vadd.f32 0.0, %v2990
      %2992 = vmatmul.bf16.gmra.mxu0 %v1141
      %v2993 = vpop.f32.mrf.mxu0
      %v2994 = vadd.f32 0.0, %v2993
      %v2995 = vpop.f32.mrf.mxu0
      %v2996 = vadd.f32 0.0, %v2995
      %2997 = vdwg.mxu0
      %2998 = vmatpush.bf16.msra.mxu0 0
      %2999 = vmatpush.bf16.msra.mxu0 0
      %3000 = vmatpush.bf16.msra.mxu0 0
      %3001 = vmatpush.bf16.msra.mxu0 0
      %3002 = vmatpush.bf16.msra.mxu0 0
      %3003 = vmatpush.bf16.msra.mxu0 0
      %3004 = vmatpush.bf16.msra.mxu0 %v1476
      %3005 = vmatpush.bf16.msra.mxu0 %v1475
      %3006 = vmatmul.bf16.gmra.mxu0 %v1232
      %v3007 = vpop.f32.mrf.mxu0
      %v3008 = vadd.f32 %v2950, %v3007
      %v3009 = vpop.f32.mrf.mxu0
      %v3010 = vadd.f32 %v2952, %v3009
      %3011 = vmatmul.bf16.gmra.mxu0 %v1235
      %v3012 = vpop.f32.mrf.mxu0
      %v3013 = vadd.f32 %v2955, %v3012
      %v3014 = vpop.f32.mrf.mxu0
      %v3015 = vadd.f32 %v2957, %v3014
      %3016 = vmatmul.bf16.gmra.mxu0 %v1238
      %v3017 = vpop.f32.mrf.mxu0
      %v3018 = vadd.f32 %v2960, %v3017
      %v3019 = vpop.f32.mrf.mxu0
      %v3020 = vadd.f32 %v2962, %v3019
      %3021 = vmatmul.bf16.gmra.mxu0 %v1241
      %v3022 = vpop.f32.mrf.mxu0
      %v3023 = vadd.f32 %v2965, %v3022
      %v3024 = vpop.f32.mrf.mxu0
      %v3025 = vadd.f32 %v2967, %v3024
      %3026 = vdwg.mxu0
      %3027 = vmatpush.bf16.msra.mxu0 0
      %3028 = vmatpush.bf16.msra.mxu0 0
      %3029 = vmatpush.bf16.msra.mxu0 0
      %3030 = vmatpush.bf16.msra.mxu0 0
      %3031 = vmatpush.bf16.msra.mxu0 0
      %3032 = vmatpush.bf16.msra.mxu0 0
      %3033 = vmatpush.bf16.msra.mxu0 %v1473
      %3034 = vmatpush.bf16.msra.mxu0 %v1469
      %3035 = vmatmul.bf16.gmra.mxu0 %v1232
      %v3036 = vpop.f32.mrf.mxu0
      %v3037 = vadd.f32 %v2979, %v3036
      %v3038 = vpop.f32.mrf.mxu0
      %v3039 = vadd.f32 %v2981, %v3038
      %3040 = vmatmul.bf16.gmra.mxu0 %v1235
      %v3041 = vpop.f32.mrf.mxu0
      %v3042 = vadd.f32 %v2984, %v3041
      %v3043 = vpop.f32.mrf.mxu0
      %v3044 = vadd.f32 %v2986, %v3043
      %3045 = vmatmul.bf16.gmra.mxu0 %v1238
      %v3046 = vpop.f32.mrf.mxu0
      %v3047 = vadd.f32 %v2989, %v3046
      %v3048 = vpop.f32.mrf.mxu0
      %v3049 = vadd.f32 %v2991, %v3048
      %3050 = vmatmul.bf16.gmra.mxu0 %v1241
      %v3051 = vpop.f32.mrf.mxu0
      %v3052 = vadd.f32 %v2994, %v3051
      %v3053 = vpop.f32.mrf.mxu0
      %v3054 = vadd.f32 %v2996, %v3053
      %3055 = vdwg.mxu0
      %3056 = vmatpush.bf16.msra.mxu0 0
      %3057 = vmatpush.bf16.msra.mxu0 0
      %3058 = vmatpush.bf16.msra.mxu0 0
      %3059 = vmatpush.bf16.msra.mxu0 0
      %3060 = vmatpush.bf16.msra.mxu0 0
      %3061 = vmatpush.bf16.msra.mxu0 0
      %3062 = vmatpush.bf16.msra.mxu0 %v1758
      %3063 = vmatpush.bf16.msra.mxu0 %v1757
      %3064 = vmatmul.bf16.gmra.mxu0 %v1346
      %v3065 = vpop.f32.mrf.mxu0
      %v3066 = vadd.f32 0.0, %v3065
      %v3067 = vpop.f32.mrf.mxu0
      %v3068 = vadd.f32 0.0, %v3067
      %3069 = vmatmul.bf16.gmra.mxu0 %v1349
      %v3070 = vpop.f32.mrf.mxu0
      %v3071 = vadd.f32 0.0, %v3070
      %v3072 = vpop.f32.mrf.mxu0
      %v3073 = vadd.f32 0.0, %v3072
      %3074 = vmatmul.bf16.gmra.mxu0 %v1352
      %v3075 = vpop.f32.mrf.mxu0
      %v3076 = vadd.f32 0.0, %v3075
      %v3077 = vpop.f32.mrf.mxu0
      %v3078 = vadd.f32 0.0, %v3077
      %3079 = vmatmul.bf16.gmra.mxu0 %v1355
      %v3080 = vpop.f32.mrf.mxu0
      %v3081 = vadd.f32 0.0, %v3080
      %v3082 = vpop.f32.mrf.mxu0
      %v3083 = vadd.f32 0.0, %v3082
      %3084 = vdwg.mxu0
      %3085 = vmatpush.bf16.msra.mxu0 0
      %3086 = vmatpush.bf16.msra.mxu0 0
      %3087 = vmatpush.bf16.msra.mxu0 0
      %3088 = vmatpush.bf16.msra.mxu0 0
      %3089 = vmatpush.bf16.msra.mxu0 0
      %3090 = vmatpush.bf16.msra.mxu0 0
      %3091 = vmatpush.bf16.msra.mxu0 %v1755
      %3092 = vmatpush.bf16.msra.mxu0 %v1751
      %3093 = vmatmul.bf16.gmra.mxu0 %v1346
      %v3094 = vpop.f32.mrf.mxu0
      %v3095 = vadd.f32 0.0, %v3094
      %v3096 = vpop.f32.mrf.mxu0
      %v3097 = vadd.f32 0.0, %v3096
      %3098 = vmatmul.bf16.gmra.mxu0 %v1349
      %v3099 = vpop.f32.mrf.mxu0
      %v3100 = vadd.f32 0.0, %v3099
      %v3101 = vpop.f32.mrf.mxu0
      %v3102 = vadd.f32 0.0, %v3101
      %3103 = vmatmul.bf16.gmra.mxu0 %v1352
      %v3104 = vpop.f32.mrf.mxu0
      %v3105 = vadd.f32 0.0, %v3104
      %v3106 = vpop.f32.mrf.mxu0
      %v3107 = vadd.f32 0.0, %v3106
      %3108 = vmatmul.bf16.gmra.mxu0 %v1355
      %v3109 = vpop.f32.mrf.mxu0
      %v3110 = vadd.f32 0.0, %v3109
      %v3111 = vpop.f32.mrf.mxu0
      %v3112 = vadd.f32 0.0, %v3111
      %3113 = vdwg.mxu0
      %v3114 = vadd.f32 %v3008, %v3066
      %v3115 = vadd.f32 %v3037, %v3095
      %v3116 = vadd.f32 %v3010, %v3068
      %v3117 = vadd.f32 %v3039, %v3097
      %v3118 = vadd.f32 %v3013, %v3071
      %v3119 = vadd.f32 %v3042, %v3100
      %v3120 = vadd.f32 %v3015, %v3073
      %v3121 = vadd.f32 %v3044, %v3102
      %v3122 = vadd.f32 %v3018, %v3076
      %v3123 = vadd.f32 %v3047, %v3105
      %v3124 = vadd.f32 %v3020, %v3078
      %v3125 = vadd.f32 %v3049, %v3107
      %v3126 = vadd.f32 %v3023, %v3081
      %v3127 = vadd.f32 %v3052, %v3110
      %v3128 = vadd.f32 %v3025, %v3083
      %v3129 = vadd.f32 %v3054, %v3112
      %3130 = vmatpush.bf16.msra.mxu0 0
      %3131 = vmatpush.bf16.msra.mxu0 0
      %3132 = vmatpush.bf16.msra.mxu0 0
      %3133 = vmatpush.bf16.msra.mxu0 0
      %3134 = vmatpush.bf16.msra.mxu0 0
      %3135 = vmatpush.bf16.msra.mxu0 0
      %3136 = vmatpush.bf16.msra.mxu0 %v1888
      %3137 = vmatpush.bf16.msra.mxu0 %v1887
      %3138 = vmatmul.bf16.gmra.mxu0 %v1482
      %v3139 = vpop.f32.mrf.mxu0
      %v3140 = vadd.f32 0.0, %v3139
      %v3141 = vpop.f32.mrf.mxu0
      %v3142 = vadd.f32 0.0, %v3141
      %3143 = vmatmul.bf16.gmra.mxu0 %v1485
      %v3144 = vpop.f32.mrf.mxu0
      %v3145 = vadd.f32 0.0, %v3144
      %v3146 = vpop.f32.mrf.mxu0
      %v3147 = vadd.f32 0.0, %v3146
      %3148 = vmatmul.bf16.gmra.mxu0 %v1488
      %v3149 = vpop.f32.mrf.mxu0
      %v3150 = vadd.f32 0.0, %v3149
      %v3151 = vpop.f32.mrf.mxu0
      %v3152 = vadd.f32 0.0, %v3151
      %3153 = vmatmul.bf16.gmra.mxu0 %v1491
      %v3154 = vpop.f32.mrf.mxu0
      %v3155 = vadd.f32 0.0, %v3154
      %v3156 = vpop.f32.mrf.mxu0
      %v3157 = vadd.f32 0.0, %v3156
      %3158 = vdwg.mxu0
      %3159 = vmatpush.bf16.msra.mxu0 0
      %3160 = vmatpush.bf16.msra.mxu0 0
      %3161 = vmatpush.bf16.msra.mxu0 0
      %3162 = vmatpush.bf16.msra.mxu0 0
      %3163 = vmatpush.bf16.msra.mxu0 0
      %3164 = vmatpush.bf16.msra.mxu0 0
      %3165 = vmatpush.bf16.msra.mxu0 %v1885
      %3166 = vmatpush.bf16.msra.mxu0 %v1881
      %3167 = vmatmul.bf16.gmra.mxu0 %v1482
      %v3168 = vpop.f32.mrf.mxu0
      %v3169 = vadd.f32 0.0, %v3168
      %v3170 = vpop.f32.mrf.mxu0
      %v3171 = vadd.f32 0.0, %v3170
      %3172 = vmatmul.bf16.gmra.mxu0 %v1485
      %v3173 = vpop.f32.mrf.mxu0
      %v3174 = vadd.f32 0.0, %v3173
      %v3175 = vpop.f32.mrf.mxu0
      %v3176 = vadd.f32 0.0, %v3175
      %3177 = vmatmul.bf16.gmra.mxu0 %v1488
      %v3178 = vpop.f32.mrf.mxu0
      %v3179 = vadd.f32 0.0, %v3178
      %v3180 = vpop.f32.mrf.mxu0
      %v3181 = vadd.f32 0.0, %v3180
      %3182 = vmatmul.bf16.gmra.mxu0 %v1491
      %v3183 = vpop.f32.mrf.mxu0
      %v3184 = vadd.f32 0.0, %v3183
      %v3185 = vpop.f32.mrf.mxu0
      %v3186 = vadd.f32 0.0, %v3185
      %3187 = vdwg.mxu0
      %v3188 = vadd.f32 %v3114, %v3140
      %v3189 = vadd.f32 %v3115, %v3169
      %v3190 = vadd.f32 %v3116, %v3142
      %v3191 = vadd.f32 %v3117, %v3171
      %v3192 = vadd.f32 %v3118, %v3145
      %v3193 = vadd.f32 %v3119, %v3174
      %v3194 = vadd.f32 %v3120, %v3147
      %v3195 = vadd.f32 %v3121, %v3176
      %v3196 = vadd.f32 %v3122, %v3150
      %v3197 = vadd.f32 %v3123, %v3179
      %v3198 = vadd.f32 %v3124, %v3152
      %v3199 = vadd.f32 %v3125, %v3181
      %v3200 = vadd.f32 %v3126, %v3155
      %v3201 = vadd.f32 %v3127, %v3184
      %v3202 = vadd.f32 %v3128, %v3157
      %v3203 = vadd.f32 %v3129, %v3186
      %3204 = vmatpush.bf16.msra.mxu0 0
      %3205 = vmatpush.bf16.msra.mxu0 0
      %3206 = vmatpush.bf16.msra.mxu0 0
      %3207 = vmatpush.bf16.msra.mxu0 0
      %3208 = vmatpush.bf16.msra.mxu0 0
      %3209 = vmatpush.bf16.msra.mxu0 0
      %3210 = vmatpush.bf16.msra.mxu0 %v2018
      %3211 = vmatpush.bf16.msra.mxu0 %v2017
      %3212 = vmatmul.bf16.gmra.mxu0 %v1634
      %v3213 = vpop.f32.mrf.mxu0
      %v3214 = vadd.f32 0.0, %v3213
      %v3215 = vpop.f32.mrf.mxu0
      %v3216 = vadd.f32 0.0, %v3215
      %3217 = vmatmul.bf16.gmra.mxu0 %v1637
      %v3218 = vpop.f32.mrf.mxu0
      %v3219 = vadd.f32 0.0, %v3218
      %v3220 = vpop.f32.mrf.mxu0
      %v3221 = vadd.f32 0.0, %v3220
      %3222 = vmatmul.bf16.gmra.mxu0 %v1640
      %v3223 = vpop.f32.mrf.mxu0
      %v3224 = vadd.f32 0.0, %v3223
      %v3225 = vpop.f32.mrf.mxu0
      %v3226 = vadd.f32 0.0, %v3225
      %3227 = vmatmul.bf16.gmra.mxu0 %v1643
      %v3228 = vpop.f32.mrf.mxu0
      %v3229 = vadd.f32 0.0, %v3228
      %v3230 = vpop.f32.mrf.mxu0
      %v3231 = vadd.f32 0.0, %v3230
      %3232 = vdwg.mxu0
      %3233 = vmatpush.bf16.msra.mxu0 0
      %3234 = vmatpush.bf16.msra.mxu0 0
      %3235 = vmatpush.bf16.msra.mxu0 0
      %3236 = vmatpush.bf16.msra.mxu0 0
      %3237 = vmatpush.bf16.msra.mxu0 0
      %3238 = vmatpush.bf16.msra.mxu0 0
      %3239 = vmatpush.bf16.msra.mxu0 %v2015
      %3240 = vmatpush.bf16.msra.mxu0 %v2011
      %3241 = vmatmul.bf16.gmra.mxu0 %v1634
      %v3242 = vpop.f32.mrf.mxu0
      %v3243 = vadd.f32 0.0, %v3242
      %v3244 = vpop.f32.mrf.mxu0
      %v3245 = vadd.f32 0.0, %v3244
      %3246 = vmatmul.bf16.gmra.mxu0 %v1637
      %v3247 = vpop.f32.mrf.mxu0
      %v3248 = vadd.f32 0.0, %v3247
      %v3249 = vpop.f32.mrf.mxu0
      %v3250 = vadd.f32 0.0, %v3249
      %3251 = vmatmul.bf16.gmra.mxu0 %v1640
      %v3252 = vpop.f32.mrf.mxu0
      %v3253 = vadd.f32 0.0, %v3252
      %v3254 = vpop.f32.mrf.mxu0
      %v3255 = vadd.f32 0.0, %v3254
      %3256 = vmatmul.bf16.gmra.mxu0 %v1643
      %v3257 = vpop.f32.mrf.mxu0
      %v3258 = vadd.f32 0.0, %v3257
      %v3259 = vpop.f32.mrf.mxu0
      %v3260 = vadd.f32 0.0, %v3259
      %3261 = vdwg.mxu0
      %v3262 = vadd.f32 %v3188, %v3214
      %v3263 = vadd.f32 %v3189, %v3243
      %v3264 = vadd.f32 %v3190, %v3216
      %v3265 = vadd.f32 %v3191, %v3245
      %v3266 = vadd.f32 %v3192, %v3219
      %v3267 = vadd.f32 %v3193, %v3248
      %v3268 = vadd.f32 %v3194, %v3221
      %v3269 = vadd.f32 %v3195, %v3250
      %v3270 = vadd.f32 %v3196, %v3224
      %v3271 = vadd.f32 %v3197, %v3253
      %v3272 = vadd.f32 %v3198, %v3226
      %v3273 = vadd.f32 %v3199, %v3255
      %v3274 = vadd.f32 %v3200, %v3229
      %v3275 = vadd.f32 %v3201, %v3258
      %v3276 = vadd.f32 %v3202, %v3231
      %v3277 = vadd.f32 %v3203, %v3260
      %3278 = vmatpush.bf16.msra.mxu0 0
      %3279 = vmatpush.bf16.msra.mxu0 0
      %3280 = vmatpush.bf16.msra.mxu0 0
      %3281 = vmatpush.bf16.msra.mxu0 0
      %3282 = vmatpush.bf16.msra.mxu0 0
      %3283 = vmatpush.bf16.msra.mxu0 0
      %3284 = vmatpush.bf16.msra.mxu0 %v2148
      %3285 = vmatpush.bf16.msra.mxu0 %v2147
      %3286 = vmatmul.bf16.gmra.mxu0 %v1764
      %v3287 = vpop.f32.mrf.mxu0
      %v3288 = vadd.f32 0.0, %v3287
      %v3289 = vpop.f32.mrf.mxu0
      %v3290 = vadd.f32 0.0, %v3289
      %3291 = vmatmul.bf16.gmra.mxu0 %v1767
      %v3292 = vpop.f32.mrf.mxu0
      %v3293 = vadd.f32 0.0, %v3292
      %v3294 = vpop.f32.mrf.mxu0
      %v3295 = vadd.f32 0.0, %v3294
      %3296 = vmatmul.bf16.gmra.mxu0 %v1770
      %v3297 = vpop.f32.mrf.mxu0
      %v3298 = vadd.f32 0.0, %v3297
      %v3299 = vpop.f32.mrf.mxu0
      %v3300 = vadd.f32 0.0, %v3299
      %3301 = vmatmul.bf16.gmra.mxu0 %v1773
      %v3302 = vpop.f32.mrf.mxu0
      %v3303 = vadd.f32 0.0, %v3302
      %v3304 = vpop.f32.mrf.mxu0
      %v3305 = vadd.f32 0.0, %v3304
      %3306 = vdwg.mxu0
      %3307 = vmatpush.bf16.msra.mxu0 0
      %3308 = vmatpush.bf16.msra.mxu0 0
      %3309 = vmatpush.bf16.msra.mxu0 0
      %3310 = vmatpush.bf16.msra.mxu0 0
      %3311 = vmatpush.bf16.msra.mxu0 0
      %3312 = vmatpush.bf16.msra.mxu0 0
      %3313 = vmatpush.bf16.msra.mxu0 %v2145
      %3314 = vmatpush.bf16.msra.mxu0 %v2141
      %3315 = vmatmul.bf16.gmra.mxu0 %v1764
      %v3316 = vpop.f32.mrf.mxu0
      %v3317 = vadd.f32 0.0, %v3316
      %v3318 = vpop.f32.mrf.mxu0
      %v3319 = vadd.f32 0.0, %v3318
      %3320 = vmatmul.bf16.gmra.mxu0 %v1767
      %v3321 = vpop.f32.mrf.mxu0
      %v3322 = vadd.f32 0.0, %v3321
      %v3323 = vpop.f32.mrf.mxu0
      %v3324 = vadd.f32 0.0, %v3323
      %3325 = vmatmul.bf16.gmra.mxu0 %v1770
      %v3326 = vpop.f32.mrf.mxu0
      %v3327 = vadd.f32 0.0, %v3326
      %v3328 = vpop.f32.mrf.mxu0
      %v3329 = vadd.f32 0.0, %v3328
      %3330 = vmatmul.bf16.gmra.mxu0 %v1773
      %v3331 = vpop.f32.mrf.mxu0
      %v3332 = vadd.f32 0.0, %v3331
      %v3333 = vpop.f32.mrf.mxu0
      %v3334 = vadd.f32 0.0, %v3333
      %3335 = vdwg.mxu0
      %v3336 = vadd.f32 %v3262, %v3288
      %v3337 = vadd.f32 %v3263, %v3317
      %v3338 = vadd.f32 %v3264, %v3290
      %v3339 = vadd.f32 %v3265, %v3319
      %v3340 = vadd.f32 %v3266, %v3293
      %v3341 = vadd.f32 %v3267, %v3322
      %v3342 = vadd.f32 %v3268, %v3295
      %v3343 = vadd.f32 %v3269, %v3324
      %v3344 = vadd.f32 %v3270, %v3298
      %v3345 = vadd.f32 %v3271, %v3327
      %v3346 = vadd.f32 %v3272, %v3300
      %v3347 = vadd.f32 %v3273, %v3329
      %v3348 = vadd.f32 %v3274, %v3303
      %v3349 = vadd.f32 %v3275, %v3332
      %v3350 = vadd.f32 %v3276, %v3305
      %v3351 = vadd.f32 %v3277, %v3334
      %3352 = vrot.lane.b32.xlu0 %v1112, 33
      %v3353 = vpop.permute.xlu0 %3352
      %3354 = vrot.lane.b32.xlu0 %v1464, 33
      %v3355 = vpop.permute.xlu0 %3354
      %3356 = vrot.lane.b32.xlu0 %v1114, 33
      %v3357 = vpop.permute.xlu0 %3356
      %3358 = vrot.lane.b32.xlu0 %v1465, 33
      %v3359 = vpop.permute.xlu0 %3358
      %vm3360 = vcmask 269312
      %v3361 = vsel %vm3360, %v3353, %v3355
      %v3362 = vsel %vm3360, %v3357, %v3359
      %3367 = vmatpush.bf16.msra.mxu0 0
      %3368 = vmatpush.bf16.msra.mxu0 0
      %3369 = vmatpush.bf16.msra.mxu0 0
      %3370 = vmatpush.bf16.msra.mxu0 0
      %3371 = vmatpush.bf16.msra.mxu0 0
      %3372 = vmatpush.bf16.msra.mxu0 0
      %3373 = vmatpush.bf16.msra.mxu0 %v3362
      %3374 = vmatpush.bf16.msra.mxu0 %v3361
      %3375 = vmatmul.bf16.gmra.mxu0 %v1894
      %v3376 = vpop.f32.mrf.mxu0
      %v3377 = vadd.f32 0.0, %v3376
      %v3378 = vpop.f32.mrf.mxu0
      %v3379 = vadd.f32 0.0, %v3378
      %3380 = vmatmul.bf16.gmra.mxu0 %v1897
      %v3381 = vpop.f32.mrf.mxu0
      %v3382 = vadd.f32 0.0, %v3381
      %v3383 = vpop.f32.mrf.mxu0
      %v3384 = vadd.f32 0.0, %v3383
      %3385 = vmatmul.bf16.gmra.mxu0 %v1900
      %v3386 = vpop.f32.mrf.mxu0
      %v3387 = vadd.f32 0.0, %v3386
      %v3388 = vpop.f32.mrf.mxu0
      %v3389 = vadd.f32 0.0, %v3388
      %3390 = vmatmul.bf16.gmra.mxu0 %v1903
      %v3391 = vpop.f32.mrf.mxu0
      %v3392 = vadd.f32 0.0, %v3391
      %v3393 = vpop.f32.mrf.mxu0
      %v3394 = vadd.f32 0.0, %v3393
      %3395 = vdwg.mxu0
      %3396 = vmatpush.bf16.msra.mxu0 0
      %3397 = vmatpush.bf16.msra.mxu0 0
      %3398 = vmatpush.bf16.msra.mxu0 0
      %3399 = vmatpush.bf16.msra.mxu0 0
      %3400 = vmatpush.bf16.msra.mxu0 0
      %3401 = vmatpush.bf16.msra.mxu0 0
      %3402 = vmatpush.bf16.msra.mxu0 %v3359
      %3403 = vmatpush.bf16.msra.mxu0 %v3355
      %3404 = vmatmul.bf16.gmra.mxu0 %v1894
      %v3405 = vpop.f32.mrf.mxu0
      %v3406 = vadd.f32 0.0, %v3405
      %v3407 = vpop.f32.mrf.mxu0
      %v3408 = vadd.f32 0.0, %v3407
      %3409 = vmatmul.bf16.gmra.mxu0 %v1897
      %v3410 = vpop.f32.mrf.mxu0
      %v3411 = vadd.f32 0.0, %v3410
      %v3412 = vpop.f32.mrf.mxu0
      %v3413 = vadd.f32 0.0, %v3412
      %3414 = vmatmul.bf16.gmra.mxu0 %v1900
      %v3415 = vpop.f32.mrf.mxu0
      %v3416 = vadd.f32 0.0, %v3415
      %v3417 = vpop.f32.mrf.mxu0
      %v3418 = vadd.f32 0.0, %v3417
      %3419 = vmatmul.bf16.gmra.mxu0 %v1903
      %v3420 = vpop.f32.mrf.mxu0
      %v3421 = vadd.f32 0.0, %v3420
      %v3422 = vpop.f32.mrf.mxu0
      %v3423 = vadd.f32 0.0, %v3422
      %3424 = vdwg.mxu0
      %v3425 = vadd.f32 %v3336, %v3377
      %v3426 = vadd.f32 %v3337, %v3406
      %v3427 = vadd.f32 %v3338, %v3379
      %v3428 = vadd.f32 %v3339, %v3408
      %v3429 = vadd.f32 %v3340, %v3382
      %v3430 = vadd.f32 %v3341, %v3411
      %v3431 = vadd.f32 %v3342, %v3384
      %v3432 = vadd.f32 %v3343, %v3413
      %v3433 = vadd.f32 %v3344, %v3387
      %v3434 = vadd.f32 %v3345, %v3416
      %v3435 = vadd.f32 %v3346, %v3389
      %v3436 = vadd.f32 %v3347, %v3418
      %v3437 = vadd.f32 %v3348, %v3392
      %v3438 = vadd.f32 %v3349, %v3421
      %v3439 = vadd.f32 %v3350, %v3394
      %v3440 = vadd.f32 %v3351, %v3423
      %3441 = vrot.lane.b32.xlu0 %v1608, 120
      %v3442 = vpop.permute.xlu0 %3441
      %3443 = vrot.lane.b32.xlu0 %v1609, 120
      %v3444 = vpop.permute.xlu0 %3443
      %3445 = vrot.lane.b32.xlu0 %v1610, 120
      %v3446 = vpop.permute.xlu0 %3445
      %3447 = vrot.lane.b32.xlu0 %v1611, 120
      %v3448 = vpop.permute.xlu0 %3447
      %vm3449 = vcmask 982016
      %v3450 = vsel %vm3449, %v3442, %v3444
      %v3451 = vsel %vm3449, %v3446, %v3448
      %3456 = vmatpush.bf16.msra.mxu0 0
      %3457 = vmatpush.bf16.msra.mxu0 0
      %3458 = vmatpush.bf16.msra.mxu0 0
      %3459 = vmatpush.bf16.msra.mxu0 0
      %3460 = vmatpush.bf16.msra.mxu0 0
      %3461 = vmatpush.bf16.msra.mxu0 0
      %3462 = vmatpush.bf16.msra.mxu0 %v3451
      %3463 = vmatpush.bf16.msra.mxu0 %v3450
      %3464 = vmatmul.bf16.gmra.mxu0 %v2024
      %v3465 = vpop.f32.mrf.mxu0
      %v3466 = vadd.f32 0.0, %v3465
      %v3467 = vpop.f32.mrf.mxu0
      %v3468 = vadd.f32 0.0, %v3467
      %3469 = vmatmul.bf16.gmra.mxu0 %v2027
      %v3470 = vpop.f32.mrf.mxu0
      %v3471 = vadd.f32 0.0, %v3470
      %v3472 = vpop.f32.mrf.mxu0
      %v3473 = vadd.f32 0.0, %v3472
      %3474 = vmatmul.bf16.gmra.mxu0 %v2030
      %v3475 = vpop.f32.mrf.mxu0
      %v3476 = vadd.f32 0.0, %v3475
      %v3477 = vpop.f32.mrf.mxu0
      %v3478 = vadd.f32 0.0, %v3477
      %3479 = vmatmul.bf16.gmra.mxu0 %v2033
      %v3480 = vpop.f32.mrf.mxu0
      %v3481 = vadd.f32 0.0, %v3480
      %v3482 = vpop.f32.mrf.mxu0
      %v3483 = vadd.f32 0.0, %v3482
      %3484 = vdwg.mxu0
      %3485 = vmatpush.bf16.msra.mxu0 0
      %3486 = vmatpush.bf16.msra.mxu0 0
      %3487 = vmatpush.bf16.msra.mxu0 0
      %3488 = vmatpush.bf16.msra.mxu0 0
      %3489 = vmatpush.bf16.msra.mxu0 0
      %3490 = vmatpush.bf16.msra.mxu0 0
      %3491 = vmatpush.bf16.msra.mxu0 %v3448
      %3492 = vmatpush.bf16.msra.mxu0 %v3444
      %3493 = vmatmul.bf16.gmra.mxu0 %v2024
      %v3494 = vpop.f32.mrf.mxu0
      %v3495 = vadd.f32 0.0, %v3494
      %v3496 = vpop.f32.mrf.mxu0
      %v3497 = vadd.f32 0.0, %v3496
      %3498 = vmatmul.bf16.gmra.mxu0 %v2027
      %v3499 = vpop.f32.mrf.mxu0
      %v3500 = vadd.f32 0.0, %v3499
      %v3501 = vpop.f32.mrf.mxu0
      %v3502 = vadd.f32 0.0, %v3501
      %3503 = vmatmul.bf16.gmra.mxu0 %v2030
      %v3504 = vpop.f32.mrf.mxu0
      %v3505 = vadd.f32 0.0, %v3504
      %v3506 = vpop.f32.mrf.mxu0
      %v3507 = vadd.f32 0.0, %v3506
      %3508 = vmatmul.bf16.gmra.mxu0 %v2033
      %v3509 = vpop.f32.mrf.mxu0
      %v3510 = vadd.f32 0.0, %v3509
      %v3511 = vpop.f32.mrf.mxu0
      %v3512 = vadd.f32 0.0, %v3511
      %3513 = vdwg.mxu0
      %v3514 = vadd.f32 %v3425, %v3466
      %v3515 = vadd.f32 %v3426, %v3495
      %v3516 = vadd.f32 %v3427, %v3468
      %v3517 = vadd.f32 %v3428, %v3497
      %v3518 = vadd.f32 %v3429, %v3471
      %v3519 = vadd.f32 %v3430, %v3500
      %v3520 = vadd.f32 %v3431, %v3473
      %v3521 = vadd.f32 %v3432, %v3502
      %v3522 = vadd.f32 %v3433, %v3476
      %v3523 = vadd.f32 %v3434, %v3505
      %v3524 = vadd.f32 %v3435, %v3478
      %v3525 = vadd.f32 %v3436, %v3507
      %v3526 = vadd.f32 %v3437, %v3481
      %v3527 = vadd.f32 %v3438, %v3510
      %v3528 = vadd.f32 %v3439, %v3483
      %v3529 = vadd.f32 %v3440, %v3512
      %3530 = vrot.lane.b32.xlu0 %v1112, 32
      %v3531 = vpop.permute.xlu0 %3530
      %3532 = vrot.lane.b32.xlu0 %v1464, 32
      %v3533 = vpop.permute.xlu0 %3532
      %3534 = vrot.lane.b32.xlu0 %v1114, 32
      %v3535 = vpop.permute.xlu0 %3534
      %3536 = vrot.lane.b32.xlu0 %v1465, 32
      %v3537 = vpop.permute.xlu0 %3536
      %vm3538 = vcmask 261120
      %v3539 = vsel %vm3538, %v3531, %v3533
      %v3540 = vsel %vm3538, %v3535, %v3537
      %3545 = vmatpush.bf16.msra.mxu0 0
      %3546 = vmatpush.bf16.msra.mxu0 0
      %3547 = vmatpush.bf16.msra.mxu0 0
      %3548 = vmatpush.bf16.msra.mxu0 0
      %3549 = vmatpush.bf16.msra.mxu0 0
      %3550 = vmatpush.bf16.msra.mxu0 0
      %3551 = vmatpush.bf16.msra.mxu0 %v3540
      %3552 = vmatpush.bf16.msra.mxu0 %v3539
      %3553 = vmatmul.bf16.gmra.mxu0 %v2154
      %v3554 = vpop.f32.mrf.mxu0
      %v3555 = vadd.f32 0.0, %v3554
      %v3556 = vpop.f32.mrf.mxu0
      %v3557 = vadd.f32 0.0, %v3556
      %3558 = vmatmul.bf16.gmra.mxu0 %v2157
      %v3559 = vpop.f32.mrf.mxu0
      %v3560 = vadd.f32 0.0, %v3559
      %v3561 = vpop.f32.mrf.mxu0
      %v3562 = vadd.f32 0.0, %v3561
      %3563 = vmatmul.bf16.gmra.mxu0 %v2160
      %v3564 = vpop.f32.mrf.mxu0
      %v3565 = vadd.f32 0.0, %v3564
      %v3566 = vpop.f32.mrf.mxu0
      %v3567 = vadd.f32 0.0, %v3566
      %3568 = vmatmul.bf16.gmra.mxu0 %v2163
      %v3569 = vpop.f32.mrf.mxu0
      %v3570 = vadd.f32 0.0, %v3569
      %v3571 = vpop.f32.mrf.mxu0
      %v3572 = vadd.f32 0.0, %v3571
      %3573 = vdwg.mxu0
      %3574 = vmatpush.bf16.msra.mxu0 0
      %3575 = vmatpush.bf16.msra.mxu0 0
      %3576 = vmatpush.bf16.msra.mxu0 0
      %3577 = vmatpush.bf16.msra.mxu0 0
      %3578 = vmatpush.bf16.msra.mxu0 0
      %3579 = vmatpush.bf16.msra.mxu0 0
      %3580 = vmatpush.bf16.msra.mxu0 %v3537
      %3581 = vmatpush.bf16.msra.mxu0 %v3533
      %3582 = vmatmul.bf16.gmra.mxu0 %v2154
      %v3583 = vpop.f32.mrf.mxu0
      %v3584 = vadd.f32 0.0, %v3583
      %v3585 = vpop.f32.mrf.mxu0
      %v3586 = vadd.f32 0.0, %v3585
      %3587 = vmatmul.bf16.gmra.mxu0 %v2157
      %v3588 = vpop.f32.mrf.mxu0
      %v3589 = vadd.f32 0.0, %v3588
      %v3590 = vpop.f32.mrf.mxu0
      %v3591 = vadd.f32 0.0, %v3590
      %3592 = vmatmul.bf16.gmra.mxu0 %v2160
      %v3593 = vpop.f32.mrf.mxu0
      %v3594 = vadd.f32 0.0, %v3593
      %v3595 = vpop.f32.mrf.mxu0
      %v3596 = vadd.f32 0.0, %v3595
      %3597 = vmatmul.bf16.gmra.mxu0 %v2163
      %v3598 = vpop.f32.mrf.mxu0
      %v3599 = vadd.f32 0.0, %v3598
      %v3600 = vpop.f32.mrf.mxu0
      %v3601 = vadd.f32 0.0, %v3600
      %3602 = vdwg.mxu0
      %v3603 = vadd.f32 %v3514, %v3555
      %v3604 = vadd.f32 %v3515, %v3584
      %v3605 = vadd.f32 %v3516, %v3557
      %v3606 = vadd.f32 %v3517, %v3586
      %v3607 = vadd.f32 %v3518, %v3560
      %v3608 = vadd.f32 %v3519, %v3589
      %v3609 = vadd.f32 %v3520, %v3562
      %v3610 = vadd.f32 %v3521, %v3591
      %v3611 = vadd.f32 %v3522, %v3565
      %v3612 = vadd.f32 %v3523, %v3594
      %v3613 = vadd.f32 %v3524, %v3567
      %v3614 = vadd.f32 %v3525, %v3596
      %v3615 = vadd.f32 %v3526, %v3570
      %v3616 = vadd.f32 %v3527, %v3599
      %v3617 = vadd.f32 %v3528, %v3572
      %v3618 = vadd.f32 %v3529, %v3601
      %v3619 = vmax.f32 %v2924, %v3603
      %v3620 = vmax.f32 %v2925, %v3604
      %v3621 = vmax.f32 %v2926, %v3605
      %v3622 = vmax.f32 %v2927, %v3606
      %v3623 = vmax.f32 %v2928, %v3607
      %v3624 = vmax.f32 %v2929, %v3608
      %v3625 = vmax.f32 %v2930, %v3609
      %v3626 = vmax.f32 %v2931, %v3610
      %v3627 = vmax.f32 %v2932, %v3611
      %v3628 = vmax.f32 %v2933, %v3612
      %v3629 = vmax.f32 %v2934, %v3613
      %v3630 = vmax.f32 %v2935, %v3614
      %v3631 = vmax.f32 %v2936, %v3615
      %v3632 = vmax.f32 %v2937, %v3616
      %v3633 = vmax.f32 %v2938, %v3617
      %v3634 = vmax.f32 %v2939, %v3618
      %3635 = vmatpush.bf16.msra.mxu0 0
      %3636 = vmatpush.bf16.msra.mxu0 0
      %3637 = vmatpush.bf16.msra.mxu0 0
      %3638 = vmatpush.bf16.msra.mxu0 0
      %3639 = vmatpush.bf16.msra.mxu0 0
      %3640 = vmatpush.bf16.msra.mxu0 0
      %3641 = vmatpush.bf16.msra.mxu0 %v1758
      %3642 = vmatpush.bf16.msra.mxu0 %v1757
      %3643 = vmatmul.bf16.gmra.mxu0 %v1132
      %v3644 = vpop.f32.mrf.mxu0
      %v3645 = vadd.f32 0.0, %v3644
      %v3646 = vpop.f32.mrf.mxu0
      %v3647 = vadd.f32 0.0, %v3646
      %3648 = vmatmul.bf16.gmra.mxu0 %v1135
      %v3649 = vpop.f32.mrf.mxu0
      %v3650 = vadd.f32 0.0, %v3649
      %v3651 = vpop.f32.mrf.mxu0
      %v3652 = vadd.f32 0.0, %v3651
      %3653 = vmatmul.bf16.gmra.mxu0 %v1138
      %v3654 = vpop.f32.mrf.mxu0
      %v3655 = vadd.f32 0.0, %v3654
      %v3656 = vpop.f32.mrf.mxu0
      %v3657 = vadd.f32 0.0, %v3656
      %3658 = vmatmul.bf16.gmra.mxu0 %v1141
      %v3659 = vpop.f32.mrf.mxu0
      %v3660 = vadd.f32 0.0, %v3659
      %v3661 = vpop.f32.mrf.mxu0
      %v3662 = vadd.f32 0.0, %v3661
      %3663 = vdwg.mxu0
      %3664 = vmatpush.bf16.msra.mxu0 0
      %3665 = vmatpush.bf16.msra.mxu0 0
      %3666 = vmatpush.bf16.msra.mxu0 0
      %3667 = vmatpush.bf16.msra.mxu0 0
      %3668 = vmatpush.bf16.msra.mxu0 0
      %3669 = vmatpush.bf16.msra.mxu0 0
      %3670 = vmatpush.bf16.msra.mxu0 %v1755
      %3671 = vmatpush.bf16.msra.mxu0 %v1751
      %3672 = vmatmul.bf16.gmra.mxu0 %v1132
      %v3673 = vpop.f32.mrf.mxu0
      %v3674 = vadd.f32 0.0, %v3673
      %v3675 = vpop.f32.mrf.mxu0
      %v3676 = vadd.f32 0.0, %v3675
      %3677 = vmatmul.bf16.gmra.mxu0 %v1135
      %v3678 = vpop.f32.mrf.mxu0
      %v3679 = vadd.f32 0.0, %v3678
      %v3680 = vpop.f32.mrf.mxu0
      %v3681 = vadd.f32 0.0, %v3680
      %3682 = vmatmul.bf16.gmra.mxu0 %v1138
      %v3683 = vpop.f32.mrf.mxu0
      %v3684 = vadd.f32 0.0, %v3683
      %v3685 = vpop.f32.mrf.mxu0
      %v3686 = vadd.f32 0.0, %v3685
      %3687 = vmatmul.bf16.gmra.mxu0 %v1141
      %v3688 = vpop.f32.mrf.mxu0
      %v3689 = vadd.f32 0.0, %v3688
      %v3690 = vpop.f32.mrf.mxu0
      %v3691 = vadd.f32 0.0, %v3690
      %3692 = vdwg.mxu0
      %3693 = vmatpush.bf16.msra.mxu0 0
      %3694 = vmatpush.bf16.msra.mxu0 0
      %3695 = vmatpush.bf16.msra.mxu0 0
      %3696 = vmatpush.bf16.msra.mxu0 0
      %3697 = vmatpush.bf16.msra.mxu0 0
      %3698 = vmatpush.bf16.msra.mxu0 0
      %3699 = vmatpush.bf16.msra.mxu0 %v1627
      %3700 = vmatpush.bf16.msra.mxu0 %v1625
      %3701 = vmatmul.bf16.gmra.mxu0 %v1232
      %v3702 = vpop.f32.mrf.mxu0
      %v3703 = vadd.f32 %v3645, %v3702
      %v3704 = vpop.f32.mrf.mxu0
      %v3705 = vadd.f32 %v3647, %v3704
      %3706 = vmatmul.bf16.gmra.mxu0 %v1235
      %v3707 = vpop.f32.mrf.mxu0
      %v3708 = vadd.f32 %v3650, %v3707
      %v3709 = vpop.f32.mrf.mxu0
      %v3710 = vadd.f32 %v3652, %v3709
      %3711 = vmatmul.bf16.gmra.mxu0 %v1238
      %v3712 = vpop.f32.mrf.mxu0
      %v3713 = vadd.f32 %v3655, %v3712
      %v3714 = vpop.f32.mrf.mxu0
      %v3715 = vadd.f32 %v3657, %v3714
      %3716 = vmatmul.bf16.gmra.mxu0 %v1241
      %v3717 = vpop.f32.mrf.mxu0
      %v3718 = vadd.f32 %v3660, %v3717
      %v3719 = vpop.f32.mrf.mxu0
      %v3720 = vadd.f32 %v3662, %v3719
      %3721 = vdwg.mxu0
      %3722 = vmatpush.bf16.msra.mxu0 0
      %3723 = vmatpush.bf16.msra.mxu0 0
      %3724 = vmatpush.bf16.msra.mxu0 0
      %3725 = vmatpush.bf16.msra.mxu0 0
      %3726 = vmatpush.bf16.msra.mxu0 0
      %3727 = vmatpush.bf16.msra.mxu0 0
      %3728 = vmatpush.bf16.msra.mxu0 %v1628
      %3729 = vmatpush.bf16.msra.mxu0 %v1626
      %3730 = vmatmul.bf16.gmra.mxu0 %v1232
      %v3731 = vpop.f32.mrf.mxu0
      %v3732 = vadd.f32 %v3674, %v3731
      %v3733 = vpop.f32.mrf.mxu0
      %v3734 = vadd.f32 %v3676, %v3733
      %3735 = vmatmul.bf16.gmra.mxu0 %v1235
      %v3736 = vpop.f32.mrf.mxu0
      %v3737 = vadd.f32 %v3679, %v3736
      %v3738 = vpop.f32.mrf.mxu0
      %v3739 = vadd.f32 %v3681, %v3738
      %3740 = vmatmul.bf16.gmra.mxu0 %v1238
      %v3741 = vpop.f32.mrf.mxu0
      %v3742 = vadd.f32 %v3684, %v3741
      %v3743 = vpop.f32.mrf.mxu0
      %v3744 = vadd.f32 %v3686, %v3743
      %3745 = vmatmul.bf16.gmra.mxu0 %v1241
      %v3746 = vpop.f32.mrf.mxu0
      %v3747 = vadd.f32 %v3689, %v3746
      %v3748 = vpop.f32.mrf.mxu0
      %v3749 = vadd.f32 %v3691, %v3748
      %3750 = vdwg.mxu0
      %3751 = vmatpush.bf16.msra.mxu0 0
      %3752 = vmatpush.bf16.msra.mxu0 0
      %3753 = vmatpush.bf16.msra.mxu0 0
      %3754 = vmatpush.bf16.msra.mxu0 0
      %3755 = vmatpush.bf16.msra.mxu0 0
      %3756 = vmatpush.bf16.msra.mxu0 0
      %3757 = vmatpush.bf16.msra.mxu0 %v2607
      %3758 = vmatpush.bf16.msra.mxu0 %v2605
      %3759 = vmatmul.bf16.gmra.mxu0 %v1346
      %v3760 = vpop.f32.mrf.mxu0
      %v3761 = vadd.f32 0.0, %v3760
      %v3762 = vpop.f32.mrf.mxu0
      %v3763 = vadd.f32 0.0, %v3762
      %3764 = vmatmul.bf16.gmra.mxu0 %v1349
      %v3765 = vpop.f32.mrf.mxu0
      %v3766 = vadd.f32 0.0, %v3765
      %v3767 = vpop.f32.mrf.mxu0
      %v3768 = vadd.f32 0.0, %v3767
      %3769 = vmatmul.bf16.gmra.mxu0 %v1352
      %v3770 = vpop.f32.mrf.mxu0
      %v3771 = vadd.f32 0.0, %v3770
      %v3772 = vpop.f32.mrf.mxu0
      %v3773 = vadd.f32 0.0, %v3772
      %3774 = vmatmul.bf16.gmra.mxu0 %v1355
      %v3775 = vpop.f32.mrf.mxu0
      %v3776 = vadd.f32 0.0, %v3775
      %v3777 = vpop.f32.mrf.mxu0
      %v3778 = vadd.f32 0.0, %v3777
      %3779 = vdwg.mxu0
      %3780 = vmatpush.bf16.msra.mxu0 0
      %3781 = vmatpush.bf16.msra.mxu0 0
      %3782 = vmatpush.bf16.msra.mxu0 0
      %3783 = vmatpush.bf16.msra.mxu0 0
      %3784 = vmatpush.bf16.msra.mxu0 0
      %3785 = vmatpush.bf16.msra.mxu0 0
      %3786 = vmatpush.bf16.msra.mxu0 %v2608
      %3787 = vmatpush.bf16.msra.mxu0 %v2606
      %3788 = vmatmul.bf16.gmra.mxu0 %v1346
      %v3789 = vpop.f32.mrf.mxu0
      %v3790 = vadd.f32 0.0, %v3789
      %v3791 = vpop.f32.mrf.mxu0
      %v3792 = vadd.f32 0.0, %v3791
      %3793 = vmatmul.bf16.gmra.mxu0 %v1349
      %v3794 = vpop.f32.mrf.mxu0
      %v3795 = vadd.f32 0.0, %v3794
      %v3796 = vpop.f32.mrf.mxu0
      %v3797 = vadd.f32 0.0, %v3796
      %3798 = vmatmul.bf16.gmra.mxu0 %v1352
      %v3799 = vpop.f32.mrf.mxu0
      %v3800 = vadd.f32 0.0, %v3799
      %v3801 = vpop.f32.mrf.mxu0
      %v3802 = vadd.f32 0.0, %v3801
      %3803 = vmatmul.bf16.gmra.mxu0 %v1355
      %v3804 = vpop.f32.mrf.mxu0
      %v3805 = vadd.f32 0.0, %v3804
      %v3806 = vpop.f32.mrf.mxu0
      %v3807 = vadd.f32 0.0, %v3806
      %3808 = vdwg.mxu0
      %v3809 = vadd.f32 %v3703, %v3761
      %v3810 = vadd.f32 %v3732, %v3790
      %v3811 = vadd.f32 %v3705, %v3763
      %v3812 = vadd.f32 %v3734, %v3792
      %v3813 = vadd.f32 %v3708, %v3766
      %v3814 = vadd.f32 %v3737, %v3795
      %v3815 = vadd.f32 %v3710, %v3768
      %v3816 = vadd.f32 %v3739, %v3797
      %v3817 = vadd.f32 %v3713, %v3771
      %v3818 = vadd.f32 %v3742, %v3800
      %v3819 = vadd.f32 %v3715, %v3773
      %v3820 = vadd.f32 %v3744, %v3802
      %v3821 = vadd.f32 %v3718, %v3776
      %v3822 = vadd.f32 %v3747, %v3805
      %v3823 = vadd.f32 %v3720, %v3778
      %v3824 = vadd.f32 %v3749, %v3807
      %3825 = vmatpush.bf16.msra.mxu0 0
      %3826 = vmatpush.bf16.msra.mxu0 0
      %3827 = vmatpush.bf16.msra.mxu0 0
      %3828 = vmatpush.bf16.msra.mxu0 0
      %3829 = vmatpush.bf16.msra.mxu0 0
      %3830 = vmatpush.bf16.msra.mxu0 0
      %3831 = vmatpush.bf16.msra.mxu0 %v2018
      %3832 = vmatpush.bf16.msra.mxu0 %v2017
      %3833 = vmatmul.bf16.gmra.mxu0 %v1482
      %v3834 = vpop.f32.mrf.mxu0
      %v3835 = vadd.f32 0.0, %v3834
      %v3836 = vpop.f32.mrf.mxu0
      %v3837 = vadd.f32 0.0, %v3836
      %3838 = vmatmul.bf16.gmra.mxu0 %v1485
      %v3839 = vpop.f32.mrf.mxu0
      %v3840 = vadd.f32 0.0, %v3839
      %v3841 = vpop.f32.mrf.mxu0
      %v3842 = vadd.f32 0.0, %v3841
      %3843 = vmatmul.bf16.gmra.mxu0 %v1488
      %v3844 = vpop.f32.mrf.mxu0
      %v3845 = vadd.f32 0.0, %v3844
      %v3846 = vpop.f32.mrf.mxu0
      %v3847 = vadd.f32 0.0, %v3846
      %3848 = vmatmul.bf16.gmra.mxu0 %v1491
      %v3849 = vpop.f32.mrf.mxu0
      %v3850 = vadd.f32 0.0, %v3849
      %v3851 = vpop.f32.mrf.mxu0
      %v3852 = vadd.f32 0.0, %v3851
      %3853 = vdwg.mxu0
      %3854 = vmatpush.bf16.msra.mxu0 0
      %3855 = vmatpush.bf16.msra.mxu0 0
      %3856 = vmatpush.bf16.msra.mxu0 0
      %3857 = vmatpush.bf16.msra.mxu0 0
      %3858 = vmatpush.bf16.msra.mxu0 0
      %3859 = vmatpush.bf16.msra.mxu0 0
      %3860 = vmatpush.bf16.msra.mxu0 %v2015
      %3861 = vmatpush.bf16.msra.mxu0 %v2011
      %3862 = vmatmul.bf16.gmra.mxu0 %v1482
      %v3863 = vpop.f32.mrf.mxu0
      %v3864 = vadd.f32 0.0, %v3863
      %v3865 = vpop.f32.mrf.mxu0
      %v3866 = vadd.f32 0.0, %v3865
      %3867 = vmatmul.bf16.gmra.mxu0 %v1485
      %v3868 = vpop.f32.mrf.mxu0
      %v3869 = vadd.f32 0.0, %v3868
      %v3870 = vpop.f32.mrf.mxu0
      %v3871 = vadd.f32 0.0, %v3870
      %3872 = vmatmul.bf16.gmra.mxu0 %v1488
      %v3873 = vpop.f32.mrf.mxu0
      %v3874 = vadd.f32 0.0, %v3873
      %v3875 = vpop.f32.mrf.mxu0
      %v3876 = vadd.f32 0.0, %v3875
      %3877 = vmatmul.bf16.gmra.mxu0 %v1491
      %v3878 = vpop.f32.mrf.mxu0
      %v3879 = vadd.f32 0.0, %v3878
      %v3880 = vpop.f32.mrf.mxu0
      %v3881 = vadd.f32 0.0, %v3880
      %3882 = vdwg.mxu0
      %v3883 = vadd.f32 %v3809, %v3835
      %v3884 = vadd.f32 %v3810, %v3864
      %v3885 = vadd.f32 %v3811, %v3837
      %v3886 = vadd.f32 %v3812, %v3866
      %v3887 = vadd.f32 %v3813, %v3840
      %v3888 = vadd.f32 %v3814, %v3869
      %v3889 = vadd.f32 %v3815, %v3842
      %v3890 = vadd.f32 %v3816, %v3871
      %v3891 = vadd.f32 %v3817, %v3845
      %v3892 = vadd.f32 %v3818, %v3874
      %v3893 = vadd.f32 %v3819, %v3847
      %v3894 = vadd.f32 %v3820, %v3876
      %v3895 = vadd.f32 %v3821, %v3850
      %v3896 = vadd.f32 %v3822, %v3879
      %v3897 = vadd.f32 %v3823, %v3852
      %v3898 = vadd.f32 %v3824, %v3881
      %3899 = vmatpush.bf16.msra.mxu0 0
      %3900 = vmatpush.bf16.msra.mxu0 0
      %3901 = vmatpush.bf16.msra.mxu0 0
      %3902 = vmatpush.bf16.msra.mxu0 0
      %3903 = vmatpush.bf16.msra.mxu0 0
      %3904 = vmatpush.bf16.msra.mxu0 0
      %3905 = vmatpush.bf16.msra.mxu0 %v2148
      %3906 = vmatpush.bf16.msra.mxu0 %v2147
      %3907 = vmatmul.bf16.gmra.mxu0 %v1634
      %v3908 = vpop.f32.mrf.mxu0
      %v3909 = vadd.f32 0.0, %v3908
      %v3910 = vpop.f32.mrf.mxu0
      %v3911 = vadd.f32 0.0, %v3910
      %3912 = vmatmul.bf16.gmra.mxu0 %v1637
      %v3913 = vpop.f32.mrf.mxu0
      %v3914 = vadd.f32 0.0, %v3913
      %v3915 = vpop.f32.mrf.mxu0
      %v3916 = vadd.f32 0.0, %v3915
      %3917 = vmatmul.bf16.gmra.mxu0 %v1640
      %v3918 = vpop.f32.mrf.mxu0
      %v3919 = vadd.f32 0.0, %v3918
      %v3920 = vpop.f32.mrf.mxu0
      %v3921 = vadd.f32 0.0, %v3920
      %3922 = vmatmul.bf16.gmra.mxu0 %v1643
      %v3923 = vpop.f32.mrf.mxu0
      %v3924 = vadd.f32 0.0, %v3923
      %v3925 = vpop.f32.mrf.mxu0
      %v3926 = vadd.f32 0.0, %v3925
      %3927 = vdwg.mxu0
      %3928 = vmatpush.bf16.msra.mxu0 0
      %3929 = vmatpush.bf16.msra.mxu0 0
      %3930 = vmatpush.bf16.msra.mxu0 0
      %3931 = vmatpush.bf16.msra.mxu0 0
      %3932 = vmatpush.bf16.msra.mxu0 0
      %3933 = vmatpush.bf16.msra.mxu0 0
      %3934 = vmatpush.bf16.msra.mxu0 %v2145
      %3935 = vmatpush.bf16.msra.mxu0 %v2141
      %3936 = vmatmul.bf16.gmra.mxu0 %v1634
      %v3937 = vpop.f32.mrf.mxu0
      %v3938 = vadd.f32 0.0, %v3937
      %v3939 = vpop.f32.mrf.mxu0
      %v3940 = vadd.f32 0.0, %v3939
      %3941 = vmatmul.bf16.gmra.mxu0 %v1637
      %v3942 = vpop.f32.mrf.mxu0
      %v3943 = vadd.f32 0.0, %v3942
      %v3944 = vpop.f32.mrf.mxu0
      %v3945 = vadd.f32 0.0, %v3944
      %3946 = vmatmul.bf16.gmra.mxu0 %v1640
      %v3947 = vpop.f32.mrf.mxu0
      %v3948 = vadd.f32 0.0, %v3947
      %v3949 = vpop.f32.mrf.mxu0
      %v3950 = vadd.f32 0.0, %v3949
      %3951 = vmatmul.bf16.gmra.mxu0 %v1643
      %v3952 = vpop.f32.mrf.mxu0
      %v3953 = vadd.f32 0.0, %v3952
      %v3954 = vpop.f32.mrf.mxu0
      %v3955 = vadd.f32 0.0, %v3954
      %3956 = vdwg.mxu0
      %v3957 = vadd.f32 %v3883, %v3909
      %v3958 = vadd.f32 %v3884, %v3938
      %v3959 = vadd.f32 %v3885, %v3911
      %v3960 = vadd.f32 %v3886, %v3940
      %v3961 = vadd.f32 %v3887, %v3914
      %v3962 = vadd.f32 %v3888, %v3943
      %v3963 = vadd.f32 %v3889, %v3916
      %v3964 = vadd.f32 %v3890, %v3945
      %v3965 = vadd.f32 %v3891, %v3919
      %v3966 = vadd.f32 %v3892, %v3948
      %v3967 = vadd.f32 %v3893, %v3921
      %v3968 = vadd.f32 %v3894, %v3950
      %v3969 = vadd.f32 %v3895, %v3924
      %v3970 = vadd.f32 %v3896, %v3953
      %v3971 = vadd.f32 %v3897, %v3926
      %v3972 = vadd.f32 %v3898, %v3955
      %3973 = vmatpush.bf16.msra.mxu0 0
      %3974 = vmatpush.bf16.msra.mxu0 0
      %3975 = vmatpush.bf16.msra.mxu0 0
      %3976 = vmatpush.bf16.msra.mxu0 0
      %3977 = vmatpush.bf16.msra.mxu0 0
      %3978 = vmatpush.bf16.msra.mxu0 0
      %3979 = vmatpush.bf16.msra.mxu0 %v2845
      %3980 = vmatpush.bf16.msra.mxu0 %v2844
      %3981 = vmatmul.bf16.gmra.mxu0 %v1764
      %v3982 = vpop.f32.mrf.mxu0
      %v3983 = vadd.f32 0.0, %v3982
      %v3984 = vpop.f32.mrf.mxu0
      %v3985 = vadd.f32 0.0, %v3984
      %3986 = vmatmul.bf16.gmra.mxu0 %v1767
      %v3987 = vpop.f32.mrf.mxu0
      %v3988 = vadd.f32 0.0, %v3987
      %v3989 = vpop.f32.mrf.mxu0
      %v3990 = vadd.f32 0.0, %v3989
      %3991 = vmatmul.bf16.gmra.mxu0 %v1770
      %v3992 = vpop.f32.mrf.mxu0
      %v3993 = vadd.f32 0.0, %v3992
      %v3994 = vpop.f32.mrf.mxu0
      %v3995 = vadd.f32 0.0, %v3994
      %3996 = vmatmul.bf16.gmra.mxu0 %v1773
      %v3997 = vpop.f32.mrf.mxu0
      %v3998 = vadd.f32 0.0, %v3997
      %v3999 = vpop.f32.mrf.mxu0
      %v4000 = vadd.f32 0.0, %v3999
      %4001 = vdwg.mxu0
      %4002 = vmatpush.bf16.msra.mxu0 0
      %4003 = vmatpush.bf16.msra.mxu0 0
      %4004 = vmatpush.bf16.msra.mxu0 0
      %4005 = vmatpush.bf16.msra.mxu0 0
      %4006 = vmatpush.bf16.msra.mxu0 0
      %4007 = vmatpush.bf16.msra.mxu0 0
      %4008 = vmatpush.bf16.msra.mxu0 %v2842
      %4009 = vmatpush.bf16.msra.mxu0 %v2838
      %4010 = vmatmul.bf16.gmra.mxu0 %v1764
      %v4011 = vpop.f32.mrf.mxu0
      %v4012 = vadd.f32 0.0, %v4011
      %v4013 = vpop.f32.mrf.mxu0
      %v4014 = vadd.f32 0.0, %v4013
      %4015 = vmatmul.bf16.gmra.mxu0 %v1767
      %v4016 = vpop.f32.mrf.mxu0
      %v4017 = vadd.f32 0.0, %v4016
      %v4018 = vpop.f32.mrf.mxu0
      %v4019 = vadd.f32 0.0, %v4018
      %4020 = vmatmul.bf16.gmra.mxu0 %v1770
      %v4021 = vpop.f32.mrf.mxu0
      %v4022 = vadd.f32 0.0, %v4021
      %v4023 = vpop.f32.mrf.mxu0
      %v4024 = vadd.f32 0.0, %v4023
      %4025 = vmatmul.bf16.gmra.mxu0 %v1773
      %v4026 = vpop.f32.mrf.mxu0
      %v4027 = vadd.f32 0.0, %v4026
      %v4028 = vpop.f32.mrf.mxu0
      %v4029 = vadd.f32 0.0, %v4028
      %4030 = vdwg.mxu0
      %v4031 = vadd.f32 %v3957, %v3983
      %v4032 = vadd.f32 %v3958, %v4012
      %v4033 = vadd.f32 %v3959, %v3985
      %v4034 = vadd.f32 %v3960, %v4014
      %v4035 = vadd.f32 %v3961, %v3988
      %v4036 = vadd.f32 %v3962, %v4017
      %v4037 = vadd.f32 %v3963, %v3990
      %v4038 = vadd.f32 %v3964, %v4019
      %v4039 = vadd.f32 %v3965, %v3993
      %v4040 = vadd.f32 %v3966, %v4022
      %v4041 = vadd.f32 %v3967, %v3995
      %v4042 = vadd.f32 %v3968, %v4024
      %v4043 = vadd.f32 %v3969, %v3998
      %v4044 = vadd.f32 %v3970, %v4027
      %v4045 = vadd.f32 %v3971, %v4000
      %v4046 = vadd.f32 %v3972, %v4029
      %4047 = vmatpush.bf16.msra.mxu0 0
      %4048 = vmatpush.bf16.msra.mxu0 0
      %4049 = vmatpush.bf16.msra.mxu0 0
      %4050 = vmatpush.bf16.msra.mxu0 0
      %4051 = vmatpush.bf16.msra.mxu0 0
      %4052 = vmatpush.bf16.msra.mxu0 0
      %4053 = vmatpush.bf16.msra.mxu0 %v3451
      %4054 = vmatpush.bf16.msra.mxu0 %v3450
      %4055 = vmatmul.bf16.gmra.mxu0 %v1894
      %v4056 = vpop.f32.mrf.mxu0
      %v4057 = vadd.f32 0.0, %v4056
      %v4058 = vpop.f32.mrf.mxu0
      %v4059 = vadd.f32 0.0, %v4058
      %4060 = vmatmul.bf16.gmra.mxu0 %v1897
      %v4061 = vpop.f32.mrf.mxu0
      %v4062 = vadd.f32 0.0, %v4061
      %v4063 = vpop.f32.mrf.mxu0
      %v4064 = vadd.f32 0.0, %v4063
      %4065 = vmatmul.bf16.gmra.mxu0 %v1900
      %v4066 = vpop.f32.mrf.mxu0
      %v4067 = vadd.f32 0.0, %v4066
      %v4068 = vpop.f32.mrf.mxu0
      %v4069 = vadd.f32 0.0, %v4068
      %4070 = vmatmul.bf16.gmra.mxu0 %v1903
      %v4071 = vpop.f32.mrf.mxu0
      %v4072 = vadd.f32 0.0, %v4071
      %v4073 = vpop.f32.mrf.mxu0
      %v4074 = vadd.f32 0.0, %v4073
      %4075 = vdwg.mxu0
      %4076 = vmatpush.bf16.msra.mxu0 0
      %4077 = vmatpush.bf16.msra.mxu0 0
      %4078 = vmatpush.bf16.msra.mxu0 0
      %4079 = vmatpush.bf16.msra.mxu0 0
      %4080 = vmatpush.bf16.msra.mxu0 0
      %4081 = vmatpush.bf16.msra.mxu0 0
      %4082 = vmatpush.bf16.msra.mxu0 %v3448
      %4083 = vmatpush.bf16.msra.mxu0 %v3444
      %4084 = vmatmul.bf16.gmra.mxu0 %v1894
      %v4085 = vpop.f32.mrf.mxu0
      %v4086 = vadd.f32 0.0, %v4085
      %v4087 = vpop.f32.mrf.mxu0
      %v4088 = vadd.f32 0.0, %v4087
      %4089 = vmatmul.bf16.gmra.mxu0 %v1897
      %v4090 = vpop.f32.mrf.mxu0
      %v4091 = vadd.f32 0.0, %v4090
      %v4092 = vpop.f32.mrf.mxu0
      %v4093 = vadd.f32 0.0, %v4092
      %4094 = vmatmul.bf16.gmra.mxu0 %v1900
      %v4095 = vpop.f32.mrf.mxu0
      %v4096 = vadd.f32 0.0, %v4095
      %v4097 = vpop.f32.mrf.mxu0
      %v4098 = vadd.f32 0.0, %v4097
      %4099 = vmatmul.bf16.gmra.mxu0 %v1903
      %v4100 = vpop.f32.mrf.mxu0
      %v4101 = vadd.f32 0.0, %v4100
      %v4102 = vpop.f32.mrf.mxu0
      %v4103 = vadd.f32 0.0, %v4102
      %4104 = vdwg.mxu0
      %v4105 = vadd.f32 %v4031, %v4057
      %v4106 = vadd.f32 %v4032, %v4086
      %v4107 = vadd.f32 %v4033, %v4059
      %v4108 = vadd.f32 %v4034, %v4088
      %v4109 = vadd.f32 %v4035, %v4062
      %v4110 = vadd.f32 %v4036, %v4091
      %v4111 = vadd.f32 %v4037, %v4064
      %v4112 = vadd.f32 %v4038, %v4093
      %v4113 = vadd.f32 %v4039, %v4067
      %v4114 = vadd.f32 %v4040, %v4096
      %v4115 = vadd.f32 %v4041, %v4069
      %v4116 = vadd.f32 %v4042, %v4098
      %v4117 = vadd.f32 %v4043, %v4072
      %v4118 = vadd.f32 %v4044, %v4101
      %v4119 = vadd.f32 %v4045, %v4074
      %v4120 = vadd.f32 %v4046, %v4103
      %4121 = vmatpush.bf16.msra.mxu0 0
      %4122 = vmatpush.bf16.msra.mxu0 0
      %4123 = vmatpush.bf16.msra.mxu0 0
      %4124 = vmatpush.bf16.msra.mxu0 0
      %4125 = vmatpush.bf16.msra.mxu0 0
      %4126 = vmatpush.bf16.msra.mxu0 0
      %4127 = vmatpush.bf16.msra.mxu0 %v3540
      %4128 = vmatpush.bf16.msra.mxu0 %v3539
      %4129 = vmatmul.bf16.gmra.mxu0 %v2024
      %v4130 = vpop.f32.mrf.mxu0
      %v4131 = vadd.f32 0.0, %v4130
      %v4132 = vpop.f32.mrf.mxu0
      %v4133 = vadd.f32 0.0, %v4132
      %4134 = vmatmul.bf16.gmra.mxu0 %v2027
      %v4135 = vpop.f32.mrf.mxu0
      %v4136 = vadd.f32 0.0, %v4135
      %v4137 = vpop.f32.mrf.mxu0
      %v4138 = vadd.f32 0.0, %v4137
      %4139 = vmatmul.bf16.gmra.mxu0 %v2030
      %v4140 = vpop.f32.mrf.mxu0
      %v4141 = vadd.f32 0.0, %v4140
      %v4142 = vpop.f32.mrf.mxu0
      %v4143 = vadd.f32 0.0, %v4142
      %4144 = vmatmul.bf16.gmra.mxu0 %v2033
      %v4145 = vpop.f32.mrf.mxu0
      %v4146 = vadd.f32 0.0, %v4145
      %v4147 = vpop.f32.mrf.mxu0
      %v4148 = vadd.f32 0.0, %v4147
      %4149 = vdwg.mxu0
      %4150 = vmatpush.bf16.msra.mxu0 0
      %4151 = vmatpush.bf16.msra.mxu0 0
      %4152 = vmatpush.bf16.msra.mxu0 0
      %4153 = vmatpush.bf16.msra.mxu0 0
      %4154 = vmatpush.bf16.msra.mxu0 0
      %4155 = vmatpush.bf16.msra.mxu0 0
      %4156 = vmatpush.bf16.msra.mxu0 %v3537
      %4157 = vmatpush.bf16.msra.mxu0 %v3533
      %4158 = vmatmul.bf16.gmra.mxu0 %v2024
      %v4159 = vpop.f32.mrf.mxu0
      %v4160 = vadd.f32 0.0, %v4159
      %v4161 = vpop.f32.mrf.mxu0
      %v4162 = vadd.f32 0.0, %v4161
      %4163 = vmatmul.bf16.gmra.mxu0 %v2027
      %v4164 = vpop.f32.mrf.mxu0
      %v4165 = vadd.f32 0.0, %v4164
      %v4166 = vpop.f32.mrf.mxu0
      %v4167 = vadd.f32 0.0, %v4166
      %4168 = vmatmul.bf16.gmra.mxu0 %v2030
      %v4169 = vpop.f32.mrf.mxu0
      %v4170 = vadd.f32 0.0, %v4169
      %v4171 = vpop.f32.mrf.mxu0
      %v4172 = vadd.f32 0.0, %v4171
      %4173 = vmatmul.bf16.gmra.mxu0 %v2033
      %v4174 = vpop.f32.mrf.mxu0
      %v4175 = vadd.f32 0.0, %v4174
      %v4176 = vpop.f32.mrf.mxu0
      %v4177 = vadd.f32 0.0, %v4176
      %4178 = vdwg.mxu0
      %v4179 = vadd.f32 %v4105, %v4131
      %v4180 = vadd.f32 %v4106, %v4160
      %v4181 = vadd.f32 %v4107, %v4133
      %v4182 = vadd.f32 %v4108, %v4162
      %v4183 = vadd.f32 %v4109, %v4136
      %v4184 = vadd.f32 %v4110, %v4165
      %v4185 = vadd.f32 %v4111, %v4138
      %v4186 = vadd.f32 %v4112, %v4167
      %v4187 = vadd.f32 %v4113, %v4141
      %v4188 = vadd.f32 %v4114, %v4170
      %v4189 = vadd.f32 %v4115, %v4143
      %v4190 = vadd.f32 %v4116, %v4172
      %v4191 = vadd.f32 %v4117, %v4146
      %v4192 = vadd.f32 %v4118, %v4175
      %v4193 = vadd.f32 %v4119, %v4148
      %v4194 = vadd.f32 %v4120, %v4177
      %4195 = vrot.lane.b32.xlu0 %v1608, 119
      %v4196 = vpop.permute.xlu0 %4195
      %4197 = vrot.lane.b32.xlu0 %v1609, 119
      %v4198 = vpop.permute.xlu0 %4197
      %4199 = vrot.lane.b32.xlu0 %v1610, 119
      %v4200 = vpop.permute.xlu0 %4199
      %4201 = vrot.lane.b32.xlu0 %v1611, 119
      %v4202 = vpop.permute.xlu0 %4201
      %vm4203 = vcmask 973824
      %v4204 = vsel %vm4203, %v4196, %v4198
      %v4205 = vsel %vm4203, %v4200, %v4202
      %4210 = vmatpush.bf16.msra.mxu0 0
      %4211 = vmatpush.bf16.msra.mxu0 0
      %4212 = vmatpush.bf16.msra.mxu0 0
      %4213 = vmatpush.bf16.msra.mxu0 0
      %4214 = vmatpush.bf16.msra.mxu0 0
      %4215 = vmatpush.bf16.msra.mxu0 0
      %4216 = vmatpush.bf16.msra.mxu0 %v4205
      %4217 = vmatpush.bf16.msra.mxu0 %v4204
      %4218 = vmatmul.bf16.gmra.mxu0 %v2154
      %v4219 = vpop.f32.mrf.mxu0
      %v4220 = vadd.f32 0.0, %v4219
      %v4221 = vpop.f32.mrf.mxu0
      %v4222 = vadd.f32 0.0, %v4221
      %4223 = vmatmul.bf16.gmra.mxu0 %v2157
      %v4224 = vpop.f32.mrf.mxu0
      %v4225 = vadd.f32 0.0, %v4224
      %v4226 = vpop.f32.mrf.mxu0
      %v4227 = vadd.f32 0.0, %v4226
      %4228 = vmatmul.bf16.gmra.mxu0 %v2160
      %v4229 = vpop.f32.mrf.mxu0
      %v4230 = vadd.f32 0.0, %v4229
      %v4231 = vpop.f32.mrf.mxu0
      %v4232 = vadd.f32 0.0, %v4231
      %4233 = vmatmul.bf16.gmra.mxu0 %v2163
      %v4234 = vpop.f32.mrf.mxu0
      %v4235 = vadd.f32 0.0, %v4234
      %v4236 = vpop.f32.mrf.mxu0
      %v4237 = vadd.f32 0.0, %v4236
      %4238 = vdwg.mxu0
      %4239 = vmatpush.bf16.msra.mxu0 0
      %4240 = vmatpush.bf16.msra.mxu0 0
      %4241 = vmatpush.bf16.msra.mxu0 0
      %4242 = vmatpush.bf16.msra.mxu0 0
      %4243 = vmatpush.bf16.msra.mxu0 0
      %4244 = vmatpush.bf16.msra.mxu0 0
      %4245 = vmatpush.bf16.msra.mxu0 %v4202
      %4246 = vmatpush.bf16.msra.mxu0 %v4198
      %4247 = vmatmul.bf16.gmra.mxu0 %v2154
      %v4248 = vpop.f32.mrf.mxu0
      %v4249 = vadd.f32 0.0, %v4248
      %v4250 = vpop.f32.mrf.mxu0
      %v4251 = vadd.f32 0.0, %v4250
      %4252 = vmatmul.bf16.gmra.mxu0 %v2157
      %v4253 = vpop.f32.mrf.mxu0
      %v4254 = vadd.f32 0.0, %v4253
      %v4255 = vpop.f32.mrf.mxu0
      %v4256 = vadd.f32 0.0, %v4255
      %4257 = vmatmul.bf16.gmra.mxu0 %v2160
      %v4258 = vpop.f32.mrf.mxu0
      %v4259 = vadd.f32 0.0, %v4258
      %v4260 = vpop.f32.mrf.mxu0
      %v4261 = vadd.f32 0.0, %v4260
      %4262 = vmatmul.bf16.gmra.mxu0 %v2163
      %v4263 = vpop.f32.mrf.mxu0
      %v4264 = vadd.f32 0.0, %v4263
      %v4265 = vpop.f32.mrf.mxu0
      %v4266 = vadd.f32 0.0, %v4265
      %4267 = vdwg.mxu0
      %v4268 = vadd.f32 %v4179, %v4220
      %v4269 = vadd.f32 %v4180, %v4249
      %v4270 = vadd.f32 %v4181, %v4222
      %v4271 = vadd.f32 %v4182, %v4251
      %v4272 = vadd.f32 %v4183, %v4225
      %v4273 = vadd.f32 %v4184, %v4254
      %v4274 = vadd.f32 %v4185, %v4227
      %v4275 = vadd.f32 %v4186, %v4256
      %v4276 = vadd.f32 %v4187, %v4230
      %v4277 = vadd.f32 %v4188, %v4259
      %v4278 = vadd.f32 %v4189, %v4232
      %v4279 = vadd.f32 %v4190, %v4261
      %v4280 = vadd.f32 %v4191, %v4235
      %v4281 = vadd.f32 %v4192, %v4264
      %v4282 = vadd.f32 %v4193, %v4237
      %v4283 = vadd.f32 %v4194, %v4266
      %v4284 = vmax.f32 %v3619, %v4268
      %v4285 = vmax.f32 %v3620, %v4269
      %v4286 = vmax.f32 %v3621, %v4270
      %v4287 = vmax.f32 %v3622, %v4271
      %v4288 = vmax.f32 %v3623, %v4272
      %v4289 = vmax.f32 %v3624, %v4273
      %v4290 = vmax.f32 %v3625, %v4274
      %v4291 = vmax.f32 %v3626, %v4275
      %v4292 = vmax.f32 %v3627, %v4276
      %v4293 = vmax.f32 %v3628, %v4277
      %v4294 = vmax.f32 %v3629, %v4278
      %v4295 = vmax.f32 %v3630, %v4279
      %v4296 = vmax.f32 %v3631, %v4280
      %v4297 = vmax.f32 %v3632, %v4281
      %v4298 = vmax.f32 %v3633, %v4282
      %v4299 = vmax.f32 %v3634, %v4283
      %v4300 = vld [vmem:[%s4] sm:$0xff]
      %v4301 = vld [vmem:[%s4 + $0x8] sm:$0xff]
      %v4302 = vld [vmem:[%s4 + $0x10] sm:$0xff]
      %v4303 = vld [vmem:[%s4 + $0x18] sm:$0xff]
      %v4304 = vld [vmem:[%s4 + $0x20] sm:$0xff]
      %v4305 = vld [vmem:[%s4 + $0x28] sm:$0xff]
      %v4306 = vld [vmem:[%s4 + $0x30] sm:$0xff]
      %v4307 = vld [vmem:[%s4 + $0x38] sm:$0xff]
      %4309 = vset.pattern.permute.xlu0 0
      %4310 = vperm.xlu0 %4309, %v4300
      %v4311 = vpop.permute.xlu0 %4310
      %4314 = vset.pattern.permute.xlu0 0
      %4315 = vperm.xlu0 %4314, %v4301
      %v4316 = vpop.permute.xlu0 %4315
      %4319 = vset.pattern.permute.xlu0 0
      %4320 = vperm.xlu0 %4319, %v4302
      %v4321 = vpop.permute.xlu0 %4320
      %4324 = vset.pattern.permute.xlu0 0
      %4325 = vperm.xlu0 %4324, %v4303
      %v4326 = vpop.permute.xlu0 %4325
      %4329 = vset.pattern.permute.xlu0 0
      %4330 = vperm.xlu0 %4329, %v4304
      %v4331 = vpop.permute.xlu0 %4330
      %4334 = vset.pattern.permute.xlu0 0
      %4335 = vperm.xlu0 %4334, %v4305
      %v4336 = vpop.permute.xlu0 %4335
      %4339 = vset.pattern.permute.xlu0 0
      %4340 = vperm.xlu0 %4339, %v4306
      %v4341 = vpop.permute.xlu0 %4340
      %4344 = vset.pattern.permute.xlu0 0
      %4345 = vperm.xlu0 %4344, %v4307
      %v4346 = vpop.permute.xlu0 %4345
      %v4348 = vadd.f32 %v4284, %v4311
      %v4349 = vadd.f32 %v4285, %v4311
      %v4350 = vadd.f32 %v4286, %v4316
      %v4351 = vadd.f32 %v4287, %v4316
      %v4352 = vadd.f32 %v4288, %v4321
      %v4353 = vadd.f32 %v4289, %v4321
      %v4354 = vadd.f32 %v4290, %v4326
      %v4355 = vadd.f32 %v4291, %v4326
      %v4356 = vadd.f32 %v4292, %v4331
      %v4357 = vadd.f32 %v4293, %v4331
      %v4358 = vadd.f32 %v4294, %v4336
      %v4359 = vadd.f32 %v4295, %v4336
      %v4360 = vadd.f32 %v4296, %v4341
      %v4361 = vadd.f32 %v4297, %v4341
      %v4362 = vadd.f32 %v4298, %v4346
      %v4363 = vadd.f32 %v4299, %v4346
      %v4364 = vmax.f32 %v4348, 0.0
      %v4365 = vmax.f32 %v4349, 0.0
      %v4366 = vmax.f32 %v4350, 0.0
      %v4367 = vmax.f32 %v4351, 0.0
      %v4368 = vmax.f32 %v4352, 0.0
      %v4369 = vmax.f32 %v4353, 0.0
      %v4370 = vmax.f32 %v4354, 0.0
      %v4371 = vmax.f32 %v4355, 0.0
      %v4372 = vmax.f32 %v4356, 0.0
      %v4373 = vmax.f32 %v4357, 0.0
      %v4374 = vmax.f32 %v4358, 0.0
      %v4375 = vmax.f32 %v4359, 0.0
      %v4376 = vmax.f32 %v4360, 0.0
      %v4377 = vmax.f32 %v4361, 0.0
      %v4378 = vmax.f32 %v4362, 0.0
      %v4379 = vmax.f32 %v4363, 0.0
      %v4380 = vpack.c.bf16 %v4365, %v4364
      %v4381 = vpack.c.bf16 %v4367, %v4366
      %v4382 = vpack.c.bf16 %v4369, %v4368
      %v4383 = vpack.c.bf16 %v4371, %v4370
      %v4384 = vpack.c.bf16 %v4373, %v4372
      %v4385 = vpack.c.bf16 %v4375, %v4374
      %v4386 = vpack.c.bf16 %v4377, %v4376
      %v4387 = vpack.c.bf16 %v4379, %v4378
      %vm4388 = vcmask 228356
      %vm4389 = vmor %vm4388, %vm277
      %4390 = vst.msk [vmem:[%s224] sm:$0xff] %vm4389, %v4380
      %4391 = vst.msk [vmem:[%s224 + $0x8] sm:$0xff] %vm4389, %v4381
      %4392 = vst.msk [vmem:[%s224 + $0x10] sm:$0xff] %vm4389, %v4382
      %4393 = vst.msk [vmem:[%s224 + $0x18] sm:$0xff] %vm4389, %v4383
      %4394 = vst.msk [vmem:[%s224 + $0x20] sm:$0xff] %vm4389, %v4384
      %4395 = vst.msk [vmem:[%s224 + $0x28] sm:$0xff] %vm4389, %v4385
      %4396 = vst.msk [vmem:[%s224 + $0x30] sm:$0xff] %vm4389, %v4386
      %4397 = vst.msk [vmem:[%s224 + $0x38] sm:$0xff] %vm4389, %v4387
      %p4398 = scmp.lt.s32.totalorder %s16, 1
      %s4399 = scalar_select %p4398, %s16, 1
      %s4400 = smul.addr %s4399, 16
      %s4401 = smul.addr %s4400, 4
      %s4402 = scalar_lea.vmem %s5, %s4401
      // Predicated region
      $region41: #{digit_encoder_forward.2} parent=39 // pred_check
        %p4403 = pneg %p144
      $region42: #{digit_encoder_forward.2} parent=39 // pred_check_branch
        %4405 = sbr.rel (%p4403) target = $region44
      $region43: #{digit_encoder_forward.2} parent=39 // pred_region
        _
      $region44: #{digit_encoder_forward.2} parent=39 // pred_fallthru
        _
    $region40: #{digit_encoder_forward.2} parent=5 // pred_fallthru
      _
    %p4406 = scmp.le.s32.totalorder 2, %s11
    // Predicated region
    $region45: #{digit_encoder_forward.2} parent=5 // pred_check
      %p4407 = pneg %p4406
    $region46: #{digit_encoder_forward.2} parent=5 // pred_check_branch
      %4409 = sbr.rel (%p4407) target = $region48
    $region47: #{digit_encoder_forward.2} parent=5 // pred_region
      %s4410 = ssub.s32 %s11, 2
      // Predicated region
      $region49: #{digit_encoder_forward.2} parent=47 // pred_check
        %p4411 = pneg %p150
      $region50: #{digit_encoder_forward.2} parent=47 // pred_check_branch
        %4413 = sbr.rel (%p4411) target = $region52
      $region51: #{digit_encoder_forward.2} parent=47 // pred_region
        %p4414 = scmp.lt.s32.totalorder %s17, 1
        %s4415 = scalar_select %p4414, %s17, 1
        %s4416 = smul.addr %s4415, 16
        %s4417 = smul.addr %s4416, 4
        %s4418 = scalar_lea.vmem %s5, %s4417
      $region52: #{digit_encoder_forward.2} parent=47 // pred_fallthru
        _
    $region48: #{digit_encoder_forward.2} parent=5 // pred_fallthru
      _
  $region6: #{digit_encoder_forward.2} parent=0 // loop_footer
    %s15 = sadd.s32 1, %s11
  $region7: #{digit_encoder_forward.2} parent=0 // loop_footer_branch
    %10 = sbr.rel target = $region3
  $region8: #{digit_encoder_forward.2} parent=0 // loop_exit
    _

// kernel: digit_encoder_forward.3
$region0: #{digit_encoder_forward.3}
  #allocation0 [shape = 'u32[]', space=smem, size = 0x4, offset = 0x4, fixed_abs, tag = 'smem constant byte address 0x4 - core index']
  #allocation1 [shape = 'u32[72,128]{1,0:T(1,128)}', space=vmem, size = 0x9000, scoped, tag = 'internal scratch']
  #allocation2 [shape = 'f32[2,128]{1,0:T(2,128)}', space=vmem, size = 0x400, scoped, tag = 'scratch operand']
  %s0 = inlined_call_operand.vmem [shape: bf16[2,9984], index: 0, kind: input, shape index: {}]
  %s1 = inlined_call_operand.vmem [shape: bf16[9984,128], index: 1, kind: input, shape index: {}]
  %s2 = inlined_call_operand.vmem [shape: f32[1,128], index: 2, kind: input, shape index: {}]
  %s3 = inlined_call_operand.vmem [shape: f32[128,10], index: 3, kind: input, shape index: {}]
  %s4 = inlined_call_operand.vmem [shape: f32[1,10], index: 4, kind: input, shape index: {}]
  %s5 = inlined_call_operand.hbm [shape: f32[2,10], index: 5, kind: output, shape index: {}]
  %s6 = sld [smem:[#allocation0]]
  $region61: #{digit_encoder_forward.3} parent=0
    _
  %s8 = ssub.s32 1, %s6
  %s9 = scalar_select 0, %s8, %s6
  $region1: #{digit_encoder_forward.3} parent=0
    #allocation3 [shape = 'u8[1024]{0}', space=vmem, size = 0x400, scoped, tag = 'output window, operand 0, single buffered']
    #allocation4 [shape = 's32[2]{0}', space=sflag, size = 0x8, scoped, tag = 'scoped memory for digit_encoder_forward.3']
    %10 = vsyncpa [#allocation4], 0
    loop: start=0, step=1, limit=4
    $region2: #{digit_encoder_forward.3} parent=1 // loop_pre_header
      _
    $region3: #{digit_encoder_forward.3} parent=1 // loop_header
      %s12 = sphi 0, %s16
      %p13 = scmp.ge.s32.totalorder %s12, 4
      %s19 = sphi 0, %s31
      %s20 = sphi 0, %s27
      %s21 = sphi 0, %s19
      %s22 = sphi 0, %s20
      %s23 = sphi 0, %s21
      %s24 = sphi 0, %s22
      %s36 = sphi 0, %s38
      %s39 = sphi 0, %s36
      %s40 = sphi 0, %s39
      %s56 = sphi 0, %s40
      %s62 = sphi 0, %s64
      %s65 = sphi 0, %s62
      %s66 = sphi 0, %s65
      %s82 = sphi 0, %s66
      %s86 = sphi 0, %s86
      %s88 = sphi 0, %s86
      %s89 = sphi 0, %s88
      %s103 = sphi 0, %s89
      %s107 = sphi 0, %s107
      %s109 = sphi 0, %s107
      %s110 = sphi 0, %s109
      %s124 = sphi 0, %s110
      %s128 = sphi 0, %s128
      %s130 = sphi 0, %s128
      %s131 = sphi 0, %s130
      %s145 = sphi 0, %s131
      %s151 = sphi 0, %s153
      %s154 = sphi 0, %s151
      %s155 = sphi 0, %s154
      %s171 = sphi 0, %s155
    $region4: #{digit_encoder_forward.3} parent=1 // loop_header_branch
      %15 = sbr.rel (%p13) target = $region8
    $region5: #{digit_encoder_forward.3} parent=1 // loop_body
      %s17 = ssub.s32 %s12, 1
      %s18 = ssub.s32 %s12, 2
      %s25 = sadd.s32 1, %s20
      %p26 = scmp.ge.s32.totalorder %s25, 2
      %s27 = scalar_select %p26, 0, %s25
      %s28 = sadd.s32 1, %s19
      %s29 = scalar_select %p26, %s28, %s19
      %p30 = scmp.ge.s32.totalorder %s29, 1
      %s31 = scalar_select %p30, 0, %s29
      %s32 = ssub.s32 %s19, %s31
      %s33 = ssub.s32 %s20, %s27
      %s34 = sor.u32 %s32, %s33
      %p35 = scmp.eq.s32.totalorder %s34, 0
      %s37 = sadd.s32 %s36, 1
      %s38 = scalar_select %p35, %s36, %s37
      %p41 = pneg %p35
      %p42 = scmp.eq.s32.totalorder %s12, 1
      %p43 = por %p41, %p42
      %p44 = scmp.ne.s32.totalorder %s36, %s39
      %p45 = scmp.eq.s32.totalorder %s12, 0
      %p46 = por %p44, %p45
      %p47 = scmp.ne.s32.totalorder %s36, %s39
      %p48 = scmp.eq.s32.totalorder %s17, 1
      %p49 = por %p47, %p48
      %p50 = scmp.ne.s32.totalorder %s39, %s40
      %p51 = scmp.eq.s32.totalorder %s17, 0
      %p52 = por %p50, %p51
      %p53 = scmp.ne.s32.totalorder %s39, %s40
      %p54 = scmp.eq.s32.totalorder %s18, 1
      %p55 = por %p53, %p54
      %p57 = scmp.ne.s32.totalorder %s40, %s56
      %p58 = scmp.eq.s32.totalorder %s18, 0
      %p59 = por %p57, %p58
      %s60 = ssub.s32 %s20, %s27
      %p61 = scmp.eq.s32.totalorder %s60, 0
      %s63 = sadd.s32 %s62, 1
      %s64 = scalar_select %p61, %s62, %s63
      %p67 = pneg %p61
      %p68 = scmp.eq.s32.totalorder %s12, 1
      %p69 = por %p67, %p68
      %p70 = scmp.ne.s32.totalorder %s62, %s65
      %p71 = scmp.eq.s32.totalorder %s12, 0
      %p72 = por %p70, %p71
      %p73 = scmp.ne.s32.totalorder %s62, %s65
      %p74 = scmp.eq.s32.totalorder %s17, 1
      %p75 = por %p73, %p74
      %p76 = scmp.ne.s32.totalorder %s65, %s66
      %p77 = scmp.eq.s32.totalorder %s17, 0
      %p78 = por %p76, %p77
      %p79 = scmp.ne.s32.totalorder %s65, %s66
      %p80 = scmp.eq.s32.totalorder %s18, 1
      %p81 = por %p79, %p80
      %p83 = scmp.ne.s32.totalorder %s66, %s82
      %p84 = scmp.eq.s32.totalorder %s18, 0
      %p85 = por %p83, %p84
      %s87 = sadd.s32 %s86, 1
      %p90 = scmp.eq.s32.totalorder %s12, 1
      %p91 = scmp.ne.s32.totalorder %s86, %s88
      %p92 = scmp.eq.s32.totalorder %s12, 0
      %p93 = por %p91, %p92
      %p94 = scmp.ne.s32.totalorder %s86, %s88
      %p95 = scmp.eq.s32.totalorder %s17, 1
      %p96 = por %p94, %p95
      %p97 = scmp.ne.s32.totalorder %s88, %s89
      %p98 = scmp.eq.s32.totalorder %s17, 0
      %p99 = por %p97, %p98
      %p100 = scmp.ne.s32.totalorder %s88, %s89
      %p101 = scmp.eq.s32.totalorder %s18, 1
      %p102 = por %p100, %p101
      %p104 = scmp.ne.s32.totalorder %s89, %s103
      %p105 = scmp.eq.s32.totalorder %s18, 0
      %p106 = por %p104, %p105
      %s108 = sadd.s32 %s107, 1
      %p111 = scmp.eq.s32.totalorder %s12, 1
      %p112 = scmp.ne.s32.totalorder %s107, %s109
      %p113 = scmp.eq.s32.totalorder %s12, 0
      %p114 = por %p112, %p113
      %p115 = scmp.ne.s32.totalorder %s107, %s109
      %p116 = scmp.eq.s32.totalorder %s17, 1
      %p117 = por %p115, %p116
      %p118 = scmp.ne.s32.totalorder %s109, %s110
      %p119 = scmp.eq.s32.totalorder %s17, 0
      %p120 = por %p118, %p119
      %p121 = scmp.ne.s32.totalorder %s109, %s110
      %p122 = scmp.eq.s32.totalorder %s18, 1
      %p123 = por %p121, %p122
      %p125 = scmp.ne.s32.totalorder %s110, %s124
      %p126 = scmp.eq.s32.totalorder %s18, 0
      %p127 = por %p125, %p126
      %s129 = sadd.s32 %s128, 1
      %p132 = scmp.eq.s32.totalorder %s12, 1
      %p133 = scmp.ne.s32.totalorder %s128, %s130
      %p134 = scmp.eq.s32.totalorder %s12, 0
      %p135 = por %p133, %p134
      %p136 = scmp.ne.s32.totalorder %s128, %s130
      %p137 = scmp.eq.s32.totalorder %s17, 1
      %p138 = por %p136, %p137
      %p139 = scmp.ne.s32.totalorder %s130, %s131
      %p140 = scmp.eq.s32.totalorder %s17, 0
      %p141 = por %p139, %p140
      %p142 = scmp.ne.s32.totalorder %s130, %s131
      %p143 = scmp.eq.s32.totalorder %s18, 1
      %p144 = por %p142, %p143
      %p146 = scmp.ne.s32.totalorder %s131, %s145
      %p147 = scmp.eq.s32.totalorder %s18, 0
      %p148 = por %p146, %p147
      %s149 = ssub.s32 %s19, %s31
      %p150 = scmp.eq.s32.totalorder %s149, 0
      %s152 = sadd.s32 %s151, 1
      %s153 = scalar_select %p150, %s151, %s152
      %p156 = pneg %p150
      %p157 = scmp.eq.s32.totalorder %s12, 1
      %p158 = por %p156, %p157
      %p159 = scmp.ne.s32.totalorder %s151, %s154
      %p160 = scmp.eq.s32.totalorder %s12, 0
      %p161 = por %p159, %p160
      %p162 = scmp.ne.s32.totalorder %s151, %s154
      %p163 = scmp.eq.s32.totalorder %s17, 1
      %p164 = por %p162, %p163
      %p165 = scmp.ne.s32.totalorder %s154, %s155
      %p166 = scmp.eq.s32.totalorder %s17, 0
      %p167 = por %p165, %p166
      %p168 = scmp.ne.s32.totalorder %s154, %s155
      %p169 = scmp.eq.s32.totalorder %s18, 1
      %p170 = por %p168, %p169
      %p172 = scmp.ne.s32.totalorder %s155, %s171
      %p173 = scmp.eq.s32.totalorder %s18, 0
      %p174 = por %p172, %p173
      %p175 = scmp.le.s32.totalorder 1, %s12
      %p176 = scmp.lt.s32.totalorder %s12, 3
      %p177 = pnand %p175, %p176
      %p178 = pneg %p177
      // Predicated region
      $region9: #{digit_encoder_forward.3} parent=5 // pred_check
        _
      $region10: #{digit_encoder_forward.3} parent=5 // pred_check_branch
        %180 = sbr.rel (%p177) target = $region12
      $region11: #{digit_encoder_forward.3} parent=5 // pred_region
        %s181 = ssub.s32 %s12, 1
        // Predicated region
        $region13: #{digit_encoder_forward.3} parent=11 // pred_check
          %p182 = pneg %p99
        $region14: #{digit_encoder_forward.3} parent=11 // pred_check_branch
          %184 = sbr.rel (%p182) target = $region16
        $region15: #{digit_encoder_forward.3} parent=11 // pred_region
          _
        $region16: #{digit_encoder_forward.3} parent=11 // pred_fallthru
          _
        // Predicated region
        $region17: #{digit_encoder_forward.3} parent=11 // pred_check
          %p185 = pneg %p120
        $region18: #{digit_encoder_forward.3} parent=11 // pred_check_branch
          %187 = sbr.rel (%p185) target = $region20
        $region19: #{digit_encoder_forward.3} parent=11 // pred_region
          _
        $region20: #{digit_encoder_forward.3} parent=11 // pred_fallthru
          _
        // Predicated region
        $region21: #{digit_encoder_forward.3} parent=11 // pred_check
          %p188 = pneg %p141
        $region22: #{digit_encoder_forward.3} parent=11 // pred_check_branch
          %190 = sbr.rel (%p188) target = $region24
        $region23: #{digit_encoder_forward.3} parent=11 // pred_region
          _
        $region24: #{digit_encoder_forward.3} parent=11 // pred_fallthru
          _
      $region12: #{digit_encoder_forward.3} parent=5 // pred_fallthru
        _
      %p191 = scmp.lt.s32.totalorder %s12, 2
      // Predicated region
      $region25: #{digit_encoder_forward.3} parent=5 // pred_check
        %p192 = pneg %p191
      $region26: #{digit_encoder_forward.3} parent=5 // pred_check_branch
        %194 = sbr.rel (%p192) target = $region28
      $region27: #{digit_encoder_forward.3} parent=5 // pred_region
        // Predicated region
        $region29: #{digit_encoder_forward.3} parent=27 // pred_check
          %p195 = pneg %p46
        $region30: #{digit_encoder_forward.3} parent=27 // pred_check_branch
          %197 = sbr.rel (%p195) target = $region32
        $region31: #{digit_encoder_forward.3} parent=27 // pred_region
          %s198 = smul.u32 39, %s20
          %p199 = scmp.lt.s32.totalorder %s19, 0
          %s200 = scalar_select %p199, %s19, 0
          %p201 = scmp.lt.s32.totalorder %s198, 77
          %s202 = scalar_select %p201, %s198, 77
          %s203 = smul.addr %s200, 78
          %s204 = sadd.s32 %s202, %s203
          %s205 = scalar_lea.vmem %s0, %s204
          %s206 = smul.u32 39, %s20
        $region32: #{digit_encoder_forward.3} parent=27 // pred_fallthru
          _
        // Predicated region
        $region33: #{digit_encoder_forward.3} parent=27 // pred_check
          %p207 = pneg %p72
        $region34: #{digit_encoder_forward.3} parent=27 // pred_check_branch
          %209 = sbr.rel (%p207) target = $region36
        $region35: #{digit_encoder_forward.3} parent=27 // pred_region
          %s210 = smul.u32 624, %s20
          %p211 = scmp.lt.s32.totalorder %s210, 1247
          %s212 = scalar_select %p211, %s210, 1247
          %s213 = smul.addr %s212, 4
          %s214 = scalar_lea.vmem %s1, %s213
          %s215 = smul.u32 624, %s20
        $region36: #{digit_encoder_forward.3} parent=27 // pred_fallthru
          _
      $region28: #{digit_encoder_forward.3} parent=5 // pred_fallthru
        _
      %p216 = scmp.le.s32.totalorder 1, %s12
      %p217 = scmp.lt.s32.totalorder %s12, 3
      %p218 = pnand %p216, %p217
      %p219 = pneg %p218
      // Predicated region
      $region37: #{digit_encoder_forward.3} parent=5 // pred_check
        _
      $region38: #{digit_encoder_forward.3} parent=5 // pred_check_branch
        %221 = sbr.rel (%p218) target = $region40
      $region39: #{digit_encoder_forward.3} parent=5 // pred_region
        %s222 = ssub.s32 %s12, 1
        %s223 = smul.u32 39, %s22
        %p224 = scmp.lt.s32.totalorder %s21, 0
        %s225 = scalar_select %p224, %s21, 0
        %p226 = scmp.lt.s32.totalorder %s223, 77
        %s227 = scalar_select %p226, %s223, 77
        %s228 = smul.addr %s225, 78
        %s229 = sadd.s32 %s227, %s228
        %s230 = scalar_lea.vmem %s0, %s229
        %p231 = pneg %p52
        %p232 = pneg %p49
        %s233 = smul.u32 624, %s22
        %p234 = scmp.lt.s32.totalorder %s233, 1247
        %s235 = scalar_select %p234, %s233, 1247
        %s236 = smul.addr %s235, 4
        %s237 = scalar_lea.vmem %s1, %s236
        %p238 = pneg %p78
        %p239 = pneg %p75
        %p240 = pneg %p99
        %p241 = pneg %p96
        %p242 = pneg %p120
        %p243 = pneg %p117
        %p244 = pneg %p141
        %p245 = pneg %p138
        %p246 = pneg %p167
        %p247 = pneg %p164
        %s248 = smul.u32 39, %s22
        %p249 = scmp.lt.s32.totalorder %s21, 0
        %s250 = scalar_select %p249, %s21, 0
        %p251 = scmp.lt.s32.totalorder %s248, 77
        %s252 = scalar_select %p251, %s248, 77
        %s253 = smul.addr %s250, 78
        %s254 = sadd.s32 %s252, %s253
        %s255 = scalar_lea.vmem %s0, %s254
        %s256 = smul.u32 39, %s22
        %s257 = smul.u32 624, %s22
        %p258 = scmp.lt.s32.totalorder %s257, 1247
        %s259 = scalar_select %p258, %s257, 1247
        %s260 = smul.addr %s259, 4
        %s261 = scalar_lea.vmem %s1, %s260
        %s262 = smul.u32 624, %s22
        %p263 = scmp.eq.s32.totalorder %s22, 0
        // Predicated region
        $region41: #{digit_encoder_forward.3} parent=39 // pred_check
          %p264 = pneg %p263
        $region42: #{digit_encoder_forward.3} parent=39 // pred_check_branch
          %266 = sbr.rel (%p264) target = $region44
        $region43: #{digit_encoder_forward.3} parent=39 // pred_region
          %267 = vst [vmem:[#allocation2] sm:$0x3] 0.0
        $region44: #{digit_encoder_forward.3} parent=39 // pred_fallthru
          _
        %v268 = vld [vmem:[#allocation2] sm:$0x3]
        %v269 = vld [vmem:[%s255] sm:$0xff]
        %v270 = vld [vmem:[%s255 + $0x8] sm:$0xff]
        %v271 = vld [vmem:[%s255 + $0x10] sm:$0xff]
        %v272 = vld [vmem:[%s255 + $0x18] sm:$0xff]
        %v273 = vld [vmem:[%s255 + $0x20] sm:$0x7f]
        %v274 = vld [vmem:[%s261] sm:$0xf]
        %v275 = vld [vmem:[%s261 + $0x4] sm:$0xf]
        %v276 = vld [vmem:[%s261 + $0x8] sm:$0xf]
        %v277 = vld [vmem:[%s261 + $0xc] sm:$0xf]
        %v278 = vld [vmem:[%s261 + $0x10] sm:$0xf]
        %v279 = vld [vmem:[%s261 + $0x14] sm:$0xf]
        %v280 = vld [vmem:[%s261 + $0x18] sm:$0xf]
        %v281 = vld [vmem:[%s261 + $0x1c] sm:$0xf]
        %v282 = vld [vmem:[%s261 + $0x20] sm:$0xf]
        %v283 = vld [vmem:[%s261 + $0x24] sm:$0xf]
        %v284 = vld [vmem:[%s261 + $0x28] sm:$0xf]
        %v285 = vld [vmem:[%s261 + $0x2c] sm:$0xf]
        %v286 = vld [vmem:[%s261 + $0x30] sm:$0xf]
        %v287 = vld [vmem:[%s261 + $0x34] sm:$0xf]
        %v288 = vld [vmem:[%s261 + $0x38] sm:$0xf]
        %v289 = vld [vmem:[%s261 + $0x3c] sm:$0xf]
        %v290 = vld [vmem:[%s261 + $0x40] sm:$0xf]
        %v291 = vld [vmem:[%s261 + $0x44] sm:$0xf]
        %v292 = vld [vmem:[%s261 + $0x48] sm:$0xf]
        %v293 = vld [vmem:[%s261 + $0x4c] sm:$0xf]
        %v294 = vld [vmem:[%s261 + $0x50] sm:$0xf]
        %v295 = vld [vmem:[%s261 + $0x54] sm:$0xf]
        %v296 = vld [vmem:[%s261 + $0x58] sm:$0xf]
        %v297 = vld [vmem:[%s261 + $0x5c] sm:$0xf]
        %v298 = vld [vmem:[%s261 + $0x60] sm:$0xf]
        %v299 = vld [vmem:[%s261 + $0x64] sm:$0xf]
        %v300 = vld [vmem:[%s261 + $0x68] sm:$0xf]
        %v301 = vld [vmem:[%s261 + $0x6c] sm:$0xf]
        %v302 = vld [vmem:[%s261 + $0x70] sm:$0xf]
        %v303 = vld [vmem:[%s261 + $0x74] sm:$0xf]
        %v304 = vld [vmem:[%s261 + $0x78] sm:$0xf]
        %v305 = vld [vmem:[%s261 + $0x7c] sm:$0xf]
        %v306 = vld [vmem:[%s261 + $0x80] sm:$0xf]
        %v307 = vld [vmem:[%s261 + $0x84] sm:$0xf]
        %v308 = vld [vmem:[%s261 + $0x88] sm:$0xf]
        %v309 = vld [vmem:[%s261 + $0x8c] sm:$0xf]
        %v310 = vld [vmem:[%s261 + $0x90] sm:$0xf]
        %v311 = vld [vmem:[%s261 + $0x94] sm:$0xf]
        %v312 = vld [vmem:[%s261 + $0x98] sm:$0xf]
        %v313 = vld [vmem:[%s261 + $0x9c] sm:$0xf]
        %v314 = vld [vmem:[%s261 + $0xa0] sm:$0xf]
        %v315 = vld [vmem:[%s261 + $0xa4] sm:$0xf]
        %v316 = vld [vmem:[%s261 + $0xa8] sm:$0xf]
        %v317 = vld [vmem:[%s261 + $0xac] sm:$0xf]
        %v318 = vld [vmem:[%s261 + $0xb0] sm:$0xf]
        %v319 = vld [vmem:[%s261 + $0xb4] sm:$0xf]
        %v320 = vld [vmem:[%s261 + $0xb8] sm:$0xf]
        %v321 = vld [vmem:[%s261 + $0xbc] sm:$0xf]
        %v322 = vld [vmem:[%s261 + $0xc0] sm:$0xf]
        %v323 = vld [vmem:[%s261 + $0xc4] sm:$0xf]
        %v324 = vld [vmem:[%s261 + $0xc8] sm:$0xf]
        %v325 = vld [vmem:[%s261 + $0xcc] sm:$0xf]
        %v326 = vld [vmem:[%s261 + $0xd0] sm:$0xf]
        %v327 = vld [vmem:[%s261 + $0xd4] sm:$0xf]
        %v328 = vld [vmem:[%s261 + $0xd8] sm:$0xf]
        %v329 = vld [vmem:[%s261 + $0xdc] sm:$0xf]
        %v330 = vld [vmem:[%s261 + $0xe0] sm:$0xf]
        %v331 = vld [vmem:[%s261 + $0xe4] sm:$0xf]
        %v332 = vld [vmem:[%s261 + $0xe8] sm:$0xf]
        %v333 = vld [vmem:[%s261 + $0xec] sm:$0xf]
        %v334 = vld [vmem:[%s261 + $0xf0] sm:$0xf]
        %v335 = vld [vmem:[%s261 + $0xf4] sm:$0xf]
        %v336 = vld [vmem:[%s261 + $0xf8] sm:$0xf]
        %v337 = vld [vmem:[%s261 + $0xfc] sm:$0xf]
        %v338 = vld [vmem:[%s261 + $0x100] sm:$0xf]
        %v339 = vld [vmem:[%s261 + $0x104] sm:$0xf]
        %v340 = vld [vmem:[%s261 + $0x108] sm:$0xf]
        %v341 = vld [vmem:[%s261 + $0x10c] sm:$0xf]
        %v342 = vld [vmem:[%s261 + $0x110] sm:$0xf]
        %v343 = vld [vmem:[%s261 + $0x114] sm:$0xf]
        %v344 = vld [vmem:[%s261 + $0x118] sm:$0xf]
        %v345 = vld [vmem:[%s261 + $0x11c] sm:$0xf]
        %v346 = vld [vmem:[%s261 + $0x120] sm:$0xf]
        %v347 = vld [vmem:[%s261 + $0x124] sm:$0xf]
        %v348 = vld [vmem:[%s261 + $0x128] sm:$0xf]
        %v349 = vld [vmem:[%s261 + $0x12c] sm:$0xf]
        %v350 = vld [vmem:[%s261 + $0x130] sm:$0xf]
        %v351 = vld [vmem:[%s261 + $0x134] sm:$0xf]
        %v352 = vld [vmem:[%s261 + $0x138] sm:$0xf]
        %v353 = vld [vmem:[%s261 + $0x13c] sm:$0xf]
        %v354 = vld [vmem:[%s261 + $0x140] sm:$0xf]
        %v355 = vld [vmem:[%s261 + $0x144] sm:$0xf]
        %v356 = vld [vmem:[%s261 + $0x148] sm:$0xf]
        %v357 = vld [vmem:[%s261 + $0x14c] sm:$0xf]
        %v358 = vld [vmem:[%s261 + $0x150] sm:$0xf]
        %v359 = vld [vmem:[%s261 + $0x154] sm:$0xf]
        %v360 = vld [vmem:[%s261 + $0x158] sm:$0xf]
        %v361 = vld [vmem:[%s261 + $0x15c] sm:$0xf]
        %v362 = vld [vmem:[%s261 + $0x160] sm:$0xf]
        %v363 = vld [vmem:[%s261 + $0x164] sm:$0xf]
        %v364 = vld [vmem:[%s261 + $0x168] sm:$0xf]
        %v365 = vld [vmem:[%s261 + $0x16c] sm:$0xf]
        %v366 = vld [vmem:[%s261 + $0x170] sm:$0xf]
        %v367 = vld [vmem:[%s261 + $0x174] sm:$0xf]
        %v368 = vld [vmem:[%s261 + $0x178] sm:$0xf]
        %v369 = vld [vmem:[%s261 + $0x17c] sm:$0xf]
        %v370 = vld [vmem:[%s261 + $0x180] sm:$0xf]
        %v371 = vld [vmem:[%s261 + $0x184] sm:$0xf]
        %v372 = vld [vmem:[%s261 + $0x188] sm:$0xf]
        %v373 = vld [vmem:[%s261 + $0x18c] sm:$0xf]
        %v374 = vld [vmem:[%s261 + $0x190] sm:$0xf]
        %v375 = vld [vmem:[%s261 + $0x194] sm:$0xf]
        %v376 = vld [vmem:[%s261 + $0x198] sm:$0xf]
        %v377 = vld [vmem:[%s261 + $0x19c] sm:$0xf]
        %v378 = vld [vmem:[%s261 + $0x1a0] sm:$0xf]
        %v379 = vld [vmem:[%s261 + $0x1a4] sm:$0xf]
        %v380 = vld [vmem:[%s261 + $0x1a8] sm:$0xf]
        %v381 = vld [vmem:[%s261 + $0x1ac] sm:$0xf]
        %v382 = vld [vmem:[%s261 + $0x1b0] sm:$0xf]
        %v383 = vld [vmem:[%s261 + $0x1b4] sm:$0xf]
        %v384 = vld [vmem:[%s261 + $0x1b8] sm:$0xf]
        %v385 = vld [vmem:[%s261 + $0x1bc] sm:$0xf]
        %v386 = vld [vmem:[%s261 + $0x1c0] sm:$0xf]
        %v387 = vld [vmem:[%s261 + $0x1c4] sm:$0xf]
        %v388 = vld [vmem:[%s261 + $0x1c8] sm:$0xf]
        %v389 = vld [vmem:[%s261 + $0x1cc] sm:$0xf]
        %v390 = vld [vmem:[%s261 + $0x1d0] sm:$0xf]
        %v391 = vld [vmem:[%s261 + $0x1d4] sm:$0xf]
        %v392 = vld [vmem:[%s261 + $0x1d8] sm:$0xf]
        %v393 = vld [vmem:[%s261 + $0x1dc] sm:$0xf]
        %v394 = vld [vmem:[%s261 + $0x1e0] sm:$0xf]
        %v395 = vld [vmem:[%s261 + $0x1e4] sm:$0xf]
        %v396 = vld [vmem:[%s261 + $0x1e8] sm:$0xf]
        %v397 = vld [vmem:[%s261 + $0x1ec] sm:$0xf]
        %v398 = vld [vmem:[%s261 + $0x1f0] sm:$0xf]
        %v399 = vld [vmem:[%s261 + $0x1f4] sm:$0xf]
        %v400 = vld [vmem:[%s261 + $0x1f8] sm:$0xf]
        %v401 = vld [vmem:[%s261 + $0x1fc] sm:$0xf]
        %v402 = vld [vmem:[%s261 + $0x200] sm:$0xf]
        %v403 = vld [vmem:[%s261 + $0x204] sm:$0xf]
        %v404 = vld [vmem:[%s261 + $0x208] sm:$0xf]
        %v405 = vld [vmem:[%s261 + $0x20c] sm:$0xf]
        %v406 = vld [vmem:[%s261 + $0x210] sm:$0xf]
        %v407 = vld [vmem:[%s261 + $0x214] sm:$0xf]
        %v408 = vld [vmem:[%s261 + $0x218] sm:$0xf]
        %v409 = vld [vmem:[%s261 + $0x21c] sm:$0xf]
        %v410 = vld [vmem:[%s261 + $0x220] sm:$0xf]
        %v411 = vld [vmem:[%s261 + $0x224] sm:$0xf]
        %v412 = vld [vmem:[%s261 + $0x228] sm:$0xf]
        %v413 = vld [vmem:[%s261 + $0x22c] sm:$0xf]
        %v414 = vld [vmem:[%s261 + $0x230] sm:$0xf]
        %v415 = vld [vmem:[%s261 + $0x234] sm:$0xf]
        %v416 = vld [vmem:[%s261 + $0x238] sm:$0xf]
        %v417 = vld [vmem:[%s261 + $0x23c] sm:$0xf]
        %v418 = vld [vmem:[%s261 + $0x240] sm:$0xf]
        %v419 = vld [vmem:[%s261 + $0x244] sm:$0xf]
        %v420 = vld [vmem:[%s261 + $0x248] sm:$0xf]
        %v421 = vld [vmem:[%s261 + $0x24c] sm:$0xf]
        %v422 = vld [vmem:[%s261 + $0x250] sm:$0xf]
        %v423 = vld [vmem:[%s261 + $0x254] sm:$0xf]
        %v424 = vld [vmem:[%s261 + $0x258] sm:$0xf]
        %v425 = vld [vmem:[%s261 + $0x25c] sm:$0xf]
        %v426 = vld [vmem:[%s261 + $0x260] sm:$0xf]
        %v427 = vld [vmem:[%s261 + $0x264] sm:$0xf]
        %v428 = vld [vmem:[%s261 + $0x268] sm:$0xf]
        %v429 = vld [vmem:[%s261 + $0x26c] sm:$0xf]
        %v430 = vld [vmem:[%s261 + $0x270] sm:$0xf]
        %v431 = vld [vmem:[%s261 + $0x274] sm:$0xf]
        %v432 = vld [vmem:[%s261 + $0x278] sm:$0xf]
        %v433 = vld [vmem:[%s261 + $0x27c] sm:$0xf]
        %v434 = vld [vmem:[%s261 + $0x280] sm:$0xf]
        %v435 = vld [vmem:[%s261 + $0x284] sm:$0xf]
        %v436 = vld [vmem:[%s261 + $0x288] sm:$0xf]
        %v437 = vld [vmem:[%s261 + $0x28c] sm:$0xf]
        %v438 = vld [vmem:[%s261 + $0x290] sm:$0xf]
        %v439 = vld [vmem:[%s261 + $0x294] sm:$0xf]
        %v440 = vld [vmem:[%s261 + $0x298] sm:$0xf]
        %v441 = vld [vmem:[%s261 + $0x29c] sm:$0xf]
        %v442 = vld [vmem:[%s261 + $0x2a0] sm:$0xf]
        %v443 = vld [vmem:[%s261 + $0x2a4] sm:$0xf]
        %v444 = vld [vmem:[%s261 + $0x2a8] sm:$0xf]
        %v445 = vld [vmem:[%s261 + $0x2ac] sm:$0xf]
        %v446 = vld [vmem:[%s261 + $0x2b0] sm:$0xf]
        %v447 = vld [vmem:[%s261 + $0x2b4] sm:$0xf]
        %v448 = vld [vmem:[%s261 + $0x2b8] sm:$0xf]
        %v449 = vld [vmem:[%s261 + $0x2bc] sm:$0xf]
        %v450 = vld [vmem:[%s261 + $0x2c0] sm:$0xf]
        %v451 = vld [vmem:[%s261 + $0x2c4] sm:$0xf]
        %v452 = vld [vmem:[%s261 + $0x2c8] sm:$0xf]
        %v453 = vld [vmem:[%s261 + $0x2cc] sm:$0xf]
        %v454 = vld [vmem:[%s261 + $0x2d0] sm:$0xf]
        %v455 = vld [vmem:[%s261 + $0x2d4] sm:$0xf]
        %v456 = vld [vmem:[%s261 + $0x2d8] sm:$0xf]
        %v457 = vld [vmem:[%s261 + $0x2dc] sm:$0xf]
        %v458 = vld [vmem:[%s261 + $0x2e0] sm:$0xf]
        %v459 = vld [vmem:[%s261 + $0x2e4] sm:$0xf]
        %v460 = vld [vmem:[%s261 + $0x2e8] sm:$0xf]
        %v461 = vld [vmem:[%s261 + $0x2ec] sm:$0xf]
        %v462 = vld [vmem:[%s261 + $0x2f0] sm:$0xf]
        %v463 = vld [vmem:[%s261 + $0x2f4] sm:$0xf]
        %v464 = vld [vmem:[%s261 + $0x2f8] sm:$0xf]
        %v465 = vld [vmem:[%s261 + $0x2fc] sm:$0xf]
        %v466 = vld [vmem:[%s261 + $0x300] sm:$0xf]
        %v467 = vld [vmem:[%s261 + $0x304] sm:$0xf]
        %v468 = vld [vmem:[%s261 + $0x308] sm:$0xf]
        %v469 = vld [vmem:[%s261 + $0x30c] sm:$0xf]
        %v470 = vld [vmem:[%s261 + $0x310] sm:$0xf]
        %v471 = vld [vmem:[%s261 + $0x314] sm:$0xf]
        %v472 = vld [vmem:[%s261 + $0x318] sm:$0xf]
        %v473 = vld [vmem:[%s261 + $0x31c] sm:$0xf]
        %v474 = vld [vmem:[%s261 + $0x320] sm:$0xf]
        %v475 = vld [vmem:[%s261 + $0x324] sm:$0xf]
        %v476 = vld [vmem:[%s261 + $0x328] sm:$0xf]
        %v477 = vld [vmem:[%s261 + $0x32c] sm:$0xf]
        %v478 = vld [vmem:[%s261 + $0x330] sm:$0xf]
        %v479 = vld [vmem:[%s261 + $0x334] sm:$0xf]
        %v480 = vld [vmem:[%s261 + $0x338] sm:$0xf]
        %v481 = vld [vmem:[%s261 + $0x33c] sm:$0xf]
        %v482 = vld [vmem:[%s261 + $0x340] sm:$0xf]
        %v483 = vld [vmem:[%s261 + $0x344] sm:$0xf]
        %v484 = vld [vmem:[%s261 + $0x348] sm:$0xf]
        %v485 = vld [vmem:[%s261 + $0x34c] sm:$0xf]
        %v486 = vld [vmem:[%s261 + $0x350] sm:$0xf]
        %v487 = vld [vmem:[%s261 + $0x354] sm:$0xf]
        %v488 = vld [vmem:[%s261 + $0x358] sm:$0xf]
        %v489 = vld [vmem:[%s261 + $0x35c] sm:$0xf]
        %v490 = vld [vmem:[%s261 + $0x360] sm:$0xf]
        %v491 = vld [vmem:[%s261 + $0x364] sm:$0xf]
        %v492 = vld [vmem:[%s261 + $0x368] sm:$0xf]
        %v493 = vld [vmem:[%s261 + $0x36c] sm:$0xf]
        %v494 = vld [vmem:[%s261 + $0x370] sm:$0xf]
        %v495 = vld [vmem:[%s261 + $0x374] sm:$0xf]
        %v496 = vld [vmem:[%s261 + $0x378] sm:$0xf]
        %v497 = vld [vmem:[%s261 + $0x37c] sm:$0xf]
        %v498 = vld [vmem:[%s261 + $0x380] sm:$0xf]
        %v499 = vld [vmem:[%s261 + $0x384] sm:$0xf]
        %v500 = vld [vmem:[%s261 + $0x388] sm:$0xf]
        %v501 = vld [vmem:[%s261 + $0x38c] sm:$0xf]
        %v502 = vld [vmem:[%s261 + $0x390] sm:$0xf]
        %v503 = vld [vmem:[%s261 + $0x394] sm:$0xf]
        %v504 = vld [vmem:[%s261 + $0x398] sm:$0xf]
        %v505 = vld [vmem:[%s261 + $0x39c] sm:$0xf]
        %v506 = vld [vmem:[%s261 + $0x3a0] sm:$0xf]
        %v507 = vld [vmem:[%s261 + $0x3a4] sm:$0xf]
        %v508 = vld [vmem:[%s261 + $0x3a8] sm:$0xf]
        %v509 = vld [vmem:[%s261 + $0x3ac] sm:$0xf]
        %v510 = vld [vmem:[%s261 + $0x3b0] sm:$0xf]
        %v511 = vld [vmem:[%s261 + $0x3b4] sm:$0xf]
        %v512 = vld [vmem:[%s261 + $0x3b8] sm:$0xf]
        %v513 = vld [vmem:[%s261 + $0x3bc] sm:$0xf]
        %v514 = vld [vmem:[%s261 + $0x3c0] sm:$0xf]
        %v515 = vld [vmem:[%s261 + $0x3c4] sm:$0xf]
        %v516 = vld [vmem:[%s261 + $0x3c8] sm:$0xf]
        %v517 = vld [vmem:[%s261 + $0x3cc] sm:$0xf]
        %v518 = vld [vmem:[%s261 + $0x3d0] sm:$0xf]
        %v519 = vld [vmem:[%s261 + $0x3d4] sm:$0xf]
        %v520 = vld [vmem:[%s261 + $0x3d8] sm:$0xf]
        %v521 = vld [vmem:[%s261 + $0x3dc] sm:$0xf]
        %v522 = vld [vmem:[%s261 + $0x3e0] sm:$0xf]
        %v523 = vld [vmem:[%s261 + $0x3e4] sm:$0xf]
        %v524 = vld [vmem:[%s261 + $0x3e8] sm:$0xf]
        %v525 = vld [vmem:[%s261 + $0x3ec] sm:$0xf]
        %v526 = vld [vmem:[%s261 + $0x3f0] sm:$0xf]
        %v527 = vld [vmem:[%s261 + $0x3f4] sm:$0xf]
        %v528 = vld [vmem:[%s261 + $0x3f8] sm:$0xf]
        %v529 = vld [vmem:[%s261 + $0x3fc] sm:$0xf]
        %v530 = vld [vmem:[%s261 + $0x400] sm:$0xf]
        %v531 = vld [vmem:[%s261 + $0x404] sm:$0xf]
        %v532 = vld [vmem:[%s261 + $0x408] sm:$0xf]
        %v533 = vld [vmem:[%s261 + $0x40c] sm:$0xf]
        %v534 = vld [vmem:[%s261 + $0x410] sm:$0xf]
        %v535 = vld [vmem:[%s261 + $0x414] sm:$0xf]
        %v536 = vld [vmem:[%s261 + $0x418] sm:$0xf]
        %v537 = vld [vmem:[%s261 + $0x41c] sm:$0xf]
        %v538 = vld [vmem:[%s261 + $0x420] sm:$0xf]
        %v539 = vld [vmem:[%s261 + $0x424] sm:$0xf]
        %v540 = vld [vmem:[%s261 + $0x428] sm:$0xf]
        %v541 = vld [vmem:[%s261 + $0x42c] sm:$0xf]
        %v542 = vld [vmem:[%s261 + $0x430] sm:$0xf]
        %v543 = vld [vmem:[%s261 + $0x434] sm:$0xf]
        %v544 = vld [vmem:[%s261 + $0x438] sm:$0xf]
        %v545 = vld [vmem:[%s261 + $0x43c] sm:$0xf]
        %v546 = vld [vmem:[%s261 + $0x440] sm:$0xf]
        %v547 = vld [vmem:[%s261 + $0x444] sm:$0xf]
        %v548 = vld [vmem:[%s261 + $0x448] sm:$0xf]
        %v549 = vld [vmem:[%s261 + $0x44c] sm:$0xf]
        %v550 = vld [vmem:[%s261 + $0x450] sm:$0xf]
        %v551 = vld [vmem:[%s261 + $0x454] sm:$0xf]
        %v552 = vld [vmem:[%s261 + $0x458] sm:$0xf]
        %v553 = vld [vmem:[%s261 + $0x45c] sm:$0xf]
        %v554 = vld [vmem:[%s261 + $0x460] sm:$0xf]
        %v555 = vld [vmem:[%s261 + $0x464] sm:$0xf]
        %v556 = vld [vmem:[%s261 + $0x468] sm:$0xf]
        %v557 = vld [vmem:[%s261 + $0x46c] sm:$0xf]
        %v558 = vld [vmem:[%s261 + $0x470] sm:$0xf]
        %v559 = vld [vmem:[%s261 + $0x474] sm:$0xf]
        %v560 = vld [vmem:[%s261 + $0x478] sm:$0xf]
        %v561 = vld [vmem:[%s261 + $0x47c] sm:$0xf]
        %v562 = vld [vmem:[%s261 + $0x480] sm:$0xf]
        %v563 = vld [vmem:[%s261 + $0x484] sm:$0xf]
        %v564 = vld [vmem:[%s261 + $0x488] sm:$0xf]
        %v565 = vld [vmem:[%s261 + $0x48c] sm:$0xf]
        %v566 = vld [vmem:[%s261 + $0x490] sm:$0xf]
        %v567 = vld [vmem:[%s261 + $0x494] sm:$0xf]
        %v568 = vld [vmem:[%s261 + $0x498] sm:$0xf]
        %v569 = vld [vmem:[%s261 + $0x49c] sm:$0xf]
        %v570 = vld [vmem:[%s261 + $0x4a0] sm:$0xf]
        %v571 = vld [vmem:[%s261 + $0x4a4] sm:$0xf]
        %v572 = vld [vmem:[%s261 + $0x4a8] sm:$0xf]
        %v573 = vld [vmem:[%s261 + $0x4ac] sm:$0xf]
        %v574 = vld [vmem:[%s261 + $0x4b0] sm:$0xf]
        %v575 = vld [vmem:[%s261 + $0x4b4] sm:$0xf]
        %v576 = vld [vmem:[%s261 + $0x4b8] sm:$0xf]
        %v577 = vld [vmem:[%s261 + $0x4bc] sm:$0xf]
        %v578 = vld [vmem:[%s261 + $0x4c0] sm:$0xf]
        %v579 = vld [vmem:[%s261 + $0x4c4] sm:$0xf]
        %v580 = vld [vmem:[%s261 + $0x4c8] sm:$0xf]
        %v581 = vld [vmem:[%s261 + $0x4cc] sm:$0xf]
        %v582 = vld [vmem:[%s261 + $0x4d0] sm:$0xf]
        %v583 = vld [vmem:[%s261 + $0x4d4] sm:$0xf]
        %v584 = vld [vmem:[%s261 + $0x4d8] sm:$0xf]
        %v585 = vld [vmem:[%s261 + $0x4dc] sm:$0xf]
        %v586 = vld [vmem:[%s261 + $0x4e0] sm:$0xf]
        %v587 = vld [vmem:[%s261 + $0x4e4] sm:$0xf]
        %v588 = vld [vmem:[%s261 + $0x4e8] sm:$0xf]
        %v589 = vld [vmem:[%s261 + $0x4ec] sm:$0xf]
        %v590 = vld [vmem:[%s261 + $0x4f0] sm:$0xf]
        %v591 = vld [vmem:[%s261 + $0x4f4] sm:$0xf]
        %v592 = vld [vmem:[%s261 + $0x4f8] sm:$0xf]
        %v593 = vld [vmem:[%s261 + $0x4fc] sm:$0xf]
        %v594 = vld [vmem:[%s261 + $0x500] sm:$0xf]
        %v595 = vld [vmem:[%s261 + $0x504] sm:$0xf]
        %v596 = vld [vmem:[%s261 + $0x508] sm:$0xf]
        %v597 = vld [vmem:[%s261 + $0x50c] sm:$0xf]
        %v598 = vld [vmem:[%s261 + $0x510] sm:$0xf]
        %v599 = vld [vmem:[%s261 + $0x514] sm:$0xf]
        %v600 = vld [vmem:[%s261 + $0x518] sm:$0xf]
        %v601 = vld [vmem:[%s261 + $0x51c] sm:$0xf]
        %v602 = vld [vmem:[%s261 + $0x520] sm:$0xf]
        %v603 = vld [vmem:[%s261 + $0x524] sm:$0xf]
        %v604 = vld [vmem:[%s261 + $0x528] sm:$0xf]
        %v605 = vld [vmem:[%s261 + $0x52c] sm:$0xf]
        %v606 = vld [vmem:[%s261 + $0x530] sm:$0xf]
        %v607 = vld [vmem:[%s261 + $0x534] sm:$0xf]
        %v608 = vld [vmem:[%s261 + $0x538] sm:$0xf]
        %v609 = vld [vmem:[%s261 + $0x53c] sm:$0xf]
        %v610 = vld [vmem:[%s261 + $0x540] sm:$0xf]
        %v611 = vld [vmem:[%s261 + $0x544] sm:$0xf]
        %v612 = vld [vmem:[%s261 + $0x548] sm:$0xf]
        %v613 = vld [vmem:[%s261 + $0x54c] sm:$0xf]
        %v614 = vld [vmem:[%s261 + $0x550] sm:$0xf]
        %v615 = vld [vmem:[%s261 + $0x554] sm:$0xf]
        %v616 = vld [vmem:[%s261 + $0x558] sm:$0xf]
        %v617 = vld [vmem:[%s261 + $0x55c] sm:$0xf]
        %v618 = vld [vmem:[%s261 + $0x560] sm:$0xf]
        %v619 = vld [vmem:[%s261 + $0x564] sm:$0xf]
        %v620 = vld [vmem:[%s261 + $0x568] sm:$0xf]
        %v621 = vld [vmem:[%s261 + $0x56c] sm:$0xf]
        %v622 = vld [vmem:[%s261 + $0x570] sm:$0xf]
        %v623 = vld [vmem:[%s261 + $0x574] sm:$0xf]
        %v624 = vld [vmem:[%s261 + $0x578] sm:$0xf]
        %v625 = vld [vmem:[%s261 + $0x57c] sm:$0xf]
        %v626 = vld [vmem:[%s261 + $0x580] sm:$0xf]
        %v627 = vld [vmem:[%s261 + $0x584] sm:$0xf]
        %v628 = vld [vmem:[%s261 + $0x588] sm:$0xf]
        %v629 = vld [vmem:[%s261 + $0x58c] sm:$0xf]
        %v630 = vld [vmem:[%s261 + $0x590] sm:$0xf]
        %v631 = vld [vmem:[%s261 + $0x594] sm:$0xf]
        %v632 = vld [vmem:[%s261 + $0x598] sm:$0xf]
        %v633 = vld [vmem:[%s261 + $0x59c] sm:$0xf]
        %v634 = vld [vmem:[%s261 + $0x5a0] sm:$0xf]
        %v635 = vld [vmem:[%s261 + $0x5a4] sm:$0xf]
        %v636 = vld [vmem:[%s261 + $0x5a8] sm:$0xf]
        %v637 = vld [vmem:[%s261 + $0x5ac] sm:$0xf]
        %v638 = vld [vmem:[%s261 + $0x5b0] sm:$0xf]
        %v639 = vld [vmem:[%s261 + $0x5b4] sm:$0xf]
        %v640 = vld [vmem:[%s261 + $0x5b8] sm:$0xf]
        %v641 = vld [vmem:[%s261 + $0x5bc] sm:$0xf]
        %v642 = vld [vmem:[%s261 + $0x5c0] sm:$0xf]
        %v643 = vld [vmem:[%s261 + $0x5c4] sm:$0xf]
        %v644 = vld [vmem:[%s261 + $0x5c8] sm:$0xf]
        %v645 = vld [vmem:[%s261 + $0x5cc] sm:$0xf]
        %v646 = vld [vmem:[%s261 + $0x5d0] sm:$0xf]
        %v647 = vld [vmem:[%s261 + $0x5d4] sm:$0xf]
        %v648 = vld [vmem:[%s261 + $0x5d8] sm:$0xf]
        %v649 = vld [vmem:[%s261 + $0x5dc] sm:$0xf]
        %v650 = vld [vmem:[%s261 + $0x5e0] sm:$0xf]
        %v651 = vld [vmem:[%s261 + $0x5e4] sm:$0xf]
        %v652 = vld [vmem:[%s261 + $0x5e8] sm:$0xf]
        %v653 = vld [vmem:[%s261 + $0x5ec] sm:$0xf]
        %v654 = vld [vmem:[%s261 + $0x5f0] sm:$0xf]
        %v655 = vld [vmem:[%s261 + $0x5f4] sm:$0xf]
        %v656 = vld [vmem:[%s261 + $0x5f8] sm:$0xf]
        %v657 = vld [vmem:[%s261 + $0x5fc] sm:$0xf]
        %v658 = vld [vmem:[%s261 + $0x600] sm:$0xf]
        %v659 = vld [vmem:[%s261 + $0x604] sm:$0xf]
        %v660 = vld [vmem:[%s261 + $0x608] sm:$0xf]
        %v661 = vld [vmem:[%s261 + $0x60c] sm:$0xf]
        %v662 = vld [vmem:[%s261 + $0x610] sm:$0xf]
        %v663 = vld [vmem:[%s261 + $0x614] sm:$0xf]
        %v664 = vld [vmem:[%s261 + $0x618] sm:$0xf]
        %v665 = vld [vmem:[%s261 + $0x61c] sm:$0xf]
        %v666 = vld [vmem:[%s261 + $0x620] sm:$0xf]
        %v667 = vld [vmem:[%s261 + $0x624] sm:$0xf]
        %v668 = vld [vmem:[%s261 + $0x628] sm:$0xf]
        %v669 = vld [vmem:[%s261 + $0x62c] sm:$0xf]
        %v670 = vld [vmem:[%s261 + $0x630] sm:$0xf]
        %v671 = vld [vmem:[%s261 + $0x634] sm:$0xf]
        %v672 = vld [vmem:[%s261 + $0x638] sm:$0xf]
        %v673 = vld [vmem:[%s261 + $0x63c] sm:$0xf]
        %v674 = vld [vmem:[%s261 + $0x640] sm:$0xf]
        %v675 = vld [vmem:[%s261 + $0x644] sm:$0xf]
        %v676 = vld [vmem:[%s261 + $0x648] sm:$0xf]
        %v677 = vld [vmem:[%s261 + $0x64c] sm:$0xf]
        %v678 = vld [vmem:[%s261 + $0x650] sm:$0xf]
        %v679 = vld [vmem:[%s261 + $0x654] sm:$0xf]
        %v680 = vld [vmem:[%s261 + $0x658] sm:$0xf]
        %v681 = vld [vmem:[%s261 + $0x65c] sm:$0xf]
        %v682 = vld [vmem:[%s261 + $0x660] sm:$0xf]
        %v683 = vld [vmem:[%s261 + $0x664] sm:$0xf]
        %v684 = vld [vmem:[%s261 + $0x668] sm:$0xf]
        %v685 = vld [vmem:[%s261 + $0x66c] sm:$0xf]
        %v686 = vld [vmem:[%s261 + $0x670] sm:$0xf]
        %v687 = vld [vmem:[%s261 + $0x674] sm:$0xf]
        %v688 = vld [vmem:[%s261 + $0x678] sm:$0xf]
        %v689 = vld [vmem:[%s261 + $0x67c] sm:$0xf]
        %v690 = vld [vmem:[%s261 + $0x680] sm:$0xf]
        %v691 = vld [vmem:[%s261 + $0x684] sm:$0xf]
        %v692 = vld [vmem:[%s261 + $0x688] sm:$0xf]
        %v693 = vld [vmem:[%s261 + $0x68c] sm:$0xf]
        %v694 = vld [vmem:[%s261 + $0x690] sm:$0xf]
        %v695 = vld [vmem:[%s261 + $0x694] sm:$0xf]
        %v696 = vld [vmem:[%s261 + $0x698] sm:$0xf]
        %v697 = vld [vmem:[%s261 + $0x69c] sm:$0xf]
        %v698 = vld [vmem:[%s261 + $0x6a0] sm:$0xf]
        %v699 = vld [vmem:[%s261 + $0x6a4] sm:$0xf]
        %v700 = vld [vmem:[%s261 + $0x6a8] sm:$0xf]
        %v701 = vld [vmem:[%s261 + $0x6ac] sm:$0xf]
        %v702 = vld [vmem:[%s261 + $0x6b0] sm:$0xf]
        %v703 = vld [vmem:[%s261 + $0x6b4] sm:$0xf]
        %v704 = vld [vmem:[%s261 + $0x6b8] sm:$0xf]
        %v705 = vld [vmem:[%s261 + $0x6bc] sm:$0xf]
        %v706 = vld [vmem:[%s261 + $0x6c0] sm:$0xf]
        %v707 = vld [vmem:[%s261 + $0x6c4] sm:$0xf]
        %v708 = vld [vmem:[%s261 + $0x6c8] sm:$0xf]
        %v709 = vld [vmem:[%s261 + $0x6cc] sm:$0xf]
        %v710 = vld [vmem:[%s261 + $0x6d0] sm:$0xf]
        %v711 = vld [vmem:[%s261 + $0x6d4] sm:$0xf]
        %v712 = vld [vmem:[%s261 + $0x6d8] sm:$0xf]
        %v713 = vld [vmem:[%s261 + $0x6dc] sm:$0xf]
        %v714 = vld [vmem:[%s261 + $0x6e0] sm:$0xf]
        %v715 = vld [vmem:[%s261 + $0x6e4] sm:$0xf]
        %v716 = vld [vmem:[%s261 + $0x6e8] sm:$0xf]
        %v717 = vld [vmem:[%s261 + $0x6ec] sm:$0xf]
        %v718 = vld [vmem:[%s261 + $0x6f0] sm:$0xf]
        %v719 = vld [vmem:[%s261 + $0x6f4] sm:$0xf]
        %v720 = vld [vmem:[%s261 + $0x6f8] sm:$0xf]
        %v721 = vld [vmem:[%s261 + $0x6fc] sm:$0xf]
        %v722 = vld [vmem:[%s261 + $0x700] sm:$0xf]
        %v723 = vld [vmem:[%s261 + $0x704] sm:$0xf]
        %v724 = vld [vmem:[%s261 + $0x708] sm:$0xf]
        %v725 = vld [vmem:[%s261 + $0x70c] sm:$0xf]
        %v726 = vld [vmem:[%s261 + $0x710] sm:$0xf]
        %v727 = vld [vmem:[%s261 + $0x714] sm:$0xf]
        %v728 = vld [vmem:[%s261 + $0x718] sm:$0xf]
        %v729 = vld [vmem:[%s261 + $0x71c] sm:$0xf]
        %v730 = vld [vmem:[%s261 + $0x720] sm:$0xf]
        %v731 = vld [vmem:[%s261 + $0x724] sm:$0xf]
        %v732 = vld [vmem:[%s261 + $0x728] sm:$0xf]
        %v733 = vld [vmem:[%s261 + $0x72c] sm:$0xf]
        %v734 = vld [vmem:[%s261 + $0x730] sm:$0xf]
        %v735 = vld [vmem:[%s261 + $0x734] sm:$0xf]
        %v736 = vld [vmem:[%s261 + $0x738] sm:$0xf]
        %v737 = vld [vmem:[%s261 + $0x73c] sm:$0xf]
        %v738 = vld [vmem:[%s261 + $0x740] sm:$0xf]
        %v739 = vld [vmem:[%s261 + $0x744] sm:$0xf]
        %v740 = vld [vmem:[%s261 + $0x748] sm:$0xf]
        %v741 = vld [vmem:[%s261 + $0x74c] sm:$0xf]
        %v742 = vld [vmem:[%s261 + $0x750] sm:$0xf]
        %v743 = vld [vmem:[%s261 + $0x754] sm:$0xf]
        %v744 = vld [vmem:[%s261 + $0x758] sm:$0xf]
        %v745 = vld [vmem:[%s261 + $0x75c] sm:$0xf]
        %v746 = vld [vmem:[%s261 + $0x760] sm:$0xf]
        %v747 = vld [vmem:[%s261 + $0x764] sm:$0xf]
        %v748 = vld [vmem:[%s261 + $0x768] sm:$0xf]
        %v749 = vld [vmem:[%s261 + $0x76c] sm:$0xf]
        %v750 = vld [vmem:[%s261 + $0x770] sm:$0xf]
        %v751 = vld [vmem:[%s261 + $0x774] sm:$0xf]
        %v752 = vld [vmem:[%s261 + $0x778] sm:$0xf]
        %v753 = vld [vmem:[%s261 + $0x77c] sm:$0xf]
        %v754 = vld [vmem:[%s261 + $0x780] sm:$0xf]
        %v755 = vld [vmem:[%s261 + $0x784] sm:$0xf]
        %v756 = vld [vmem:[%s261 + $0x788] sm:$0xf]
        %v757 = vld [vmem:[%s261 + $0x78c] sm:$0xf]
        %v758 = vld [vmem:[%s261 + $0x790] sm:$0xf]
        %v759 = vld [vmem:[%s261 + $0x794] sm:$0xf]
        %v760 = vld [vmem:[%s261 + $0x798] sm:$0xf]
        %v761 = vld [vmem:[%s261 + $0x79c] sm:$0xf]
        %v762 = vld [vmem:[%s261 + $0x7a0] sm:$0xf]
        %v763 = vld [vmem:[%s261 + $0x7a4] sm:$0xf]
        %v764 = vld [vmem:[%s261 + $0x7a8] sm:$0xf]
        %v765 = vld [vmem:[%s261 + $0x7ac] sm:$0xf]
        %v766 = vld [vmem:[%s261 + $0x7b0] sm:$0xf]
        %v767 = vld [vmem:[%s261 + $0x7b4] sm:$0xf]
        %v768 = vld [vmem:[%s261 + $0x7b8] sm:$0xf]
        %v769 = vld [vmem:[%s261 + $0x7bc] sm:$0xf]
        %v770 = vld [vmem:[%s261 + $0x7c0] sm:$0xf]
        %v771 = vld [vmem:[%s261 + $0x7c4] sm:$0xf]
        %v772 = vld [vmem:[%s261 + $0x7c8] sm:$0xf]
        %v773 = vld [vmem:[%s261 + $0x7cc] sm:$0xf]
        %v774 = vld [vmem:[%s261 + $0x7d0] sm:$0xf]
        %v775 = vld [vmem:[%s261 + $0x7d4] sm:$0xf]
        %v776 = vld [vmem:[%s261 + $0x7d8] sm:$0xf]
        %v777 = vld [vmem:[%s261 + $0x7dc] sm:$0xf]
        %v778 = vld [vmem:[%s261 + $0x7e0] sm:$0xf]
        %v779 = vld [vmem:[%s261 + $0x7e4] sm:$0xf]
        %v780 = vld [vmem:[%s261 + $0x7e8] sm:$0xf]
        %v781 = vld [vmem:[%s261 + $0x7ec] sm:$0xf]
        %v782 = vld [vmem:[%s261 + $0x7f0] sm:$0xf]
        %v783 = vld [vmem:[%s261 + $0x7f4] sm:$0xf]
        %v784 = vld [vmem:[%s261 + $0x7f8] sm:$0xf]
        %v785 = vld [vmem:[%s261 + $0x7fc] sm:$0xf]
        %v786 = vld [vmem:[%s261 + $0x800] sm:$0xf]
        %v787 = vld [vmem:[%s261 + $0x804] sm:$0xf]
        %v788 = vld [vmem:[%s261 + $0x808] sm:$0xf]
        %v789 = vld [vmem:[%s261 + $0x80c] sm:$0xf]
        %v790 = vld [vmem:[%s261 + $0x810] sm:$0xf]
        %v791 = vld [vmem:[%s261 + $0x814] sm:$0xf]
        %v792 = vld [vmem:[%s261 + $0x818] sm:$0xf]
        %v793 = vld [vmem:[%s261 + $0x81c] sm:$0xf]
        %v794 = vld [vmem:[%s261 + $0x820] sm:$0xf]
        %v795 = vld [vmem:[%s261 + $0x824] sm:$0xf]
        %v796 = vld [vmem:[%s261 + $0x828] sm:$0xf]
        %v797 = vld [vmem:[%s261 + $0x82c] sm:$0xf]
        %v798 = vld [vmem:[%s261 + $0x830] sm:$0xf]
        %v799 = vld [vmem:[%s261 + $0x834] sm:$0xf]
        %v800 = vld [vmem:[%s261 + $0x838] sm:$0xf]
        %v801 = vld [vmem:[%s261 + $0x83c] sm:$0xf]
        %v802 = vld [vmem:[%s261 + $0x840] sm:$0xf]
        %v803 = vld [vmem:[%s261 + $0x844] sm:$0xf]
        %v804 = vld [vmem:[%s261 + $0x848] sm:$0xf]
        %v805 = vld [vmem:[%s261 + $0x84c] sm:$0xf]
        %v806 = vld [vmem:[%s261 + $0x850] sm:$0xf]
        %v807 = vld [vmem:[%s261 + $0x854] sm:$0xf]
        %v808 = vld [vmem:[%s261 + $0x858] sm:$0xf]
        %v809 = vld [vmem:[%s261 + $0x85c] sm:$0xf]
        %v810 = vld [vmem:[%s261 + $0x860] sm:$0xf]
        %v811 = vld [vmem:[%s261 + $0x864] sm:$0xf]
        %v812 = vld [vmem:[%s261 + $0x868] sm:$0xf]
        %v813 = vld [vmem:[%s261 + $0x86c] sm:$0xf]
        %v814 = vld [vmem:[%s261 + $0x870] sm:$0xf]
        %v815 = vld [vmem:[%s261 + $0x874] sm:$0xf]
        %v816 = vld [vmem:[%s261 + $0x878] sm:$0xf]
        %v817 = vld [vmem:[%s261 + $0x87c] sm:$0xf]
        %v818 = vld [vmem:[%s261 + $0x880] sm:$0xf]
        %v819 = vld [vmem:[%s261 + $0x884] sm:$0xf]
        %v820 = vld [vmem:[%s261 + $0x888] sm:$0xf]
        %v821 = vld [vmem:[%s261 + $0x88c] sm:$0xf]
        %v822 = vld [vmem:[%s261 + $0x890] sm:$0xf]
        %v823 = vld [vmem:[%s261 + $0x894] sm:$0xf]
        %v824 = vld [vmem:[%s261 + $0x898] sm:$0xf]
        %v825 = vld [vmem:[%s261 + $0x89c] sm:$0xf]
        %v826 = vld [vmem:[%s261 + $0x8a0] sm:$0xf]
        %v827 = vld [vmem:[%s261 + $0x8a4] sm:$0xf]
        %v828 = vld [vmem:[%s261 + $0x8a8] sm:$0xf]
        %v829 = vld [vmem:[%s261 + $0x8ac] sm:$0xf]
        %v830 = vld [vmem:[%s261 + $0x8b0] sm:$0xf]
        %v831 = vld [vmem:[%s261 + $0x8b4] sm:$0xf]
        %v832 = vld [vmem:[%s261 + $0x8b8] sm:$0xf]
        %v833 = vld [vmem:[%s261 + $0x8bc] sm:$0xf]
        %v834 = vld [vmem:[%s261 + $0x8c0] sm:$0xf]
        %v835 = vld [vmem:[%s261 + $0x8c4] sm:$0xf]
        %v836 = vld [vmem:[%s261 + $0x8c8] sm:$0xf]
        %v837 = vld [vmem:[%s261 + $0x8cc] sm:$0xf]
        %v838 = vld [vmem:[%s261 + $0x8d0] sm:$0xf]
        %v839 = vld [vmem:[%s261 + $0x8d4] sm:$0xf]
        %v840 = vld [vmem:[%s261 + $0x8d8] sm:$0xf]
        %v841 = vld [vmem:[%s261 + $0x8dc] sm:$0xf]
        %v842 = vld [vmem:[%s261 + $0x8e0] sm:$0xf]
        %v843 = vld [vmem:[%s261 + $0x8e4] sm:$0xf]
        %v844 = vld [vmem:[%s261 + $0x8e8] sm:$0xf]
        %v845 = vld [vmem:[%s261 + $0x8ec] sm:$0xf]
        %v846 = vld [vmem:[%s261 + $0x8f0] sm:$0xf]
        %v847 = vld [vmem:[%s261 + $0x8f4] sm:$0xf]
        %v848 = vld [vmem:[%s261 + $0x8f8] sm:$0xf]
        %v849 = vld [vmem:[%s261 + $0x8fc] sm:$0xf]
        %v850 = vld [vmem:[%s261 + $0x900] sm:$0xf]
        %v851 = vld [vmem:[%s261 + $0x904] sm:$0xf]
        %v852 = vld [vmem:[%s261 + $0x908] sm:$0xf]
        %v853 = vld [vmem:[%s261 + $0x90c] sm:$0xf]
        %v854 = vld [vmem:[%s261 + $0x910] sm:$0xf]
        %v855 = vld [vmem:[%s261 + $0x914] sm:$0xf]
        %v856 = vld [vmem:[%s261 + $0x918] sm:$0xf]
        %v857 = vld [vmem:[%s261 + $0x91c] sm:$0xf]
        %v858 = vld [vmem:[%s261 + $0x920] sm:$0xf]
        %v859 = vld [vmem:[%s261 + $0x924] sm:$0xf]
        %v860 = vld [vmem:[%s261 + $0x928] sm:$0xf]
        %v861 = vld [vmem:[%s261 + $0x92c] sm:$0xf]
        %v862 = vld [vmem:[%s261 + $0x930] sm:$0xf]
        %v863 = vld [vmem:[%s261 + $0x934] sm:$0xf]
        %v864 = vld [vmem:[%s261 + $0x938] sm:$0xf]
        %v865 = vld [vmem:[%s261 + $0x93c] sm:$0xf]
        %v866 = vld [vmem:[%s261 + $0x940] sm:$0xf]
        %v867 = vld [vmem:[%s261 + $0x944] sm:$0xf]
        %v868 = vld [vmem:[%s261 + $0x948] sm:$0xf]
        %v869 = vld [vmem:[%s261 + $0x94c] sm:$0xf]
        %v870 = vld [vmem:[%s261 + $0x950] sm:$0xf]
        %v871 = vld [vmem:[%s261 + $0x954] sm:$0xf]
        %v872 = vld [vmem:[%s261 + $0x958] sm:$0xf]
        %v873 = vld [vmem:[%s261 + $0x95c] sm:$0xf]
        %v874 = vld [vmem:[%s261 + $0x960] sm:$0xf]
        %v875 = vld [vmem:[%s261 + $0x964] sm:$0xf]
        %v876 = vld [vmem:[%s261 + $0x968] sm:$0xf]
        %v877 = vld [vmem:[%s261 + $0x96c] sm:$0xf]
        %v878 = vld [vmem:[%s261 + $0x970] sm:$0xf]
        %v879 = vld [vmem:[%s261 + $0x974] sm:$0xf]
        %v880 = vld [vmem:[%s261 + $0x978] sm:$0xf]
        %v881 = vld [vmem:[%s261 + $0x97c] sm:$0xf]
        %v882 = vld [vmem:[%s261 + $0x980] sm:$0xf]
        %v883 = vld [vmem:[%s261 + $0x984] sm:$0xf]
        %v884 = vld [vmem:[%s261 + $0x988] sm:$0xf]
        %v885 = vld [vmem:[%s261 + $0x98c] sm:$0xf]
        %v886 = vld [vmem:[%s261 + $0x990] sm:$0xf]
        %v887 = vld [vmem:[%s261 + $0x994] sm:$0xf]
        %v888 = vld [vmem:[%s261 + $0x998] sm:$0xf]
        %v889 = vld [vmem:[%s261 + $0x99c] sm:$0xf]
        %v890 = vld [vmem:[%s261 + $0x9a0] sm:$0xf]
        %v891 = vld [vmem:[%s261 + $0x9a4] sm:$0xf]
        %v892 = vld [vmem:[%s261 + $0x9a8] sm:$0xf]
        %v893 = vld [vmem:[%s261 + $0x9ac] sm:$0xf]
        %v894 = vld [vmem:[%s261 + $0x9b0] sm:$0xf]
        %v895 = vld [vmem:[%s261 + $0x9b4] sm:$0xf]
        %v896 = vld [vmem:[%s261 + $0x9b8] sm:$0xf]
        %v897 = vld [vmem:[%s261 + $0x9bc] sm:$0xf]
        %899 = vst [vmem:[#allocation1] ss:$9 sm:$0xff] %v269
        %v900 = vld [vmem:[#allocation1] sm:$0xff]
        %v901 = vld [vmem:[#allocation1 + $0x9] sm:$0xff]
        %v902 = vld [vmem:[#allocation1 + $0x12] sm:$0xff]
        %v903 = vld [vmem:[#allocation1 + $0x1b] sm:$0xff]
        %v904 = vld [vmem:[#allocation1 + $0x24] sm:$0xff]
        %v905 = vld [vmem:[#allocation1 + $0x2d] sm:$0xff]
        %v906 = vld [vmem:[#allocation1 + $0x36] sm:$0xff]
        %v907 = vld [vmem:[#allocation1 + $0x3f] sm:$0xff]
        %909 = vst [vmem:[#allocation1] ss:$9 sm:$0xff] %v270
        %v910 = vld [vmem:[#allocation1] sm:$0xff]
        %v911 = vld [vmem:[#allocation1 + $0x9] sm:$0xff]
        %v912 = vld [vmem:[#allocation1 + $0x12] sm:$0xff]
        %v913 = vld [vmem:[#allocation1 + $0x1b] sm:$0xff]
        %v914 = vld [vmem:[#allocation1 + $0x24] sm:$0xff]
        %v915 = vld [vmem:[#allocation1 + $0x2d] sm:$0xff]
        %v916 = vld [vmem:[#allocation1 + $0x36] sm:$0xff]
        %v917 = vld [vmem:[#allocation1 + $0x3f] sm:$0xff]
        %919 = vst [vmem:[#allocation1] ss:$9 sm:$0xff] %v271
        %v920 = vld [vmem:[#allocation1] sm:$0xff]
        %v921 = vld [vmem:[#allocation1 + $0x9] sm:$0xff]
        %v922 = vld [vmem:[#allocation1 + $0x12] sm:$0xff]
        %v923 = vld [vmem:[#allocation1 + $0x1b] sm:$0xff]
        %v924 = vld [vmem:[#allocation1 + $0x24] sm:$0xff]
        %v925 = vld [vmem:[#allocation1 + $0x2d] sm:$0xff]
        %v926 = vld [vmem:[#allocation1 + $0x36] sm:$0xff]
        %v927 = vld [vmem:[#allocation1 + $0x3f] sm:$0xff]
        %929 = vst [vmem:[#allocation1] ss:$9 sm:$0xff] %v272
        %v930 = vld [vmem:[#allocation1] sm:$0xff]
        %v931 = vld [vmem:[#allocation1 + $0x9] sm:$0xff]
        %v932 = vld [vmem:[#allocation1 + $0x12] sm:$0xff]
        %v933 = vld [vmem:[#allocation1 + $0x1b] sm:$0xff]
        %v934 = vld [vmem:[#allocation1 + $0x24] sm:$0xff]
        %v935 = vld [vmem:[#allocation1 + $0x2d] sm:$0xff]
        %v936 = vld [vmem:[#allocation1 + $0x36] sm:$0xff]
        %v937 = vld [vmem:[#allocation1 + $0x3f] sm:$0xff]
        %939 = vst [vmem:[#allocation1] ss:$9 sm:$0xff] %v273
        %v940 = vld [vmem:[#allocation1] sm:$0xff]
        %v941 = vld [vmem:[#allocation1 + $0x9] sm:$0xff]
        %v942 = vld [vmem:[#allocation1 + $0x12] sm:$0xff]
        %v943 = vld [vmem:[#allocation1 + $0x1b] sm:$0xff]
        %v944 = vld [vmem:[#allocation1 + $0x24] sm:$0xff]
        %v945 = vld [vmem:[#allocation1 + $0x2d] sm:$0xff]
        %v946 = vld [vmem:[#allocation1 + $0x36] sm:$0xff]
        %v1610 = vunpack.c.l.b16 %v274
        %v1611 = vunpack.c.l.b16 %v275
        %v1612 = vunpack.c.l.b16 %v276
        %v1613 = vunpack.c.l.b16 %v277
        %v1614 = vunpack.c.l.b16 %v278
        %v1615 = vunpack.c.l.b16 %v279
        %v1616 = vunpack.c.l.b16 %v280
        %v1617 = vunpack.c.l.b16 %v281
        %v1618 = vunpack.c.l.b16 %v282
        %v1619 = vunpack.c.l.b16 %v283
        %v1620 = vunpack.c.l.b16 %v284
        %v1621 = vunpack.c.l.b16 %v285
        %v1622 = vunpack.c.l.b16 %v286
        %v1623 = vunpack.c.l.b16 %v287
        %v1624 = vunpack.c.l.b16 %v288
        %v1625 = vunpack.c.l.b16 %v289
        %v1626 = vunpack.c.l.b16 %v290
        %v1627 = vunpack.c.l.b16 %v291
        %v1628 = vunpack.c.l.b16 %v292
        %v1629 = vunpack.c.l.b16 %v293
        %v1630 = vunpack.c.l.b16 %v294
        %v1631 = vunpack.c.l.b16 %v295
        %v1632 = vunpack.c.l.b16 %v296
        %v1633 = vunpack.c.l.b16 %v297
        %v1634 = vunpack.c.l.b16 %v298
        %v1635 = vunpack.c.l.b16 %v299
        %v1636 = vunpack.c.l.b16 %v300
        %v1637 = vunpack.c.l.b16 %v301
        %v1638 = vunpack.c.l.b16 %v302
        %v1639 = vunpack.c.l.b16 %v303
        %v1640 = vunpack.c.l.b16 %v304
        %v1641 = vunpack.c.l.b16 %v305
        %v1642 = vunpack.c.l.b16 %v306
        %v1643 = vunpack.c.l.b16 %v307
        %v1644 = vunpack.c.l.b16 %v308
        %v1645 = vunpack.c.l.b16 %v309
        %v1646 = vunpack.c.l.b16 %v310
        %v1647 = vunpack.c.l.b16 %v311
        %v1648 = vunpack.c.l.b16 %v312
        %v1649 = vunpack.c.l.b16 %v313
        %v1650 = vunpack.c.l.b16 %v314
        %v1651 = vunpack.c.l.b16 %v315
        %v1652 = vunpack.c.l.b16 %v316
        %v1653 = vunpack.c.l.b16 %v317
        %v1654 = vunpack.c.l.b16 %v318
        %v1655 = vunpack.c.l.b16 %v319
        %v1656 = vunpack.c.l.b16 %v320
        %v1657 = vunpack.c.l.b16 %v321
        %v1658 = vunpack.c.l.b16 %v322
        %v1659 = vunpack.c.l.b16 %v323
        %v1660 = vunpack.c.l.b16 %v324
        %v1661 = vunpack.c.l.b16 %v325
        %v1662 = vunpack.c.l.b16 %v326
        %v1663 = vunpack.c.l.b16 %v327
        %v1664 = vunpack.c.l.b16 %v328
        %v1665 = vunpack.c.l.b16 %v329
        %v1666 = vunpack.c.l.b16 %v330
        %v1667 = vunpack.c.l.b16 %v331
        %v1668 = vunpack.c.l.b16 %v332
        %v1669 = vunpack.c.l.b16 %v333
        %v1670 = vunpack.c.l.b16 %v334
        %v1671 = vunpack.c.l.b16 %v335
        %v1672 = vunpack.c.l.b16 %v336
        %v1673 = vunpack.c.l.b16 %v337
        %v1674 = vunpack.c.l.b16 %v338
        %v1675 = vunpack.c.l.b16 %v339
        %v1676 = vunpack.c.l.b16 %v340
        %v1677 = vunpack.c.l.b16 %v341
        %v1678 = vunpack.c.l.b16 %v342
        %v1679 = vunpack.c.l.b16 %v343
        %v1680 = vunpack.c.l.b16 %v344
        %v1681 = vunpack.c.l.b16 %v345
        %v1682 = vunpack.c.l.b16 %v346
        %v1683 = vunpack.c.l.b16 %v347
        %v1684 = vunpack.c.l.b16 %v348
        %v1685 = vunpack.c.l.b16 %v349
        %v1686 = vunpack.c.l.b16 %v350
        %v1687 = vunpack.c.l.b16 %v351
        %v1688 = vunpack.c.l.b16 %v352
        %v1689 = vunpack.c.l.b16 %v353
        %v1690 = vunpack.c.l.b16 %v354
        %v1691 = vunpack.c.l.b16 %v355
        %v1692 = vunpack.c.l.b16 %v356
        %v1693 = vunpack.c.l.b16 %v357
        %v1694 = vunpack.c.l.b16 %v358
        %v1695 = vunpack.c.l.b16 %v359
        %v1696 = vunpack.c.l.b16 %v360
        %v1697 = vunpack.c.l.b16 %v361
        %v1698 = vunpack.c.l.b16 %v362
        %v1699 = vunpack.c.l.b16 %v363
        %v1700 = vunpack.c.l.b16 %v364
        %v1701 = vunpack.c.l.b16 %v365
        %v1702 = vunpack.c.l.b16 %v366
        %v1703 = vunpack.c.l.b16 %v367
        %v1704 = vunpack.c.l.b16 %v368
        %v1705 = vunpack.c.l.b16 %v369
        %v1706 = vunpack.c.l.b16 %v370
        %v1707 = vunpack.c.l.b16 %v371
        %v1708 = vunpack.c.l.b16 %v372
        %v1709 = vunpack.c.l.b16 %v373
        %v1710 = vunpack.c.l.b16 %v374
        %v1711 = vunpack.c.l.b16 %v375
        %v1712 = vunpack.c.l.b16 %v376
        %v1713 = vunpack.c.l.b16 %v377
        %v1714 = vunpack.c.l.b16 %v378
        %v1715 = vunpack.c.l.b16 %v379
        %v1716 = vunpack.c.l.b16 %v380
        %v1717 = vunpack.c.l.b16 %v381
        %v1718 = vunpack.c.l.b16 %v382
        %v1719 = vunpack.c.l.b16 %v383
        %v1720 = vunpack.c.l.b16 %v384
        %v1721 = vunpack.c.l.b16 %v385
        %v1722 = vunpack.c.l.b16 %v386
        %v1723 = vunpack.c.l.b16 %v387
        %v1724 = vunpack.c.l.b16 %v388
        %v1725 = vunpack.c.l.b16 %v389
        %v1726 = vunpack.c.l.b16 %v390
        %v1727 = vunpack.c.l.b16 %v391
        %v1728 = vunpack.c.l.b16 %v392
        %v1729 = vunpack.c.l.b16 %v393
        %v1730 = vunpack.c.l.b16 %v394
        %v1731 = vunpack.c.l.b16 %v395
        %v1732 = vunpack.c.l.b16 %v396
        %v1733 = vunpack.c.l.b16 %v397
        %v1734 = vunpack.c.l.b16 %v398
        %v1735 = vunpack.c.l.b16 %v399
        %v1736 = vunpack.c.l.b16 %v400
        %v1737 = vunpack.c.l.b16 %v401
        %v1738 = vunpack.c.l.b16 %v402
        %v1739 = vunpack.c.l.b16 %v403
        %v1740 = vunpack.c.l.b16 %v404
        %v1741 = vunpack.c.l.b16 %v405
        %v1742 = vunpack.c.l.b16 %v406
        %v1743 = vunpack.c.l.b16 %v407
        %v1744 = vunpack.c.l.b16 %v408
        %v1745 = vunpack.c.l.b16 %v409
        %v1746 = vunpack.c.l.b16 %v410
        %v1747 = vunpack.c.l.b16 %v411
        %v1748 = vunpack.c.l.b16 %v412
        %v1749 = vunpack.c.l.b16 %v413
        %v1750 = vunpack.c.l.b16 %v414
        %v1751 = vunpack.c.l.b16 %v415
        %v1752 = vunpack.c.l.b16 %v416
        %v1753 = vunpack.c.l.b16 %v417
        %v1754 = vunpack.c.l.b16 %v418
        %v1755 = vunpack.c.l.b16 %v419
        %v1756 = vunpack.c.l.b16 %v420
        %v1757 = vunpack.c.l.b16 %v421
        %v1758 = vunpack.c.l.b16 %v422
        %v1759 = vunpack.c.l.b16 %v423
        %v1760 = vunpack.c.l.b16 %v424
        %v1761 = vunpack.c.l.b16 %v425
        %v1762 = vunpack.c.l.b16 %v426
        %v1763 = vunpack.c.l.b16 %v427
        %v1764 = vunpack.c.l.b16 %v428
        %v1765 = vunpack.c.l.b16 %v429
        %v1766 = vunpack.c.l.b16 %v430
        %v1767 = vunpack.c.l.b16 %v431
        %v1768 = vunpack.c.l.b16 %v432
        %v1769 = vunpack.c.l.b16 %v433
        %v1770 = vunpack.c.l.b16 %v434
        %v1771 = vunpack.c.l.b16 %v435
        %v1772 = vunpack.c.l.b16 %v436
        %v1773 = vunpack.c.l.b16 %v437
        %v1774 = vunpack.c.l.b16 %v438
        %v1775 = vunpack.c.l.b16 %v439
        %v1776 = vunpack.c.l.b16 %v440
        %v1777 = vunpack.c.l.b16 %v441
        %v1778 = vunpack.c.l.b16 %v442
        %v1779 = vunpack.c.l.b16 %v443
        %v1780 = vunpack.c.l.b16 %v444
        %v1781 = vunpack.c.l.b16 %v445
        %v1782 = vunpack.c.l.b16 %v446
        %v1783 = vunpack.c.l.b16 %v447
        %v1784 = vunpack.c.l.b16 %v448
        %v1785 = vunpack.c.l.b16 %v449
        %v1786 = vunpack.c.l.b16 %v450
        %v1787 = vunpack.c.l.b16 %v451
        %v1788 = vunpack.c.l.b16 %v452
        %v1789 = vunpack.c.l.b16 %v453
        %v1790 = vunpack.c.l.b16 %v454
        %v1791 = vunpack.c.l.b16 %v455
        %v1792 = vunpack.c.l.b16 %v456
        %v1793 = vunpack.c.l.b16 %v457
        %v1794 = vunpack.c.l.b16 %v458
        %v1795 = vunpack.c.l.b16 %v459
        %v1796 = vunpack.c.l.b16 %v460
        %v1797 = vunpack.c.l.b16 %v461
        %v1798 = vunpack.c.l.b16 %v462
        %v1799 = vunpack.c.l.b16 %v463
        %v1800 = vunpack.c.l.b16 %v464
        %v1801 = vunpack.c.l.b16 %v465
        %v1802 = vunpack.c.l.b16 %v466
        %v1803 = vunpack.c.l.b16 %v467
        %v1804 = vunpack.c.l.b16 %v468
        %v1805 = vunpack.c.l.b16 %v469
        %v1806 = vunpack.c.l.b16 %v470
        %v1807 = vunpack.c.l.b16 %v471
        %v1808 = vunpack.c.l.b16 %v472
        %v1809 = vunpack.c.l.b16 %v473
        %v1810 = vunpack.c.l.b16 %v474
        %v1811 = vunpack.c.l.b16 %v475
        %v1812 = vunpack.c.l.b16 %v476
        %v1813 = vunpack.c.l.b16 %v477
        %v1814 = vunpack.c.l.b16 %v478
        %v1815 = vunpack.c.l.b16 %v479
        %v1816 = vunpack.c.l.b16 %v480
        %v1817 = vunpack.c.l.b16 %v481
        %v1818 = vunpack.c.l.b16 %v482
        %v1819 = vunpack.c.l.b16 %v483
        %v1820 = vunpack.c.l.b16 %v484
        %v1821 = vunpack.c.l.b16 %v485
        %v1822 = vunpack.c.l.b16 %v486
        %v1823 = vunpack.c.l.b16 %v487
        %v1824 = vunpack.c.l.b16 %v488
        %v1825 = vunpack.c.l.b16 %v489
        %v1826 = vunpack.c.l.b16 %v490
        %v1827 = vunpack.c.l.b16 %v491
        %v1828 = vunpack.c.l.b16 %v492
        %v1829 = vunpack.c.l.b16 %v493
        %v1830 = vunpack.c.l.b16 %v494
        %v1831 = vunpack.c.l.b16 %v495
        %v1832 = vunpack.c.l.b16 %v496
        %v1833 = vunpack.c.l.b16 %v497
        %v1834 = vunpack.c.l.b16 %v498
        %v1835 = vunpack.c.l.b16 %v499
        %v1836 = vunpack.c.l.b16 %v500
        %v1837 = vunpack.c.l.b16 %v501
        %v1838 = vunpack.c.l.b16 %v502
        %v1839 = vunpack.c.l.b16 %v503
        %v1840 = vunpack.c.l.b16 %v504
        %v1841 = vunpack.c.l.b16 %v505
        %v1842 = vunpack.c.l.b16 %v506
        %v1843 = vunpack.c.l.b16 %v507
        %v1844 = vunpack.c.l.b16 %v508
        %v1845 = vunpack.c.l.b16 %v509
        %v1846 = vunpack.c.l.b16 %v510
        %v1847 = vunpack.c.l.b16 %v511
        %v1848 = vunpack.c.l.b16 %v512
        %v1849 = vunpack.c.l.b16 %v513
        %v1850 = vunpack.c.l.b16 %v514
        %v1851 = vunpack.c.l.b16 %v515
        %v1852 = vunpack.c.l.b16 %v516
        %v1853 = vunpack.c.l.b16 %v517
        %v1854 = vunpack.c.l.b16 %v518
        %v1855 = vunpack.c.l.b16 %v519
        %v1856 = vunpack.c.l.b16 %v520
        %v1857 = vunpack.c.l.b16 %v521
        %v1858 = vunpack.c.l.b16 %v522
        %v1859 = vunpack.c.l.b16 %v523
        %v1860 = vunpack.c.l.b16 %v524
        %v1861 = vunpack.c.l.b16 %v525
        %v1862 = vunpack.c.l.b16 %v526
        %v1863 = vunpack.c.l.b16 %v527
        %v1864 = vunpack.c.l.b16 %v528
        %v1865 = vunpack.c.l.b16 %v529
        %v1866 = vunpack.c.l.b16 %v530
        %v1867 = vunpack.c.l.b16 %v531
        %v1868 = vunpack.c.l.b16 %v532
        %v1869 = vunpack.c.l.b16 %v533
        %v1870 = vunpack.c.l.b16 %v534
        %v1871 = vunpack.c.l.b16 %v535
        %v1872 = vunpack.c.l.b16 %v536
        %v1873 = vunpack.c.l.b16 %v537
        %v1874 = vunpack.c.l.b16 %v538
        %v1875 = vunpack.c.l.b16 %v539
        %v1876 = vunpack.c.l.b16 %v540
        %v1877 = vunpack.c.l.b16 %v541
        %v1878 = vunpack.c.l.b16 %v542
        %v1879 = vunpack.c.l.b16 %v543
        %v1880 = vunpack.c.l.b16 %v544
        %v1881 = vunpack.c.l.b16 %v545
        %v1882 = vunpack.c.l.b16 %v546
        %v1883 = vunpack.c.l.b16 %v547
        %v1884 = vunpack.c.l.b16 %v548
        %v1885 = vunpack.c.l.b16 %v549
        %v1886 = vunpack.c.l.b16 %v550
        %v1887 = vunpack.c.l.b16 %v551
        %v1888 = vunpack.c.l.b16 %v552
        %v1889 = vunpack.c.l.b16 %v553
        %v1890 = vunpack.c.l.b16 %v554
        %v1891 = vunpack.c.l.b16 %v555
        %v1892 = vunpack.c.l.b16 %v556
        %v1893 = vunpack.c.l.b16 %v557
        %v1894 = vunpack.c.l.b16 %v558
        %v1895 = vunpack.c.l.b16 %v559
        %v1896 = vunpack.c.l.b16 %v560
        %v1897 = vunpack.c.l.b16 %v561
        %v1898 = vunpack.c.l.b16 %v562
        %v1899 = vunpack.c.l.b16 %v563
        %v1900 = vunpack.c.l.b16 %v564
        %v1901 = vunpack.c.l.b16 %v565
        %v1902 = vunpack.c.l.b16 %v566
        %v1903 = vunpack.c.l.b16 %v567
        %v1904 = vunpack.c.l.b16 %v568
        %v1905 = vunpack.c.l.b16 %v569
        %v1906 = vunpack.c.l.b16 %v570
        %v1907 = vunpack.c.l.b16 %v571
        %v1908 = vunpack.c.l.b16 %v572
        %v1909 = vunpack.c.l.b16 %v573
        %v1910 = vunpack.c.l.b16 %v574
        %v1911 = vunpack.c.l.b16 %v575
        %v1912 = vunpack.c.l.b16 %v576
        %v1913 = vunpack.c.l.b16 %v577
        %v1914 = vunpack.c.l.b16 %v578
        %v1915 = vunpack.c.l.b16 %v579
        %v1916 = vunpack.c.l.b16 %v580
        %v1917 = vunpack.c.l.b16 %v581
        %v1918 = vunpack.c.l.b16 %v582
        %v1919 = vunpack.c.l.b16 %v583
        %v1920 = vunpack.c.l.b16 %v584
        %v1921 = vunpack.c.l.b16 %v585
        %v1922 = vunpack.c.l.b16 %v586
        %v1923 = vunpack.c.l.b16 %v587
        %v1924 = vunpack.c.l.b16 %v588
        %v1925 = vunpack.c.l.b16 %v589
        %v1926 = vunpack.c.l.b16 %v590
        %v1927 = vunpack.c.l.b16 %v591
        %v1928 = vunpack.c.l.b16 %v592
        %v1929 = vunpack.c.l.b16 %v593
        %v1930 = vunpack.c.l.b16 %v594
        %v1931 = vunpack.c.l.b16 %v595
        %v1932 = vunpack.c.l.b16 %v596
        %v1933 = vunpack.c.l.b16 %v597
        %v1934 = vunpack.c.l.b16 %v598
        %v1935 = vunpack.c.l.b16 %v599
        %v1936 = vunpack.c.l.b16 %v600
        %v1937 = vunpack.c.l.b16 %v601
        %v1938 = vunpack.c.l.b16 %v602
        %v1939 = vunpack.c.l.b16 %v603
        %v1940 = vunpack.c.l.b16 %v604
        %v1941 = vunpack.c.l.b16 %v605
        %v1942 = vunpack.c.l.b16 %v606
        %v1943 = vunpack.c.l.b16 %v607
        %v1944 = vunpack.c.l.b16 %v608
        %v1945 = vunpack.c.l.b16 %v609
        %v1946 = vunpack.c.l.b16 %v610
        %v1947 = vunpack.c.l.b16 %v611
        %v1948 = vunpack.c.l.b16 %v612
        %v1949 = vunpack.c.l.b16 %v613
        %v1950 = vunpack.c.l.b16 %v614
        %v1951 = vunpack.c.l.b16 %v615
        %v1952 = vunpack.c.l.b16 %v616
        %v1953 = vunpack.c.l.b16 %v617
        %v1954 = vunpack.c.l.b16 %v618
        %v1955 = vunpack.c.l.b16 %v619
        %v1956 = vunpack.c.l.b16 %v620
        %v1957 = vunpack.c.l.b16 %v621
        %v1958 = vunpack.c.l.b16 %v622
        %v1959 = vunpack.c.l.b16 %v623
        %v1960 = vunpack.c.l.b16 %v624
        %v1961 = vunpack.c.l.b16 %v625
        %v1962 = vunpack.c.l.b16 %v626
        %v1963 = vunpack.c.l.b16 %v627
        %v1964 = vunpack.c.l.b16 %v628
        %v1965 = vunpack.c.l.b16 %v629
        %v1966 = vunpack.c.l.b16 %v630
        %v1967 = vunpack.c.l.b16 %v631
        %v1968 = vunpack.c.l.b16 %v632
        %v1969 = vunpack.c.l.b16 %v633
        %v1970 = vunpack.c.l.b16 %v634
        %v1971 = vunpack.c.l.b16 %v635
        %v1972 = vunpack.c.l.b16 %v636
        %v1973 = vunpack.c.l.b16 %v637
        %v1974 = vunpack.c.l.b16 %v638
        %v1975 = vunpack.c.l.b16 %v639
        %v1976 = vunpack.c.l.b16 %v640
        %v1977 = vunpack.c.l.b16 %v641
        %v1978 = vunpack.c.l.b16 %v642
        %v1979 = vunpack.c.l.b16 %v643
        %v1980 = vunpack.c.l.b16 %v644
        %v1981 = vunpack.c.l.b16 %v645
        %v1982 = vunpack.c.l.b16 %v646
        %v1983 = vunpack.c.l.b16 %v647
        %v1984 = vunpack.c.l.b16 %v648
        %v1985 = vunpack.c.l.b16 %v649
        %v1986 = vunpack.c.l.b16 %v650
        %v1987 = vunpack.c.l.b16 %v651
        %v1988 = vunpack.c.l.b16 %v652
        %v1989 = vunpack.c.l.b16 %v653
        %v1990 = vunpack.c.l.b16 %v654
        %v1991 = vunpack.c.l.b16 %v655
        %v1992 = vunpack.c.l.b16 %v656
        %v1993 = vunpack.c.l.b16 %v657
        %v1994 = vunpack.c.l.b16 %v658
        %v1995 = vunpack.c.l.b16 %v659
        %v1996 = vunpack.c.l.b16 %v660
        %v1997 = vunpack.c.l.b16 %v661
        %v1998 = vunpack.c.l.b16 %v662
        %v1999 = vunpack.c.l.b16 %v663
        %v2000 = vunpack.c.l.b16 %v664
        %v2001 = vunpack.c.l.b16 %v665
        %v2002 = vunpack.c.l.b16 %v666
        %v2003 = vunpack.c.l.b16 %v667
        %v2004 = vunpack.c.l.b16 %v668
        %v2005 = vunpack.c.l.b16 %v669
        %v2006 = vunpack.c.l.b16 %v670
        %v2007 = vunpack.c.l.b16 %v671
        %v2008 = vunpack.c.l.b16 %v672
        %v2009 = vunpack.c.l.b16 %v673
        %v2010 = vunpack.c.l.b16 %v674
        %v2011 = vunpack.c.l.b16 %v675
        %v2012 = vunpack.c.l.b16 %v676
        %v2013 = vunpack.c.l.b16 %v677
        %v2014 = vunpack.c.l.b16 %v678
        %v2015 = vunpack.c.l.b16 %v679
        %v2016 = vunpack.c.l.b16 %v680
        %v2017 = vunpack.c.l.b16 %v681
        %v2018 = vunpack.c.l.b16 %v682
        %v2019 = vunpack.c.l.b16 %v683
        %v2020 = vunpack.c.l.b16 %v684
        %v2021 = vunpack.c.l.b16 %v685
        %v2022 = vunpack.c.l.b16 %v686
        %v2023 = vunpack.c.l.b16 %v687
        %v2024 = vunpack.c.l.b16 %v688
        %v2025 = vunpack.c.l.b16 %v689
        %v2026 = vunpack.c.l.b16 %v690
        %v2027 = vunpack.c.l.b16 %v691
        %v2028 = vunpack.c.l.b16 %v692
        %v2029 = vunpack.c.l.b16 %v693
        %v2030 = vunpack.c.l.b16 %v694
        %v2031 = vunpack.c.l.b16 %v695
        %v2032 = vunpack.c.l.b16 %v696
        %v2033 = vunpack.c.l.b16 %v697
        %v2034 = vunpack.c.l.b16 %v698
        %v2035 = vunpack.c.l.b16 %v699
        %v2036 = vunpack.c.l.b16 %v700
        %v2037 = vunpack.c.l.b16 %v701
        %v2038 = vunpack.c.l.b16 %v702
        %v2039 = vunpack.c.l.b16 %v703
        %v2040 = vunpack.c.l.b16 %v704
        %v2041 = vunpack.c.l.b16 %v705
        %v2042 = vunpack.c.l.b16 %v706
        %v2043 = vunpack.c.l.b16 %v707
        %v2044 = vunpack.c.l.b16 %v708
        %v2045 = vunpack.c.l.b16 %v709
        %v2046 = vunpack.c.l.b16 %v710
        %v2047 = vunpack.c.l.b16 %v711
        %v2048 = vunpack.c.l.b16 %v712
        %v2049 = vunpack.c.l.b16 %v713
        %v2050 = vunpack.c.l.b16 %v714
        %v2051 = vunpack.c.l.b16 %v715
        %v2052 = vunpack.c.l.b16 %v716
        %v2053 = vunpack.c.l.b16 %v717
        %v2054 = vunpack.c.l.b16 %v718
        %v2055 = vunpack.c.l.b16 %v719
        %v2056 = vunpack.c.l.b16 %v720
        %v2057 = vunpack.c.l.b16 %v721
        %v2058 = vunpack.c.l.b16 %v722
        %v2059 = vunpack.c.l.b16 %v723
        %v2060 = vunpack.c.l.b16 %v724
        %v2061 = vunpack.c.l.b16 %v725
        %v2062 = vunpack.c.l.b16 %v726
        %v2063 = vunpack.c.l.b16 %v727
        %v2064 = vunpack.c.l.b16 %v728
        %v2065 = vunpack.c.l.b16 %v729
        %v2066 = vunpack.c.l.b16 %v730
        %v2067 = vunpack.c.l.b16 %v731
        %v2068 = vunpack.c.l.b16 %v732
        %v2069 = vunpack.c.l.b16 %v733
        %v2070 = vunpack.c.l.b16 %v734
        %v2071 = vunpack.c.l.b16 %v735
        %v2072 = vunpack.c.l.b16 %v736
        %v2073 = vunpack.c.l.b16 %v737
        %v2074 = vunpack.c.l.b16 %v738
        %v2075 = vunpack.c.l.b16 %v739
        %v2076 = vunpack.c.l.b16 %v740
        %v2077 = vunpack.c.l.b16 %v741
        %v2078 = vunpack.c.l.b16 %v742
        %v2079 = vunpack.c.l.b16 %v743
        %v2080 = vunpack.c.l.b16 %v744
        %v2081 = vunpack.c.l.b16 %v745
        %v2082 = vunpack.c.l.b16 %v746
        %v2083 = vunpack.c.l.b16 %v747
        %v2084 = vunpack.c.l.b16 %v748
        %v2085 = vunpack.c.l.b16 %v749
        %v2086 = vunpack.c.l.b16 %v750
        %v2087 = vunpack.c.l.b16 %v751
        %v2088 = vunpack.c.l.b16 %v752
        %v2089 = vunpack.c.l.b16 %v753
        %v2090 = vunpack.c.l.b16 %v754
        %v2091 = vunpack.c.l.b16 %v755
        %v2092 = vunpack.c.l.b16 %v756
        %v2093 = vunpack.c.l.b16 %v757
        %v2094 = vunpack.c.l.b16 %v758
        %v2095 = vunpack.c.l.b16 %v759
        %v2096 = vunpack.c.l.b16 %v760
        %v2097 = vunpack.c.l.b16 %v761
        %v2098 = vunpack.c.l.b16 %v762
        %v2099 = vunpack.c.l.b16 %v763
        %v2100 = vunpack.c.l.b16 %v764
        %v2101 = vunpack.c.l.b16 %v765
        %v2102 = vunpack.c.l.b16 %v766
        %v2103 = vunpack.c.l.b16 %v767
        %v2104 = vunpack.c.l.b16 %v768
        %v2105 = vunpack.c.l.b16 %v769
        %v2106 = vunpack.c.l.b16 %v770
        %v2107 = vunpack.c.l.b16 %v771
        %v2108 = vunpack.c.l.b16 %v772
        %v2109 = vunpack.c.l.b16 %v773
        %v2110 = vunpack.c.l.b16 %v774
        %v2111 = vunpack.c.l.b16 %v775
        %v2112 = vunpack.c.l.b16 %v776
        %v2113 = vunpack.c.l.b16 %v777
        %v2114 = vunpack.c.l.b16 %v778
        %v2115 = vunpack.c.l.b16 %v779
        %v2116 = vunpack.c.l.b16 %v780
        %v2117 = vunpack.c.l.b16 %v781
        %v2118 = vunpack.c.l.b16 %v782
        %v2119 = vunpack.c.l.b16 %v783
        %v2120 = vunpack.c.l.b16 %v784
        %v2121 = vunpack.c.l.b16 %v785
        %v2122 = vunpack.c.l.b16 %v786
        %v2123 = vunpack.c.l.b16 %v787
        %v2124 = vunpack.c.l.b16 %v788
        %v2125 = vunpack.c.l.b16 %v789
        %v2126 = vunpack.c.l.b16 %v790
        %v2127 = vunpack.c.l.b16 %v791
        %v2128 = vunpack.c.l.b16 %v792
        %v2129 = vunpack.c.l.b16 %v793
        %v2130 = vunpack.c.l.b16 %v794
        %v2131 = vunpack.c.l.b16 %v795
        %v2132 = vunpack.c.l.b16 %v796
        %v2133 = vunpack.c.l.b16 %v797
        %v2134 = vunpack.c.l.b16 %v798
        %v2135 = vunpack.c.l.b16 %v799
        %v2136 = vunpack.c.l.b16 %v800
        %v2137 = vunpack.c.l.b16 %v801
        %v2138 = vunpack.c.l.b16 %v802
        %v2139 = vunpack.c.l.b16 %v803
        %v2140 = vunpack.c.l.b16 %v804
        %v2141 = vunpack.c.l.b16 %v805
        %v2142 = vunpack.c.l.b16 %v806
        %v2143 = vunpack.c.l.b16 %v807
        %v2144 = vunpack.c.l.b16 %v808
        %v2145 = vunpack.c.l.b16 %v809
        %v2146 = vunpack.c.l.b16 %v810
        %v2147 = vunpack.c.l.b16 %v811
        %v2148 = vunpack.c.l.b16 %v812
        %v2149 = vunpack.c.l.b16 %v813
        %v2150 = vunpack.c.l.b16 %v814
        %v2151 = vunpack.c.l.b16 %v815
        %v2152 = vunpack.c.l.b16 %v816
        %v2153 = vunpack.c.l.b16 %v817
        %v2154 = vunpack.c.l.b16 %v818
        %v2155 = vunpack.c.l.b16 %v819
        %v2156 = vunpack.c.l.b16 %v820
        %v2157 = vunpack.c.l.b16 %v821
        %v2158 = vunpack.c.l.b16 %v822
        %v2159 = vunpack.c.l.b16 %v823
        %v2160 = vunpack.c.l.b16 %v824
        %v2161 = vunpack.c.l.b16 %v825
        %v2162 = vunpack.c.l.b16 %v826
        %v2163 = vunpack.c.l.b16 %v827
        %v2164 = vunpack.c.l.b16 %v828
        %v2165 = vunpack.c.l.b16 %v829
        %v2166 = vunpack.c.l.b16 %v830
        %v2167 = vunpack.c.l.b16 %v831
        %v2168 = vunpack.c.l.b16 %v832
        %v2169 = vunpack.c.l.b16 %v833
        %v2170 = vunpack.c.l.b16 %v834
        %v2171 = vunpack.c.l.b16 %v835
        %v2172 = vunpack.c.l.b16 %v836
        %v2173 = vunpack.c.l.b16 %v837
        %v2174 = vunpack.c.l.b16 %v838
        %v2175 = vunpack.c.l.b16 %v839
        %v2176 = vunpack.c.l.b16 %v840
        %v2177 = vunpack.c.l.b16 %v841
        %v2178 = vunpack.c.l.b16 %v842
        %v2179 = vunpack.c.l.b16 %v843
        %v2180 = vunpack.c.l.b16 %v844
        %v2181 = vunpack.c.l.b16 %v845
        %v2182 = vunpack.c.l.b16 %v846
        %v2183 = vunpack.c.l.b16 %v847
        %v2184 = vunpack.c.l.b16 %v848
        %v2185 = vunpack.c.l.b16 %v849
        %v2186 = vunpack.c.l.b16 %v850
        %v2187 = vunpack.c.l.b16 %v851
        %v2188 = vunpack.c.l.b16 %v852
        %v2189 = vunpack.c.l.b16 %v853
        %v2190 = vunpack.c.l.b16 %v854
        %v2191 = vunpack.c.l.b16 %v855
        %v2192 = vunpack.c.l.b16 %v856
        %v2193 = vunpack.c.l.b16 %v857
        %v2194 = vunpack.c.l.b16 %v858
        %v2195 = vunpack.c.l.b16 %v859
        %v2196 = vunpack.c.l.b16 %v860
        %v2197 = vunpack.c.l.b16 %v861
        %v2198 = vunpack.c.l.b16 %v862
        %v2199 = vunpack.c.l.b16 %v863
        %v2200 = vunpack.c.l.b16 %v864
        %v2201 = vunpack.c.l.b16 %v865
        %v2202 = vunpack.c.l.b16 %v866
        %v2203 = vunpack.c.l.b16 %v867
        %v2204 = vunpack.c.l.b16 %v868
        %v2205 = vunpack.c.l.b16 %v869
        %v2206 = vunpack.c.l.b16 %v870
        %v2207 = vunpack.c.l.b16 %v871
        %v2208 = vunpack.c.l.b16 %v872
        %v2209 = vunpack.c.l.b16 %v873
        %v2210 = vunpack.c.l.b16 %v874
        %v2211 = vunpack.c.l.b16 %v875
        %v2212 = vunpack.c.l.b16 %v876
        %v2213 = vunpack.c.l.b16 %v877
        %v2214 = vunpack.c.l.b16 %v878
        %v2215 = vunpack.c.l.b16 %v879
        %v2216 = vunpack.c.l.b16 %v880
        %v2217 = vunpack.c.l.b16 %v881
        %v2218 = vunpack.c.l.b16 %v882
        %v2219 = vunpack.c.l.b16 %v883
        %v2220 = vunpack.c.l.b16 %v884
        %v2221 = vunpack.c.l.b16 %v885
        %v2222 = vunpack.c.l.b16 %v886
        %v2223 = vunpack.c.l.b16 %v887
        %v2224 = vunpack.c.l.b16 %v888
        %v2225 = vunpack.c.l.b16 %v889
        %v2226 = vunpack.c.l.b16 %v890
        %v2227 = vunpack.c.l.b16 %v891
        %v2228 = vunpack.c.l.b16 %v892
        %v2229 = vunpack.c.l.b16 %v893
        %v2230 = vunpack.c.l.b16 %v894
        %v2231 = vunpack.c.l.b16 %v895
        %v2232 = vunpack.c.l.b16 %v896
        %v2233 = vunpack.c.l.b16 %v897
        %v2234 = vpack.c.b16 %v1611, %v1610
        %v2235 = vpack.c.b16 %v1613, %v1612
        %v2236 = vpack.c.b16 %v1615, %v1614
        %v2237 = vpack.c.b16 %v1617, %v1616
        %v2238 = vpack.c.b16 %v1619, %v1618
        %v2239 = vpack.c.b16 %v1621, %v1620
        %v2240 = vpack.c.b16 %v1623, %v1622
        %v2241 = vpack.c.b16 %v1625, %v1624
        %v2242 = vpack.c.b16 %v1627, %v1626
        %v2243 = vpack.c.b16 %v1629, %v1628
        %v2244 = vpack.c.b16 %v1631, %v1630
        %v2245 = vpack.c.b16 %v1633, %v1632
        %v2246 = vpack.c.b16 %v1635, %v1634
        %v2247 = vpack.c.b16 %v1637, %v1636
        %v2248 = vpack.c.b16 %v1639, %v1638
        %v2249 = vpack.c.b16 %v1641, %v1640
        %v2250 = vpack.c.b16 %v1643, %v1642
        %v2251 = vpack.c.b16 %v1645, %v1644
        %v2252 = vpack.c.b16 %v1647, %v1646
        %v2253 = vpack.c.b16 %v1649, %v1648
        %v2254 = vpack.c.b16 %v1651, %v1650
        %v2255 = vpack.c.b16 %v1653, %v1652
        %v2256 = vpack.c.b16 %v1655, %v1654
        %v2257 = vpack.c.b16 %v1657, %v1656
        %v2258 = vpack.c.b16 %v1659, %v1658
        %v2259 = vpack.c.b16 %v1661, %v1660
        %v2260 = vpack.c.b16 %v1663, %v1662
        %v2261 = vpack.c.b16 %v1665, %v1664
        %v2262 = vpack.c.b16 %v1667, %v1666
        %v2263 = vpack.c.b16 %v1669, %v1668
        %v2264 = vpack.c.b16 %v1671, %v1670
        %v2265 = vpack.c.b16 %v1673, %v1672
        %v2266 = vpack.c.b16 %v1675, %v1674
        %v2267 = vpack.c.b16 %v1677, %v1676
        %v2268 = vpack.c.b16 %v1679, %v1678
        %v2269 = vpack.c.b16 %v1681, %v1680
        %v2270 = vpack.c.b16 %v1683, %v1682
        %v2271 = vpack.c.b16 %v1685, %v1684
        %v2272 = vpack.c.b16 %v1687, %v1686
        %v2273 = vpack.c.b16 %v1689, %v1688
        %v2274 = vpack.c.b16 %v1691, %v1690
        %v2275 = vpack.c.b16 %v1693, %v1692
        %v2276 = vpack.c.b16 %v1695, %v1694
        %v2277 = vpack.c.b16 %v1697, %v1696
        %v2278 = vpack.c.b16 %v1699, %v1698
        %v2279 = vpack.c.b16 %v1701, %v1700
        %v2280 = vpack.c.b16 %v1703, %v1702
        %v2281 = vpack.c.b16 %v1705, %v1704
        %v2282 = vpack.c.b16 %v1707, %v1706
        %v2283 = vpack.c.b16 %v1709, %v1708
        %v2284 = vpack.c.b16 %v1711, %v1710
        %v2285 = vpack.c.b16 %v1713, %v1712
        %v2286 = vpack.c.b16 %v1715, %v1714
        %v2287 = vpack.c.b16 %v1717, %v1716
        %v2288 = vpack.c.b16 %v1719, %v1718
        %v2289 = vpack.c.b16 %v1721, %v1720
        %v2290 = vpack.c.b16 %v1723, %v1722
        %v2291 = vpack.c.b16 %v1725, %v1724
        %v2292 = vpack.c.b16 %v1727, %v1726
        %v2293 = vpack.c.b16 %v1729, %v1728
        %v2294 = vpack.c.b16 %v1731, %v1730
        %v2295 = vpack.c.b16 %v1733, %v1732
        %v2296 = vpack.c.b16 %v1735, %v1734
        %v2297 = vpack.c.b16 %v1737, %v1736
        %v2298 = vpack.c.b16 %v1739, %v1738
        %v2299 = vpack.c.b16 %v1741, %v1740
        %v2300 = vpack.c.b16 %v1743, %v1742
        %v2301 = vpack.c.b16 %v1745, %v1744
        %v2302 = vpack.c.b16 %v1747, %v1746
        %v2303 = vpack.c.b16 %v1749, %v1748
        %v2304 = vpack.c.b16 %v1751, %v1750
        %v2305 = vpack.c.b16 %v1753, %v1752
        %v2306 = vpack.c.b16 %v1755, %v1754
        %v2307 = vpack.c.b16 %v1757, %v1756
        %v2308 = vpack.c.b16 %v1759, %v1758
        %v2309 = vpack.c.b16 %v1761, %v1760
        %v2310 = vpack.c.b16 %v1763, %v1762
        %v2311 = vpack.c.b16 %v1765, %v1764
        %v2312 = vpack.c.b16 %v1767, %v1766
        %v2313 = vpack.c.b16 %v1769, %v1768
        %v2314 = vpack.c.b16 %v1771, %v1770
        %v2315 = vpack.c.b16 %v1773, %v1772
        %v2316 = vpack.c.b16 %v1775, %v1774
        %v2317 = vpack.c.b16 %v1777, %v1776
        %v2318 = vpack.c.b16 %v1779, %v1778
        %v2319 = vpack.c.b16 %v1781, %v1780
        %v2320 = vpack.c.b16 %v1783, %v1782
        %v2321 = vpack.c.b16 %v1785, %v1784
        %v2322 = vpack.c.b16 %v1787, %v1786
        %v2323 = vpack.c.b16 %v1789, %v1788
        %v2324 = vpack.c.b16 %v1791, %v1790
        %v2325 = vpack.c.b16 %v1793, %v1792
        %v2326 = vpack.c.b16 %v1795, %v1794
        %v2327 = vpack.c.b16 %v1797, %v1796
        %v2328 = vpack.c.b16 %v1799, %v1798
        %v2329 = vpack.c.b16 %v1801, %v1800
        %v2330 = vpack.c.b16 %v1803, %v1802
        %v2331 = vpack.c.b16 %v1805, %v1804
        %v2332 = vpack.c.b16 %v1807, %v1806
        %v2333 = vpack.c.b16 %v1809, %v1808
        %v2334 = vpack.c.b16 %v1811, %v1810
        %v2335 = vpack.c.b16 %v1813, %v1812
        %v2336 = vpack.c.b16 %v1815, %v1814
        %v2337 = vpack.c.b16 %v1817, %v1816
        %v2338 = vpack.c.b16 %v1819, %v1818
        %v2339 = vpack.c.b16 %v1821, %v1820
        %v2340 = vpack.c.b16 %v1823, %v1822
        %v2341 = vpack.c.b16 %v1825, %v1824
        %v2342 = vpack.c.b16 %v1827, %v1826
        %v2343 = vpack.c.b16 %v1829, %v1828
        %v2344 = vpack.c.b16 %v1831, %v1830
        %v2345 = vpack.c.b16 %v1833, %v1832
        %v2346 = vpack.c.b16 %v1835, %v1834
        %v2347 = vpack.c.b16 %v1837, %v1836
        %v2348 = vpack.c.b16 %v1839, %v1838
        %v2349 = vpack.c.b16 %v1841, %v1840
        %v2350 = vpack.c.b16 %v1843, %v1842
        %v2351 = vpack.c.b16 %v1845, %v1844
        %v2352 = vpack.c.b16 %v1847, %v1846
        %v2353 = vpack.c.b16 %v1849, %v1848
        %v2354 = vpack.c.b16 %v1851, %v1850
        %v2355 = vpack.c.b16 %v1853, %v1852
        %v2356 = vpack.c.b16 %v1855, %v1854
        %v2357 = vpack.c.b16 %v1857, %v1856
        %v2358 = vpack.c.b16 %v1859, %v1858
        %v2359 = vpack.c.b16 %v1861, %v1860
        %v2360 = vpack.c.b16 %v1863, %v1862
        %v2361 = vpack.c.b16 %v1865, %v1864
        %v2362 = vpack.c.b16 %v1867, %v1866
        %v2363 = vpack.c.b16 %v1869, %v1868
        %v2364 = vpack.c.b16 %v1871, %v1870
        %v2365 = vpack.c.b16 %v1873, %v1872
        %v2366 = vpack.c.b16 %v1875, %v1874
        %v2367 = vpack.c.b16 %v1877, %v1876
        %v2368 = vpack.c.b16 %v1879, %v1878
        %v2369 = vpack.c.b16 %v1881, %v1880
        %v2370 = vpack.c.b16 %v1883, %v1882
        %v2371 = vpack.c.b16 %v1885, %v1884
        %v2372 = vpack.c.b16 %v1887, %v1886
        %v2373 = vpack.c.b16 %v1889, %v1888
        %v2374 = vpack.c.b16 %v1891, %v1890
        %v2375 = vpack.c.b16 %v1893, %v1892
        %v2376 = vpack.c.b16 %v1895, %v1894
        %v2377 = vpack.c.b16 %v1897, %v1896
        %v2378 = vpack.c.b16 %v1899, %v1898
        %v2379 = vpack.c.b16 %v1901, %v1900
        %v2380 = vpack.c.b16 %v1903, %v1902
        %v2381 = vpack.c.b16 %v1905, %v1904
        %v2382 = vpack.c.b16 %v1907, %v1906
        %v2383 = vpack.c.b16 %v1909, %v1908
        %v2384 = vpack.c.b16 %v1911, %v1910
        %v2385 = vpack.c.b16 %v1913, %v1912
        %v2386 = vpack.c.b16 %v1915, %v1914
        %v2387 = vpack.c.b16 %v1917, %v1916
        %v2388 = vpack.c.b16 %v1919, %v1918
        %v2389 = vpack.c.b16 %v1921, %v1920
        %v2390 = vpack.c.b16 %v1923, %v1922
        %v2391 = vpack.c.b16 %v1925, %v1924
        %v2392 = vpack.c.b16 %v1927, %v1926
        %v2393 = vpack.c.b16 %v1929, %v1928
        %v2394 = vpack.c.b16 %v1931, %v1930
        %v2395 = vpack.c.b16 %v1933, %v1932
        %v2396 = vpack.c.b16 %v1935, %v1934
        %v2397 = vpack.c.b16 %v1937, %v1936
        %v2398 = vpack.c.b16 %v1939, %v1938
        %v2399 = vpack.c.b16 %v1941, %v1940
        %v2400 = vpack.c.b16 %v1943, %v1942
        %v2401 = vpack.c.b16 %v1945, %v1944
        %v2402 = vpack.c.b16 %v1947, %v1946
        %v2403 = vpack.c.b16 %v1949, %v1948
        %v2404 = vpack.c.b16 %v1951, %v1950
        %v2405 = vpack.c.b16 %v1953, %v1952
        %v2406 = vpack.c.b16 %v1955, %v1954
        %v2407 = vpack.c.b16 %v1957, %v1956
        %v2408 = vpack.c.b16 %v1959, %v1958
        %v2409 = vpack.c.b16 %v1961, %v1960
        %v2410 = vpack.c.b16 %v1963, %v1962
        %v2411 = vpack.c.b16 %v1965, %v1964
        %v2412 = vpack.c.b16 %v1967, %v1966
        %v2413 = vpack.c.b16 %v1969, %v1968
        %v2414 = vpack.c.b16 %v1971, %v1970
        %v2415 = vpack.c.b16 %v1973, %v1972
        %v2416 = vpack.c.b16 %v1975, %v1974
        %v2417 = vpack.c.b16 %v1977, %v1976
        %v2418 = vpack.c.b16 %v1979, %v1978
        %v2419 = vpack.c.b16 %v1981, %v1980
        %v2420 = vpack.c.b16 %v1983, %v1982
        %v2421 = vpack.c.b16 %v1985, %v1984
        %v2422 = vpack.c.b16 %v1987, %v1986
        %v2423 = vpack.c.b16 %v1989, %v1988
        %v2424 = vpack.c.b16 %v1991, %v1990
        %v2425 = vpack.c.b16 %v1993, %v1992
        %v2426 = vpack.c.b16 %v1995, %v1994
        %v2427 = vpack.c.b16 %v1997, %v1996
        %v2428 = vpack.c.b16 %v1999, %v1998
        %v2429 = vpack.c.b16 %v2001, %v2000
        %v2430 = vpack.c.b16 %v2003, %v2002
        %v2431 = vpack.c.b16 %v2005, %v2004
        %v2432 = vpack.c.b16 %v2007, %v2006
        %v2433 = vpack.c.b16 %v2009, %v2008
        %v2434 = vpack.c.b16 %v2011, %v2010
        %v2435 = vpack.c.b16 %v2013, %v2012
        %v2436 = vpack.c.b16 %v2015, %v2014
        %v2437 = vpack.c.b16 %v2017, %v2016
        %v2438 = vpack.c.b16 %v2019, %v2018
        %v2439 = vpack.c.b16 %v2021, %v2020
        %v2440 = vpack.c.b16 %v2023, %v2022
        %v2441 = vpack.c.b16 %v2025, %v2024
        %v2442 = vpack.c.b16 %v2027, %v2026
        %v2443 = vpack.c.b16 %v2029, %v2028
        %v2444 = vpack.c.b16 %v2031, %v2030
        %v2445 = vpack.c.b16 %v2033, %v2032
        %v2446 = vpack.c.b16 %v2035, %v2034
        %v2447 = vpack.c.b16 %v2037, %v2036
        %v2448 = vpack.c.b16 %v2039, %v2038
        %v2449 = vpack.c.b16 %v2041, %v2040
        %v2450 = vpack.c.b16 %v2043, %v2042
        %v2451 = vpack.c.b16 %v2045, %v2044
        %v2452 = vpack.c.b16 %v2047, %v2046
        %v2453 = vpack.c.b16 %v2049, %v2048
        %v2454 = vpack.c.b16 %v2051, %v2050
        %v2455 = vpack.c.b16 %v2053, %v2052
        %v2456 = vpack.c.b16 %v2055, %v2054
        %v2457 = vpack.c.b16 %v2057, %v2056
        %v2458 = vpack.c.b16 %v2059, %v2058
        %v2459 = vpack.c.b16 %v2061, %v2060
        %v2460 = vpack.c.b16 %v2063, %v2062
        %v2461 = vpack.c.b16 %v2065, %v2064
        %v2462 = vpack.c.b16 %v2067, %v2066
        %v2463 = vpack.c.b16 %v2069, %v2068
        %v2464 = vpack.c.b16 %v2071, %v2070
        %v2465 = vpack.c.b16 %v2073, %v2072
        %v2466 = vpack.c.b16 %v2075, %v2074
        %v2467 = vpack.c.b16 %v2077, %v2076
        %v2468 = vpack.c.b16 %v2079, %v2078
        %v2469 = vpack.c.b16 %v2081, %v2080
        %v2470 = vpack.c.b16 %v2083, %v2082
        %v2471 = vpack.c.b16 %v2085, %v2084
        %v2472 = vpack.c.b16 %v2087, %v2086
        %v2473 = vpack.c.b16 %v2089, %v2088
        %v2474 = vpack.c.b16 %v2091, %v2090
        %v2475 = vpack.c.b16 %v2093, %v2092
        %v2476 = vpack.c.b16 %v2095, %v2094
        %v2477 = vpack.c.b16 %v2097, %v2096
        %v2478 = vpack.c.b16 %v2099, %v2098
        %v2479 = vpack.c.b16 %v2101, %v2100
        %v2480 = vpack.c.b16 %v2103, %v2102
        %v2481 = vpack.c.b16 %v2105, %v2104
        %v2482 = vpack.c.b16 %v2107, %v2106
        %v2483 = vpack.c.b16 %v2109, %v2108
        %v2484 = vpack.c.b16 %v2111, %v2110
        %v2485 = vpack.c.b16 %v2113, %v2112
        %v2486 = vpack.c.b16 %v2115, %v2114
        %v2487 = vpack.c.b16 %v2117, %v2116
        %v2488 = vpack.c.b16 %v2119, %v2118
        %v2489 = vpack.c.b16 %v2121, %v2120
        %v2490 = vpack.c.b16 %v2123, %v2122
        %v2491 = vpack.c.b16 %v2125, %v2124
        %v2492 = vpack.c.b16 %v2127, %v2126
        %v2493 = vpack.c.b16 %v2129, %v2128
        %v2494 = vpack.c.b16 %v2131, %v2130
        %v2495 = vpack.c.b16 %v2133, %v2132
        %v2496 = vpack.c.b16 %v2135, %v2134
        %v2497 = vpack.c.b16 %v2137, %v2136
        %v2498 = vpack.c.b16 %v2139, %v2138
        %v2499 = vpack.c.b16 %v2141, %v2140
        %v2500 = vpack.c.b16 %v2143, %v2142
        %v2501 = vpack.c.b16 %v2145, %v2144
        %v2502 = vpack.c.b16 %v2147, %v2146
        %v2503 = vpack.c.b16 %v2149, %v2148
        %v2504 = vpack.c.b16 %v2151, %v2150
        %v2505 = vpack.c.b16 %v2153, %v2152
        %v2506 = vpack.c.b16 %v2155, %v2154
        %v2507 = vpack.c.b16 %v2157, %v2156
        %v2508 = vpack.c.b16 %v2159, %v2158
        %v2509 = vpack.c.b16 %v2161, %v2160
        %v2510 = vpack.c.b16 %v2163, %v2162
        %v2511 = vpack.c.b16 %v2165, %v2164
        %v2512 = vpack.c.b16 %v2167, %v2166
        %v2513 = vpack.c.b16 %v2169, %v2168
        %v2514 = vpack.c.b16 %v2171, %v2170
        %v2515 = vpack.c.b16 %v2173, %v2172
        %v2516 = vpack.c.b16 %v2175, %v2174
        %v2517 = vpack.c.b16 %v2177, %v2176
        %v2518 = vpack.c.b16 %v2179, %v2178
        %v2519 = vpack.c.b16 %v2181, %v2180
        %v2520 = vpack.c.b16 %v2183, %v2182
        %v2521 = vpack.c.b16 %v2185, %v2184
        %v2522 = vpack.c.b16 %v2187, %v2186
        %v2523 = vpack.c.b16 %v2189, %v2188
        %v2524 = vpack.c.b16 %v2191, %v2190
        %v2525 = vpack.c.b16 %v2193, %v2192
        %v2526 = vpack.c.b16 %v2195, %v2194
        %v2527 = vpack.c.b16 %v2197, %v2196
        %v2528 = vpack.c.b16 %v2199, %v2198
        %v2529 = vpack.c.b16 %v2201, %v2200
        %v2530 = vpack.c.b16 %v2203, %v2202
        %v2531 = vpack.c.b16 %v2205, %v2204
        %v2532 = vpack.c.b16 %v2207, %v2206
        %v2533 = vpack.c.b16 %v2209, %v2208
        %v2534 = vpack.c.b16 %v2211, %v2210
        %v2535 = vpack.c.b16 %v2213, %v2212
        %v2536 = vpack.c.b16 %v2215, %v2214
        %v2537 = vpack.c.b16 %v2217, %v2216
        %v2538 = vpack.c.b16 %v2219, %v2218
        %v2539 = vpack.c.b16 %v2221, %v2220
        %v2540 = vpack.c.b16 %v2223, %v2222
        %v2541 = vpack.c.b16 %v2225, %v2224
        %v2542 = vpack.c.b16 %v2227, %v2226
        %v2543 = vpack.c.b16 %v2229, %v2228
        %v2544 = vpack.c.b16 %v2231, %v2230
        %v2545 = vpack.c.b16 %v2233, %v2232
        %2858 = vmatpush.bf16.msra.mxu0 %v2241
        %2859 = vmatpush.bf16.msra.mxu0 %v2240
        %2860 = vmatpush.bf16.msra.mxu0 %v2239
        %2861 = vmatpush.bf16.msra.mxu0 %v2238
        %2862 = vmatpush.bf16.msra.mxu0 %v2237
        %2863 = vmatpush.bf16.msra.mxu0 %v2236
        %2864 = vmatpush.bf16.msra.mxu0 %v2235
        %2865 = vmatpush.bf16.msra.mxu0 %v2234
        %2866 = vmatmul.bf16.gmra.mxu0 %v900
        %v2867 = vpop.f32.mrf.mxu0
        %v2868 = vadd.f32 0.0, %v2867
        %v2869 = vpop.f32.mrf.mxu0
        %2870 = vdwg.mxu0
        %2871 = vmatpush.bf16.msra.mxu0 %v2249
        %2872 = vmatpush.bf16.msra.mxu0 %v2248
        %2873 = vmatpush.bf16.msra.mxu0 %v2247
        %2874 = vmatpush.bf16.msra.mxu0 %v2246
        %2875 = vmatpush.bf16.msra.mxu0 %v2245
        %2876 = vmatpush.bf16.msra.mxu0 %v2244
        %2877 = vmatpush.bf16.msra.mxu0 %v2243
        %2878 = vmatpush.bf16.msra.mxu0 %v2242
        %2879 = vmatmul.bf16.gmra.mxu0 %v901
        %v2880 = vpop.f32.mrf.mxu0
        %v2881 = vadd.f32 %v2868, %v2880
        %v2882 = vpop.f32.mrf.mxu0
        %2883 = vdwg.mxu0
        %2884 = vmatpush.bf16.msra.mxu0 %v2257
        %2885 = vmatpush.bf16.msra.mxu0 %v2256
        %2886 = vmatpush.bf16.msra.mxu0 %v2255
        %2887 = vmatpush.bf16.msra.mxu0 %v2254
        %2888 = vmatpush.bf16.msra.mxu0 %v2253
        %2889 = vmatpush.bf16.msra.mxu0 %v2252
        %2890 = vmatpush.bf16.msra.mxu0 %v2251
        %2891 = vmatpush.bf16.msra.mxu0 %v2250
        %2892 = vmatmul.bf16.gmra.mxu0 %v902
        %v2893 = vpop.f32.mrf.mxu0
        %v2894 = vadd.f32 %v2881, %v2893
        %v2895 = vpop.f32.mrf.mxu0
        %2896 = vdwg.mxu0
        %2897 = vmatpush.bf16.msra.mxu0 %v2265
        %2898 = vmatpush.bf16.msra.mxu0 %v2264
        %2899 = vmatpush.bf16.msra.mxu0 %v2263
        %2900 = vmatpush.bf16.msra.mxu0 %v2262
        %2901 = vmatpush.bf16.msra.mxu0 %v2261
        %2902 = vmatpush.bf16.msra.mxu0 %v2260
        %2903 = vmatpush.bf16.msra.mxu0 %v2259
        %2904 = vmatpush.bf16.msra.mxu0 %v2258
        %2905 = vmatmul.bf16.gmra.mxu0 %v903
        %v2906 = vpop.f32.mrf.mxu0
        %v2907 = vadd.f32 %v2894, %v2906
        %v2908 = vpop.f32.mrf.mxu0
        %2909 = vdwg.mxu0
        %2910 = vmatpush.bf16.msra.mxu0 %v2273
        %2911 = vmatpush.bf16.msra.mxu0 %v2272
        %2912 = vmatpush.bf16.msra.mxu0 %v2271
        %2913 = vmatpush.bf16.msra.mxu0 %v2270
        %2914 = vmatpush.bf16.msra.mxu0 %v2269
        %2915 = vmatpush.bf16.msra.mxu0 %v2268
        %2916 = vmatpush.bf16.msra.mxu0 %v2267
        %2917 = vmatpush.bf16.msra.mxu0 %v2266
        %2918 = vmatmul.bf16.gmra.mxu0 %v904
        %v2919 = vpop.f32.mrf.mxu0
        %v2920 = vadd.f32 %v2907, %v2919
        %v2921 = vpop.f32.mrf.mxu0
        %2922 = vdwg.mxu0
        %2923 = vmatpush.bf16.msra.mxu0 %v2281
        %2924 = vmatpush.bf16.msra.mxu0 %v2280
        %2925 = vmatpush.bf16.msra.mxu0 %v2279
        %2926 = vmatpush.bf16.msra.mxu0 %v2278
        %2927 = vmatpush.bf16.msra.mxu0 %v2277
        %2928 = vmatpush.bf16.msra.mxu0 %v2276
        %2929 = vmatpush.bf16.msra.mxu0 %v2275
        %2930 = vmatpush.bf16.msra.mxu0 %v2274
        %2931 = vmatmul.bf16.gmra.mxu0 %v905
        %v2932 = vpop.f32.mrf.mxu0
        %v2933 = vadd.f32 %v2920, %v2932
        %v2934 = vpop.f32.mrf.mxu0
        %2935 = vdwg.mxu0
        %2936 = vmatpush.bf16.msra.mxu0 %v2289
        %2937 = vmatpush.bf16.msra.mxu0 %v2288
        %2938 = vmatpush.bf16.msra.mxu0 %v2287
        %2939 = vmatpush.bf16.msra.mxu0 %v2286
        %2940 = vmatpush.bf16.msra.mxu0 %v2285
        %2941 = vmatpush.bf16.msra.mxu0 %v2284
        %2942 = vmatpush.bf16.msra.mxu0 %v2283
        %2943 = vmatpush.bf16.msra.mxu0 %v2282
        %2944 = vmatmul.bf16.gmra.mxu0 %v906
        %v2945 = vpop.f32.mrf.mxu0
        %v2946 = vadd.f32 %v2933, %v2945
        %v2947 = vpop.f32.mrf.mxu0
        %2948 = vdwg.mxu0
        %2949 = vmatpush.bf16.msra.mxu0 %v2297
        %2950 = vmatpush.bf16.msra.mxu0 %v2296
        %2951 = vmatpush.bf16.msra.mxu0 %v2295
        %2952 = vmatpush.bf16.msra.mxu0 %v2294
        %2953 = vmatpush.bf16.msra.mxu0 %v2293
        %2954 = vmatpush.bf16.msra.mxu0 %v2292
        %2955 = vmatpush.bf16.msra.mxu0 %v2291
        %2956 = vmatpush.bf16.msra.mxu0 %v2290
        %2957 = vmatmul.bf16.gmra.mxu0 %v907
        %v2958 = vpop.f32.mrf.mxu0
        %v2959 = vadd.f32 %v2946, %v2958
        %v2960 = vpop.f32.mrf.mxu0
        %2961 = vdwg.mxu0
        %2962 = vmatpush.bf16.msra.mxu0 %v2305
        %2963 = vmatpush.bf16.msra.mxu0 %v2304
        %2964 = vmatpush.bf16.msra.mxu0 %v2303
        %2965 = vmatpush.bf16.msra.mxu0 %v2302
        %2966 = vmatpush.bf16.msra.mxu0 %v2301
        %2967 = vmatpush.bf16.msra.mxu0 %v2300
        %2968 = vmatpush.bf16.msra.mxu0 %v2299
        %2969 = vmatpush.bf16.msra.mxu0 %v2298
        %2970 = vmatmul.bf16.gmra.mxu0 %v910
        %v2971 = vpop.f32.mrf.mxu0
        %v2972 = vadd.f32 %v2959, %v2971
        %v2973 = vpop.f32.mrf.mxu0
        %2974 = vdwg.mxu0
        %2975 = vmatpush.bf16.msra.mxu0 %v2313
        %2976 = vmatpush.bf16.msra.mxu0 %v2312
        %2977 = vmatpush.bf16.msra.mxu0 %v2311
        %2978 = vmatpush.bf16.msra.mxu0 %v2310
        %2979 = vmatpush.bf16.msra.mxu0 %v2309
        %2980 = vmatpush.bf16.msra.mxu0 %v2308
        %2981 = vmatpush.bf16.msra.mxu0 %v2307
        %2982 = vmatpush.bf16.msra.mxu0 %v2306
        %2983 = vmatmul.bf16.gmra.mxu0 %v911
        %v2984 = vpop.f32.mrf.mxu0
        %v2985 = vadd.f32 %v2972, %v2984
        %v2986 = vpop.f32.mrf.mxu0
        %2987 = vdwg.mxu0
        %2988 = vmatpush.bf16.msra.mxu0 %v2321
        %2989 = vmatpush.bf16.msra.mxu0 %v2320
        %2990 = vmatpush.bf16.msra.mxu0 %v2319
        %2991 = vmatpush.bf16.msra.mxu0 %v2318
        %2992 = vmatpush.bf16.msra.mxu0 %v2317
        %2993 = vmatpush.bf16.msra.mxu0 %v2316
        %2994 = vmatpush.bf16.msra.mxu0 %v2315
        %2995 = vmatpush.bf16.msra.mxu0 %v2314
        %2996 = vmatmul.bf16.gmra.mxu0 %v912
        %v2997 = vpop.f32.mrf.mxu0
        %v2998 = vadd.f32 %v2985, %v2997
        %v2999 = vpop.f32.mrf.mxu0
        %3000 = vdwg.mxu0
        %3001 = vmatpush.bf16.msra.mxu0 %v2329
        %3002 = vmatpush.bf16.msra.mxu0 %v2328
        %3003 = vmatpush.bf16.msra.mxu0 %v2327
        %3004 = vmatpush.bf16.msra.mxu0 %v2326
        %3005 = vmatpush.bf16.msra.mxu0 %v2325
        %3006 = vmatpush.bf16.msra.mxu0 %v2324
        %3007 = vmatpush.bf16.msra.mxu0 %v2323
        %3008 = vmatpush.bf16.msra.mxu0 %v2322
        %3009 = vmatmul.bf16.gmra.mxu0 %v913
        %v3010 = vpop.f32.mrf.mxu0
        %v3011 = vadd.f32 %v2998, %v3010
        %v3012 = vpop.f32.mrf.mxu0
        %3013 = vdwg.mxu0
        %3014 = vmatpush.bf16.msra.mxu0 %v2337
        %3015 = vmatpush.bf16.msra.mxu0 %v2336
        %3016 = vmatpush.bf16.msra.mxu0 %v2335
        %3017 = vmatpush.bf16.msra.mxu0 %v2334
        %3018 = vmatpush.bf16.msra.mxu0 %v2333
        %3019 = vmatpush.bf16.msra.mxu0 %v2332
        %3020 = vmatpush.bf16.msra.mxu0 %v2331
        %3021 = vmatpush.bf16.msra.mxu0 %v2330
        %3022 = vmatmul.bf16.gmra.mxu0 %v914
        %v3023 = vpop.f32.mrf.mxu0
        %v3024 = vadd.f32 %v3011, %v3023
        %v3025 = vpop.f32.mrf.mxu0
        %3026 = vdwg.mxu0
        %3027 = vmatpush.bf16.msra.mxu0 %v2345
        %3028 = vmatpush.bf16.msra.mxu0 %v2344
        %3029 = vmatpush.bf16.msra.mxu0 %v2343
        %3030 = vmatpush.bf16.msra.mxu0 %v2342
        %3031 = vmatpush.bf16.msra.mxu0 %v2341
        %3032 = vmatpush.bf16.msra.mxu0 %v2340
        %3033 = vmatpush.bf16.msra.mxu0 %v2339
        %3034 = vmatpush.bf16.msra.mxu0 %v2338
        %3035 = vmatmul.bf16.gmra.mxu0 %v915
        %v3036 = vpop.f32.mrf.mxu0
        %v3037 = vadd.f32 %v3024, %v3036
        %v3038 = vpop.f32.mrf.mxu0
        %3039 = vdwg.mxu0
        %3040 = vmatpush.bf16.msra.mxu0 %v2353
        %3041 = vmatpush.bf16.msra.mxu0 %v2352
        %3042 = vmatpush.bf16.msra.mxu0 %v2351
        %3043 = vmatpush.bf16.msra.mxu0 %v2350
        %3044 = vmatpush.bf16.msra.mxu0 %v2349
        %3045 = vmatpush.bf16.msra.mxu0 %v2348
        %3046 = vmatpush.bf16.msra.mxu0 %v2347
        %3047 = vmatpush.bf16.msra.mxu0 %v2346
        %3048 = vmatmul.bf16.gmra.mxu0 %v916
        %v3049 = vpop.f32.mrf.mxu0
        %v3050 = vadd.f32 %v3037, %v3049
        %v3051 = vpop.f32.mrf.mxu0
        %3052 = vdwg.mxu0
        %3053 = vmatpush.bf16.msra.mxu0 %v2361
        %3054 = vmatpush.bf16.msra.mxu0 %v2360
        %3055 = vmatpush.bf16.msra.mxu0 %v2359
        %3056 = vmatpush.bf16.msra.mxu0 %v2358
        %3057 = vmatpush.bf16.msra.mxu0 %v2357
        %3058 = vmatpush.bf16.msra.mxu0 %v2356
        %3059 = vmatpush.bf16.msra.mxu0 %v2355
        %3060 = vmatpush.bf16.msra.mxu0 %v2354
        %3061 = vmatmul.bf16.gmra.mxu0 %v917
        %v3062 = vpop.f32.mrf.mxu0
        %v3063 = vadd.f32 %v3050, %v3062
        %v3064 = vpop.f32.mrf.mxu0
        %3065 = vdwg.mxu0
        %3066 = vmatpush.bf16.msra.mxu0 %v2369
        %3067 = vmatpush.bf16.msra.mxu0 %v2368
        %3068 = vmatpush.bf16.msra.mxu0 %v2367
        %3069 = vmatpush.bf16.msra.mxu0 %v2366
        %3070 = vmatpush.bf16.msra.mxu0 %v2365
        %3071 = vmatpush.bf16.msra.mxu0 %v2364
        %3072 = vmatpush.bf16.msra.mxu0 %v2363
        %3073 = vmatpush.bf16.msra.mxu0 %v2362
        %3074 = vmatmul.bf16.gmra.mxu0 %v920
        %v3075 = vpop.f32.mrf.mxu0
        %v3076 = vadd.f32 %v3063, %v3075
        %v3077 = vpop.f32.mrf.mxu0
        %3078 = vdwg.mxu0
        %3079 = vmatpush.bf16.msra.mxu0 %v2377
        %3080 = vmatpush.bf16.msra.mxu0 %v2376
        %3081 = vmatpush.bf16.msra.mxu0 %v2375
        %3082 = vmatpush.bf16.msra.mxu0 %v2374
        %3083 = vmatpush.bf16.msra.mxu0 %v2373
        %3084 = vmatpush.bf16.msra.mxu0 %v2372
        %3085 = vmatpush.bf16.msra.mxu0 %v2371
        %3086 = vmatpush.bf16.msra.mxu0 %v2370
        %3087 = vmatmul.bf16.gmra.mxu0 %v921
        %v3088 = vpop.f32.mrf.mxu0
        %v3089 = vadd.f32 %v3076, %v3088
        %v3090 = vpop.f32.mrf.mxu0
        %3091 = vdwg.mxu0
        %3092 = vmatpush.bf16.msra.mxu0 %v2385
        %3093 = vmatpush.bf16.msra.mxu0 %v2384
        %3094 = vmatpush.bf16.msra.mxu0 %v2383
        %3095 = vmatpush.bf16.msra.mxu0 %v2382
        %3096 = vmatpush.bf16.msra.mxu0 %v2381
        %3097 = vmatpush.bf16.msra.mxu0 %v2380
        %3098 = vmatpush.bf16.msra.mxu0 %v2379
        %3099 = vmatpush.bf16.msra.mxu0 %v2378
        %3100 = vmatmul.bf16.gmra.mxu0 %v922
        %v3101 = vpop.f32.mrf.mxu0
        %v3102 = vadd.f32 %v3089, %v3101
        %v3103 = vpop.f32.mrf.mxu0
        %3104 = vdwg.mxu0
        %3105 = vmatpush.bf16.msra.mxu0 %v2393
        %3106 = vmatpush.bf16.msra.mxu0 %v2392
        %3107 = vmatpush.bf16.msra.mxu0 %v2391
        %3108 = vmatpush.bf16.msra.mxu0 %v2390
        %3109 = vmatpush.bf16.msra.mxu0 %v2389
        %3110 = vmatpush.bf16.msra.mxu0 %v2388
        %3111 = vmatpush.bf16.msra.mxu0 %v2387
        %3112 = vmatpush.bf16.msra.mxu0 %v2386
        %3113 = vmatmul.bf16.gmra.mxu0 %v923
        %v3114 = vpop.f32.mrf.mxu0
        %v3115 = vadd.f32 %v3102, %v3114
        %v3116 = vpop.f32.mrf.mxu0
        %3117 = vdwg.mxu0
        %3118 = vmatpush.bf16.msra.mxu0 %v2401
        %3119 = vmatpush.bf16.msra.mxu0 %v2400
        %3120 = vmatpush.bf16.msra.mxu0 %v2399
        %3121 = vmatpush.bf16.msra.mxu0 %v2398
        %3122 = vmatpush.bf16.msra.mxu0 %v2397
        %3123 = vmatpush.bf16.msra.mxu0 %v2396
        %3124 = vmatpush.bf16.msra.mxu0 %v2395
        %3125 = vmatpush.bf16.msra.mxu0 %v2394
        %3126 = vmatmul.bf16.gmra.mxu0 %v924
        %v3127 = vpop.f32.mrf.mxu0
        %v3128 = vadd.f32 %v3115, %v3127
        %v3129 = vpop.f32.mrf.mxu0
        %3130 = vdwg.mxu0
        %3131 = vmatpush.bf16.msra.mxu0 %v2409
        %3132 = vmatpush.bf16.msra.mxu0 %v2408
        %3133 = vmatpush.bf16.msra.mxu0 %v2407
        %3134 = vmatpush.bf16.msra.mxu0 %v2406
        %3135 = vmatpush.bf16.msra.mxu0 %v2405
        %3136 = vmatpush.bf16.msra.mxu0 %v2404
        %3137 = vmatpush.bf16.msra.mxu0 %v2403
        %3138 = vmatpush.bf16.msra.mxu0 %v2402
        %3139 = vmatmul.bf16.gmra.mxu0 %v925
        %v3140 = vpop.f32.mrf.mxu0
        %v3141 = vadd.f32 %v3128, %v3140
        %v3142 = vpop.f32.mrf.mxu0
        %3143 = vdwg.mxu0
        %3144 = vmatpush.bf16.msra.mxu0 %v2417
        %3145 = vmatpush.bf16.msra.mxu0 %v2416
        %3146 = vmatpush.bf16.msra.mxu0 %v2415
        %3147 = vmatpush.bf16.msra.mxu0 %v2414
        %3148 = vmatpush.bf16.msra.mxu0 %v2413
        %3149 = vmatpush.bf16.msra.mxu0 %v2412
        %3150 = vmatpush.bf16.msra.mxu0 %v2411
        %3151 = vmatpush.bf16.msra.mxu0 %v2410
        %3152 = vmatmul.bf16.gmra.mxu0 %v926
        %v3153 = vpop.f32.mrf.mxu0
        %v3154 = vadd.f32 %v3141, %v3153
        %v3155 = vpop.f32.mrf.mxu0
        %3156 = vdwg.mxu0
        %3157 = vmatpush.bf16.msra.mxu0 %v2425
        %3158 = vmatpush.bf16.msra.mxu0 %v2424
        %3159 = vmatpush.bf16.msra.mxu0 %v2423
        %3160 = vmatpush.bf16.msra.mxu0 %v2422
        %3161 = vmatpush.bf16.msra.mxu0 %v2421
        %3162 = vmatpush.bf16.msra.mxu0 %v2420
        %3163 = vmatpush.bf16.msra.mxu0 %v2419
        %3164 = vmatpush.bf16.msra.mxu0 %v2418
        %3165 = vmatmul.bf16.gmra.mxu0 %v927
        %v3166 = vpop.f32.mrf.mxu0
        %v3167 = vadd.f32 %v3154, %v3166
        %v3168 = vpop.f32.mrf.mxu0
        %3169 = vdwg.mxu0
        %3170 = vmatpush.bf16.msra.mxu0 %v2433
        %3171 = vmatpush.bf16.msra.mxu0 %v2432
        %3172 = vmatpush.bf16.msra.mxu0 %v2431
        %3173 = vmatpush.bf16.msra.mxu0 %v2430
        %3174 = vmatpush.bf16.msra.mxu0 %v2429
        %3175 = vmatpush.bf16.msra.mxu0 %v2428
        %3176 = vmatpush.bf16.msra.mxu0 %v2427
        %3177 = vmatpush.bf16.msra.mxu0 %v2426
        %3178 = vmatmul.bf16.gmra.mxu0 %v930
        %v3179 = vpop.f32.mrf.mxu0
        %v3180 = vadd.f32 %v3167, %v3179
        %v3181 = vpop.f32.mrf.mxu0
        %3182 = vdwg.mxu0
        %3183 = vmatpush.bf16.msra.mxu0 %v2441
        %3184 = vmatpush.bf16.msra.mxu0 %v2440
        %3185 = vmatpush.bf16.msra.mxu0 %v2439
        %3186 = vmatpush.bf16.msra.mxu0 %v2438
        %3187 = vmatpush.bf16.msra.mxu0 %v2437
        %3188 = vmatpush.bf16.msra.mxu0 %v2436
        %3189 = vmatpush.bf16.msra.mxu0 %v2435
        %3190 = vmatpush.bf16.msra.mxu0 %v2434
        %3191 = vmatmul.bf16.gmra.mxu0 %v931
        %v3192 = vpop.f32.mrf.mxu0
        %v3193 = vadd.f32 %v3180, %v3192
        %v3194 = vpop.f32.mrf.mxu0
        %3195 = vdwg.mxu0
        %3196 = vmatpush.bf16.msra.mxu0 %v2449
        %3197 = vmatpush.bf16.msra.mxu0 %v2448
        %3198 = vmatpush.bf16.msra.mxu0 %v2447
        %3199 = vmatpush.bf16.msra.mxu0 %v2446
        %3200 = vmatpush.bf16.msra.mxu0 %v2445
        %3201 = vmatpush.bf16.msra.mxu0 %v2444
        %3202 = vmatpush.bf16.msra.mxu0 %v2443
        %3203 = vmatpush.bf16.msra.mxu0 %v2442
        %3204 = vmatmul.bf16.gmra.mxu0 %v932
        %v3205 = vpop.f32.mrf.mxu0
        %v3206 = vadd.f32 %v3193, %v3205
        %v3207 = vpop.f32.mrf.mxu0
        %3208 = vdwg.mxu0
        %3209 = vmatpush.bf16.msra.mxu0 %v2457
        %3210 = vmatpush.bf16.msra.mxu0 %v2456
        %3211 = vmatpush.bf16.msra.mxu0 %v2455
        %3212 = vmatpush.bf16.msra.mxu0 %v2454
        %3213 = vmatpush.bf16.msra.mxu0 %v2453
        %3214 = vmatpush.bf16.msra.mxu0 %v2452
        %3215 = vmatpush.bf16.msra.mxu0 %v2451
        %3216 = vmatpush.bf16.msra.mxu0 %v2450
        %3217 = vmatmul.bf16.gmra.mxu0 %v933
        %v3218 = vpop.f32.mrf.mxu0
        %v3219 = vadd.f32 %v3206, %v3218
        %v3220 = vpop.f32.mrf.mxu0
        %3221 = vdwg.mxu0
        %3222 = vmatpush.bf16.msra.mxu0 %v2465
        %3223 = vmatpush.bf16.msra.mxu0 %v2464
        %3224 = vmatpush.bf16.msra.mxu0 %v2463
        %3225 = vmatpush.bf16.msra.mxu0 %v2462
        %3226 = vmatpush.bf16.msra.mxu0 %v2461
        %3227 = vmatpush.bf16.msra.mxu0 %v2460
        %3228 = vmatpush.bf16.msra.mxu0 %v2459
        %3229 = vmatpush.bf16.msra.mxu0 %v2458
        %3230 = vmatmul.bf16.gmra.mxu0 %v934
        %v3231 = vpop.f32.mrf.mxu0
        %v3232 = vadd.f32 %v3219, %v3231
        %v3233 = vpop.f32.mrf.mxu0
        %3234 = vdwg.mxu0
        %3235 = vmatpush.bf16.msra.mxu0 %v2473
        %3236 = vmatpush.bf16.msra.mxu0 %v2472
        %3237 = vmatpush.bf16.msra.mxu0 %v2471
        %3238 = vmatpush.bf16.msra.mxu0 %v2470
        %3239 = vmatpush.bf16.msra.mxu0 %v2469
        %3240 = vmatpush.bf16.msra.mxu0 %v2468
        %3241 = vmatpush.bf16.msra.mxu0 %v2467
        %3242 = vmatpush.bf16.msra.mxu0 %v2466
        %3243 = vmatmul.bf16.gmra.mxu0 %v935
        %v3244 = vpop.f32.mrf.mxu0
        %v3245 = vadd.f32 %v3232, %v3244
        %v3246 = vpop.f32.mrf.mxu0
        %3247 = vdwg.mxu0
        %3248 = vmatpush.bf16.msra.mxu0 %v2481
        %3249 = vmatpush.bf16.msra.mxu0 %v2480
        %3250 = vmatpush.bf16.msra.mxu0 %v2479
        %3251 = vmatpush.bf16.msra.mxu0 %v2478
        %3252 = vmatpush.bf16.msra.mxu0 %v2477
        %3253 = vmatpush.bf16.msra.mxu0 %v2476
        %3254 = vmatpush.bf16.msra.mxu0 %v2475
        %3255 = vmatpush.bf16.msra.mxu0 %v2474
        %3256 = vmatmul.bf16.gmra.mxu0 %v936
        %v3257 = vpop.f32.mrf.mxu0
        %v3258 = vadd.f32 %v3245, %v3257
        %v3259 = vpop.f32.mrf.mxu0
        %3260 = vdwg.mxu0
        %3261 = vmatpush.bf16.msra.mxu0 %v2489
        %3262 = vmatpush.bf16.msra.mxu0 %v2488
        %3263 = vmatpush.bf16.msra.mxu0 %v2487
        %3264 = vmatpush.bf16.msra.mxu0 %v2486
        %3265 = vmatpush.bf16.msra.mxu0 %v2485
        %3266 = vmatpush.bf16.msra.mxu0 %v2484
        %3267 = vmatpush.bf16.msra.mxu0 %v2483
        %3268 = vmatpush.bf16.msra.mxu0 %v2482
        %3269 = vmatmul.bf16.gmra.mxu0 %v937
        %v3270 = vpop.f32.mrf.mxu0
        %v3271 = vadd.f32 %v3258, %v3270
        %v3272 = vpop.f32.mrf.mxu0
        %3273 = vdwg.mxu0
        %3274 = vmatpush.bf16.msra.mxu0 %v2497
        %3275 = vmatpush.bf16.msra.mxu0 %v2496
        %3276 = vmatpush.bf16.msra.mxu0 %v2495
        %3277 = vmatpush.bf16.msra.mxu0 %v2494
        %3278 = vmatpush.bf16.msra.mxu0 %v2493
        %3279 = vmatpush.bf16.msra.mxu0 %v2492
        %3280 = vmatpush.bf16.msra.mxu0 %v2491
        %3281 = vmatpush.bf16.msra.mxu0 %v2490
        %3282 = vmatmul.bf16.gmra.mxu0 %v940
        %v3283 = vpop.f32.mrf.mxu0
        %v3284 = vadd.f32 %v3271, %v3283
        %v3285 = vpop.f32.mrf.mxu0
        %3286 = vdwg.mxu0
        %3287 = vmatpush.bf16.msra.mxu0 %v2505
        %3288 = vmatpush.bf16.msra.mxu0 %v2504
        %3289 = vmatpush.bf16.msra.mxu0 %v2503
        %3290 = vmatpush.bf16.msra.mxu0 %v2502
        %3291 = vmatpush.bf16.msra.mxu0 %v2501
        %3292 = vmatpush.bf16.msra.mxu0 %v2500
        %3293 = vmatpush.bf16.msra.mxu0 %v2499
        %3294 = vmatpush.bf16.msra.mxu0 %v2498
        %3295 = vmatmul.bf16.gmra.mxu0 %v941
        %v3296 = vpop.f32.mrf.mxu0
        %v3297 = vadd.f32 %v3284, %v3296
        %v3298 = vpop.f32.mrf.mxu0
        %3299 = vdwg.mxu0
        %3300 = vmatpush.bf16.msra.mxu0 %v2513
        %3301 = vmatpush.bf16.msra.mxu0 %v2512
        %3302 = vmatpush.bf16.msra.mxu0 %v2511
        %3303 = vmatpush.bf16.msra.mxu0 %v2510
        %3304 = vmatpush.bf16.msra.mxu0 %v2509
        %3305 = vmatpush.bf16.msra.mxu0 %v2508
        %3306 = vmatpush.bf16.msra.mxu0 %v2507
        %3307 = vmatpush.bf16.msra.mxu0 %v2506
        %3308 = vmatmul.bf16.gmra.mxu0 %v942
        %v3309 = vpop.f32.mrf.mxu0
        %v3310 = vadd.f32 %v3297, %v3309
        %v3311 = vpop.f32.mrf.mxu0
        %3312 = vdwg.mxu0
        %3313 = vmatpush.bf16.msra.mxu0 %v2521
        %3314 = vmatpush.bf16.msra.mxu0 %v2520
        %3315 = vmatpush.bf16.msra.mxu0 %v2519
        %3316 = vmatpush.bf16.msra.mxu0 %v2518
        %3317 = vmatpush.bf16.msra.mxu0 %v2517
        %3318 = vmatpush.bf16.msra.mxu0 %v2516
        %3319 = vmatpush.bf16.msra.mxu0 %v2515
        %3320 = vmatpush.bf16.msra.mxu0 %v2514
        %3321 = vmatmul.bf16.gmra.mxu0 %v943
        %v3322 = vpop.f32.mrf.mxu0
        %v3323 = vadd.f32 %v3310, %v3322
        %v3324 = vpop.f32.mrf.mxu0
        %3325 = vdwg.mxu0
        %3326 = vmatpush.bf16.msra.mxu0 %v2529
        %3327 = vmatpush.bf16.msra.mxu0 %v2528
        %3328 = vmatpush.bf16.msra.mxu0 %v2527
        %3329 = vmatpush.bf16.msra.mxu0 %v2526
        %3330 = vmatpush.bf16.msra.mxu0 %v2525
        %3331 = vmatpush.bf16.msra.mxu0 %v2524
        %3332 = vmatpush.bf16.msra.mxu0 %v2523
        %3333 = vmatpush.bf16.msra.mxu0 %v2522
        %3334 = vmatmul.bf16.gmra.mxu0 %v944
        %v3335 = vpop.f32.mrf.mxu0
        %v3336 = vadd.f32 %v3323, %v3335
        %v3337 = vpop.f32.mrf.mxu0
        %3338 = vdwg.mxu0
        %3339 = vmatpush.bf16.msra.mxu0 %v2537
        %3340 = vmatpush.bf16.msra.mxu0 %v2536
        %3341 = vmatpush.bf16.msra.mxu0 %v2535
        %3342 = vmatpush.bf16.msra.mxu0 %v2534
        %3343 = vmatpush.bf16.msra.mxu0 %v2533
        %3344 = vmatpush.bf16.msra.mxu0 %v2532
        %3345 = vmatpush.bf16.msra.mxu0 %v2531
        %3346 = vmatpush.bf16.msra.mxu0 %v2530
        %3347 = vmatmul.bf16.gmra.mxu0 %v945
        %v3348 = vpop.f32.mrf.mxu0
        %v3349 = vadd.f32 %v3336, %v3348
        %v3350 = vpop.f32.mrf.mxu0
        %3351 = vdwg.mxu0
        %3352 = vmatpush.bf16.msra.mxu0 %v2545
        %3353 = vmatpush.bf16.msra.mxu0 %v2544
        %3354 = vmatpush.bf16.msra.mxu0 %v2543
        %3355 = vmatpush.bf16.msra.mxu0 %v2542
        %3356 = vmatpush.bf16.msra.mxu0 %v2541
        %3357 = vmatpush.bf16.msra.mxu0 %v2540
        %3358 = vmatpush.bf16.msra.mxu0 %v2539
        %3359 = vmatpush.bf16.msra.mxu0 %v2538
        %3360 = vmatmul.bf16.gmra.mxu0 %v946
        %v3361 = vpop.f32.mrf.mxu0
        %v3362 = vadd.f32 %v3349, %v3361
        %v3363 = vpop.f32.mrf.mxu0
        %3364 = vdwg.mxu0
        %v3365 = vadd.f32 %v268, %v3362
        %3366 = vst [vmem:[#allocation2] sm:$0x3] %v3365
        %p3367 = scmp.eq.s32.totalorder %s22, 1
        // Predicated region
        $region45: #{digit_encoder_forward.3} parent=39 // pred_check
          %p3368 = pneg %p3367
        $region46: #{digit_encoder_forward.3} parent=39 // pred_check_branch
          %3370 = sbr.rel (%p3368) target = $region48
        $region47: #{digit_encoder_forward.3} parent=39 // pred_region
          %v3371 = vld [vmem:[#allocation2] sm:$0x3]
          %v3372 = vld [vmem:[%s2] sm:$0x1]
          %v3374 = vperm.slane %v3372, 0
          %v3376 = vadd.f32 %v3371, %v3374
          %v3377 = vmax.f32 %v3376, 0.0
          %v3378 = vld [vmem:[%s3] sm:$0xff]
          %v3379 = vld [vmem:[%s3 + $0x8] sm:$0xff]
          %v3380 = vld [vmem:[%s3 + $0x10] sm:$0xff]
          %v3381 = vld [vmem:[%s3 + $0x18] sm:$0xff]
          %v3382 = vld [vmem:[%s3 + $0x20] sm:$0xff]
          %v3383 = vld [vmem:[%s3 + $0x28] sm:$0xff]
          %v3384 = vld [vmem:[%s3 + $0x30] sm:$0xff]
          %v3385 = vld [vmem:[%s3 + $0x38] sm:$0xff]
          %v3386 = vld [vmem:[%s3 + $0x40] sm:$0xff]
          %v3387 = vld [vmem:[%s3 + $0x48] sm:$0xff]
          %v3388 = vld [vmem:[%s3 + $0x50] sm:$0xff]
          %v3389 = vld [vmem:[%s3 + $0x58] sm:$0xff]
          %v3390 = vld [vmem:[%s3 + $0x60] sm:$0xff]
          %v3391 = vld [vmem:[%s3 + $0x68] sm:$0xff]
          %v3392 = vld [vmem:[%s3 + $0x70] sm:$0xff]
          %v3393 = vld [vmem:[%s3 + $0x78] sm:$0xff]
          %v3394 = vld [vmem:[%s4] sm:$0x1]
          %v3396 = vperm.slane %v3394, 0
          %3398 = vmatpush.msra.mxu0 %v3393
          %3399 = vmatpush.msra.mxu0 %v3392
          %3400 = vmatpush.msra.mxu0 %v3391
          %3401 = vmatpush.msra.mxu0 %v3390
          %3402 = vmatpush.msra.mxu0 %v3389
          %3403 = vmatpush.msra.mxu0 %v3388
          %3404 = vmatpush.msra.mxu0 %v3387
          %3405 = vmatpush.msra.mxu0 %v3386
          %3406 = vmatpush.msra.mxu0 %v3385
          %3407 = vmatpush.msra.mxu0 %v3384
          %3408 = vmatpush.msra.mxu0 %v3383
          %3409 = vmatpush.msra.mxu0 %v3382
          %3410 = vmatpush.msra.mxu0 %v3381
          %3411 = vmatpush.msra.mxu0 %v3380
          %3412 = vmatpush.msra.mxu0 %v3379
          %3413 = vmatpush.msra.mxu0 %v3378
          %3414 = vmatmul.f32.gmra.mxu0 %v3377
          %v3415 = vpop.f32.mrf.mxu0
          %v3416 = vadd.f32 %v3396, %v3415
          %3417 = vdwg.mxu0
          %vm3418 = vcmask 74752
          %3419 = vst.msk [vmem:[#allocation3] sm:$0x3] %vm3418, %v3416
        $region48: #{digit_encoder_forward.3} parent=39 // pred_fallthru
          _
        // Predicated region
        $region49: #{digit_encoder_forward.3} parent=39 // pred_check
          %p3420 = pneg %p164
        $region50: #{digit_encoder_forward.3} parent=39 // pred_check_branch
          %3422 = sbr.rel (%p3420) target = $region52
        $region51: #{digit_encoder_forward.3} parent=39 // pred_region
          %3424 = vsyncadd [#allocation4], 0
          %s3425 = smul.addr %s21, 2
          %s3426 = scalar_lea.hbm %s5, %s3425
          %s3428 = sshll.u32 [#allocation3], 4
          %s3429 = int_to_ptr.vmem [resolvable:$true] %s3428
          %s3430 = sshll.u32 %s3426, 4
          %s3431 = int_to_ptr.hbm [resolvable:$true] %s3430
          %3433 = dma.vmem_to_hbm [thread:$0]  %s3429, 32, %s3431, [#allocation4]
        $region52: #{digit_encoder_forward.3} parent=39 // pred_fallthru
          _
        // Predicated region
        $region53: #{digit_encoder_forward.3} parent=39 // pred_check
          %p3434 = pneg %p164
        $region54: #{digit_encoder_forward.3} parent=39 // pred_check_branch
          %3436 = sbr.rel (%p3434) target = $region56
        $region55: #{digit_encoder_forward.3} parent=39 // pred_region
          %3438 = dma.done [#allocation4], 32
        $region56: #{digit_encoder_forward.3} parent=39 // pred_fallthru
          _
      $region40: #{digit_encoder_forward.3} parent=5 // pred_fallthru
        _
      %p3439 = scmp.le.s32.totalorder 2, %s12
      // Predicated region
      $region57: #{digit_encoder_forward.3} parent=5 // pred_check
        %p3440 = pneg %p3439
      $region58: #{digit_encoder_forward.3} parent=5 // pred_check_branch
        %3442 = sbr.rel (%p3440) target = $region60
      $region59: #{digit_encoder_forward.3} parent=5 // pred_region
        %s3443 = ssub.s32 %s12, 2
      $region60: #{digit_encoder_forward.3} parent=5 // pred_fallthru
        _
    $region6: #{digit_encoder_forward.3} parent=1 // loop_footer
      %s16 = sadd.s32 1, %s12
    $region7: #{digit_encoder_forward.3} parent=1 // loop_footer_branch
      %11 = sbr.rel target = $region3
    $region8: #{digit_encoder_forward.3} parent=1 // loop_exit
      _
    %3444 = vsyncpa [#allocation4], 1
    %s3445 = scalar_lea.sflag [#allocation4], 1
    %3446 = vsyncpa %s3445, 1

</llo_original>
